<compile_context>
chip_gen: v7x
topology: tpu7x:2x2x1
jax: 0.10.0
libtpu: 0.0.40
codegen_flags: <defaults>
</compile_context>

<pallas_src>
import functools

import numpy as np
import jax
import jax.numpy as jnp
from jax.experimental import pallas as pl
from jax.experimental.pallas import tpu as pltpu

NHIDDEN = 128     # hard-coded in the SPADE module
EPS = 1e-5        # nn.InstanceNorm2d default


def _spade_kernel(seg_ref, x_ref, w1_ref, w2_ref, w3_ref,
                  b1_ref, b2_ref, b3_ref, mask_ref,
                  o_ref, acc_ref, actv_ref, *, H, W):
    WA = W + 4                 # flat row stride shared by every stage
    LA = (H + 3) * WA          # padded-activation flat length (stage A output)
    SB = H * WA                # gamma/beta/output flat length

    # ---------------- stage A: mlp_shared conv (label_nc -> 128) + ReLU ----------
    seg = seg_ref[0]                                            # (Cl, LS) bf16
    for t in range(9):
        kh, kw = t // 3, t % 3
        d = kh * WA + kw
        part = jnp.dot(w1_ref[t], seg[:, d:d + LA],             # (128,Cl)@(Cl,LA)
                       preferred_element_type=jnp.float32)
        if t == 0:
            acc_ref[...] = part
        else:
            acc_ref[...] += part
    # bias + ReLU, then zero the padding ring (this IS the zero padding of conv2/3)
    actv = jnp.maximum(acc_ref[...] + b1_ref[...], 0.0) * mask_ref[...]
    actv_ref[...] = actv.astype(jnp.bfloat16)

    # ---------------- stage B: mlp_gamma / mlp_beta convs (128 -> norm_nc) -------
    Cn = x_ref.shape[1]
    g_acc = jnp.zeros((Cn, SB), jnp.float32)
    be_acc = jnp.zeros((Cn, SB), jnp.float32)
    for t in range(9):
        kh, kw = t // 3, t % 3
        d = kh * WA + kw
        a = actv_ref[:, d:d + SB]                               # (128, SB) bf16, shared
        g_acc = g_acc + jnp.dot(w2_ref[t], a, preferred_element_type=jnp.float32)
        be_acc = be_acc + jnp.dot(w3_ref[t], a, preferred_element_type=jnp.float32)
    gamma = g_acc + b2_ref[...]
    beta = be_acc + b3_ref[...]

    # ---------------- stage C: InstanceNorm2d(x) + SPADE modulation --------------
    x = x_ref[0]                                                # (Cn, SB) f32, zero pad cols
    inv_n = 1.0 / float(H * W)                                  # pad cols are zero -> sums exact
    mean = jnp.sum(x, axis=1, keepdims=True) * inv_n
    var = jnp.sum(x * x, axis=1, keepdims=True) * inv_n - mean * mean
    rstd = jax.lax.rsqrt(var + EPS)
    xnorm = (x - mean) * rstd
    o_ref[0] = xnorm * (1.0 + gamma) + beta


def _nearest_resize(seg, H, W):
    """F.interpolate(mode='nearest') to (H, W), NCHW."""
    Hs, Ws = seg.shape[2], seg.shape[3]
    ih = (jnp.arange(H) * Hs) // H
    iw = (jnp.arange(W) * Ws) // W
    return seg[:, :, ih][:, :, :, iw]


def spade_pallas(x, segmap, w1, b1, w2, b2, w3, b3):
    """
    x:      (B, norm_nc, H, W) f32        segmap: (B, label_nc, Hs, Ws) f32
    w1/b1:  mlp_shared conv (128, label_nc, 3, 3) / (128,)
    w2/b2:  mlp_gamma  conv (norm_nc, 128, 3, 3) / (norm_nc,)
    w3/b3:  mlp_beta   conv (norm_nc, 128, 3, 3) / (norm_nc,)
    returns (B, norm_nc, H, W) f32
    """
    B, Cn, H, W = x.shape
    Cl = segmap.shape[1]
    WA = W + 4
    LS = (H + 6) * WA          # segmap padded flat length
    LA = (H + 3) * WA
    SB = H * WA

    # --- data-layout glue (pure JAX): nearest resize, pad, flatten, cast ---------
    segr = _nearest_resize(segmap, H, W)                                   # (B,Cl,H,W)
    seg_p = jnp.pad(segr, ((0, 0), (0, 0), (2, 4), (2, 2)))                # pad=2 + slack rows
    seg_flat = seg_p.reshape(B, Cl, LS).astype(jnp.bfloat16)

    x_p = jnp.pad(x, ((0, 0), (0, 0), (0, 0), (0, 4)))                     # width -> WA (zeros)
    x_flat = x_p.reshape(B, Cn, SB).astype(jnp.float32)

    # per-tap transposed weights (Cout, Cin), bf16 for the MXU
    w1_t = jnp.transpose(w1, (2, 3, 0, 1)).reshape(9, NHIDDEN, Cl).astype(jnp.bfloat16)
    w2_t = jnp.transpose(w2, (2, 3, 0, 1)).reshape(9, Cn, NHIDDEN).astype(jnp.bfloat16)
    w3_t = jnp.transpose(w3, (2, 3, 0, 1)).reshape(9, Cn, NHIDDEN).astype(jnp.bfloat16)
    b1_c = b1.reshape(NHIDDEN, 1).astype(jnp.float32)
    b2_c = b2.reshape(Cn, 1).astype(jnp.float32)
    b3_c = b3.reshape(Cn, 1).astype(jnp.float32)

    # interior mask on the padded-activation flat grid (O(spatial), built once)
    ii, jj = np.divmod(np.arange(LA), WA)
    mask_np = ((ii >= 1) & (ii <= H) & (jj >= 1) & (jj <= W)).astype(np.float32)
    mask = jnp.asarray(mask_np.reshape(1, LA))

    flops = B * (2 * LA * NHIDDEN * Cl * 9 + 2 * 2 * SB * Cn * NHIDDEN * 9)
    bytes_accessed = (B * Cl * LS * 2 + B * Cn * SB * 4 + B * Cn * SB * 4
                      + (w1_t.size + w2_t.size + w3_t.size) * 2)

    kernel = functools.partial(_spade_kernel, H=H, W=W)
    out_flat = pl.pallas_call(
        kernel,
        out_shape=jax.ShapeDtypeStruct((B, Cn, SB), jnp.float32),
        grid_spec=pltpu.PrefetchScalarGridSpec(
            num_scalar_prefetch=0,
            grid=(B,),
            in_specs=[
                pl.BlockSpec((1, Cl, LS), lambda b: (b, 0, 0)),
                pl.BlockSpec((1, Cn, SB), lambda b: (b, 0, 0)),
                pl.BlockSpec((9, NHIDDEN, Cl), lambda b: (0, 0, 0)),   # resident weights
                pl.BlockSpec((9, Cn, NHIDDEN), lambda b: (0, 0, 0)),
                pl.BlockSpec((9, Cn, NHIDDEN), lambda b: (0, 0, 0)),
                pl.BlockSpec((NHIDDEN, 1), lambda b: (0, 0)),
                pl.BlockSpec((Cn, 1), lambda b: (0, 0)),
                pl.BlockSpec((Cn, 1), lambda b: (0, 0)),
                pl.BlockSpec((1, LA), lambda b: (0, 0)),
            ],
            out_specs=pl.BlockSpec((1, Cn, SB), lambda b: (b, 0, 0)),
            scratch_shapes=[
                pltpu.VMEM((NHIDDEN, LA), jnp.float32),    # conv1 f32 accumulator
                pltpu.VMEM((NHIDDEN, LA), jnp.bfloat16),   # padded activation (conv2/3 input)
            ],
        ),
        compiler_params=pltpu.CompilerParams(dimension_semantics=("parallel",)),
        cost_estimate=pl.CostEstimate(flops=flops, transcendentals=B * Cn,
                                      bytes_accessed=bytes_accessed),
    )(seg_flat, x_flat, w1_t, w2_t, w3_t, b1_c, b2_c, b3_c, mask)

    # (B, Cn, H*WA) -> (B, Cn, H, W): drop the 4 stride-slack columns; already NCHW.
    return out_flat.reshape(B, Cn, H, WA)[:, :, :, :W]


def _reference(x, segmap, w1, b1, w2, b2, w3, b3):
    """Pure-JAX f32 reference mirroring the PyTorch SPADE module."""
    B, Cn, H, W = x.shape
    mean = x.mean(axis=(2, 3), keepdims=True)
    var = ((x - mean) ** 2).mean(axis=(2, 3), keepdims=True)
    xn = (x - mean) / jnp.sqrt(var + EPS)

    segr = _nearest_resize(segmap, H, W)

    def conv(a, w, b):
        y = jax.lax.conv_general_dilated(
            a, w, window_strides=(1, 1), padding=[(1, 1), (1, 1)],
            dimension_numbers=("NCHW", "OIHW", "NCHW"))
        return y + b.reshape(1, -1, 1, 1)

    actv = jnp.maximum(conv(segr, w1, b1), 0.0)
    gamma = conv(actv, w2, b2)
    beta = conv(actv, w3, b3)
    return xn * (1.0 + gamma) + beta


if __name__ == "__main__":
    B, Cn, Cl, H, W = 2, 4, 4, 16, 16      # norm_nc=4, label_nc=4
    Hs = Ws = 8                            # segmap at half resolution (nearest upsample 2x)

    key = jax.random.PRNGKey(0)
    ks = jax.random.split(key, 8)
    x = jax.random.normal(ks[0], (B, Cn, H, W), jnp.float32)
    seg = jax.random.normal(ks[1], (B, Cl, Hs, Ws), jnp.float32)
    w1 = jax.random.normal(ks[2], (NHIDDEN, Cl, 3, 3), jnp.float32) * 0.1
    b1 = jax.random.normal(ks[3], (NHIDDEN,), jnp.float32) * 0.1
    w2 = jax.random.normal(ks[4], (Cn, NHIDDEN, 3, 3), jnp.float32) * 0.05
    b2 = jax.random.normal(ks[5], (Cn,), jnp.float32) * 0.1
    w3 = jax.random.normal(ks[6], (Cn, NHIDDEN, 3, 3), jnp.float32) * 0.05
    b3 = jax.random.normal(ks[7], (Cn,), jnp.float32) * 0.1

    out = jax.block_until_ready(spade_pallas(x, seg, w1, b1, w2, b2, w3, b3))
    assert out.shape == (B, Cn, H, W)

    ref = _reference(x, seg, w1, b1, w2, b2, w3, b3)
    # bf16 MXU inputs with f32 accumulation -> loose-ish tolerance vs the f32 reference.
    np.testing.assert_allclose(np.asarray(out), np.asarray(ref), rtol=5e-2, atol=5e-2)
    print("KERNEL_OK")
</pallas_src>

<mosaic_0001>
module attributes {stable_mosaic.version = 11 : i64} {
  func.func @_spade_kernel(%arg0: i32, %arg1: memref<1x4x440xbf16, #tpu.memory_space<vmem>>, %arg2: memref<1x4x320xf32, #tpu.memory_space<vmem>>, %arg3: memref<9x128x4xbf16, #tpu.memory_space<vmem>>, %arg4: memref<9x4x128xbf16, #tpu.memory_space<vmem>>, %arg5: memref<9x4x128xbf16, #tpu.memory_space<vmem>>, %arg6: memref<128x1xf32, #tpu.memory_space<vmem>>, %arg7: memref<4x1xf32, #tpu.memory_space<vmem>>, %arg8: memref<4x1xf32, #tpu.memory_space<vmem>>, %arg9: memref<1x380xf32, #tpu.memory_space<vmem>>, %arg10: memref<1x4x320xf32, #tpu.memory_space<vmem>>, %arg11: memref<128x380xf32, #tpu.memory_space<vmem>>, %arg12: memref<128x380xbf16, #tpu.memory_space<vmem>>) attributes {dimension_semantics = [#tpu.dimension_semantics<parallel>], iteration_bounds = array<i64: 2>, scalar_prefetch = 0 : i64, scratch_operands = 2 : i64, tpu.core_type = #tpu.core_type<tc>, window_params = [{transform_indices = @transform_0, window_bounds = array<i64: 1, 4, 440>}, {transform_indices = @transform_1, window_bounds = array<i64: 1, 4, 320>}, {pipeline_mode = #tpu.pipeline_mode<synchronous>, transform_indices = @transform_2, window_bounds = array<i64: 9, 128, 4>}, {pipeline_mode = #tpu.pipeline_mode<synchronous>, transform_indices = @transform_3, window_bounds = array<i64: 9, 4, 128>}, {pipeline_mode = #tpu.pipeline_mode<synchronous>, transform_indices = @transform_4, window_bounds = array<i64: 9, 4, 128>}, {pipeline_mode = #tpu.pipeline_mode<synchronous>, transform_indices = @transform_5, window_bounds = array<i64: 128, 1>}, {pipeline_mode = #tpu.pipeline_mode<synchronous>, transform_indices = @transform_6, window_bounds = array<i64: 4, 1>}, {pipeline_mode = #tpu.pipeline_mode<synchronous>, transform_indices = @transform_7, window_bounds = array<i64: 4, 1>}, {pipeline_mode = #tpu.pipeline_mode<synchronous>, transform_indices = @transform_8, window_bounds = array<i64: 1, 380>}, {transform_indices = @transform_9, window_bounds = array<i64: 1, 4, 320>}]} {
    %c0 = arith.constant 0 : index
    %c0_0 = arith.constant 0 : index
    %c0_1 = arith.constant 0 : index
    %0 = vector.load %arg1[%c0, %c0_0, %c0_1] : memref<1x4x440xbf16, #tpu.memory_space<vmem>>, vector<1x4x440xbf16>
    %1 = vector.shape_cast %0 : vector<1x4x440xbf16> to vector<4x440xbf16>
    %c0_2 = arith.constant 0 : index
    %c0_3 = arith.constant 0 : index
    %c0_4 = arith.constant 0 : index
    %2 = vector.load %arg3[%c0_2, %c0_3, %c0_4] : memref<9x128x4xbf16, #tpu.memory_space<vmem>>, vector<1x128x4xbf16>
    %3 = vector.shape_cast %2 : vector<1x128x4xbf16> to vector<128x4xbf16>
    %4 = vector.extract_strided_slice %1 {offsets = [0, 0], sizes = [4, 380], strides = [1, 1]} : vector<4x440xbf16> to vector<4x380xbf16>
    %cst = arith.constant dense<0.000000e+00> : vector<128x380xf32>
    %5 = tpu.matmul %3, %4, %cst {dimension_numbers = #tpu.dot_dimension_numbers<[1], [0], [0], [1], [0, 0, 1, 1], [], []>} : vector<128x4xbf16>, vector<4x380xbf16>, vector<128x380xf32> -> vector<128x380xf32>
    %c0_5 = arith.constant 0 : index
    %c0_6 = arith.constant 0 : index
    %6 = vector.load %arg11[%c0_5, %c0_6] : memref<128x380xf32, #tpu.memory_space<vmem>>, vector<128x380xf32>
    tpu.vector_store %arg11[%c0_5, %c0_6], %5 {strides = array<i32>} : memref<128x380xf32, #tpu.memory_space<vmem>>, vector<128x380xf32>,
    %c1 = arith.constant 1 : index
    %c0_7 = arith.constant 0 : index
    %c0_8 = arith.constant 0 : index
    %7 = vector.load %arg3[%c1, %c0_7, %c0_8] : memref<9x128x4xbf16, #tpu.memory_space<vmem>>, vector<1x128x4xbf16>
    %8 = vector.shape_cast %7 : vector<1x128x4xbf16> to vector<128x4xbf16>
    %9 = vector.extract_strided_slice %1 {offsets = [0, 1], sizes = [4, 380], strides = [1, 1]} : vector<4x440xbf16> to vector<4x380xbf16>
    %cst_9 = arith.constant dense<0.000000e+00> : vector<128x380xf32>
    %10 = tpu.matmul %8, %9, %cst_9 {dimension_numbers = #tpu.dot_dimension_numbers<[1], [0], [0], [1], [0, 0, 1, 1], [], []>} : vector<128x4xbf16>, vector<4x380xbf16>, vector<128x380xf32> -> vector<128x380xf32>
    %c0_10 = arith.constant 0 : index
    %c0_11 = arith.constant 0 : index
    %11 = vector.load %arg11[%c0_10, %c0_11] : memref<128x380xf32, #tpu.memory_space<vmem>>, vector<128x380xf32>
    %12 = arith.addf %11, %10 : vector<128x380xf32>
    %c0_12 = arith.constant 0 : index
    %c0_13 = arith.constant 0 : index
    %13 = vector.load %arg11[%c0_12, %c0_13] : memref<128x380xf32, #tpu.memory_space<vmem>>, vector<128x380xf32>
    tpu.vector_store %arg11[%c0_12, %c0_13], %12 {strides = array<i32>} : memref<128x380xf32, #tpu.memory_space<vmem>>, vector<128x380xf32>,
    %c2 = arith.constant 2 : index
    %c0_14 = arith.constant 0 : index
    %c0_15 = arith.constant 0 : index
    %14 = vector.load %arg3[%c2, %c0_14, %c0_15] : memref<9x128x4xbf16, #tpu.memory_space<vmem>>, vector<1x128x4xbf16>
    %15 = vector.shape_cast %14 : vector<1x128x4xbf16> to vector<128x4xbf16>
    %16 = vector.extract_strided_slice %1 {offsets = [0, 2], sizes = [4, 380], strides = [1, 1]} : vector<4x440xbf16> to vector<4x380xbf16>
    %cst_16 = arith.constant dense<0.000000e+00> : vector<128x380xf32>
    %17 = tpu.matmul %15, %16, %cst_16 {dimension_numbers = #tpu.dot_dimension_numbers<[1], [0], [0], [1], [0, 0, 1, 1], [], []>} : vector<128x4xbf16>, vector<4x380xbf16>, vector<128x380xf32> -> vector<128x380xf32>
    %c0_17 = arith.constant 0 : index
    %c0_18 = arith.constant 0 : index
    %18 = vector.load %arg11[%c0_17, %c0_18] : memref<128x380xf32, #tpu.memory_space<vmem>>, vector<128x380xf32>
    %19 = arith.addf %18, %17 : vector<128x380xf32>
    %c0_19 = arith.constant 0 : index
    %c0_20 = arith.constant 0 : index
    %20 = vector.load %arg11[%c0_19, %c0_20] : memref<128x380xf32, #tpu.memory_space<vmem>>, vector<128x380xf32>
    tpu.vector_store %arg11[%c0_19, %c0_20], %19 {strides = array<i32>} : memref<128x380xf32, #tpu.memory_space<vmem>>, vector<128x380xf32>,
    %c3 = arith.constant 3 : index
    %c0_21 = arith.constant 0 : index
    %c0_22 = arith.constant 0 : index
    %21 = vector.load %arg3[%c3, %c0_21, %c0_22] : memref<9x128x4xbf16, #tpu.memory_space<vmem>>, vector<1x128x4xbf16>
    %22 = vector.shape_cast %21 : vector<1x128x4xbf16> to vector<128x4xbf16>
    %23 = vector.extract_strided_slice %1 {offsets = [0, 20], sizes = [4, 380], strides = [1, 1]} : vector<4x440xbf16> to vector<4x380xbf16>
    %cst_23 = arith.constant dense<0.000000e+00> : vector<128x380xf32>
    %24 = tpu.matmul %22, %23, %cst_23 {dimension_numbers = #tpu.dot_dimension_numbers<[1], [0], [0], [1], [0, 0, 1, 1], [], []>} : vector<128x4xbf16>, vector<4x380xbf16>, vector<128x380xf32> -> vector<128x380xf32>
    %c0_24 = arith.constant 0 : index
    %c0_25 = arith.constant 0 : index
    %25 = vector.load %arg11[%c0_24, %c0_25] : memref<128x380xf32, #tpu.memory_space<vmem>>, vector<128x380xf32>
    %26 = arith.addf %25, %24 : vector<128x380xf32>
    %c0_26 = arith.constant 0 : index
    %c0_27 = arith.constant 0 : index
    %27 = vector.load %arg11[%c0_26, %c0_27] : memref<128x380xf32, #tpu.memory_space<vmem>>, vector<128x380xf32>
    tpu.vector_store %arg11[%c0_26, %c0_27], %26 {strides = array<i32>} : memref<128x380xf32, #tpu.memory_space<vmem>>, vector<128x380xf32>,
    %c4 = arith.constant 4 : index
    %c0_28 = arith.constant 0 : index
    %c0_29 = arith.constant 0 : index
    %28 = vector.load %arg3[%c4, %c0_28, %c0_29] : memref<9x128x4xbf16, #tpu.memory_space<vmem>>, vector<1x128x4xbf16>
    %29 = vector.shape_cast %28 : vector<1x128x4xbf16> to vector<128x4xbf16>
    %30 = vector.extract_strided_slice %1 {offsets = [0, 21], sizes = [4, 380], strides = [1, 1]} : vector<4x440xbf16> to vector<4x380xbf16>
    %cst_30 = arith.constant dense<0.000000e+00> : vector<128x380xf32>
    %31 = tpu.matmul %29, %30, %cst_30 {dimension_numbers = #tpu.dot_dimension_numbers<[1], [0], [0], [1], [0, 0, 1, 1], [], []>} : vector<128x4xbf16>, vector<4x380xbf16>, vector<128x380xf32> -> vector<128x380xf32>
    %c0_31 = arith.constant 0 : index
    %c0_32 = arith.constant 0 : index
    %32 = vector.load %arg11[%c0_31, %c0_32] : memref<128x380xf32, #tpu.memory_space<vmem>>, vector<128x380xf32>
    %33 = arith.addf %32, %31 : vector<128x380xf32>
    %c0_33 = arith.constant 0 : index
    %c0_34 = arith.constant 0 : index
    %34 = vector.load %arg11[%c0_33, %c0_34] : memref<128x380xf32, #tpu.memory_space<vmem>>, vector<128x380xf32>
    tpu.vector_store %arg11[%c0_33, %c0_34], %33 {strides = array<i32>} : memref<128x380xf32, #tpu.memory_space<vmem>>, vector<128x380xf32>,
    %c5 = arith.constant 5 : index
    %c0_35 = arith.constant 0 : index
    %c0_36 = arith.constant 0 : index
    %35 = vector.load %arg3[%c5, %c0_35, %c0_36] : memref<9x128x4xbf16, #tpu.memory_space<vmem>>, vector<1x128x4xbf16>
    %36 = vector.shape_cast %35 : vector<1x128x4xbf16> to vector<128x4xbf16>
    %37 = vector.extract_strided_slice %1 {offsets = [0, 22], sizes = [4, 380], strides = [1, 1]} : vector<4x440xbf16> to vector<4x380xbf16>
    %cst_37 = arith.constant dense<0.000000e+00> : vector<128x380xf32>
    %38 = tpu.matmul %36, %37, %cst_37 {dimension_numbers = #tpu.dot_dimension_numbers<[1], [0], [0], [1], [0, 0, 1, 1], [], []>} : vector<128x4xbf16>, vector<4x380xbf16>, vector<128x380xf32> -> vector<128x380xf32>
    %c0_38 = arith.constant 0 : index
    %c0_39 = arith.constant 0 : index
    %39 = vector.load %arg11[%c0_38, %c0_39] : memref<128x380xf32, #tpu.memory_space<vmem>>, vector<128x380xf32>
    %40 = arith.addf %39, %38 : vector<128x380xf32>
    %c0_40 = arith.constant 0 : index
    %c0_41 = arith.constant 0 : index
    %41 = vector.load %arg11[%c0_40, %c0_41] : memref<128x380xf32, #tpu.memory_space<vmem>>, vector<128x380xf32>
    tpu.vector_store %arg11[%c0_40, %c0_41], %40 {strides = array<i32>} : memref<128x380xf32, #tpu.memory_space<vmem>>, vector<128x380xf32>,
    %c6 = arith.constant 6 : index
    %c0_42 = arith.constant 0 : index
    %c0_43 = arith.constant 0 : index
    %42 = vector.load %arg3[%c6, %c0_42, %c0_43] : memref<9x128x4xbf16, #tpu.memory_space<vmem>>, vector<1x128x4xbf16>
    %43 = vector.shape_cast %42 : vector<1x128x4xbf16> to vector<128x4xbf16>
    %44 = vector.extract_strided_slice %1 {offsets = [0, 40], sizes = [4, 380], strides = [1, 1]} : vector<4x440xbf16> to vector<4x380xbf16>
    %cst_44 = arith.constant dense<0.000000e+00> : vector<128x380xf32>
    %45 = tpu.matmul %43, %44, %cst_44 {dimension_numbers = #tpu.dot_dimension_numbers<[1], [0], [0], [1], [0, 0, 1, 1], [], []>} : vector<128x4xbf16>, vector<4x380xbf16>, vector<128x380xf32> -> vector<128x380xf32>
    %c0_45 = arith.constant 0 : index
    %c0_46 = arith.constant 0 : index
    %46 = vector.load %arg11[%c0_45, %c0_46] : memref<128x380xf32, #tpu.memory_space<vmem>>, vector<128x380xf32>
    %47 = arith.addf %46, %45 : vector<128x380xf32>
    %c0_47 = arith.constant 0 : index
    %c0_48 = arith.constant 0 : index
    %48 = vector.load %arg11[%c0_47, %c0_48] : memref<128x380xf32, #tpu.memory_space<vmem>>, vector<128x380xf32>
    tpu.vector_store %arg11[%c0_47, %c0_48], %47 {strides = array<i32>} : memref<128x380xf32, #tpu.memory_space<vmem>>, vector<128x380xf32>,
    %c7 = arith.constant 7 : index
    %c0_49 = arith.constant 0 : index
    %c0_50 = arith.constant 0 : index
    %49 = vector.load %arg3[%c7, %c0_49, %c0_50] : memref<9x128x4xbf16, #tpu.memory_space<vmem>>, vector<1x128x4xbf16>
    %50 = vector.shape_cast %49 : vector<1x128x4xbf16> to vector<128x4xbf16>
    %51 = vector.extract_strided_slice %1 {offsets = [0, 41], sizes = [4, 380], strides = [1, 1]} : vector<4x440xbf16> to vector<4x380xbf16>
    %cst_51 = arith.constant dense<0.000000e+00> : vector<128x380xf32>
    %52 = tpu.matmul %50, %51, %cst_51 {dimension_numbers = #tpu.dot_dimension_numbers<[1], [0], [0], [1], [0, 0, 1, 1], [], []>} : vector<128x4xbf16>, vector<4x380xbf16>, vector<128x380xf32> -> vector<128x380xf32>
    %c0_52 = arith.constant 0 : index
    %c0_53 = arith.constant 0 : index
    %53 = vector.load %arg11[%c0_52, %c0_53] : memref<128x380xf32, #tpu.memory_space<vmem>>, vector<128x380xf32>
    %54 = arith.addf %53, %52 : vector<128x380xf32>
    %c0_54 = arith.constant 0 : index
    %c0_55 = arith.constant 0 : index
    %55 = vector.load %arg11[%c0_54, %c0_55] : memref<128x380xf32, #tpu.memory_space<vmem>>, vector<128x380xf32>
    tpu.vector_store %arg11[%c0_54, %c0_55], %54 {strides = array<i32>} : memref<128x380xf32, #tpu.memory_space<vmem>>, vector<128x380xf32>,
    %c8 = arith.constant 8 : index
    %c0_56 = arith.constant 0 : index
    %c0_57 = arith.constant 0 : index
    %56 = vector.load %arg3[%c8, %c0_56, %c0_57] : memref<9x128x4xbf16, #tpu.memory_space<vmem>>, vector<1x128x4xbf16>
    %57 = vector.shape_cast %56 : vector<1x128x4xbf16> to vector<128x4xbf16>
    %58 = vector.extract_strided_slice %1 {offsets = [0, 42], sizes = [4, 380], strides = [1, 1]} : vector<4x440xbf16> to vector<4x380xbf16>
    %cst_58 = arith.constant dense<0.000000e+00> : vector<128x380xf32>
    %59 = tpu.matmul %57, %58, %cst_58 {dimension_numbers = #tpu.dot_dimension_numbers<[1], [0], [0], [1], [0, 0, 1, 1], [], []>} : vector<128x4xbf16>, vector<4x380xbf16>, vector<128x380xf32> -> vector<128x380xf32>
    %c0_59 = arith.constant 0 : index
    %c0_60 = arith.constant 0 : index
    %60 = vector.load %arg11[%c0_59, %c0_60] : memref<128x380xf32, #tpu.memory_space<vmem>>, vector<128x380xf32>
    %61 = arith.addf %60, %59 : vector<128x380xf32>
    %c0_61 = arith.constant 0 : index
    %c0_62 = arith.constant 0 : index
    %62 = vector.load %arg11[%c0_61, %c0_62] : memref<128x380xf32, #tpu.memory_space<vmem>>, vector<128x380xf32>
    tpu.vector_store %arg11[%c0_61, %c0_62], %61 {strides = array<i32>} : memref<128x380xf32, #tpu.memory_space<vmem>>, vector<128x380xf32>,
    %c0_63 = arith.constant 0 : index
    %c0_64 = arith.constant 0 : index
    %63 = vector.load %arg11[%c0_63, %c0_64] : memref<128x380xf32, #tpu.memory_space<vmem>>, vector<128x380xf32>
    %c0_65 = arith.constant 0 : index
    %c0_66 = arith.constant 0 : index
    %64 = vector.load %arg6[%c0_65, %c0_66] : memref<128x1xf32, #tpu.memory_space<vmem>>, vector<128x1xf32>
    %65 = vector.broadcast %64 : vector<128x1xf32> to vector<128x380xf32>
    %66 = arith.addf %63, %65 : vector<128x380xf32>
    %cst_67 = arith.constant 0.000000e+00 : f32
    %67 = vector.broadcast %cst_67 : f32 to vector<128x380xf32>
    %68 = arith.maximumf %66, %67 : vector<128x380xf32>
    %c0_68 = arith.constant 0 : index
    %c0_69 = arith.constant 0 : index
    %69 = vector.load %arg9[%c0_68, %c0_69] : memref<1x380xf32, #tpu.memory_space<vmem>>, vector<1x380xf32>
    %70 = vector.broadcast %69 : vector<1x380xf32> to vector<128x380xf32>
    %71 = arith.mulf %68, %70 : vector<128x380xf32>
    %72 = arith.truncf %71 : vector<128x380xf32> to vector<128x380xbf16>
    %c0_70 = arith.constant 0 : index
    %c0_71 = arith.constant 0 : index
    %73 = vector.load %arg12[%c0_70, %c0_71] : memref<128x380xbf16, #tpu.memory_space<vmem>>, vector<128x380xbf16>
    tpu.vector_store %arg12[%c0_70, %c0_71], %72 {strides = array<i32>} : memref<128x380xbf16, #tpu.memory_space<vmem>>, vector<128x380xbf16>,
    %cst_72 = arith.constant 0.000000e+00 : f32
    %74 = vector.broadcast %cst_72 : f32 to vector<4x320xf32>
    %cst_73 = arith.constant 0.000000e+00 : f32
    %75 = vector.broadcast %cst_73 : f32 to vector<4x320xf32>
    %c0_74 = arith.constant 0 : index
    %c0_75 = arith.constant 0 : index
    %76 = vector.load %arg12[%c0_74, %c0_75] : memref<128x380xbf16, #tpu.memory_space<vmem>>, vector<128x320xbf16>
    %c0_76 = arith.constant 0 : index
    %c0_77 = arith.constant 0 : index
    %c0_78 = arith.constant 0 : index
    %77 = vector.load %arg4[%c0_76, %c0_77, %c0_78] : memref<9x4x128xbf16, #tpu.memory_space<vmem>>, vector<1x4x128xbf16>
    %78 = vector.shape_cast %77 : vector<1x4x128xbf16> to vector<4x128xbf16>
    %cst_79 = arith.constant dense<0.000000e+00> : vector<4x320xf32>
    %79 = tpu.matmul %78, %76, %cst_79 {dimension_numbers = #tpu.dot_dimension_numbers<[1], [0], [0], [1], [0, 0, 1, 1], [], []>} : vector<4x128xbf16>, vector<128x320xbf16>, vector<4x320xf32> -> vector<4x320xf32>
    %80 = arith.addf %74, %79 : vector<4x320xf32>
    %c0_80 = arith.constant 0 : index
    %c0_81 = arith.constant 0 : index
    %c0_82 = arith.constant 0 : index
    %81 = vector.load %arg5[%c0_80, %c0_81, %c0_82] : memref<9x4x128xbf16, #tpu.memory_space<vmem>>, vector<1x4x128xbf16>
    %82 = vector.shape_cast %81 : vector<1x4x128xbf16> to vector<4x128xbf16>
    %cst_83 = arith.constant dense<0.000000e+00> : vector<4x320xf32>
    %83 = tpu.matmul %82, %76, %cst_83 {dimension_numbers = #tpu.dot_dimension_numbers<[1], [0], [0], [1], [0, 0, 1, 1], [], []>} : vector<4x128xbf16>, vector<128x320xbf16>, vector<4x320xf32> -> vector<4x320xf32>
    %84 = arith.addf %75, %83 : vector<4x320xf32>
    %c0_84 = arith.constant 0 : index
    %c1_85 = arith.constant 1 : index
    %85 = vector.load %arg12[%c0_84, %c1_85] : memref<128x380xbf16, #tpu.memory_space<vmem>>, vector<128x320xbf16>
    %c1_86 = arith.constant 1 : index
    %c0_87 = arith.constant 0 : index
    %c0_88 = arith.constant 0 : index
    %86 = vector.load %arg4[%c1_86, %c0_87, %c0_88] : memref<9x4x128xbf16, #tpu.memory_space<vmem>>, vector<1x4x128xbf16>
    %87 = vector.shape_cast %86 : vector<1x4x128xbf16> to vector<4x128xbf16>
    %cst_89 = arith.constant dense<0.000000e+00> : vector<4x320xf32>
    %88 = tpu.matmul %87, %85, %cst_89 {dimension_numbers = #tpu.dot_dimension_numbers<[1], [0], [0], [1], [0, 0, 1, 1], [], []>} : vector<4x128xbf16>, vector<128x320xbf16>, vector<4x320xf32> -> vector<4x320xf32>
    %89 = arith.addf %80, %88 : vector<4x320xf32>
    %c1_90 = arith.constant 1 : index
    %c0_91 = arith.constant 0 : index
    %c0_92 = arith.constant 0 : index
    %90 = vector.load %arg5[%c1_90, %c0_91, %c0_92] : memref<9x4x128xbf16, #tpu.memory_space<vmem>>, vector<1x4x128xbf16>
    %91 = vector.shape_cast %90 : vector<1x4x128xbf16> to vector<4x128xbf16>
    %cst_93 = arith.constant dense<0.000000e+00> : vector<4x320xf32>
    %92 = tpu.matmul %91, %85, %cst_93 {dimension_numbers = #tpu.dot_dimension_numbers<[1], [0], [0], [1], [0, 0, 1, 1], [], []>} : vector<4x128xbf16>, vector<128x320xbf16>, vector<4x320xf32> -> vector<4x320xf32>
    %93 = arith.addf %84, %92 : vector<4x320xf32>
    %c0_94 = arith.constant 0 : index
    %c2_95 = arith.constant 2 : index
    %94 = vector.load %arg12[%c0_94, %c2_95] : memref<128x380xbf16, #tpu.memory_space<vmem>>, vector<128x320xbf16>
    %c2_96 = arith.constant 2 : index
    %c0_97 = arith.constant 0 : index
    %c0_98 = arith.constant 0 : index
    %95 = vector.load %arg4[%c2_96, %c0_97, %c0_98] : memref<9x4x128xbf16, #tpu.memory_space<vmem>>, vector<1x4x128xbf16>
    %96 = vector.shape_cast %95 : vector<1x4x128xbf16> to vector<4x128xbf16>
    %cst_99 = arith.constant dense<0.000000e+00> : vector<4x320xf32>
    %97 = tpu.matmul %96, %94, %cst_99 {dimension_numbers = #tpu.dot_dimension_numbers<[1], [0], [0], [1], [0, 0, 1, 1], [], []>} : vector<4x128xbf16>, vector<128x320xbf16>, vector<4x320xf32> -> vector<4x320xf32>
    %98 = arith.addf %89, %97 : vector<4x320xf32>
    %c2_100 = arith.constant 2 : index
    %c0_101 = arith.constant 0 : index
    %c0_102 = arith.constant 0 : index
    %99 = vector.load %arg5[%c2_100, %c0_101, %c0_102] : memref<9x4x128xbf16, #tpu.memory_space<vmem>>, vector<1x4x128xbf16>
    %100 = vector.shape_cast %99 : vector<1x4x128xbf16> to vector<4x128xbf16>
    %cst_103 = arith.constant dense<0.000000e+00> : vector<4x320xf32>
    %101 = tpu.matmul %100, %94, %cst_103 {dimension_numbers = #tpu.dot_dimension_numbers<[1], [0], [0], [1], [0, 0, 1, 1], [], []>} : vector<4x128xbf16>, vector<128x320xbf16>, vector<4x320xf32> -> vector<4x320xf32>
    %102 = arith.addf %93, %101 : vector<4x320xf32>
    %c0_104 = arith.constant 0 : index
    %c20 = arith.constant 20 : index
    %103 = vector.load %arg12[%c0_104, %c20] : memref<128x380xbf16, #tpu.memory_space<vmem>>, vector<128x320xbf16>
    %c3_105 = arith.constant 3 : index
    %c0_106 = arith.constant 0 : index
    %c0_107 = arith.constant 0 : index
    %104 = vector.load %arg4[%c3_105, %c0_106, %c0_107] : memref<9x4x128xbf16, #tpu.memory_space<vmem>>, vector<1x4x128xbf16>
    %105 = vector.shape_cast %104 : vector<1x4x128xbf16> to vector<4x128xbf16>
    %cst_108 = arith.constant dense<0.000000e+00> : vector<4x320xf32>
    %106 = tpu.matmul %105, %103, %cst_108 {dimension_numbers = #tpu.dot_dimension_numbers<[1], [0], [0], [1], [0, 0, 1, 1], [], []>} : vector<4x128xbf16>, vector<128x320xbf16>, vector<4x320xf32> -> vector<4x320xf32>
    %107 = arith.addf %98, %106 : vector<4x320xf32>
    %c3_109 = arith.constant 3 : index
    %c0_110 = arith.constant 0 : index
    %c0_111 = arith.constant 0 : index
    %108 = vector.load %arg5[%c3_109, %c0_110, %c0_111] : memref<9x4x128xbf16, #tpu.memory_space<vmem>>, vector<1x4x128xbf16>
    %109 = vector.shape_cast %108 : vector<1x4x128xbf16> to vector<4x128xbf16>
    %cst_112 = arith.constant dense<0.000000e+00> : vector<4x320xf32>
    %110 = tpu.matmul %109, %103, %cst_112 {dimension_numbers = #tpu.dot_dimension_numbers<[1], [0], [0], [1], [0, 0, 1, 1], [], []>} : vector<4x128xbf16>, vector<128x320xbf16>, vector<4x320xf32> -> vector<4x320xf32>
    %111 = arith.addf %102, %110 : vector<4x320xf32>
    %c0_113 = arith.constant 0 : index
    %c21 = arith.constant 21 : index
    %112 = vector.load %arg12[%c0_113, %c21] : memref<128x380xbf16, #tpu.memory_space<vmem>>, vector<128x320xbf16>
    %c4_114 = arith.constant 4 : index
    %c0_115 = arith.constant 0 : index
    %c0_116 = arith.constant 0 : index
    %113 = vector.load %arg4[%c4_114, %c0_115, %c0_116] : memref<9x4x128xbf16, #tpu.memory_space<vmem>>, vector<1x4x128xbf16>
    %114 = vector.shape_cast %113 : vector<1x4x128xbf16> to vector<4x128xbf16>
    %cst_117 = arith.constant dense<0.000000e+00> : vector<4x320xf32>
    %115 = tpu.matmul %114, %112, %cst_117 {dimension_numbers = #tpu.dot_dimension_numbers<[1], [0], [0], [1], [0, 0, 1, 1], [], []>} : vector<4x128xbf16>, vector<128x320xbf16>, vector<4x320xf32> -> vector<4x320xf32>
    %116 = arith.addf %107, %115 : vector<4x320xf32>
    %c4_118 = arith.constant 4 : index
    %c0_119 = arith.constant 0 : index
    %c0_120 = arith.constant 0 : index
    %117 = vector.load %arg5[%c4_118, %c0_119, %c0_120] : memref<9x4x128xbf16, #tpu.memory_space<vmem>>, vector<1x4x128xbf16>
    %118 = vector.shape_cast %117 : vector<1x4x128xbf16> to vector<4x128xbf16>
    %cst_121 = arith.constant dense<0.000000e+00> : vector<4x320xf32>
    %119 = tpu.matmul %118, %112, %cst_121 {dimension_numbers = #tpu.dot_dimension_numbers<[1], [0], [0], [1], [0, 0, 1, 1], [], []>} : vector<4x128xbf16>, vector<128x320xbf16>, vector<4x320xf32> -> vector<4x320xf32>
    %120 = arith.addf %111, %119 : vector<4x320xf32>
    %c0_122 = arith.constant 0 : index
    %c22 = arith.constant 22 : index
    %121 = vector.load %arg12[%c0_122, %c22] : memref<128x380xbf16, #tpu.memory_space<vmem>>, vector<128x320xbf16>
    %c5_123 = arith.constant 5 : index
    %c0_124 = arith.constant 0 : index
    %c0_125 = arith.constant 0 : index
    %122 = vector.load %arg4[%c5_123, %c0_124, %c0_125] : memref<9x4x128xbf16, #tpu.memory_space<vmem>>, vector<1x4x128xbf16>
    %123 = vector.shape_cast %122 : vector<1x4x128xbf16> to vector<4x128xbf16>
    %cst_126 = arith.constant dense<0.000000e+00> : vector<4x320xf32>
    %124 = tpu.matmul %123, %121, %cst_126 {dimension_numbers = #tpu.dot_dimension_numbers<[1], [0], [0], [1], [0, 0, 1, 1], [], []>} : vector<4x128xbf16>, vector<128x320xbf16>, vector<4x320xf32> -> vector<4x320xf32>
    %125 = arith.addf %116, %124 : vector<4x320xf32>
    %c5_127 = arith.constant 5 : index
    %c0_128 = arith.constant 0 : index
    %c0_129 = arith.constant 0 : index
    %126 = vector.load %arg5[%c5_127, %c0_128, %c0_129] : memref<9x4x128xbf16, #tpu.memory_space<vmem>>, vector<1x4x128xbf16>
    %127 = vector.shape_cast %126 : vector<1x4x128xbf16> to vector<4x128xbf16>
    %cst_130 = arith.constant dense<0.000000e+00> : vector<4x320xf32>
    %128 = tpu.matmul %127, %121, %cst_130 {dimension_numbers = #tpu.dot_dimension_numbers<[1], [0], [0], [1], [0, 0, 1, 1], [], []>} : vector<4x128xbf16>, vector<128x320xbf16>, vector<4x320xf32> -> vector<4x320xf32>
    %129 = arith.addf %120, %128 : vector<4x320xf32>
    %c0_131 = arith.constant 0 : index
    %c40 = arith.constant 40 : index
    %130 = vector.load %arg12[%c0_131, %c40] : memref<128x380xbf16, #tpu.memory_space<vmem>>, vector<128x320xbf16>
    %c6_132 = arith.constant 6 : index
    %c0_133 = arith.constant 0 : index
    %c0_134 = arith.constant 0 : index
    %131 = vector.load %arg4[%c6_132, %c0_133, %c0_134] : memref<9x4x128xbf16, #tpu.memory_space<vmem>>, vector<1x4x128xbf16>
    %132 = vector.shape_cast %131 : vector<1x4x128xbf16> to vector<4x128xbf16>
    %cst_135 = arith.constant dense<0.000000e+00> : vector<4x320xf32>
    %133 = tpu.matmul %132, %130, %cst_135 {dimension_numbers = #tpu.dot_dimension_numbers<[1], [0], [0], [1], [0, 0, 1, 1], [], []>} : vector<4x128xbf16>, vector<128x320xbf16>, vector<4x320xf32> -> vector<4x320xf32>
    %134 = arith.addf %125, %133 : vector<4x320xf32>
    %c6_136 = arith.constant 6 : index
    %c0_137 = arith.constant 0 : index
    %c0_138 = arith.constant 0 : index
    %135 = vector.load %arg5[%c6_136, %c0_137, %c0_138] : memref<9x4x128xbf16, #tpu.memory_space<vmem>>, vector<1x4x128xbf16>
    %136 = vector.shape_cast %135 : vector<1x4x128xbf16> to vector<4x128xbf16>
    %cst_139 = arith.constant dense<0.000000e+00> : vector<4x320xf32>
    %137 = tpu.matmul %136, %130, %cst_139 {dimension_numbers = #tpu.dot_dimension_numbers<[1], [0], [0], [1], [0, 0, 1, 1], [], []>} : vector<4x128xbf16>, vector<128x320xbf16>, vector<4x320xf32> -> vector<4x320xf32>
    %138 = arith.addf %129, %137 : vector<4x320xf32>
    %c0_140 = arith.constant 0 : index
    %c41 = arith.constant 41 : index
    %139 = vector.load %arg12[%c0_140, %c41] : memref<128x380xbf16, #tpu.memory_space<vmem>>, vector<128x320xbf16>
    %c7_141 = arith.constant 7 : index
    %c0_142 = arith.constant 0 : index
    %c0_143 = arith.constant 0 : index
    %140 = vector.load %arg4[%c7_141, %c0_142, %c0_143] : memref<9x4x128xbf16, #tpu.memory_space<vmem>>, vector<1x4x128xbf16>
    %141 = vector.shape_cast %140 : vector<1x4x128xbf16> to vector<4x128xbf16>
    %cst_144 = arith.constant dense<0.000000e+00> : vector<4x320xf32>
    %142 = tpu.matmul %141, %139, %cst_144 {dimension_numbers = #tpu.dot_dimension_numbers<[1], [0], [0], [1], [0, 0, 1, 1], [], []>} : vector<4x128xbf16>, vector<128x320xbf16>, vector<4x320xf32> -> vector<4x320xf32>
    %143 = arith.addf %134, %142 : vector<4x320xf32>
    %c7_145 = arith.constant 7 : index
    %c0_146 = arith.constant 0 : index
    %c0_147 = arith.constant 0 : index
    %144 = vector.load %arg5[%c7_145, %c0_146, %c0_147] : memref<9x4x128xbf16, #tpu.memory_space<vmem>>, vector<1x4x128xbf16>
    %145 = vector.shape_cast %144 : vector<1x4x128xbf16> to vector<4x128xbf16>
    %cst_148 = arith.constant dense<0.000000e+00> : vector<4x320xf32>
    %146 = tpu.matmul %145, %139, %cst_148 {dimension_numbers = #tpu.dot_dimension_numbers<[1], [0], [0], [1], [0, 0, 1, 1], [], []>} : vector<4x128xbf16>, vector<128x320xbf16>, vector<4x320xf32> -> vector<4x320xf32>
    %147 = arith.addf %138, %146 : vector<4x320xf32>
    %c0_149 = arith.constant 0 : index
    %c42 = arith.constant 42 : index
    %148 = vector.load %arg12[%c0_149, %c42] : memref<128x380xbf16, #tpu.memory_space<vmem>>, vector<128x320xbf16>
    %c8_150 = arith.constant 8 : index
    %c0_151 = arith.constant 0 : index
    %c0_152 = arith.constant 0 : index
    %149 = vector.load %arg4[%c8_150, %c0_151, %c0_152] : memref<9x4x128xbf16, #tpu.memory_space<vmem>>, vector<1x4x128xbf16>
    %150 = vector.shape_cast %149 : vector<1x4x128xbf16> to vector<4x128xbf16>
    %cst_153 = arith.constant dense<0.000000e+00> : vector<4x320xf32>
    %151 = tpu.matmul %150, %148, %cst_153 {dimension_numbers = #tpu.dot_dimension_numbers<[1], [0], [0], [1], [0, 0, 1, 1], [], []>} : vector<4x128xbf16>, vector<128x320xbf16>, vector<4x320xf32> -> vector<4x320xf32>
    %152 = arith.addf %143, %151 : vector<4x320xf32>
    %c8_154 = arith.constant 8 : index
    %c0_155 = arith.constant 0 : index
    %c0_156 = arith.constant 0 : index
    %153 = vector.load %arg5[%c8_154, %c0_155, %c0_156] : memref<9x4x128xbf16, #tpu.memory_space<vmem>>, vector<1x4x128xbf16>
    %154 = vector.shape_cast %153 : vector<1x4x128xbf16> to vector<4x128xbf16>
    %cst_157 = arith.constant dense<0.000000e+00> : vector<4x320xf32>
    %155 = tpu.matmul %154, %148, %cst_157 {dimension_numbers = #tpu.dot_dimension_numbers<[1], [0], [0], [1], [0, 0, 1, 1], [], []>} : vector<4x128xbf16>, vector<128x320xbf16>, vector<4x320xf32> -> vector<4x320xf32>
    %156 = arith.addf %147, %155 : vector<4x320xf32>
    %c0_158 = arith.constant 0 : index
    %c0_159 = arith.constant 0 : index
    %157 = vector.load %arg7[%c0_158, %c0_159] : memref<4x1xf32, #tpu.memory_space<vmem>>, vector<4x1xf32>
    %158 = vector.broadcast %157 : vector<4x1xf32> to vector<4x320xf32>
    %159 = arith.addf %152, %158 : vector<4x320xf32>
    %c0_160 = arith.constant 0 : index
    %c0_161 = arith.constant 0 : index
    %160 = vector.load %arg8[%c0_160, %c0_161] : memref<4x1xf32, #tpu.memory_space<vmem>>, vector<4x1xf32>
    %161 = vector.broadcast %160 : vector<4x1xf32> to vector<4x320xf32>
    %162 = arith.addf %156, %161 : vector<4x320xf32>
    %c0_162 = arith.constant 0 : index
    %c0_163 = arith.constant 0 : index
    %c0_164 = arith.constant 0 : index
    %163 = vector.load %arg2[%c0_162, %c0_163, %c0_164] : memref<1x4x320xf32, #tpu.memory_space<vmem>>, vector<1x4x320xf32>
    %164 = vector.shape_cast %163 : vector<1x4x320xf32> to vector<4x320xf32>
    %cst_165 = arith.constant dense<0.000000e+00> : vector<4xf32>
    %165 = vector.multi_reduction <add>, %164, %cst_165 [1] : vector<4x320xf32> to vector<4xf32>
    %166 = vector.shape_cast %165 : vector<4xf32> to vector<4x1xf32>
    %cst_166 = arith.constant 3.906250e-03 : f32
    %167 = vector.broadcast %cst_166 : f32 to vector<4x1xf32>
    %168 = arith.mulf %166, %167 : vector<4x1xf32>
    %169 = arith.mulf %164, %164 : vector<4x320xf32>
    %cst_167 = arith.constant dense<0.000000e+00> : vector<4xf32>
    %170 = vector.multi_reduction <add>, %169, %cst_167 [1] : vector<4x320xf32> to vector<4xf32>
    %171 = vector.shape_cast %170 : vector<4xf32> to vector<4x1xf32>
    %cst_168 = arith.constant 3.906250e-03 : f32
    %172 = vector.broadcast %cst_168 : f32 to vector<4x1xf32>
    %173 = arith.mulf %171, %172 : vector<4x1xf32>
    %174 = arith.mulf %168, %168 : vector<4x1xf32>
    %175 = arith.subf %173, %174 : vector<4x1xf32>
    %cst_169 = arith.constant 9.99999974E-6 : f32
    %176 = vector.broadcast %cst_169 : f32 to vector<4x1xf32>
    %177 = arith.addf %175, %176 : vector<4x1xf32>
    %178 = math.rsqrt %177 : vector<4x1xf32>
    %179 = vector.broadcast %168 : vector<4x1xf32> to vector<4x320xf32>
    %180 = arith.subf %164, %179 : vector<4x320xf32>
    %181 = vector.broadcast %178 : vector<4x1xf32> to vector<4x320xf32>
    %182 = arith.mulf %180, %181 : vector<4x320xf32>
    %cst_170 = arith.constant 1.000000e+00 : f32
    %183 = vector.broadcast %cst_170 : f32 to vector<4x320xf32>
    %184 = arith.addf %183, %159 : vector<4x320xf32>
    %185 = arith.mulf %182, %184 : vector<4x320xf32>
    %186 = arith.addf %185, %162 : vector<4x320xf32>
    %c0_171 = arith.constant 0 : index
    %c0_172 = arith.constant 0 : index
    %c0_173 = arith.constant 0 : index
    %187 = vector.load %arg10[%c0_171, %c0_172, %c0_173] : memref<1x4x320xf32, #tpu.memory_space<vmem>>, vector<1x4x320xf32>
    %188 = vector.shape_cast %187 : vector<1x4x320xf32> to vector<4x320xf32>
    %189 = vector.shape_cast %186 : vector<4x320xf32> to vector<1x4x320xf32>
    tpu.vector_store %arg10[%c0_171, %c0_172, %c0_173], %189 {strides = array<i32>} : memref<1x4x320xf32, #tpu.memory_space<vmem>>, vector<1x4x320xf32>,
    return
  }
  func.func @transform_0(%arg0: i32) -> (i32, i32, i32) {
    %c0_i32 = arith.constant 0 : i32
    %c0_i32_0 = arith.constant 0 : i32
    %c0_i32_1 = arith.constant 0 : i32
    return %arg0, %c0_i32, %c0_i32_0 : i32, i32, i32
  }
  func.func @transform_1(%arg0: i32) -> (i32, i32, i32) {
    %c0_i32 = arith.constant 0 : i32
    %c0_i32_0 = arith.constant 0 : i32
    %c0_i32_1 = arith.constant 0 : i32
    return %arg0, %c0_i32, %c0_i32_0 : i32, i32, i32
  }
  func.func @transform_2(%arg0: i32) -> (i32, i32, i32) {
    %c0_i32 = arith.constant 0 : i32
    %c0_i32_0 = arith.constant 0 : i32
    %c0_i32_1 = arith.constant 0 : i32
    %c0_i32_2 = arith.constant 0 : i32
    return %c0_i32, %c0_i32_0, %c0_i32_1 : i32, i32, i32
  }
  func.func @transform_3(%arg0: i32) -> (i32, i32, i32) {
    %c0_i32 = arith.constant 0 : i32
    %c0_i32_0 = arith.constant 0 : i32
    %c0_i32_1 = arith.constant 0 : i32
    %c0_i32_2 = arith.constant 0 : i32
    return %c0_i32, %c0_i32_0, %c0_i32_1 : i32, i32, i32
  }
  func.func @transform_4(%arg0: i32) -> (i32, i32, i32) {
    %c0_i32 = arith.constant 0 : i32
    %c0_i32_0 = arith.constant 0 : i32
    %c0_i32_1 = arith.constant 0 : i32
    %c0_i32_2 = arith.constant 0 : i32
    return %c0_i32, %c0_i32_0, %c0_i32_1 : i32, i32, i32
  }
  func.func @transform_5(%arg0: i32) -> (i32, i32) {
    %c0_i32 = arith.constant 0 : i32
    %c0_i32_0 = arith.constant 0 : i32
    %c0_i32_1 = arith.constant 0 : i32
    return %c0_i32, %c0_i32_0 : i32, i32
  }
  func.func @transform_6(%arg0: i32) -> (i32, i32) {
    %c0_i32 = arith.constant 0 : i32
    %c0_i32_0 = arith.constant 0 : i32
    %c0_i32_1 = arith.constant 0 : i32
    return %c0_i32, %c0_i32_0 : i32, i32
  }
  func.func @transform_7(%arg0: i32) -> (i32, i32) {
    %c0_i32 = arith.constant 0 : i32
    %c0_i32_0 = arith.constant 0 : i32
    %c0_i32_1 = arith.constant 0 : i32
    return %c0_i32, %c0_i32_0 : i32, i32
  }
  func.func @transform_8(%arg0: i32) -> (i32, i32) {
    %c0_i32 = arith.constant 0 : i32
    %c0_i32_0 = arith.constant 0 : i32
    %c0_i32_1 = arith.constant 0 : i32
    return %c0_i32, %c0_i32_0 : i32, i32
  }
  func.func @transform_9(%arg0: i32) -> (i32, i32, i32) {
    %c0_i32 = arith.constant 0 : i32
    %c0_i32_0 = arith.constant 0 : i32
    %c0_i32_1 = arith.constant 0 : i32
    return %arg0, %c0_i32, %c0_i32_0 : i32, i32, i32
  }
}

</mosaic_0001>

<llo_original>
// kernel: tpu_custom_call.1
$region0: #{tpu_custom_call.1}
  #allocation0 [shape = 'u32[]', space=smem, size = 0x4, offset = 0x4, fixed_abs, tag = 'smem constant byte address 0x4 - core index']
  #allocation1 [shape = 'u32[144,128]{1,0:T(1,128)}', space=vmem, size = 0x12000, scoped, tag = 'internal scratch']
  #allocation2 [shape = 'f32[128,380]{1,0:T(8,128)}', space=vmem, size = 0x30000, scoped, tag = 'scratch operand']
  #allocation3 [shape = 'bf16[128,380]{1,0:T(16,128)(2,1)}', space=vmem, size = 0x18000, scoped, tag = 'scratch operand']
  %s0 = inlined_call_operand.vmem [shape: bf16[2,4,440], index: 0, kind: input, shape index: {}]
  %s1 = inlined_call_operand.vmem [shape: f32[2,4,320], index: 1, kind: input, shape index: {}]
  %s2 = inlined_call_operand.vmem [shape: bf16[9,128,4], index: 2, kind: input, shape index: {}]
  %s3 = inlined_call_operand.vmem [shape: bf16[9,4,128], index: 3, kind: input, shape index: {}]
  %s4 = inlined_call_operand.vmem [shape: bf16[9,4,128], index: 4, kind: input, shape index: {}]
  %s5 = inlined_call_operand.vmem [shape: f32[128,1], index: 5, kind: input, shape index: {}]
  %s6 = inlined_call_operand.vmem [shape: f32[4,1], index: 6, kind: input, shape index: {}]
  %s7 = inlined_call_operand.vmem [shape: f32[4,1], index: 7, kind: input, shape index: {}]
  %s8 = inlined_call_operand.vmem [shape: f32[1,380], index: 8, kind: input, shape index: {}]
  %s9 = inlined_call_operand.hbm [shape: f32[2,4,320], index: 9, kind: output, shape index: {}]
  %s10 = sld [smem:[#allocation0]]
  $region69: #{tpu_custom_call.1} parent=0
    _
  %s12 = ssub.s32 1, %s10
  %s13 = scalar_select 0, %s12, %s10
  $region1: #{tpu_custom_call.1} parent=0
    #allocation4 [shape = 'u8[12288]{0}', space=vmem, size = 0x3000, scoped, tag = 'output window, operand 0']
    #allocation5 [shape = 's32[2]{0}', space=sflag, size = 0x8, scoped, tag = 'scoped memory for tpu_custom_call.1']
    %14 = vsyncpa [#allocation5], 0
    %s15 = scalar_lea.sflag [#allocation5], 1
    %16 = vsyncpa %s15, 0
    loop: start=0, step=1, limit=4
    $region2: #{tpu_custom_call.1} parent=1 // loop_pre_header
      _
    $region3: #{tpu_custom_call.1} parent=1 // loop_header
      %s18 = sphi 0, %s22
      %p19 = scmp.ge.s32.totalorder %s18, 4
      %s28 = sphi 0, %s30
      %s31 = sphi 0, %s28
      %s32 = sphi 0, %s31
      %s48 = sphi 0, %s32
      %s54 = sphi 0, %s56
      %s57 = sphi 0, %s54
      %s58 = sphi 0, %s57
      %s74 = sphi 0, %s58
      %s78 = sphi 0, %s78
      %s80 = sphi 0, %s78
      %s81 = sphi 0, %s80
      %s95 = sphi 0, %s81
      %s99 = sphi 0, %s99
      %s101 = sphi 0, %s99
      %s102 = sphi 0, %s101
      %s116 = sphi 0, %s102
      %s120 = sphi 0, %s120
      %s122 = sphi 0, %s120
      %s123 = sphi 0, %s122
      %s137 = sphi 0, %s123
      %s141 = sphi 0, %s141
      %s143 = sphi 0, %s141
      %s144 = sphi 0, %s143
      %s158 = sphi 0, %s144
      %s162 = sphi 0, %s162
      %s164 = sphi 0, %s162
      %s165 = sphi 0, %s164
      %s179 = sphi 0, %s165
      %s183 = sphi 0, %s183
      %s185 = sphi 0, %s183
      %s186 = sphi 0, %s185
      %s200 = sphi 0, %s186
      %s204 = sphi 0, %s204
      %s206 = sphi 0, %s204
      %s207 = sphi 0, %s206
      %s221 = sphi 0, %s207
      %s227 = sphi 0, %s229
      %s230 = sphi 0, %s227
      %s231 = sphi 0, %s230
      %s247 = sphi 0, %s231
    $region4: #{tpu_custom_call.1} parent=1 // loop_header_branch
      %21 = sbr.rel (%p19) target = $region8
    $region5: #{tpu_custom_call.1} parent=1 // loop_body
      %s23 = ssub.s32 %s18, 1
      %s24 = ssub.s32 %s18, 2
      %s25 = sadd.s32 %s18, 1
      %s26 = ssub.s32 %s18, %s25
      %p27 = scmp.eq.s32.totalorder %s26, 0
      %s29 = sadd.s32 %s28, 1
      %s30 = scalar_select %p27, %s28, %s29
      %p33 = pneg %p27
      %p34 = scmp.eq.s32.totalorder %s18, 1
      %p35 = por %p33, %p34
      %p36 = scmp.ne.s32.totalorder %s28, %s31
      %p37 = scmp.eq.s32.totalorder %s18, 0
      %p38 = por %p36, %p37
      %p39 = scmp.ne.s32.totalorder %s28, %s31
      %p40 = scmp.eq.s32.totalorder %s23, 1
      %p41 = por %p39, %p40
      %p42 = scmp.ne.s32.totalorder %s31, %s32
      %p43 = scmp.eq.s32.totalorder %s23, 0
      %p44 = por %p42, %p43
      %p45 = scmp.ne.s32.totalorder %s31, %s32
      %p46 = scmp.eq.s32.totalorder %s24, 1
      %p47 = por %p45, %p46
      %p49 = scmp.ne.s32.totalorder %s32, %s48
      %p50 = scmp.eq.s32.totalorder %s24, 0
      %p51 = por %p49, %p50
      %s52 = ssub.s32 %s18, %s25
      %p53 = scmp.eq.s32.totalorder %s52, 0
      %s55 = sadd.s32 %s54, 1
      %s56 = scalar_select %p53, %s54, %s55
      %p59 = pneg %p53
      %p60 = scmp.eq.s32.totalorder %s18, 1
      %p61 = por %p59, %p60
      %p62 = scmp.ne.s32.totalorder %s54, %s57
      %p63 = scmp.eq.s32.totalorder %s18, 0
      %p64 = por %p62, %p63
      %p65 = scmp.ne.s32.totalorder %s54, %s57
      %p66 = scmp.eq.s32.totalorder %s23, 1
      %p67 = por %p65, %p66
      %p68 = scmp.ne.s32.totalorder %s57, %s58
      %p69 = scmp.eq.s32.totalorder %s23, 0
      %p70 = por %p68, %p69
      %p71 = scmp.ne.s32.totalorder %s57, %s58
      %p72 = scmp.eq.s32.totalorder %s24, 1
      %p73 = por %p71, %p72
      %p75 = scmp.ne.s32.totalorder %s58, %s74
      %p76 = scmp.eq.s32.totalorder %s24, 0
      %p77 = por %p75, %p76
      %s79 = sadd.s32 %s78, 1
      %p82 = scmp.eq.s32.totalorder %s18, 1
      %p83 = scmp.ne.s32.totalorder %s78, %s80
      %p84 = scmp.eq.s32.totalorder %s18, 0
      %p85 = por %p83, %p84
      %p86 = scmp.ne.s32.totalorder %s78, %s80
      %p87 = scmp.eq.s32.totalorder %s23, 1
      %p88 = por %p86, %p87
      %p89 = scmp.ne.s32.totalorder %s80, %s81
      %p90 = scmp.eq.s32.totalorder %s23, 0
      %p91 = por %p89, %p90
      %p92 = scmp.ne.s32.totalorder %s80, %s81
      %p93 = scmp.eq.s32.totalorder %s24, 1
      %p94 = por %p92, %p93
      %p96 = scmp.ne.s32.totalorder %s81, %s95
      %p97 = scmp.eq.s32.totalorder %s24, 0
      %p98 = por %p96, %p97
      %s100 = sadd.s32 %s99, 1
      %p103 = scmp.eq.s32.totalorder %s18, 1
      %p104 = scmp.ne.s32.totalorder %s99, %s101
      %p105 = scmp.eq.s32.totalorder %s18, 0
      %p106 = por %p104, %p105
      %p107 = scmp.ne.s32.totalorder %s99, %s101
      %p108 = scmp.eq.s32.totalorder %s23, 1
      %p109 = por %p107, %p108
      %p110 = scmp.ne.s32.totalorder %s101, %s102
      %p111 = scmp.eq.s32.totalorder %s23, 0
      %p112 = por %p110, %p111
      %p113 = scmp.ne.s32.totalorder %s101, %s102
      %p114 = scmp.eq.s32.totalorder %s24, 1
      %p115 = por %p113, %p114
      %p117 = scmp.ne.s32.totalorder %s102, %s116
      %p118 = scmp.eq.s32.totalorder %s24, 0
      %p119 = por %p117, %p118
      %s121 = sadd.s32 %s120, 1
      %p124 = scmp.eq.s32.totalorder %s18, 1
      %p125 = scmp.ne.s32.totalorder %s120, %s122
      %p126 = scmp.eq.s32.totalorder %s18, 0
      %p127 = por %p125, %p126
      %p128 = scmp.ne.s32.totalorder %s120, %s122
      %p129 = scmp.eq.s32.totalorder %s23, 1
      %p130 = por %p128, %p129
      %p131 = scmp.ne.s32.totalorder %s122, %s123
      %p132 = scmp.eq.s32.totalorder %s23, 0
      %p133 = por %p131, %p132
      %p134 = scmp.ne.s32.totalorder %s122, %s123
      %p135 = scmp.eq.s32.totalorder %s24, 1
      %p136 = por %p134, %p135
      %p138 = scmp.ne.s32.totalorder %s123, %s137
      %p139 = scmp.eq.s32.totalorder %s24, 0
      %p140 = por %p138, %p139
      %s142 = sadd.s32 %s141, 1
      %p145 = scmp.eq.s32.totalorder %s18, 1
      %p146 = scmp.ne.s32.totalorder %s141, %s143
      %p147 = scmp.eq.s32.totalorder %s18, 0
      %p148 = por %p146, %p147
      %p149 = scmp.ne.s32.totalorder %s141, %s143
      %p150 = scmp.eq.s32.totalorder %s23, 1
      %p151 = por %p149, %p150
      %p152 = scmp.ne.s32.totalorder %s143, %s144
      %p153 = scmp.eq.s32.totalorder %s23, 0
      %p154 = por %p152, %p153
      %p155 = scmp.ne.s32.totalorder %s143, %s144
      %p156 = scmp.eq.s32.totalorder %s24, 1
      %p157 = por %p155, %p156
      %p159 = scmp.ne.s32.totalorder %s144, %s158
      %p160 = scmp.eq.s32.totalorder %s24, 0
      %p161 = por %p159, %p160
      %s163 = sadd.s32 %s162, 1
      %p166 = scmp.eq.s32.totalorder %s18, 1
      %p167 = scmp.ne.s32.totalorder %s162, %s164
      %p168 = scmp.eq.s32.totalorder %s18, 0
      %p169 = por %p167, %p168
      %p170 = scmp.ne.s32.totalorder %s162, %s164
      %p171 = scmp.eq.s32.totalorder %s23, 1
      %p172 = por %p170, %p171
      %p173 = scmp.ne.s32.totalorder %s164, %s165
      %p174 = scmp.eq.s32.totalorder %s23, 0
      %p175 = por %p173, %p174
      %p176 = scmp.ne.s32.totalorder %s164, %s165
      %p177 = scmp.eq.s32.totalorder %s24, 1
      %p178 = por %p176, %p177
      %p180 = scmp.ne.s32.totalorder %s165, %s179
      %p181 = scmp.eq.s32.totalorder %s24, 0
      %p182 = por %p180, %p181
      %s184 = sadd.s32 %s183, 1
      %p187 = scmp.eq.s32.totalorder %s18, 1
      %p188 = scmp.ne.s32.totalorder %s183, %s185
      %p189 = scmp.eq.s32.totalorder %s18, 0
      %p190 = por %p188, %p189
      %p191 = scmp.ne.s32.totalorder %s183, %s185
      %p192 = scmp.eq.s32.totalorder %s23, 1
      %p193 = por %p191, %p192
      %p194 = scmp.ne.s32.totalorder %s185, %s186
      %p195 = scmp.eq.s32.totalorder %s23, 0
      %p196 = por %p194, %p195
      %p197 = scmp.ne.s32.totalorder %s185, %s186
      %p198 = scmp.eq.s32.totalorder %s24, 1
      %p199 = por %p197, %p198
      %p201 = scmp.ne.s32.totalorder %s186, %s200
      %p202 = scmp.eq.s32.totalorder %s24, 0
      %p203 = por %p201, %p202
      %s205 = sadd.s32 %s204, 1
      %p208 = scmp.eq.s32.totalorder %s18, 1
      %p209 = scmp.ne.s32.totalorder %s204, %s206
      %p210 = scmp.eq.s32.totalorder %s18, 0
      %p211 = por %p209, %p210
      %p212 = scmp.ne.s32.totalorder %s204, %s206
      %p213 = scmp.eq.s32.totalorder %s23, 1
      %p214 = por %p212, %p213
      %p215 = scmp.ne.s32.totalorder %s206, %s207
      %p216 = scmp.eq.s32.totalorder %s23, 0
      %p217 = por %p215, %p216
      %p218 = scmp.ne.s32.totalorder %s206, %s207
      %p219 = scmp.eq.s32.totalorder %s24, 1
      %p220 = por %p218, %p219
      %p222 = scmp.ne.s32.totalorder %s207, %s221
      %p223 = scmp.eq.s32.totalorder %s24, 0
      %p224 = por %p222, %p223
      %s225 = ssub.s32 %s18, %s25
      %p226 = scmp.eq.s32.totalorder %s225, 0
      %s228 = sadd.s32 %s227, 1
      %s229 = scalar_select %p226, %s227, %s228
      %p232 = pneg %p226
      %p233 = scmp.eq.s32.totalorder %s18, 1
      %p234 = por %p232, %p233
      %p235 = scmp.ne.s32.totalorder %s227, %s230
      %p236 = scmp.eq.s32.totalorder %s18, 0
      %p237 = por %p235, %p236
      %p238 = scmp.ne.s32.totalorder %s227, %s230
      %p239 = scmp.eq.s32.totalorder %s23, 1
      %p240 = por %p238, %p239
      %p241 = scmp.ne.s32.totalorder %s230, %s231
      %p242 = scmp.eq.s32.totalorder %s23, 0
      %p243 = por %p241, %p242
      %p244 = scmp.ne.s32.totalorder %s230, %s231
      %p245 = scmp.eq.s32.totalorder %s24, 1
      %p246 = por %p244, %p245
      %p248 = scmp.ne.s32.totalorder %s231, %s247
      %p249 = scmp.eq.s32.totalorder %s24, 0
      %p250 = por %p248, %p249
      %p251 = scmp.le.s32.totalorder 1, %s18
      %p252 = scmp.lt.s32.totalorder %s18, 3
      %p253 = pnand %p251, %p252
      %p254 = pneg %p253
      // Predicated region
      $region9: #{tpu_custom_call.1} parent=5 // pred_check
        _
      $region10: #{tpu_custom_call.1} parent=5 // pred_check_branch
        %256 = sbr.rel (%p253) target = $region12
      $region11: #{tpu_custom_call.1} parent=5 // pred_region
        %s257 = ssub.s32 %s18, 1
        // Predicated region
        $region13: #{tpu_custom_call.1} parent=11 // pred_check
          %p258 = pneg %p91
        $region14: #{tpu_custom_call.1} parent=11 // pred_check_branch
          %260 = sbr.rel (%p258) target = $region16
        $region15: #{tpu_custom_call.1} parent=11 // pred_region
          _
        $region16: #{tpu_custom_call.1} parent=11 // pred_fallthru
          _
        // Predicated region
        $region17: #{tpu_custom_call.1} parent=11 // pred_check
          %p261 = pneg %p112
        $region18: #{tpu_custom_call.1} parent=11 // pred_check_branch
          %263 = sbr.rel (%p261) target = $region20
        $region19: #{tpu_custom_call.1} parent=11 // pred_region
          _
        $region20: #{tpu_custom_call.1} parent=11 // pred_fallthru
          _
        // Predicated region
        $region21: #{tpu_custom_call.1} parent=11 // pred_check
          %p264 = pneg %p133
        $region22: #{tpu_custom_call.1} parent=11 // pred_check_branch
          %266 = sbr.rel (%p264) target = $region24
        $region23: #{tpu_custom_call.1} parent=11 // pred_region
          _
        $region24: #{tpu_custom_call.1} parent=11 // pred_fallthru
          _
        // Predicated region
        $region25: #{tpu_custom_call.1} parent=11 // pred_check
          %p267 = pneg %p154
        $region26: #{tpu_custom_call.1} parent=11 // pred_check_branch
          %269 = sbr.rel (%p267) target = $region28
        $region27: #{tpu_custom_call.1} parent=11 // pred_region
          _
        $region28: #{tpu_custom_call.1} parent=11 // pred_fallthru
          _
        // Predicated region
        $region29: #{tpu_custom_call.1} parent=11 // pred_check
          %p270 = pneg %p175
        $region30: #{tpu_custom_call.1} parent=11 // pred_check_branch
          %272 = sbr.rel (%p270) target = $region32
        $region31: #{tpu_custom_call.1} parent=11 // pred_region
          _
        $region32: #{tpu_custom_call.1} parent=11 // pred_fallthru
          _
        // Predicated region
        $region33: #{tpu_custom_call.1} parent=11 // pred_check
          %p273 = pneg %p196
        $region34: #{tpu_custom_call.1} parent=11 // pred_check_branch
          %275 = sbr.rel (%p273) target = $region36
        $region35: #{tpu_custom_call.1} parent=11 // pred_region
          _
        $region36: #{tpu_custom_call.1} parent=11 // pred_fallthru
          _
        // Predicated region
        $region37: #{tpu_custom_call.1} parent=11 // pred_check
          %p276 = pneg %p217
        $region38: #{tpu_custom_call.1} parent=11 // pred_check_branch
          %278 = sbr.rel (%p276) target = $region40
        $region39: #{tpu_custom_call.1} parent=11 // pred_region
          _
        $region40: #{tpu_custom_call.1} parent=11 // pred_fallthru
          _
      $region12: #{tpu_custom_call.1} parent=5 // pred_fallthru
        _
      %p279 = scmp.lt.s32.totalorder %s18, 2
      // Predicated region
      $region41: #{tpu_custom_call.1} parent=5 // pred_check
        %p280 = pneg %p279
      $region42: #{tpu_custom_call.1} parent=5 // pred_check_branch
        %282 = sbr.rel (%p280) target = $region44
      $region43: #{tpu_custom_call.1} parent=5 // pred_region
        // Predicated region
        $region45: #{tpu_custom_call.1} parent=43 // pred_check
          %p283 = pneg %p38
        $region46: #{tpu_custom_call.1} parent=43 // pred_check_branch
          %285 = sbr.rel (%p283) target = $region48
        $region47: #{tpu_custom_call.1} parent=43 // pred_region
          %p286 = scmp.lt.s32.totalorder %s18, 1
          %s287 = scalar_select %p286, %s18, 1
          %s288 = smul.addr %s287, 4
          %s289 = smul.addr %s288, 2
          %s290 = scalar_lea.vmem %s0, %s289
        $region48: #{tpu_custom_call.1} parent=43 // pred_fallthru
          _
        // Predicated region
        $region49: #{tpu_custom_call.1} parent=43 // pred_check
          %p291 = pneg %p64
        $region50: #{tpu_custom_call.1} parent=43 // pred_check_branch
          %293 = sbr.rel (%p291) target = $region52
        $region51: #{tpu_custom_call.1} parent=43 // pred_region
          %p294 = scmp.lt.s32.totalorder %s18, 1
          %s295 = scalar_select %p294, %s18, 1
          %s296 = smul.addr %s295, 3
          %s297 = smul.addr %s296, 4
          %s298 = scalar_lea.vmem %s1, %s297
        $region52: #{tpu_custom_call.1} parent=43 // pred_fallthru
          _
      $region44: #{tpu_custom_call.1} parent=5 // pred_fallthru
        _
      %p299 = scmp.le.s32.totalorder 1, %s18
      %p300 = scmp.lt.s32.totalorder %s18, 3
      %p301 = pnand %p299, %p300
      %p302 = pneg %p301
      // Predicated region
      $region53: #{tpu_custom_call.1} parent=5 // pred_check
        _
      $region54: #{tpu_custom_call.1} parent=5 // pred_check_branch
        %304 = sbr.rel (%p301) target = $region56
      $region55: #{tpu_custom_call.1} parent=5 // pred_region
        %s305 = ssub.s32 %s18, 1
        %p306 = scmp.lt.s32.totalorder %s23, 1
        %s307 = scalar_select %p306, %s23, 1
        %s308 = smul.addr %s307, 4
        %s309 = smul.addr %s308, 2
        %s310 = scalar_lea.vmem %s0, %s309
        %p311 = pneg %p44
        %p312 = pneg %p41
        %p313 = scmp.lt.s32.totalorder %s23, 1
        %s314 = scalar_select %p313, %s23, 1
        %s315 = smul.addr %s314, 3
        %s316 = smul.addr %s315, 4
        %s317 = scalar_lea.vmem %s1, %s316
        %p318 = pneg %p70
        %p319 = pneg %p67
        %p320 = pneg %p91
        %p321 = pneg %p88
        %p322 = pneg %p112
        %p323 = pneg %p109
        %p324 = pneg %p133
        %p325 = pneg %p130
        %p326 = pneg %p154
        %p327 = pneg %p151
        %p328 = pneg %p175
        %p329 = pneg %p172
        %p330 = pneg %p196
        %p331 = pneg %p193
        %p332 = pneg %p217
        %p333 = pneg %p214
        %p334 = pneg %p243
        %p335 = pneg %p240
        %s336 = sand.u32 %s230, 1
        %s337 = scalar_lea.sflag [#allocation5], %s336
        %s338 = sand.u32 %s230, 1
        %s339 = smul.addr %s338, 12
        %s340 = scalar_lea.vmem [#allocation4], %s339
        %p341 = scmp.lt.s32.totalorder %s23, 1
        %s342 = scalar_select %p341, %s23, 1
        %s343 = smul.addr %s342, 4
        %s344 = smul.addr %s343, 2
        %s345 = scalar_lea.vmem %s0, %s344
        %p346 = scmp.lt.s32.totalorder %s23, 1
        %s347 = scalar_select %p346, %s23, 1
        %s348 = smul.addr %s347, 3
        %s349 = smul.addr %s348, 4
        %s350 = scalar_lea.vmem %s1, %s349
        %v352 = vld [vmem:[%s345] sm:$0xff]
        %v353 = vld [vmem:[%s2] sm:$0xf]
        %v354 = vld [vmem:[%s2 + $0x4] sm:$0xf]
        %v355 = vld [vmem:[%s2 + $0x8] sm:$0xf]
        %v356 = vld [vmem:[%s2 + $0xc] sm:$0xf]
        %v357 = vld [vmem:[%s2 + $0x10] sm:$0xf]
        %v358 = vld [vmem:[%s2 + $0x14] sm:$0xf]
        %v359 = vld [vmem:[%s2 + $0x18] sm:$0xf]
        %v360 = vld [vmem:[%s2 + $0x1c] sm:$0xf]
        %v361 = vld [vmem:[%s2 + $0x20] sm:$0xf]
        %v362 = vld [vmem:[%s2 + $0x24] sm:$0xf]
        %v363 = vld [vmem:[%s2 + $0x28] sm:$0xf]
        %v364 = vld [vmem:[%s2 + $0x2c] sm:$0xf]
        %v365 = vld [vmem:[%s2 + $0x30] sm:$0xf]
        %v366 = vld [vmem:[%s2 + $0x34] sm:$0xf]
        %v367 = vld [vmem:[%s2 + $0x38] sm:$0xf]
        %v368 = vld [vmem:[%s2 + $0x3c] sm:$0xf]
        %v385 = vunpack.c.l.b16 %v353
        %v386 = vunpack.c.l.b16 %v354
        %v387 = vunpack.c.l.b16 %v355
        %v388 = vunpack.c.l.b16 %v356
        %v389 = vunpack.c.l.b16 %v357
        %v390 = vunpack.c.l.b16 %v358
        %v391 = vunpack.c.l.b16 %v359
        %v392 = vunpack.c.l.b16 %v360
        %v393 = vunpack.c.l.b16 %v361
        %v394 = vunpack.c.l.b16 %v362
        %v395 = vunpack.c.l.b16 %v363
        %v396 = vunpack.c.l.b16 %v364
        %v397 = vunpack.c.l.b16 %v365
        %v398 = vunpack.c.l.b16 %v366
        %v399 = vunpack.c.l.b16 %v367
        %v400 = vunpack.c.l.b16 %v368
        %v401 = vpack.c.b16 %v386, %v385
        %v402 = vpack.c.b16 %v388, %v387
        %v403 = vpack.c.b16 %v390, %v389
        %v404 = vpack.c.b16 %v392, %v391
        %v405 = vpack.c.b16 %v394, %v393
        %v406 = vpack.c.b16 %v396, %v395
        %v407 = vpack.c.b16 %v398, %v397
        %v408 = vpack.c.b16 %v400, %v399
        %v410 = vcombine.high %v352, %v352
        %v412 = vunpack.c.l.s4 1983009808
        %v413 = vunpack.c.0.s8 %v412
        %v414 = vlaneseq
        %v415 = vshrl.u32 %v414, 7
        %v416 = vsub.s32 %v413, %v415
        %v417 = vrot.slane %v352, %v416
        %v419 = vunpack.c.l.s4 1983009808
        %v420 = vunpack.c.0.s8 %v419
        %v421 = vlaneseq
        %v422 = vshrl.u32 %v421, 7
        %v423 = vsub.s32 %v420, %v422
        %v424 = vrot.slane %v410, %v423
        %v425 = vcombine.high %v417, %v417
        %vm426 = vcmask 31744
        %v428 = vsel %vm426, %v401, 0
        %v431 = vsel %vm426, %v402, 0
        %v434 = vsel %vm426, %v403, 0
        %v437 = vsel %vm426, %v404, 0
        %v440 = vsel %vm426, %v405, 0
        %v443 = vsel %vm426, %v406, 0
        %v446 = vsel %vm426, %v407, 0
        %v449 = vsel %vm426, %v408, 0
        %vm451 = vcmask 1041408
        %v453 = vsel %vm451, %v417, 0
        %v456 = vsel %vm451, %v425, 0
        %v459 = vsel %vm451, %v424, 0
        %461 = vmatprep.subr.bf16.mxu0 %v456
        %462 = vmatpush1.bf16.msra.mxu0 %v453
        %463 = vmatprep.subr.bf16.mxu0 0
        %464 = vmatpush1.bf16.msra.mxu0 0
        %465 = vmatprep.subr.bf16.mxu0 0
        %466 = vmatpush1.bf16.msra.mxu0 0
        %467 = vmatprep.subr.bf16.mxu0 0
        %468 = vmatpush1.bf16.msra.mxu0 0
        %469 = vmatprep.subr.bf16.mxu0 0
        %470 = vmatpush1.bf16.msra.mxu0 0
        %471 = vmatprep.subr.bf16.mxu0 0
        %472 = vmatpush1.bf16.msra.mxu0 0
        %473 = vmatprep.subr.bf16.mxu0 0
        %474 = vmatpush1.bf16.msra.mxu0 0
        %475 = vmatprep.subr.bf16.mxu0 0
        %476 = vmatpush1.bf16.msra.mxu0 0
        %477 = vmatprep.subr.bf16.mxu0 0
        %478 = vmatpush1.bf16.msra.mxu0 0
        %479 = vmatprep.subr.bf16.mxu0 0
        %480 = vmatpush1.bf16.msra.mxu0 0
        %481 = vmatprep.subr.bf16.mxu0 0
        %482 = vmatpush1.bf16.msra.mxu0 0
        %483 = vmatprep.subr.bf16.mxu0 0
        %484 = vmatpush1.bf16.msra.mxu0 0
        %485 = vmatprep.subr.bf16.mxu0 0
        %486 = vmatpush1.bf16.msra.mxu0 0
        %487 = vmatprep.subr.bf16.mxu0 0
        %488 = vmatpush1.bf16.msra.mxu0 0
        %489 = vmatprep.subr.bf16.mxu0 0
        %490 = vmatpush1.bf16.msra.mxu0 0
        %491 = vmatprep.subr.bf16.mxu0 0
        %492 = vmatpush1.bf16.msra.mxu0 0
        %493 = vmatprep.mubr.bf16.mxu0 0
        %494 = vmatmul.mubr.bf16.gmra.mrb[0].mxu0 %v428
        %v495 = vpop.f32.mrb[0].mxu0
        %v496 = vadd.f32 0.0, %v495
        %v497 = vpop.f32.mrb[0].mxu0
        %v498 = vadd.f32 0.0, %v497
        %v499 = vpop.f32.mrb[0].mxu0
        %v500 = vadd.f32 0.0, %v499
        %v501 = vpop.f32.mrb[0].mxu0
        %v502 = vadd.f32 0.0, %v501
        %503 = vmatprep.mubr.bf16.mxu0 0
        %504 = vmatmul.mubr.bf16.gmra.mrb[0].mxu0 %v431
        %v505 = vpop.f32.mrb[0].mxu0
        %v506 = vadd.f32 0.0, %v505
        %v507 = vpop.f32.mrb[0].mxu0
        %v508 = vadd.f32 0.0, %v507
        %v509 = vpop.f32.mrb[0].mxu0
        %v510 = vadd.f32 0.0, %v509
        %v511 = vpop.f32.mrb[0].mxu0
        %v512 = vadd.f32 0.0, %v511
        %513 = vmatprep.mubr.bf16.mxu0 0
        %514 = vmatmul.mubr.bf16.gmra.mrb[0].mxu0 %v434
        %v515 = vpop.f32.mrb[0].mxu0
        %v516 = vadd.f32 0.0, %v515
        %v517 = vpop.f32.mrb[0].mxu0
        %v518 = vadd.f32 0.0, %v517
        %v519 = vpop.f32.mrb[0].mxu0
        %v520 = vadd.f32 0.0, %v519
        %v521 = vpop.f32.mrb[0].mxu0
        %v522 = vadd.f32 0.0, %v521
        %523 = vmatprep.mubr.bf16.mxu0 0
        %524 = vmatmul.mubr.bf16.gmra.mrb[0].mxu0 %v437
        %v525 = vpop.f32.mrb[0].mxu0
        %v526 = vadd.f32 0.0, %v525
        %v527 = vpop.f32.mrb[0].mxu0
        %v528 = vadd.f32 0.0, %v527
        %v529 = vpop.f32.mrb[0].mxu0
        %v530 = vadd.f32 0.0, %v529
        %v531 = vpop.f32.mrb[0].mxu0
        %v532 = vadd.f32 0.0, %v531
        %533 = vmatprep.mubr.bf16.mxu0 0
        %534 = vmatmul.mubr.bf16.gmra.mrb[0].mxu0 %v440
        %v535 = vpop.f32.mrb[0].mxu0
        %v536 = vadd.f32 0.0, %v535
        %v537 = vpop.f32.mrb[0].mxu0
        %v538 = vadd.f32 0.0, %v537
        %v539 = vpop.f32.mrb[0].mxu0
        %v540 = vadd.f32 0.0, %v539
        %v541 = vpop.f32.mrb[0].mxu0
        %v542 = vadd.f32 0.0, %v541
        %543 = vmatprep.mubr.bf16.mxu0 0
        %544 = vmatmul.mubr.bf16.gmra.mrb[0].mxu0 %v443
        %v545 = vpop.f32.mrb[0].mxu0
        %v546 = vadd.f32 0.0, %v545
        %v547 = vpop.f32.mrb[0].mxu0
        %v548 = vadd.f32 0.0, %v547
        %v549 = vpop.f32.mrb[0].mxu0
        %v550 = vadd.f32 0.0, %v549
        %v551 = vpop.f32.mrb[0].mxu0
        %v552 = vadd.f32 0.0, %v551
        %553 = vmatprep.mubr.bf16.mxu0 0
        %554 = vmatmul.mubr.bf16.gmra.mrb[0].mxu0 %v446
        %v555 = vpop.f32.mrb[0].mxu0
        %v556 = vadd.f32 0.0, %v555
        %v557 = vpop.f32.mrb[0].mxu0
        %v558 = vadd.f32 0.0, %v557
        %v559 = vpop.f32.mrb[0].mxu0
        %v560 = vadd.f32 0.0, %v559
        %v561 = vpop.f32.mrb[0].mxu0
        %v562 = vadd.f32 0.0, %v561
        %563 = vmatprep.mubr.bf16.mxu0 0
        %564 = vmatmul.mubr.bf16.gmra.mrb[0].mxu0 %v449
        %v565 = vpop.f32.mrb[0].mxu0
        %v566 = vadd.f32 0.0, %v565
        %v567 = vpop.f32.mrb[0].mxu0
        %v568 = vadd.f32 0.0, %v567
        %v569 = vpop.f32.mrb[0].mxu0
        %v570 = vadd.f32 0.0, %v569
        %v571 = vpop.f32.mrb[0].mxu0
        %v572 = vadd.f32 0.0, %v571
        %573 = vdwg.mxu0
        %574 = vmatprep.subr.bf16.mxu0 0
        %575 = vmatpush1.bf16.msra.mxu0 %v459
        %576 = vmatprep.subr.bf16.mxu0 0
        %577 = vmatpush1.bf16.msra.mxu0 0
        %578 = vmatprep.subr.bf16.mxu0 0
        %579 = vmatpush1.bf16.msra.mxu0 0
        %580 = vmatprep.subr.bf16.mxu0 0
        %581 = vmatpush1.bf16.msra.mxu0 0
        %582 = vmatprep.subr.bf16.mxu0 0
        %583 = vmatpush1.bf16.msra.mxu0 0
        %584 = vmatprep.subr.bf16.mxu0 0
        %585 = vmatpush1.bf16.msra.mxu0 0
        %586 = vmatprep.subr.bf16.mxu0 0
        %587 = vmatpush1.bf16.msra.mxu0 0
        %588 = vmatprep.subr.bf16.mxu0 0
        %589 = vmatpush1.bf16.msra.mxu0 0
        %590 = vmatprep.subr.bf16.mxu0 0
        %591 = vmatpush1.bf16.msra.mxu0 0
        %592 = vmatprep.subr.bf16.mxu0 0
        %593 = vmatpush1.bf16.msra.mxu0 0
        %594 = vmatprep.subr.bf16.mxu0 0
        %595 = vmatpush1.bf16.msra.mxu0 0
        %596 = vmatprep.subr.bf16.mxu0 0
        %597 = vmatpush1.bf16.msra.mxu0 0
        %598 = vmatprep.subr.bf16.mxu0 0
        %599 = vmatpush1.bf16.msra.mxu0 0
        %600 = vmatprep.subr.bf16.mxu0 0
        %601 = vmatpush1.bf16.msra.mxu0 0
        %602 = vmatprep.subr.bf16.mxu0 0
        %603 = vmatpush1.bf16.msra.mxu0 0
        %604 = vmatprep.subr.bf16.mxu0 0
        %605 = vmatpush1.bf16.msra.mxu0 0
        %606 = vmatprep.mubr.bf16.mxu0 0
        %607 = vmatmul.mubr.bf16.gmra.mrb[0].mxu0 %v428
        %v608 = vpop.f32.mrb[0].mxu0
        %v609 = vadd.f32 0.0, %v608
        %v610 = vpop.f32.mrb[0].mxu0
        %v611 = vpop.f32.mrb[0].mxu0
        %v612 = vadd.f32 0.0, %v611
        %v613 = vpop.f32.mrb[0].mxu0
        %614 = vmatprep.mubr.bf16.mxu0 0
        %615 = vmatmul.mubr.bf16.gmra.mrb[0].mxu0 %v431
        %v616 = vpop.f32.mrb[0].mxu0
        %v617 = vadd.f32 0.0, %v616
        %v618 = vpop.f32.mrb[0].mxu0
        %v619 = vpop.f32.mrb[0].mxu0
        %v620 = vadd.f32 0.0, %v619
        %v621 = vpop.f32.mrb[0].mxu0
        %622 = vmatprep.mubr.bf16.mxu0 0
        %623 = vmatmul.mubr.bf16.gmra.mrb[0].mxu0 %v434
        %v624 = vpop.f32.mrb[0].mxu0
        %v625 = vadd.f32 0.0, %v624
        %v626 = vpop.f32.mrb[0].mxu0
        %v627 = vpop.f32.mrb[0].mxu0
        %v628 = vadd.f32 0.0, %v627
        %v629 = vpop.f32.mrb[0].mxu0
        %630 = vmatprep.mubr.bf16.mxu0 0
        %631 = vmatmul.mubr.bf16.gmra.mrb[0].mxu0 %v437
        %v632 = vpop.f32.mrb[0].mxu0
        %v633 = vadd.f32 0.0, %v632
        %v634 = vpop.f32.mrb[0].mxu0
        %v635 = vpop.f32.mrb[0].mxu0
        %v636 = vadd.f32 0.0, %v635
        %v637 = vpop.f32.mrb[0].mxu0
        %638 = vmatprep.mubr.bf16.mxu0 0
        %639 = vmatmul.mubr.bf16.gmra.mrb[0].mxu0 %v440
        %v640 = vpop.f32.mrb[0].mxu0
        %v641 = vadd.f32 0.0, %v640
        %v642 = vpop.f32.mrb[0].mxu0
        %v643 = vpop.f32.mrb[0].mxu0
        %v644 = vadd.f32 0.0, %v643
        %v645 = vpop.f32.mrb[0].mxu0
        %646 = vmatprep.mubr.bf16.mxu0 0
        %647 = vmatmul.mubr.bf16.gmra.mrb[0].mxu0 %v443
        %v648 = vpop.f32.mrb[0].mxu0
        %v649 = vadd.f32 0.0, %v648
        %v650 = vpop.f32.mrb[0].mxu0
        %v651 = vpop.f32.mrb[0].mxu0
        %v652 = vadd.f32 0.0, %v651
        %v653 = vpop.f32.mrb[0].mxu0
        %654 = vmatprep.mubr.bf16.mxu0 0
        %655 = vmatmul.mubr.bf16.gmra.mrb[0].mxu0 %v446
        %v656 = vpop.f32.mrb[0].mxu0
        %v657 = vadd.f32 0.0, %v656
        %v658 = vpop.f32.mrb[0].mxu0
        %v659 = vpop.f32.mrb[0].mxu0
        %v660 = vadd.f32 0.0, %v659
        %v661 = vpop.f32.mrb[0].mxu0
        %662 = vmatprep.mubr.bf16.mxu0 0
        %663 = vmatmul.mubr.bf16.gmra.mrb[0].mxu0 %v449
        %v664 = vpop.f32.mrb[0].mxu0
        %v665 = vadd.f32 0.0, %v664
        %v666 = vpop.f32.mrb[0].mxu0
        %v667 = vpop.f32.mrb[0].mxu0
        %v668 = vadd.f32 0.0, %v667
        %v669 = vpop.f32.mrb[0].mxu0
        %670 = vdwg.mxu0
        %671 = vst [vmem:[#allocation2] sm:$0xff] %v496
        %672 = vst [vmem:[#allocation2 + $0x8] sm:$0xff] %v498
        %vm673 = vcmask 1014784
        %674 = vst.msk [vmem:[#allocation2 + $0x10] sm:$0xff] %vm673, %v609
        %675 = vst [vmem:[#allocation2 + $0x18] sm:$0xff] %v500
        %676 = vst [vmem:[#allocation2 + $0x20] sm:$0xff] %v502
        %677 = vst.msk [vmem:[#allocation2 + $0x28] sm:$0xff] %vm673, %v612
        %678 = vst [vmem:[#allocation2 + $0x30] sm:$0xff] %v506
        %679 = vst [vmem:[#allocation2 + $0x38] sm:$0xff] %v508
        %680 = vst.msk [vmem:[#allocation2 + $0x40] sm:$0xff] %vm673, %v617
        %681 = vst [vmem:[#allocation2 + $0x48] sm:$0xff] %v510
        %682 = vst [vmem:[#allocation2 + $0x50] sm:$0xff] %v512
        %683 = vst.msk [vmem:[#allocation2 + $0x58] sm:$0xff] %vm673, %v620
        %684 = vst [vmem:[#allocation2 + $0x60] sm:$0xff] %v516
        %685 = vst [vmem:[#allocation2 + $0x68] sm:$0xff] %v518
        %686 = vst.msk [vmem:[#allocation2 + $0x70] sm:$0xff] %vm673, %v625
        %687 = vst [vmem:[#allocation2 + $0x78] sm:$0xff] %v520
        %688 = vst [vmem:[#allocation2 + $0x80] sm:$0xff] %v522
        %689 = vst.msk [vmem:[#allocation2 + $0x88] sm:$0xff] %vm673, %v628
        %690 = vst [vmem:[#allocation2 + $0x90] sm:$0xff] %v526
        %691 = vst [vmem:[#allocation2 + $0x98] sm:$0xff] %v528
        %692 = vst.msk [vmem:[#allocation2 + $0xa0] sm:$0xff] %vm673, %v633
        %693 = vst [vmem:[#allocation2 + $0xa8] sm:$0xff] %v530
        %694 = vst [vmem:[#allocation2 + $0xb0] sm:$0xff] %v532
        %695 = vst.msk [vmem:[#allocation2 + $0xb8] sm:$0xff] %vm673, %v636
        %696 = vst [vmem:[#allocation2 + $0xc0] sm:$0xff] %v536
        %697 = vst [vmem:[#allocation2 + $0xc8] sm:$0xff] %v538
        %698 = vst.msk [vmem:[#allocation2 + $0xd0] sm:$0xff] %vm673, %v641
        %699 = vst [vmem:[#allocation2 + $0xd8] sm:$0xff] %v540
        %700 = vst [vmem:[#allocation2 + $0xe0] sm:$0xff] %v542
        %701 = vst.msk [vmem:[#allocation2 + $0xe8] sm:$0xff] %vm673, %v644
        %702 = vst [vmem:[#allocation2 + $0xf0] sm:$0xff] %v546
        %703 = vst [vmem:[#allocation2 + $0xf8] sm:$0xff] %v548
        %704 = vst.msk [vmem:[#allocation2 + $0x100] sm:$0xff] %vm673, %v649
        %705 = vst [vmem:[#allocation2 + $0x108] sm:$0xff] %v550
        %706 = vst [vmem:[#allocation2 + $0x110] sm:$0xff] %v552
        %707 = vst.msk [vmem:[#allocation2 + $0x118] sm:$0xff] %vm673, %v652
        %708 = vst [vmem:[#allocation2 + $0x120] sm:$0xff] %v556
        %709 = vst [vmem:[#allocation2 + $0x128] sm:$0xff] %v558
        %710 = vst.msk [vmem:[#allocation2 + $0x130] sm:$0xff] %vm673, %v657
        %711 = vst [vmem:[#allocation2 + $0x138] sm:$0xff] %v560
        %712 = vst [vmem:[#allocation2 + $0x140] sm:$0xff] %v562
        %713 = vst.msk [vmem:[#allocation2 + $0x148] sm:$0xff] %vm673, %v660
        %714 = vst [vmem:[#allocation2 + $0x150] sm:$0xff] %v566
        %715 = vst [vmem:[#allocation2 + $0x158] sm:$0xff] %v568
        %716 = vst.msk [vmem:[#allocation2 + $0x160] sm:$0xff] %vm673, %v665
        %717 = vst [vmem:[#allocation2 + $0x168] sm:$0xff] %v570
        %718 = vst [vmem:[#allocation2 + $0x170] sm:$0xff] %v572
        %719 = vst.msk [vmem:[#allocation2 + $0x178] sm:$0xff] %vm673, %v668
        %s720 = scalar_lea.vmem %s2, 64
        %v721 = vld [vmem:[%s720] sm:$0xf]
        %v722 = vld [vmem:[%s720 + $0x4] sm:$0xf]
        %v723 = vld [vmem:[%s720 + $0x8] sm:$0xf]
        %v724 = vld [vmem:[%s720 + $0xc] sm:$0xf]
        %v725 = vld [vmem:[%s720 + $0x10] sm:$0xf]
        %v726 = vld [vmem:[%s720 + $0x14] sm:$0xf]
        %v727 = vld [vmem:[%s720 + $0x18] sm:$0xf]
        %v728 = vld [vmem:[%s720 + $0x1c] sm:$0xf]
        %v729 = vld [vmem:[%s720 + $0x20] sm:$0xf]
        %v730 = vld [vmem:[%s720 + $0x24] sm:$0xf]
        %v731 = vld [vmem:[%s720 + $0x28] sm:$0xf]
        %v732 = vld [vmem:[%s720 + $0x2c] sm:$0xf]
        %v733 = vld [vmem:[%s720 + $0x30] sm:$0xf]
        %v734 = vld [vmem:[%s720 + $0x34] sm:$0xf]
        %v735 = vld [vmem:[%s720 + $0x38] sm:$0xf]
        %v736 = vld [vmem:[%s720 + $0x3c] sm:$0xf]
        %v753 = vunpack.c.l.b16 %v721
        %v754 = vunpack.c.l.b16 %v722
        %v755 = vunpack.c.l.b16 %v723
        %v756 = vunpack.c.l.b16 %v724
        %v757 = vunpack.c.l.b16 %v725
        %v758 = vunpack.c.l.b16 %v726
        %v759 = vunpack.c.l.b16 %v727
        %v760 = vunpack.c.l.b16 %v728
        %v761 = vunpack.c.l.b16 %v729
        %v762 = vunpack.c.l.b16 %v730
        %v763 = vunpack.c.l.b16 %v731
        %v764 = vunpack.c.l.b16 %v732
        %v765 = vunpack.c.l.b16 %v733
        %v766 = vunpack.c.l.b16 %v734
        %v767 = vunpack.c.l.b16 %v735
        %v768 = vunpack.c.l.b16 %v736
        %v769 = vpack.c.b16 %v754, %v753
        %v770 = vpack.c.b16 %v756, %v755
        %v771 = vpack.c.b16 %v758, %v757
        %v772 = vpack.c.b16 %v760, %v759
        %v773 = vpack.c.b16 %v762, %v761
        %v774 = vpack.c.b16 %v764, %v763
        %v775 = vpack.c.b16 %v766, %v765
        %v776 = vpack.c.b16 %v768, %v767
        %777 = vrot.lane.b32.xlu0 %v417, 127
        %v778 = vpop.permute.xlu0 %777
        %779 = vrot.lane.b32.xlu0 %v425, 127
        %v780 = vpop.permute.xlu0 %779
        %781 = vrot.lane.b32.xlu0 %v424, 127
        %v782 = vpop.permute.xlu0 %781
        %vm783 = vcmask 1039360
        %v784 = vsel %vm783, %v778, %v780
        %v785 = vsel %vm783, %v780, %v782
        %v787 = vsel %vm426, %v769, 0
        %v790 = vsel %vm426, %v770, 0
        %v793 = vsel %vm426, %v771, 0
        %v796 = vsel %vm426, %v772, 0
        %v799 = vsel %vm426, %v773, 0
        %v802 = vsel %vm426, %v774, 0
        %v805 = vsel %vm426, %v775, 0
        %v808 = vsel %vm426, %v776, 0
        %v811 = vsel %vm451, %v784, 0
        %v814 = vsel %vm451, %v785, 0
        %v817 = vsel %vm451, %v782, 0
        %819 = vmatprep.subr.bf16.mxu0 %v814
        %820 = vmatpush1.bf16.msra.mxu0 %v811
        %821 = vmatprep.subr.bf16.mxu0 0
        %822 = vmatpush1.bf16.msra.mxu0 0
        %823 = vmatprep.subr.bf16.mxu0 0
        %824 = vmatpush1.bf16.msra.mxu0 0
        %825 = vmatprep.subr.bf16.mxu0 0
        %826 = vmatpush1.bf16.msra.mxu0 0
        %827 = vmatprep.subr.bf16.mxu0 0
        %828 = vmatpush1.bf16.msra.mxu0 0
        %829 = vmatprep.subr.bf16.mxu0 0
        %830 = vmatpush1.bf16.msra.mxu0 0
        %831 = vmatprep.subr.bf16.mxu0 0
        %832 = vmatpush1.bf16.msra.mxu0 0
        %833 = vmatprep.subr.bf16.mxu0 0
        %834 = vmatpush1.bf16.msra.mxu0 0
        %835 = vmatprep.subr.bf16.mxu0 0
        %836 = vmatpush1.bf16.msra.mxu0 0
        %837 = vmatprep.subr.bf16.mxu0 0
        %838 = vmatpush1.bf16.msra.mxu0 0
        %839 = vmatprep.subr.bf16.mxu0 0
        %840 = vmatpush1.bf16.msra.mxu0 0
        %841 = vmatprep.subr.bf16.mxu0 0
        %842 = vmatpush1.bf16.msra.mxu0 0
        %843 = vmatprep.subr.bf16.mxu0 0
        %844 = vmatpush1.bf16.msra.mxu0 0
        %845 = vmatprep.subr.bf16.mxu0 0
        %846 = vmatpush1.bf16.msra.mxu0 0
        %847 = vmatprep.subr.bf16.mxu0 0
        %848 = vmatpush1.bf16.msra.mxu0 0
        %849 = vmatprep.subr.bf16.mxu0 0
        %850 = vmatpush1.bf16.msra.mxu0 0
        %851 = vmatprep.mubr.bf16.mxu0 0
        %852 = vmatmul.mubr.bf16.gmra.mrb[0].mxu0 %v787
        %v853 = vpop.f32.mrb[0].mxu0
        %v854 = vadd.f32 0.0, %v853
        %v855 = vpop.f32.mrb[0].mxu0
        %v856 = vadd.f32 0.0, %v855
        %v857 = vpop.f32.mrb[0].mxu0
        %v858 = vadd.f32 0.0, %v857
        %v859 = vpop.f32.mrb[0].mxu0
        %v860 = vadd.f32 0.0, %v859
        %861 = vmatprep.mubr.bf16.mxu0 0
        %862 = vmatmul.mubr.bf16.gmra.mrb[0].mxu0 %v790
        %v863 = vpop.f32.mrb[0].mxu0
        %v864 = vadd.f32 0.0, %v863
        %v865 = vpop.f32.mrb[0].mxu0
        %v866 = vadd.f32 0.0, %v865
        %v867 = vpop.f32.mrb[0].mxu0
        %v868 = vadd.f32 0.0, %v867
        %v869 = vpop.f32.mrb[0].mxu0
        %v870 = vadd.f32 0.0, %v869
        %871 = vmatprep.mubr.bf16.mxu0 0
        %872 = vmatmul.mubr.bf16.gmra.mrb[0].mxu0 %v793
        %v873 = vpop.f32.mrb[0].mxu0
        %v874 = vadd.f32 0.0, %v873
        %v875 = vpop.f32.mrb[0].mxu0
        %v876 = vadd.f32 0.0, %v875
        %v877 = vpop.f32.mrb[0].mxu0
        %v878 = vadd.f32 0.0, %v877
        %v879 = vpop.f32.mrb[0].mxu0
        %v880 = vadd.f32 0.0, %v879
        %881 = vmatprep.mubr.bf16.mxu0 0
        %882 = vmatmul.mubr.bf16.gmra.mrb[0].mxu0 %v796
        %v883 = vpop.f32.mrb[0].mxu0
        %v884 = vadd.f32 0.0, %v883
        %v885 = vpop.f32.mrb[0].mxu0
        %v886 = vadd.f32 0.0, %v885
        %v887 = vpop.f32.mrb[0].mxu0
        %v888 = vadd.f32 0.0, %v887
        %v889 = vpop.f32.mrb[0].mxu0
        %v890 = vadd.f32 0.0, %v889
        %891 = vmatprep.mubr.bf16.mxu0 0
        %892 = vmatmul.mubr.bf16.gmra.mrb[0].mxu0 %v799
        %v893 = vpop.f32.mrb[0].mxu0
        %v894 = vadd.f32 0.0, %v893
        %v895 = vpop.f32.mrb[0].mxu0
        %v896 = vadd.f32 0.0, %v895
        %v897 = vpop.f32.mrb[0].mxu0
        %v898 = vadd.f32 0.0, %v897
        %v899 = vpop.f32.mrb[0].mxu0
        %v900 = vadd.f32 0.0, %v899
        %901 = vmatprep.mubr.bf16.mxu0 0
        %902 = vmatmul.mubr.bf16.gmra.mrb[0].mxu0 %v802
        %v903 = vpop.f32.mrb[0].mxu0
        %v904 = vadd.f32 0.0, %v903
        %v905 = vpop.f32.mrb[0].mxu0
        %v906 = vadd.f32 0.0, %v905
        %v907 = vpop.f32.mrb[0].mxu0
        %v908 = vadd.f32 0.0, %v907
        %v909 = vpop.f32.mrb[0].mxu0
        %v910 = vadd.f32 0.0, %v909
        %911 = vmatprep.mubr.bf16.mxu0 0
        %912 = vmatmul.mubr.bf16.gmra.mrb[0].mxu0 %v805
        %v913 = vpop.f32.mrb[0].mxu0
        %v914 = vadd.f32 0.0, %v913
        %v915 = vpop.f32.mrb[0].mxu0
        %v916 = vadd.f32 0.0, %v915
        %v917 = vpop.f32.mrb[0].mxu0
        %v918 = vadd.f32 0.0, %v917
        %v919 = vpop.f32.mrb[0].mxu0
        %v920 = vadd.f32 0.0, %v919
        %921 = vmatprep.mubr.bf16.mxu0 0
        %922 = vmatmul.mubr.bf16.gmra.mrb[0].mxu0 %v808
        %v923 = vpop.f32.mrb[0].mxu0
        %v924 = vadd.f32 0.0, %v923
        %v925 = vpop.f32.mrb[0].mxu0
        %v926 = vadd.f32 0.0, %v925
        %v927 = vpop.f32.mrb[0].mxu0
        %v928 = vadd.f32 0.0, %v927
        %v929 = vpop.f32.mrb[0].mxu0
        %v930 = vadd.f32 0.0, %v929
        %931 = vdwg.mxu0
        %932 = vmatprep.subr.bf16.mxu0 0
        %933 = vmatpush1.bf16.msra.mxu0 %v817
        %934 = vmatprep.subr.bf16.mxu0 0
        %935 = vmatpush1.bf16.msra.mxu0 0
        %936 = vmatprep.subr.bf16.mxu0 0
        %937 = vmatpush1.bf16.msra.mxu0 0
        %938 = vmatprep.subr.bf16.mxu0 0
        %939 = vmatpush1.bf16.msra.mxu0 0
        %940 = vmatprep.subr.bf16.mxu0 0
        %941 = vmatpush1.bf16.msra.mxu0 0
        %942 = vmatprep.subr.bf16.mxu0 0
        %943 = vmatpush1.bf16.msra.mxu0 0
        %944 = vmatprep.subr.bf16.mxu0 0
        %945 = vmatpush1.bf16.msra.mxu0 0
        %946 = vmatprep.subr.bf16.mxu0 0
        %947 = vmatpush1.bf16.msra.mxu0 0
        %948 = vmatprep.subr.bf16.mxu0 0
        %949 = vmatpush1.bf16.msra.mxu0 0
        %950 = vmatprep.subr.bf16.mxu0 0
        %951 = vmatpush1.bf16.msra.mxu0 0
        %952 = vmatprep.subr.bf16.mxu0 0
        %953 = vmatpush1.bf16.msra.mxu0 0
        %954 = vmatprep.subr.bf16.mxu0 0
        %955 = vmatpush1.bf16.msra.mxu0 0
        %956 = vmatprep.subr.bf16.mxu0 0
        %957 = vmatpush1.bf16.msra.mxu0 0
        %958 = vmatprep.subr.bf16.mxu0 0
        %959 = vmatpush1.bf16.msra.mxu0 0
        %960 = vmatprep.subr.bf16.mxu0 0
        %961 = vmatpush1.bf16.msra.mxu0 0
        %962 = vmatprep.subr.bf16.mxu0 0
        %963 = vmatpush1.bf16.msra.mxu0 0
        %964 = vmatprep.mubr.bf16.mxu0 0
        %965 = vmatmul.mubr.bf16.gmra.mrb[0].mxu0 %v787
        %v966 = vpop.f32.mrb[0].mxu0
        %v967 = vadd.f32 0.0, %v966
        %v968 = vpop.f32.mrb[0].mxu0
        %v969 = vpop.f32.mrb[0].mxu0
        %v970 = vadd.f32 0.0, %v969
        %v971 = vpop.f32.mrb[0].mxu0
        %972 = vmatprep.mubr.bf16.mxu0 0
        %973 = vmatmul.mubr.bf16.gmra.mrb[0].mxu0 %v790
        %v974 = vpop.f32.mrb[0].mxu0
        %v975 = vadd.f32 0.0, %v974
        %v976 = vpop.f32.mrb[0].mxu0
        %v977 = vpop.f32.mrb[0].mxu0
        %v978 = vadd.f32 0.0, %v977
        %v979 = vpop.f32.mrb[0].mxu0
        %980 = vmatprep.mubr.bf16.mxu0 0
        %981 = vmatmul.mubr.bf16.gmra.mrb[0].mxu0 %v793
        %v982 = vpop.f32.mrb[0].mxu0
        %v983 = vadd.f32 0.0, %v982
        %v984 = vpop.f32.mrb[0].mxu0
        %v985 = vpop.f32.mrb[0].mxu0
        %v986 = vadd.f32 0.0, %v985
        %v987 = vpop.f32.mrb[0].mxu0
        %988 = vmatprep.mubr.bf16.mxu0 0
        %989 = vmatmul.mubr.bf16.gmra.mrb[0].mxu0 %v796
        %v990 = vpop.f32.mrb[0].mxu0
        %v991 = vadd.f32 0.0, %v990
        %v992 = vpop.f32.mrb[0].mxu0
        %v993 = vpop.f32.mrb[0].mxu0
        %v994 = vadd.f32 0.0, %v993
        %v995 = vpop.f32.mrb[0].mxu0
        %996 = vmatprep.mubr.bf16.mxu0 0
        %997 = vmatmul.mubr.bf16.gmra.mrb[0].mxu0 %v799
        %v998 = vpop.f32.mrb[0].mxu0
        %v999 = vadd.f32 0.0, %v998
        %v1000 = vpop.f32.mrb[0].mxu0
        %v1001 = vpop.f32.mrb[0].mxu0
        %v1002 = vadd.f32 0.0, %v1001
        %v1003 = vpop.f32.mrb[0].mxu0
        %1004 = vmatprep.mubr.bf16.mxu0 0
        %1005 = vmatmul.mubr.bf16.gmra.mrb[0].mxu0 %v802
        %v1006 = vpop.f32.mrb[0].mxu0
        %v1007 = vadd.f32 0.0, %v1006
        %v1008 = vpop.f32.mrb[0].mxu0
        %v1009 = vpop.f32.mrb[0].mxu0
        %v1010 = vadd.f32 0.0, %v1009
        %v1011 = vpop.f32.mrb[0].mxu0
        %1012 = vmatprep.mubr.bf16.mxu0 0
        %1013 = vmatmul.mubr.bf16.gmra.mrb[0].mxu0 %v805
        %v1014 = vpop.f32.mrb[0].mxu0
        %v1015 = vadd.f32 0.0, %v1014
        %v1016 = vpop.f32.mrb[0].mxu0
        %v1017 = vpop.f32.mrb[0].mxu0
        %v1018 = vadd.f32 0.0, %v1017
        %v1019 = vpop.f32.mrb[0].mxu0
        %1020 = vmatprep.mubr.bf16.mxu0 0
        %1021 = vmatmul.mubr.bf16.gmra.mrb[0].mxu0 %v808
        %v1022 = vpop.f32.mrb[0].mxu0
        %v1023 = vadd.f32 0.0, %v1022
        %v1024 = vpop.f32.mrb[0].mxu0
        %v1025 = vpop.f32.mrb[0].mxu0
        %v1026 = vadd.f32 0.0, %v1025
        %v1027 = vpop.f32.mrb[0].mxu0
        %1028 = vdwg.mxu0
        %v1029 = vld [vmem:[#allocation2] sm:$0xff]
        %v1030 = vld [vmem:[#allocation2 + $0x8] sm:$0xff]
        %v1031 = vld [vmem:[#allocation2 + $0x10] sm:$0xff]
        %v1032 = vld [vmem:[#allocation2 + $0x18] sm:$0xff]
        %v1033 = vld [vmem:[#allocation2 + $0x20] sm:$0xff]
        %v1034 = vld [vmem:[#allocation2 + $0x28] sm:$0xff]
        %v1035 = vld [vmem:[#allocation2 + $0x30] sm:$0xff]
        %v1036 = vld [vmem:[#allocation2 + $0x38] sm:$0xff]
        %v1037 = vld [vmem:[#allocation2 + $0x40] sm:$0xff]
        %v1038 = vld [vmem:[#allocation2 + $0x48] sm:$0xff]
        %v1039 = vld [vmem:[#allocation2 + $0x50] sm:$0xff]
        %v1040 = vld [vmem:[#allocation2 + $0x58] sm:$0xff]
        %v1041 = vld [vmem:[#allocation2 + $0x60] sm:$0xff]
        %v1042 = vld [vmem:[#allocation2 + $0x68] sm:$0xff]
        %v1043 = vld [vmem:[#allocation2 + $0x70] sm:$0xff]
        %v1044 = vld [vmem:[#allocation2 + $0x78] sm:$0xff]
        %v1045 = vld [vmem:[#allocation2 + $0x80] sm:$0xff]
        %v1046 = vld [vmem:[#allocation2 + $0x88] sm:$0xff]
        %v1047 = vld [vmem:[#allocation2 + $0x90] sm:$0xff]
        %v1048 = vld [vmem:[#allocation2 + $0x98] sm:$0xff]
        %v1049 = vld [vmem:[#allocation2 + $0xa0] sm:$0xff]
        %v1050 = vld [vmem:[#allocation2 + $0xa8] sm:$0xff]
        %v1051 = vld [vmem:[#allocation2 + $0xb0] sm:$0xff]
        %v1052 = vld [vmem:[#allocation2 + $0xb8] sm:$0xff]
        %v1053 = vld [vmem:[#allocation2 + $0xc0] sm:$0xff]
        %v1054 = vld [vmem:[#allocation2 + $0xc8] sm:$0xff]
        %v1055 = vld [vmem:[#allocation2 + $0xd0] sm:$0xff]
        %v1056 = vld [vmem:[#allocation2 + $0xd8] sm:$0xff]
        %v1057 = vld [vmem:[#allocation2 + $0xe0] sm:$0xff]
        %v1058 = vld [vmem:[#allocation2 + $0xe8] sm:$0xff]
        %v1059 = vld [vmem:[#allocation2 + $0xf0] sm:$0xff]
        %v1060 = vld [vmem:[#allocation2 + $0xf8] sm:$0xff]
        %v1061 = vld [vmem:[#allocation2 + $0x100] sm:$0xff]
        %v1062 = vld [vmem:[#allocation2 + $0x108] sm:$0xff]
        %v1063 = vld [vmem:[#allocation2 + $0x110] sm:$0xff]
        %v1064 = vld [vmem:[#allocation2 + $0x118] sm:$0xff]
        %v1065 = vld [vmem:[#allocation2 + $0x120] sm:$0xff]
        %v1066 = vld [vmem:[#allocation2 + $0x128] sm:$0xff]
        %v1067 = vld [vmem:[#allocation2 + $0x130] sm:$0xff]
        %v1068 = vld [vmem:[#allocation2 + $0x138] sm:$0xff]
        %v1069 = vld [vmem:[#allocation2 + $0x140] sm:$0xff]
        %v1070 = vld [vmem:[#allocation2 + $0x148] sm:$0xff]
        %v1071 = vld [vmem:[#allocation2 + $0x150] sm:$0xff]
        %v1072 = vld [vmem:[#allocation2 + $0x158] sm:$0xff]
        %v1073 = vld [vmem:[#allocation2 + $0x160] sm:$0xff]
        %v1074 = vld [vmem:[#allocation2 + $0x168] sm:$0xff]
        %v1075 = vld [vmem:[#allocation2 + $0x170] sm:$0xff]
        %v1076 = vld [vmem:[#allocation2 + $0x178] sm:$0xff]
        %v1077 = vadd.f32 %v1029, %v854
        %v1078 = vadd.f32 %v1030, %v856
        %v1079 = vadd.f32 %v1031, %v967
        %v1080 = vadd.f32 %v1032, %v858
        %v1081 = vadd.f32 %v1033, %v860
        %v1082 = vadd.f32 %v1034, %v970
        %v1083 = vadd.f32 %v1035, %v864
        %v1084 = vadd.f32 %v1036, %v866
        %v1085 = vadd.f32 %v1037, %v975
        %v1086 = vadd.f32 %v1038, %v868
        %v1087 = vadd.f32 %v1039, %v870
        %v1088 = vadd.f32 %v1040, %v978
        %v1089 = vadd.f32 %v1041, %v874
        %v1090 = vadd.f32 %v1042, %v876
        %v1091 = vadd.f32 %v1043, %v983
        %v1092 = vadd.f32 %v1044, %v878
        %v1093 = vadd.f32 %v1045, %v880
        %v1094 = vadd.f32 %v1046, %v986
        %v1095 = vadd.f32 %v1047, %v884
        %v1096 = vadd.f32 %v1048, %v886
        %v1097 = vadd.f32 %v1049, %v991
        %v1098 = vadd.f32 %v1050, %v888
        %v1099 = vadd.f32 %v1051, %v890
        %v1100 = vadd.f32 %v1052, %v994
        %v1101 = vadd.f32 %v1053, %v894
        %v1102 = vadd.f32 %v1054, %v896
        %v1103 = vadd.f32 %v1055, %v999
        %v1104 = vadd.f32 %v1056, %v898
        %v1105 = vadd.f32 %v1057, %v900
        %v1106 = vadd.f32 %v1058, %v1002
        %v1107 = vadd.f32 %v1059, %v904
        %v1108 = vadd.f32 %v1060, %v906
        %v1109 = vadd.f32 %v1061, %v1007
        %v1110 = vadd.f32 %v1062, %v908
        %v1111 = vadd.f32 %v1063, %v910
        %v1112 = vadd.f32 %v1064, %v1010
        %v1113 = vadd.f32 %v1065, %v914
        %v1114 = vadd.f32 %v1066, %v916
        %v1115 = vadd.f32 %v1067, %v1015
        %v1116 = vadd.f32 %v1068, %v918
        %v1117 = vadd.f32 %v1069, %v920
        %v1118 = vadd.f32 %v1070, %v1018
        %v1119 = vadd.f32 %v1071, %v924
        %v1120 = vadd.f32 %v1072, %v926
        %v1121 = vadd.f32 %v1073, %v1023
        %v1122 = vadd.f32 %v1074, %v928
        %v1123 = vadd.f32 %v1075, %v930
        %v1124 = vadd.f32 %v1076, %v1026
        %1125 = vst [vmem:[#allocation2] sm:$0xff] %v1077
        %1126 = vst [vmem:[#allocation2 + $0x8] sm:$0xff] %v1078
        %1127 = vst.msk [vmem:[#allocation2 + $0x10] sm:$0xff] %vm673, %v1079
        %1128 = vst [vmem:[#allocation2 + $0x18] sm:$0xff] %v1080
        %1129 = vst [vmem:[#allocation2 + $0x20] sm:$0xff] %v1081
        %1130 = vst.msk [vmem:[#allocation2 + $0x28] sm:$0xff] %vm673, %v1082
        %1131 = vst [vmem:[#allocation2 + $0x30] sm:$0xff] %v1083
        %1132 = vst [vmem:[#allocation2 + $0x38] sm:$0xff] %v1084
        %1133 = vst.msk [vmem:[#allocation2 + $0x40] sm:$0xff] %vm673, %v1085
        %1134 = vst [vmem:[#allocation2 + $0x48] sm:$0xff] %v1086
        %1135 = vst [vmem:[#allocation2 + $0x50] sm:$0xff] %v1087
        %1136 = vst.msk [vmem:[#allocation2 + $0x58] sm:$0xff] %vm673, %v1088
        %1137 = vst [vmem:[#allocation2 + $0x60] sm:$0xff] %v1089
        %1138 = vst [vmem:[#allocation2 + $0x68] sm:$0xff] %v1090
        %1139 = vst.msk [vmem:[#allocation2 + $0x70] sm:$0xff] %vm673, %v1091
        %1140 = vst [vmem:[#allocation2 + $0x78] sm:$0xff] %v1092
        %1141 = vst [vmem:[#allocation2 + $0x80] sm:$0xff] %v1093
        %1142 = vst.msk [vmem:[#allocation2 + $0x88] sm:$0xff] %vm673, %v1094
        %1143 = vst [vmem:[#allocation2 + $0x90] sm:$0xff] %v1095
        %1144 = vst [vmem:[#allocation2 + $0x98] sm:$0xff] %v1096
        %1145 = vst.msk [vmem:[#allocation2 + $0xa0] sm:$0xff] %vm673, %v1097
        %1146 = vst [vmem:[#allocation2 + $0xa8] sm:$0xff] %v1098
        %1147 = vst [vmem:[#allocation2 + $0xb0] sm:$0xff] %v1099
        %1148 = vst.msk [vmem:[#allocation2 + $0xb8] sm:$0xff] %vm673, %v1100
        %1149 = vst [vmem:[#allocation2 + $0xc0] sm:$0xff] %v1101
        %1150 = vst [vmem:[#allocation2 + $0xc8] sm:$0xff] %v1102
        %1151 = vst.msk [vmem:[#allocation2 + $0xd0] sm:$0xff] %vm673, %v1103
        %1152 = vst [vmem:[#allocation2 + $0xd8] sm:$0xff] %v1104
        %1153 = vst [vmem:[#allocation2 + $0xe0] sm:$0xff] %v1105
        %1154 = vst.msk [vmem:[#allocation2 + $0xe8] sm:$0xff] %vm673, %v1106
        %1155 = vst [vmem:[#allocation2 + $0xf0] sm:$0xff] %v1107
        %1156 = vst [vmem:[#allocation2 + $0xf8] sm:$0xff] %v1108
        %1157 = vst.msk [vmem:[#allocation2 + $0x100] sm:$0xff] %vm673, %v1109
        %1158 = vst [vmem:[#allocation2 + $0x108] sm:$0xff] %v1110
        %1159 = vst [vmem:[#allocation2 + $0x110] sm:$0xff] %v1111
        %1160 = vst.msk [vmem:[#allocation2 + $0x118] sm:$0xff] %vm673, %v1112
        %1161 = vst [vmem:[#allocation2 + $0x120] sm:$0xff] %v1113
        %1162 = vst [vmem:[#allocation2 + $0x128] sm:$0xff] %v1114
        %1163 = vst.msk [vmem:[#allocation2 + $0x130] sm:$0xff] %vm673, %v1115
        %1164 = vst [vmem:[#allocation2 + $0x138] sm:$0xff] %v1116
        %1165 = vst [vmem:[#allocation2 + $0x140] sm:$0xff] %v1117
        %1166 = vst.msk [vmem:[#allocation2 + $0x148] sm:$0xff] %vm673, %v1118
        %1167 = vst [vmem:[#allocation2 + $0x150] sm:$0xff] %v1119
        %1168 = vst [vmem:[#allocation2 + $0x158] sm:$0xff] %v1120
        %1169 = vst.msk [vmem:[#allocation2 + $0x160] sm:$0xff] %vm673, %v1121
        %1170 = vst [vmem:[#allocation2 + $0x168] sm:$0xff] %v1122
        %1171 = vst [vmem:[#allocation2 + $0x170] sm:$0xff] %v1123
        %1172 = vst.msk [vmem:[#allocation2 + $0x178] sm:$0xff] %vm673, %v1124
        %s1173 = scalar_lea.vmem %s2, 128
        %v1174 = vld [vmem:[%s1173] sm:$0xf]
        %v1175 = vld [vmem:[%s1173 + $0x4] sm:$0xf]
        %v1176 = vld [vmem:[%s1173 + $0x8] sm:$0xf]
        %v1177 = vld [vmem:[%s1173 + $0xc] sm:$0xf]
        %v1178 = vld [vmem:[%s1173 + $0x10] sm:$0xf]
        %v1179 = vld [vmem:[%s1173 + $0x14] sm:$0xf]
        %v1180 = vld [vmem:[%s1173 + $0x18] sm:$0xf]
        %v1181 = vld [vmem:[%s1173 + $0x1c] sm:$0xf]
        %v1182 = vld [vmem:[%s1173 + $0x20] sm:$0xf]
        %v1183 = vld [vmem:[%s1173 + $0x24] sm:$0xf]
        %v1184 = vld [vmem:[%s1173 + $0x28] sm:$0xf]
        %v1185 = vld [vmem:[%s1173 + $0x2c] sm:$0xf]
        %v1186 = vld [vmem:[%s1173 + $0x30] sm:$0xf]
        %v1187 = vld [vmem:[%s1173 + $0x34] sm:$0xf]
        %v1188 = vld [vmem:[%s1173 + $0x38] sm:$0xf]
        %v1189 = vld [vmem:[%s1173 + $0x3c] sm:$0xf]
        %v1206 = vunpack.c.l.b16 %v1174
        %v1207 = vunpack.c.l.b16 %v1175
        %v1208 = vunpack.c.l.b16 %v1176
        %v1209 = vunpack.c.l.b16 %v1177
        %v1210 = vunpack.c.l.b16 %v1178
        %v1211 = vunpack.c.l.b16 %v1179
        %v1212 = vunpack.c.l.b16 %v1180
        %v1213 = vunpack.c.l.b16 %v1181
        %v1214 = vunpack.c.l.b16 %v1182
        %v1215 = vunpack.c.l.b16 %v1183
        %v1216 = vunpack.c.l.b16 %v1184
        %v1217 = vunpack.c.l.b16 %v1185
        %v1218 = vunpack.c.l.b16 %v1186
        %v1219 = vunpack.c.l.b16 %v1187
        %v1220 = vunpack.c.l.b16 %v1188
        %v1221 = vunpack.c.l.b16 %v1189
        %v1222 = vpack.c.b16 %v1207, %v1206
        %v1223 = vpack.c.b16 %v1209, %v1208
        %v1224 = vpack.c.b16 %v1211, %v1210
        %v1225 = vpack.c.b16 %v1213, %v1212
        %v1226 = vpack.c.b16 %v1215, %v1214
        %v1227 = vpack.c.b16 %v1217, %v1216
        %v1228 = vpack.c.b16 %v1219, %v1218
        %v1229 = vpack.c.b16 %v1221, %v1220
        %1230 = vrot.lane.b32.xlu0 %v417, 126
        %v1231 = vpop.permute.xlu0 %1230
        %1232 = vrot.lane.b32.xlu0 %v425, 126
        %v1233 = vpop.permute.xlu0 %1232
        %1234 = vrot.lane.b32.xlu0 %v424, 126
        %v1235 = vpop.permute.xlu0 %1234
        %vm1236 = vcmask 1031168
        %v1237 = vsel %vm1236, %v1231, %v1233
        %v1238 = vsel %vm1236, %v1233, %v1235
        %v1240 = vsel %vm426, %v1222, 0
        %v1243 = vsel %vm426, %v1223, 0
        %v1246 = vsel %vm426, %v1224, 0
        %v1249 = vsel %vm426, %v1225, 0
        %v1252 = vsel %vm426, %v1226, 0
        %v1255 = vsel %vm426, %v1227, 0
        %v1258 = vsel %vm426, %v1228, 0
        %v1261 = vsel %vm426, %v1229, 0
        %v1264 = vsel %vm451, %v1237, 0
        %v1267 = vsel %vm451, %v1238, 0
        %v1270 = vsel %vm451, %v1235, 0
        %1272 = vmatprep.subr.bf16.mxu0 %v1267
        %1273 = vmatpush1.bf16.msra.mxu0 %v1264
        %1274 = vmatprep.subr.bf16.mxu0 0
        %1275 = vmatpush1.bf16.msra.mxu0 0
        %1276 = vmatprep.subr.bf16.mxu0 0
        %1277 = vmatpush1.bf16.msra.mxu0 0
        %1278 = vmatprep.subr.bf16.mxu0 0
        %1279 = vmatpush1.bf16.msra.mxu0 0
        %1280 = vmatprep.subr.bf16.mxu0 0
        %1281 = vmatpush1.bf16.msra.mxu0 0
        %1282 = vmatprep.subr.bf16.mxu0 0
        %1283 = vmatpush1.bf16.msra.mxu0 0
        %1284 = vmatprep.subr.bf16.mxu0 0
        %1285 = vmatpush1.bf16.msra.mxu0 0
        %1286 = vmatprep.subr.bf16.mxu0 0
        %1287 = vmatpush1.bf16.msra.mxu0 0
        %1288 = vmatprep.subr.bf16.mxu0 0
        %1289 = vmatpush1.bf16.msra.mxu0 0
        %1290 = vmatprep.subr.bf16.mxu0 0
        %1291 = vmatpush1.bf16.msra.mxu0 0
        %1292 = vmatprep.subr.bf16.mxu0 0
        %1293 = vmatpush1.bf16.msra.mxu0 0
        %1294 = vmatprep.subr.bf16.mxu0 0
        %1295 = vmatpush1.bf16.msra.mxu0 0
        %1296 = vmatprep.subr.bf16.mxu0 0
        %1297 = vmatpush1.bf16.msra.mxu0 0
        %1298 = vmatprep.subr.bf16.mxu0 0
        %1299 = vmatpush1.bf16.msra.mxu0 0
        %1300 = vmatprep.subr.bf16.mxu0 0
        %1301 = vmatpush1.bf16.msra.mxu0 0
        %1302 = vmatprep.subr.bf16.mxu0 0
        %1303 = vmatpush1.bf16.msra.mxu0 0
        %1304 = vmatprep.mubr.bf16.mxu0 0
        %1305 = vmatmul.mubr.bf16.gmra.mrb[0].mxu0 %v1240
        %v1306 = vpop.f32.mrb[0].mxu0
        %v1307 = vadd.f32 0.0, %v1306
        %v1308 = vpop.f32.mrb[0].mxu0
        %v1309 = vadd.f32 0.0, %v1308
        %v1310 = vpop.f32.mrb[0].mxu0
        %v1311 = vadd.f32 0.0, %v1310
        %v1312 = vpop.f32.mrb[0].mxu0
        %v1313 = vadd.f32 0.0, %v1312
        %1314 = vmatprep.mubr.bf16.mxu0 0
        %1315 = vmatmul.mubr.bf16.gmra.mrb[0].mxu0 %v1243
        %v1316 = vpop.f32.mrb[0].mxu0
        %v1317 = vadd.f32 0.0, %v1316
        %v1318 = vpop.f32.mrb[0].mxu0
        %v1319 = vadd.f32 0.0, %v1318
        %v1320 = vpop.f32.mrb[0].mxu0
        %v1321 = vadd.f32 0.0, %v1320
        %v1322 = vpop.f32.mrb[0].mxu0
        %v1323 = vadd.f32 0.0, %v1322
        %1324 = vmatprep.mubr.bf16.mxu0 0
        %1325 = vmatmul.mubr.bf16.gmra.mrb[0].mxu0 %v1246
        %v1326 = vpop.f32.mrb[0].mxu0
        %v1327 = vadd.f32 0.0, %v1326
        %v1328 = vpop.f32.mrb[0].mxu0
        %v1329 = vadd.f32 0.0, %v1328
        %v1330 = vpop.f32.mrb[0].mxu0
        %v1331 = vadd.f32 0.0, %v1330
        %v1332 = vpop.f32.mrb[0].mxu0
        %v1333 = vadd.f32 0.0, %v1332
        %1334 = vmatprep.mubr.bf16.mxu0 0
        %1335 = vmatmul.mubr.bf16.gmra.mrb[0].mxu0 %v1249
        %v1336 = vpop.f32.mrb[0].mxu0
        %v1337 = vadd.f32 0.0, %v1336
        %v1338 = vpop.f32.mrb[0].mxu0
        %v1339 = vadd.f32 0.0, %v1338
        %v1340 = vpop.f32.mrb[0].mxu0
        %v1341 = vadd.f32 0.0, %v1340
        %v1342 = vpop.f32.mrb[0].mxu0
        %v1343 = vadd.f32 0.0, %v1342
        %1344 = vmatprep.mubr.bf16.mxu0 0
        %1345 = vmatmul.mubr.bf16.gmra.mrb[0].mxu0 %v1252
        %v1346 = vpop.f32.mrb[0].mxu0
        %v1347 = vadd.f32 0.0, %v1346
        %v1348 = vpop.f32.mrb[0].mxu0
        %v1349 = vadd.f32 0.0, %v1348
        %v1350 = vpop.f32.mrb[0].mxu0
        %v1351 = vadd.f32 0.0, %v1350
        %v1352 = vpop.f32.mrb[0].mxu0
        %v1353 = vadd.f32 0.0, %v1352
        %1354 = vmatprep.mubr.bf16.mxu0 0
        %1355 = vmatmul.mubr.bf16.gmra.mrb[0].mxu0 %v1255
        %v1356 = vpop.f32.mrb[0].mxu0
        %v1357 = vadd.f32 0.0, %v1356
        %v1358 = vpop.f32.mrb[0].mxu0
        %v1359 = vadd.f32 0.0, %v1358
        %v1360 = vpop.f32.mrb[0].mxu0
        %v1361 = vadd.f32 0.0, %v1360
        %v1362 = vpop.f32.mrb[0].mxu0
        %v1363 = vadd.f32 0.0, %v1362
        %1364 = vmatprep.mubr.bf16.mxu0 0
        %1365 = vmatmul.mubr.bf16.gmra.mrb[0].mxu0 %v1258
        %v1366 = vpop.f32.mrb[0].mxu0
        %v1367 = vadd.f32 0.0, %v1366
        %v1368 = vpop.f32.mrb[0].mxu0
        %v1369 = vadd.f32 0.0, %v1368
        %v1370 = vpop.f32.mrb[0].mxu0
        %v1371 = vadd.f32 0.0, %v1370
        %v1372 = vpop.f32.mrb[0].mxu0
        %v1373 = vadd.f32 0.0, %v1372
        %1374 = vmatprep.mubr.bf16.mxu0 0
        %1375 = vmatmul.mubr.bf16.gmra.mrb[0].mxu0 %v1261
        %v1376 = vpop.f32.mrb[0].mxu0
        %v1377 = vadd.f32 0.0, %v1376
        %v1378 = vpop.f32.mrb[0].mxu0
        %v1379 = vadd.f32 0.0, %v1378
        %v1380 = vpop.f32.mrb[0].mxu0
        %v1381 = vadd.f32 0.0, %v1380
        %v1382 = vpop.f32.mrb[0].mxu0
        %v1383 = vadd.f32 0.0, %v1382
        %1384 = vdwg.mxu0
        %1385 = vmatprep.subr.bf16.mxu0 0
        %1386 = vmatpush1.bf16.msra.mxu0 %v1270
        %1387 = vmatprep.subr.bf16.mxu0 0
        %1388 = vmatpush1.bf16.msra.mxu0 0
        %1389 = vmatprep.subr.bf16.mxu0 0
        %1390 = vmatpush1.bf16.msra.mxu0 0
        %1391 = vmatprep.subr.bf16.mxu0 0
        %1392 = vmatpush1.bf16.msra.mxu0 0
        %1393 = vmatprep.subr.bf16.mxu0 0
        %1394 = vmatpush1.bf16.msra.mxu0 0
        %1395 = vmatprep.subr.bf16.mxu0 0
        %1396 = vmatpush1.bf16.msra.mxu0 0
        %1397 = vmatprep.subr.bf16.mxu0 0
        %1398 = vmatpush1.bf16.msra.mxu0 0
        %1399 = vmatprep.subr.bf16.mxu0 0
        %1400 = vmatpush1.bf16.msra.mxu0 0
        %1401 = vmatprep.subr.bf16.mxu0 0
        %1402 = vmatpush1.bf16.msra.mxu0 0
        %1403 = vmatprep.subr.bf16.mxu0 0
        %1404 = vmatpush1.bf16.msra.mxu0 0
        %1405 = vmatprep.subr.bf16.mxu0 0
        %1406 = vmatpush1.bf16.msra.mxu0 0
        %1407 = vmatprep.subr.bf16.mxu0 0
        %1408 = vmatpush1.bf16.msra.mxu0 0
        %1409 = vmatprep.subr.bf16.mxu0 0
        %1410 = vmatpush1.bf16.msra.mxu0 0
        %1411 = vmatprep.subr.bf16.mxu0 0
        %1412 = vmatpush1.bf16.msra.mxu0 0
        %1413 = vmatprep.subr.bf16.mxu0 0
        %1414 = vmatpush1.bf16.msra.mxu0 0
        %1415 = vmatprep.subr.bf16.mxu0 0
        %1416 = vmatpush1.bf16.msra.mxu0 0
        %1417 = vmatprep.mubr.bf16.mxu0 0
        %1418 = vmatmul.mubr.bf16.gmra.mrb[0].mxu0 %v1240
        %v1419 = vpop.f32.mrb[0].mxu0
        %v1420 = vadd.f32 0.0, %v1419
        %v1421 = vpop.f32.mrb[0].mxu0
        %v1422 = vpop.f32.mrb[0].mxu0
        %v1423 = vadd.f32 0.0, %v1422
        %v1424 = vpop.f32.mrb[0].mxu0
        %1425 = vmatprep.mubr.bf16.mxu0 0
        %1426 = vmatmul.mubr.bf16.gmra.mrb[0].mxu0 %v1243
        %v1427 = vpop.f32.mrb[0].mxu0
        %v1428 = vadd.f32 0.0, %v1427
        %v1429 = vpop.f32.mrb[0].mxu0
        %v1430 = vpop.f32.mrb[0].mxu0
        %v1431 = vadd.f32 0.0, %v1430
        %v1432 = vpop.f32.mrb[0].mxu0
        %1433 = vmatprep.mubr.bf16.mxu0 0
        %1434 = vmatmul.mubr.bf16.gmra.mrb[0].mxu0 %v1246
        %v1435 = vpop.f32.mrb[0].mxu0
        %v1436 = vadd.f32 0.0, %v1435
        %v1437 = vpop.f32.mrb[0].mxu0
        %v1438 = vpop.f32.mrb[0].mxu0
        %v1439 = vadd.f32 0.0, %v1438
        %v1440 = vpop.f32.mrb[0].mxu0
        %1441 = vmatprep.mubr.bf16.mxu0 0
        %1442 = vmatmul.mubr.bf16.gmra.mrb[0].mxu0 %v1249
        %v1443 = vpop.f32.mrb[0].mxu0
        %v1444 = vadd.f32 0.0, %v1443
        %v1445 = vpop.f32.mrb[0].mxu0
        %v1446 = vpop.f32.mrb[0].mxu0
        %v1447 = vadd.f32 0.0, %v1446
        %v1448 = vpop.f32.mrb[0].mxu0
        %1449 = vmatprep.mubr.bf16.mxu0 0
        %1450 = vmatmul.mubr.bf16.gmra.mrb[0].mxu0 %v1252
        %v1451 = vpop.f32.mrb[0].mxu0
        %v1452 = vadd.f32 0.0, %v1451
        %v1453 = vpop.f32.mrb[0].mxu0
        %v1454 = vpop.f32.mrb[0].mxu0
        %v1455 = vadd.f32 0.0, %v1454
        %v1456 = vpop.f32.mrb[0].mxu0
        %1457 = vmatprep.mubr.bf16.mxu0 0
        %1458 = vmatmul.mubr.bf16.gmra.mrb[0].mxu0 %v1255
        %v1459 = vpop.f32.mrb[0].mxu0
        %v1460 = vadd.f32 0.0, %v1459
        %v1461 = vpop.f32.mrb[0].mxu0
        %v1462 = vpop.f32.mrb[0].mxu0
        %v1463 = vadd.f32 0.0, %v1462
        %v1464 = vpop.f32.mrb[0].mxu0
        %1465 = vmatprep.mubr.bf16.mxu0 0
        %1466 = vmatmul.mubr.bf16.gmra.mrb[0].mxu0 %v1258
        %v1467 = vpop.f32.mrb[0].mxu0
        %v1468 = vadd.f32 0.0, %v1467
        %v1469 = vpop.f32.mrb[0].mxu0
        %v1470 = vpop.f32.mrb[0].mxu0
        %v1471 = vadd.f32 0.0, %v1470
        %v1472 = vpop.f32.mrb[0].mxu0
        %1473 = vmatprep.mubr.bf16.mxu0 0
        %1474 = vmatmul.mubr.bf16.gmra.mrb[0].mxu0 %v1261
        %v1475 = vpop.f32.mrb[0].mxu0
        %v1476 = vadd.f32 0.0, %v1475
        %v1477 = vpop.f32.mrb[0].mxu0
        %v1478 = vpop.f32.mrb[0].mxu0
        %v1479 = vadd.f32 0.0, %v1478
        %v1480 = vpop.f32.mrb[0].mxu0
        %1481 = vdwg.mxu0
        %v1482 = vld [vmem:[#allocation2] sm:$0xff]
        %v1483 = vld [vmem:[#allocation2 + $0x8] sm:$0xff]
        %v1484 = vld [vmem:[#allocation2 + $0x10] sm:$0xff]
        %v1485 = vld [vmem:[#allocation2 + $0x18] sm:$0xff]
        %v1486 = vld [vmem:[#allocation2 + $0x20] sm:$0xff]
        %v1487 = vld [vmem:[#allocation2 + $0x28] sm:$0xff]
        %v1488 = vld [vmem:[#allocation2 + $0x30] sm:$0xff]
        %v1489 = vld [vmem:[#allocation2 + $0x38] sm:$0xff]
        %v1490 = vld [vmem:[#allocation2 + $0x40] sm:$0xff]
        %v1491 = vld [vmem:[#allocation2 + $0x48] sm:$0xff]
        %v1492 = vld [vmem:[#allocation2 + $0x50] sm:$0xff]
        %v1493 = vld [vmem:[#allocation2 + $0x58] sm:$0xff]
        %v1494 = vld [vmem:[#allocation2 + $0x60] sm:$0xff]
        %v1495 = vld [vmem:[#allocation2 + $0x68] sm:$0xff]
        %v1496 = vld [vmem:[#allocation2 + $0x70] sm:$0xff]
        %v1497 = vld [vmem:[#allocation2 + $0x78] sm:$0xff]
        %v1498 = vld [vmem:[#allocation2 + $0x80] sm:$0xff]
        %v1499 = vld [vmem:[#allocation2 + $0x88] sm:$0xff]
        %v1500 = vld [vmem:[#allocation2 + $0x90] sm:$0xff]
        %v1501 = vld [vmem:[#allocation2 + $0x98] sm:$0xff]
        %v1502 = vld [vmem:[#allocation2 + $0xa0] sm:$0xff]
        %v1503 = vld [vmem:[#allocation2 + $0xa8] sm:$0xff]
        %v1504 = vld [vmem:[#allocation2 + $0xb0] sm:$0xff]
        %v1505 = vld [vmem:[#allocation2 + $0xb8] sm:$0xff]
        %v1506 = vld [vmem:[#allocation2 + $0xc0] sm:$0xff]
        %v1507 = vld [vmem:[#allocation2 + $0xc8] sm:$0xff]
        %v1508 = vld [vmem:[#allocation2 + $0xd0] sm:$0xff]
        %v1509 = vld [vmem:[#allocation2 + $0xd8] sm:$0xff]
        %v1510 = vld [vmem:[#allocation2 + $0xe0] sm:$0xff]
        %v1511 = vld [vmem:[#allocation2 + $0xe8] sm:$0xff]
        %v1512 = vld [vmem:[#allocation2 + $0xf0] sm:$0xff]
        %v1513 = vld [vmem:[#allocation2 + $0xf8] sm:$0xff]
        %v1514 = vld [vmem:[#allocation2 + $0x100] sm:$0xff]
        %v1515 = vld [vmem:[#allocation2 + $0x108] sm:$0xff]
        %v1516 = vld [vmem:[#allocation2 + $0x110] sm:$0xff]
        %v1517 = vld [vmem:[#allocation2 + $0x118] sm:$0xff]
        %v1518 = vld [vmem:[#allocation2 + $0x120] sm:$0xff]
        %v1519 = vld [vmem:[#allocation2 + $0x128] sm:$0xff]
        %v1520 = vld [vmem:[#allocation2 + $0x130] sm:$0xff]
        %v1521 = vld [vmem:[#allocation2 + $0x138] sm:$0xff]
        %v1522 = vld [vmem:[#allocation2 + $0x140] sm:$0xff]
        %v1523 = vld [vmem:[#allocation2 + $0x148] sm:$0xff]
        %v1524 = vld [vmem:[#allocation2 + $0x150] sm:$0xff]
        %v1525 = vld [vmem:[#allocation2 + $0x158] sm:$0xff]
        %v1526 = vld [vmem:[#allocation2 + $0x160] sm:$0xff]
        %v1527 = vld [vmem:[#allocation2 + $0x168] sm:$0xff]
        %v1528 = vld [vmem:[#allocation2 + $0x170] sm:$0xff]
        %v1529 = vld [vmem:[#allocation2 + $0x178] sm:$0xff]
        %v1530 = vadd.f32 %v1482, %v1307
        %v1531 = vadd.f32 %v1483, %v1309
        %v1532 = vadd.f32 %v1484, %v1420
        %v1533 = vadd.f32 %v1485, %v1311
        %v1534 = vadd.f32 %v1486, %v1313
        %v1535 = vadd.f32 %v1487, %v1423
        %v1536 = vadd.f32 %v1488, %v1317
        %v1537 = vadd.f32 %v1489, %v1319
        %v1538 = vadd.f32 %v1490, %v1428
        %v1539 = vadd.f32 %v1491, %v1321
        %v1540 = vadd.f32 %v1492, %v1323
        %v1541 = vadd.f32 %v1493, %v1431
        %v1542 = vadd.f32 %v1494, %v1327
        %v1543 = vadd.f32 %v1495, %v1329
        %v1544 = vadd.f32 %v1496, %v1436
        %v1545 = vadd.f32 %v1497, %v1331
        %v1546 = vadd.f32 %v1498, %v1333
        %v1547 = vadd.f32 %v1499, %v1439
        %v1548 = vadd.f32 %v1500, %v1337
        %v1549 = vadd.f32 %v1501, %v1339
        %v1550 = vadd.f32 %v1502, %v1444
        %v1551 = vadd.f32 %v1503, %v1341
        %v1552 = vadd.f32 %v1504, %v1343
        %v1553 = vadd.f32 %v1505, %v1447
        %v1554 = vadd.f32 %v1506, %v1347
        %v1555 = vadd.f32 %v1507, %v1349
        %v1556 = vadd.f32 %v1508, %v1452
        %v1557 = vadd.f32 %v1509, %v1351
        %v1558 = vadd.f32 %v1510, %v1353
        %v1559 = vadd.f32 %v1511, %v1455
        %v1560 = vadd.f32 %v1512, %v1357
        %v1561 = vadd.f32 %v1513, %v1359
        %v1562 = vadd.f32 %v1514, %v1460
        %v1563 = vadd.f32 %v1515, %v1361
        %v1564 = vadd.f32 %v1516, %v1363
        %v1565 = vadd.f32 %v1517, %v1463
        %v1566 = vadd.f32 %v1518, %v1367
        %v1567 = vadd.f32 %v1519, %v1369
        %v1568 = vadd.f32 %v1520, %v1468
        %v1569 = vadd.f32 %v1521, %v1371
        %v1570 = vadd.f32 %v1522, %v1373
        %v1571 = vadd.f32 %v1523, %v1471
        %v1572 = vadd.f32 %v1524, %v1377
        %v1573 = vadd.f32 %v1525, %v1379
        %v1574 = vadd.f32 %v1526, %v1476
        %v1575 = vadd.f32 %v1527, %v1381
        %v1576 = vadd.f32 %v1528, %v1383
        %v1577 = vadd.f32 %v1529, %v1479
        %1578 = vst [vmem:[#allocation2] sm:$0xff] %v1530
        %1579 = vst [vmem:[#allocation2 + $0x8] sm:$0xff] %v1531
        %1580 = vst.msk [vmem:[#allocation2 + $0x10] sm:$0xff] %vm673, %v1532
        %1581 = vst [vmem:[#allocation2 + $0x18] sm:$0xff] %v1533
        %1582 = vst [vmem:[#allocation2 + $0x20] sm:$0xff] %v1534
        %1583 = vst.msk [vmem:[#allocation2 + $0x28] sm:$0xff] %vm673, %v1535
        %1584 = vst [vmem:[#allocation2 + $0x30] sm:$0xff] %v1536
        %1585 = vst [vmem:[#allocation2 + $0x38] sm:$0xff] %v1537
        %1586 = vst.msk [vmem:[#allocation2 + $0x40] sm:$0xff] %vm673, %v1538
        %1587 = vst [vmem:[#allocation2 + $0x48] sm:$0xff] %v1539
        %1588 = vst [vmem:[#allocation2 + $0x50] sm:$0xff] %v1540
        %1589 = vst.msk [vmem:[#allocation2 + $0x58] sm:$0xff] %vm673, %v1541
        %1590 = vst [vmem:[#allocation2 + $0x60] sm:$0xff] %v1542
        %1591 = vst [vmem:[#allocation2 + $0x68] sm:$0xff] %v1543
        %1592 = vst.msk [vmem:[#allocation2 + $0x70] sm:$0xff] %vm673, %v1544
        %1593 = vst [vmem:[#allocation2 + $0x78] sm:$0xff] %v1545
        %1594 = vst [vmem:[#allocation2 + $0x80] sm:$0xff] %v1546
        %1595 = vst.msk [vmem:[#allocation2 + $0x88] sm:$0xff] %vm673, %v1547
        %1596 = vst [vmem:[#allocation2 + $0x90] sm:$0xff] %v1548
        %1597 = vst [vmem:[#allocation2 + $0x98] sm:$0xff] %v1549
        %1598 = vst.msk [vmem:[#allocation2 + $0xa0] sm:$0xff] %vm673, %v1550
        %1599 = vst [vmem:[#allocation2 + $0xa8] sm:$0xff] %v1551
        %1600 = vst [vmem:[#allocation2 + $0xb0] sm:$0xff] %v1552
        %1601 = vst.msk [vmem:[#allocation2 + $0xb8] sm:$0xff] %vm673, %v1553
        %1602 = vst [vmem:[#allocation2 + $0xc0] sm:$0xff] %v1554
        %1603 = vst [vmem:[#allocation2 + $0xc8] sm:$0xff] %v1555
        %1604 = vst.msk [vmem:[#allocation2 + $0xd0] sm:$0xff] %vm673, %v1556
        %1605 = vst [vmem:[#allocation2 + $0xd8] sm:$0xff] %v1557
        %1606 = vst [vmem:[#allocation2 + $0xe0] sm:$0xff] %v1558
        %1607 = vst.msk [vmem:[#allocation2 + $0xe8] sm:$0xff] %vm673, %v1559
        %1608 = vst [vmem:[#allocation2 + $0xf0] sm:$0xff] %v1560
        %1609 = vst [vmem:[#allocation2 + $0xf8] sm:$0xff] %v1561
        %1610 = vst.msk [vmem:[#allocation2 + $0x100] sm:$0xff] %vm673, %v1562
        %1611 = vst [vmem:[#allocation2 + $0x108] sm:$0xff] %v1563
        %1612 = vst [vmem:[#allocation2 + $0x110] sm:$0xff] %v1564
        %1613 = vst.msk [vmem:[#allocation2 + $0x118] sm:$0xff] %vm673, %v1565
        %1614 = vst [vmem:[#allocation2 + $0x120] sm:$0xff] %v1566
        %1615 = vst [vmem:[#allocation2 + $0x128] sm:$0xff] %v1567
        %1616 = vst.msk [vmem:[#allocation2 + $0x130] sm:$0xff] %vm673, %v1568
        %1617 = vst [vmem:[#allocation2 + $0x138] sm:$0xff] %v1569
        %1618 = vst [vmem:[#allocation2 + $0x140] sm:$0xff] %v1570
        %1619 = vst.msk [vmem:[#allocation2 + $0x148] sm:$0xff] %vm673, %v1571
        %1620 = vst [vmem:[#allocation2 + $0x150] sm:$0xff] %v1572
        %1621 = vst [vmem:[#allocation2 + $0x158] sm:$0xff] %v1573
        %1622 = vst.msk [vmem:[#allocation2 + $0x160] sm:$0xff] %vm673, %v1574
        %1623 = vst [vmem:[#allocation2 + $0x168] sm:$0xff] %v1575
        %1624 = vst [vmem:[#allocation2 + $0x170] sm:$0xff] %v1576
        %1625 = vst.msk [vmem:[#allocation2 + $0x178] sm:$0xff] %vm673, %v1577
        %s1626 = scalar_lea.vmem %s2, 192
        %v1627 = vld [vmem:[%s1626] sm:$0xf]
        %v1628 = vld [vmem:[%s1626 + $0x4] sm:$0xf]
        %v1629 = vld [vmem:[%s1626 + $0x8] sm:$0xf]
        %v1630 = vld [vmem:[%s1626 + $0xc] sm:$0xf]
        %v1631 = vld [vmem:[%s1626 + $0x10] sm:$0xf]
        %v1632 = vld [vmem:[%s1626 + $0x14] sm:$0xf]
        %v1633 = vld [vmem:[%s1626 + $0x18] sm:$0xf]
        %v1634 = vld [vmem:[%s1626 + $0x1c] sm:$0xf]
        %v1635 = vld [vmem:[%s1626 + $0x20] sm:$0xf]
        %v1636 = vld [vmem:[%s1626 + $0x24] sm:$0xf]
        %v1637 = vld [vmem:[%s1626 + $0x28] sm:$0xf]
        %v1638 = vld [vmem:[%s1626 + $0x2c] sm:$0xf]
        %v1639 = vld [vmem:[%s1626 + $0x30] sm:$0xf]
        %v1640 = vld [vmem:[%s1626 + $0x34] sm:$0xf]
        %v1641 = vld [vmem:[%s1626 + $0x38] sm:$0xf]
        %v1642 = vld [vmem:[%s1626 + $0x3c] sm:$0xf]
        %v1659 = vunpack.c.l.b16 %v1627
        %v1660 = vunpack.c.l.b16 %v1628
        %v1661 = vunpack.c.l.b16 %v1629
        %v1662 = vunpack.c.l.b16 %v1630
        %v1663 = vunpack.c.l.b16 %v1631
        %v1664 = vunpack.c.l.b16 %v1632
        %v1665 = vunpack.c.l.b16 %v1633
        %v1666 = vunpack.c.l.b16 %v1634
        %v1667 = vunpack.c.l.b16 %v1635
        %v1668 = vunpack.c.l.b16 %v1636
        %v1669 = vunpack.c.l.b16 %v1637
        %v1670 = vunpack.c.l.b16 %v1638
        %v1671 = vunpack.c.l.b16 %v1639
        %v1672 = vunpack.c.l.b16 %v1640
        %v1673 = vunpack.c.l.b16 %v1641
        %v1674 = vunpack.c.l.b16 %v1642
        %v1675 = vpack.c.b16 %v1660, %v1659
        %v1676 = vpack.c.b16 %v1662, %v1661
        %v1677 = vpack.c.b16 %v1664, %v1663
        %v1678 = vpack.c.b16 %v1666, %v1665
        %v1679 = vpack.c.b16 %v1668, %v1667
        %v1680 = vpack.c.b16 %v1670, %v1669
        %v1681 = vpack.c.b16 %v1672, %v1671
        %v1682 = vpack.c.b16 %v1674, %v1673
        %v1683 = vcombine.high %v424, %v424
        %1684 = vrot.lane.b32.xlu0 %v417, 108
        %v1685 = vpop.permute.xlu0 %1684
        %1686 = vrot.lane.b32.xlu0 %v425, 108
        %v1687 = vpop.permute.xlu0 %1686
        %1688 = vrot.lane.b32.xlu0 %v424, 108
        %v1689 = vpop.permute.xlu0 %1688
        %1690 = vrot.lane.b32.xlu0 %v1683, 108
        %v1691 = vpop.permute.xlu0 %1690
        %vm1692 = vcmask 883712
        %v1693 = vsel %vm1692, %v1685, %v1687
        %v1694 = vsel %vm1692, %v1687, %v1689
        %v1695 = vsel %vm1692, %v1689, %v1691
        %v1697 = vsel %vm426, %v1675, 0
        %v1700 = vsel %vm426, %v1676, 0
        %v1703 = vsel %vm426, %v1677, 0
        %v1706 = vsel %vm426, %v1678, 0
        %v1709 = vsel %vm426, %v1679, 0
        %v1712 = vsel %vm426, %v1680, 0
        %v1715 = vsel %vm426, %v1681, 0
        %v1718 = vsel %vm426, %v1682, 0
        %v1721 = vsel %vm451, %v1693, 0
        %v1724 = vsel %vm451, %v1694, 0
        %v1727 = vsel %vm451, %v1695, 0
        %1729 = vmatprep.subr.bf16.mxu0 %v1724
        %1730 = vmatpush1.bf16.msra.mxu0 %v1721
        %1731 = vmatprep.subr.bf16.mxu0 0
        %1732 = vmatpush1.bf16.msra.mxu0 0
        %1733 = vmatprep.subr.bf16.mxu0 0
        %1734 = vmatpush1.bf16.msra.mxu0 0
        %1735 = vmatprep.subr.bf16.mxu0 0
        %1736 = vmatpush1.bf16.msra.mxu0 0
        %1737 = vmatprep.subr.bf16.mxu0 0
        %1738 = vmatpush1.bf16.msra.mxu0 0
        %1739 = vmatprep.subr.bf16.mxu0 0
        %1740 = vmatpush1.bf16.msra.mxu0 0
        %1741 = vmatprep.subr.bf16.mxu0 0
        %1742 = vmatpush1.bf16.msra.mxu0 0
        %1743 = vmatprep.subr.bf16.mxu0 0
        %1744 = vmatpush1.bf16.msra.mxu0 0
        %1745 = vmatprep.subr.bf16.mxu0 0
        %1746 = vmatpush1.bf16.msra.mxu0 0
        %1747 = vmatprep.subr.bf16.mxu0 0
        %1748 = vmatpush1.bf16.msra.mxu0 0
        %1749 = vmatprep.subr.bf16.mxu0 0
        %1750 = vmatpush1.bf16.msra.mxu0 0
        %1751 = vmatprep.subr.bf16.mxu0 0
        %1752 = vmatpush1.bf16.msra.mxu0 0
        %1753 = vmatprep.subr.bf16.mxu0 0
        %1754 = vmatpush1.bf16.msra.mxu0 0
        %1755 = vmatprep.subr.bf16.mxu0 0
        %1756 = vmatpush1.bf16.msra.mxu0 0
        %1757 = vmatprep.subr.bf16.mxu0 0
        %1758 = vmatpush1.bf16.msra.mxu0 0
        %1759 = vmatprep.subr.bf16.mxu0 0
        %1760 = vmatpush1.bf16.msra.mxu0 0
        %1761 = vmatprep.mubr.bf16.mxu0 0
        %1762 = vmatmul.mubr.bf16.gmra.mrb[0].mxu0 %v1697
        %v1763 = vpop.f32.mrb[0].mxu0
        %v1764 = vadd.f32 0.0, %v1763
        %v1765 = vpop.f32.mrb[0].mxu0
        %v1766 = vadd.f32 0.0, %v1765
        %v1767 = vpop.f32.mrb[0].mxu0
        %v1768 = vadd.f32 0.0, %v1767
        %v1769 = vpop.f32.mrb[0].mxu0
        %v1770 = vadd.f32 0.0, %v1769
        %1771 = vmatprep.mubr.bf16.mxu0 0
        %1772 = vmatmul.mubr.bf16.gmra.mrb[0].mxu0 %v1700
        %v1773 = vpop.f32.mrb[0].mxu0
        %v1774 = vadd.f32 0.0, %v1773
        %v1775 = vpop.f32.mrb[0].mxu0
        %v1776 = vadd.f32 0.0, %v1775
        %v1777 = vpop.f32.mrb[0].mxu0
        %v1778 = vadd.f32 0.0, %v1777
        %v1779 = vpop.f32.mrb[0].mxu0
        %v1780 = vadd.f32 0.0, %v1779
        %1781 = vmatprep.mubr.bf16.mxu0 0
        %1782 = vmatmul.mubr.bf16.gmra.mrb[0].mxu0 %v1703
        %v1783 = vpop.f32.mrb[0].mxu0
        %v1784 = vadd.f32 0.0, %v1783
        %v1785 = vpop.f32.mrb[0].mxu0
        %v1786 = vadd.f32 0.0, %v1785
        %v1787 = vpop.f32.mrb[0].mxu0
        %v1788 = vadd.f32 0.0, %v1787
        %v1789 = vpop.f32.mrb[0].mxu0
        %v1790 = vadd.f32 0.0, %v1789
        %1791 = vmatprep.mubr.bf16.mxu0 0
        %1792 = vmatmul.mubr.bf16.gmra.mrb[0].mxu0 %v1706
        %v1793 = vpop.f32.mrb[0].mxu0
        %v1794 = vadd.f32 0.0, %v1793
        %v1795 = vpop.f32.mrb[0].mxu0
        %v1796 = vadd.f32 0.0, %v1795
        %v1797 = vpop.f32.mrb[0].mxu0
        %v1798 = vadd.f32 0.0, %v1797
        %v1799 = vpop.f32.mrb[0].mxu0
        %v1800 = vadd.f32 0.0, %v1799
        %1801 = vmatprep.mubr.bf16.mxu0 0
        %1802 = vmatmul.mubr.bf16.gmra.mrb[0].mxu0 %v1709
        %v1803 = vpop.f32.mrb[0].mxu0
        %v1804 = vadd.f32 0.0, %v1803
        %v1805 = vpop.f32.mrb[0].mxu0
        %v1806 = vadd.f32 0.0, %v1805
        %v1807 = vpop.f32.mrb[0].mxu0
        %v1808 = vadd.f32 0.0, %v1807
        %v1809 = vpop.f32.mrb[0].mxu0
        %v1810 = vadd.f32 0.0, %v1809
        %1811 = vmatprep.mubr.bf16.mxu0 0
        %1812 = vmatmul.mubr.bf16.gmra.mrb[0].mxu0 %v1712
        %v1813 = vpop.f32.mrb[0].mxu0
        %v1814 = vadd.f32 0.0, %v1813
        %v1815 = vpop.f32.mrb[0].mxu0
        %v1816 = vadd.f32 0.0, %v1815
        %v1817 = vpop.f32.mrb[0].mxu0
        %v1818 = vadd.f32 0.0, %v1817
        %v1819 = vpop.f32.mrb[0].mxu0
        %v1820 = vadd.f32 0.0, %v1819
        %1821 = vmatprep.mubr.bf16.mxu0 0
        %1822 = vmatmul.mubr.bf16.gmra.mrb[0].mxu0 %v1715
        %v1823 = vpop.f32.mrb[0].mxu0
        %v1824 = vadd.f32 0.0, %v1823
        %v1825 = vpop.f32.mrb[0].mxu0
        %v1826 = vadd.f32 0.0, %v1825
        %v1827 = vpop.f32.mrb[0].mxu0
        %v1828 = vadd.f32 0.0, %v1827
        %v1829 = vpop.f32.mrb[0].mxu0
        %v1830 = vadd.f32 0.0, %v1829
        %1831 = vmatprep.mubr.bf16.mxu0 0
        %1832 = vmatmul.mubr.bf16.gmra.mrb[0].mxu0 %v1718
        %v1833 = vpop.f32.mrb[0].mxu0
        %v1834 = vadd.f32 0.0, %v1833
        %v1835 = vpop.f32.mrb[0].mxu0
        %v1836 = vadd.f32 0.0, %v1835
        %v1837 = vpop.f32.mrb[0].mxu0
        %v1838 = vadd.f32 0.0, %v1837
        %v1839 = vpop.f32.mrb[0].mxu0
        %v1840 = vadd.f32 0.0, %v1839
        %1841 = vdwg.mxu0
        %1842 = vmatprep.subr.bf16.mxu0 0
        %1843 = vmatpush1.bf16.msra.mxu0 %v1727
        %1844 = vmatprep.subr.bf16.mxu0 0
        %1845 = vmatpush1.bf16.msra.mxu0 0
        %1846 = vmatprep.subr.bf16.mxu0 0
        %1847 = vmatpush1.bf16.msra.mxu0 0
        %1848 = vmatprep.subr.bf16.mxu0 0
        %1849 = vmatpush1.bf16.msra.mxu0 0
        %1850 = vmatprep.subr.bf16.mxu0 0
        %1851 = vmatpush1.bf16.msra.mxu0 0
        %1852 = vmatprep.subr.bf16.mxu0 0
        %1853 = vmatpush1.bf16.msra.mxu0 0
        %1854 = vmatprep.subr.bf16.mxu0 0
        %1855 = vmatpush1.bf16.msra.mxu0 0
        %1856 = vmatprep.subr.bf16.mxu0 0
        %1857 = vmatpush1.bf16.msra.mxu0 0
        %1858 = vmatprep.subr.bf16.mxu0 0
        %1859 = vmatpush1.bf16.msra.mxu0 0
        %1860 = vmatprep.subr.bf16.mxu0 0
        %1861 = vmatpush1.bf16.msra.mxu0 0
        %1862 = vmatprep.subr.bf16.mxu0 0
        %1863 = vmatpush1.bf16.msra.mxu0 0
        %1864 = vmatprep.subr.bf16.mxu0 0
        %1865 = vmatpush1.bf16.msra.mxu0 0
        %1866 = vmatprep.subr.bf16.mxu0 0
        %1867 = vmatpush1.bf16.msra.mxu0 0
        %1868 = vmatprep.subr.bf16.mxu0 0
        %1869 = vmatpush1.bf16.msra.mxu0 0
        %1870 = vmatprep.subr.bf16.mxu0 0
        %1871 = vmatpush1.bf16.msra.mxu0 0
        %1872 = vmatprep.subr.bf16.mxu0 0
        %1873 = vmatpush1.bf16.msra.mxu0 0
        %1874 = vmatprep.mubr.bf16.mxu0 0
        %1875 = vmatmul.mubr.bf16.gmra.mrb[0].mxu0 %v1697
        %v1876 = vpop.f32.mrb[0].mxu0
        %v1877 = vadd.f32 0.0, %v1876
        %v1878 = vpop.f32.mrb[0].mxu0
        %v1879 = vpop.f32.mrb[0].mxu0
        %v1880 = vadd.f32 0.0, %v1879
        %v1881 = vpop.f32.mrb[0].mxu0
        %1882 = vmatprep.mubr.bf16.mxu0 0
        %1883 = vmatmul.mubr.bf16.gmra.mrb[0].mxu0 %v1700
        %v1884 = vpop.f32.mrb[0].mxu0
        %v1885 = vadd.f32 0.0, %v1884
        %v1886 = vpop.f32.mrb[0].mxu0
        %v1887 = vpop.f32.mrb[0].mxu0
        %v1888 = vadd.f32 0.0, %v1887
        %v1889 = vpop.f32.mrb[0].mxu0
        %1890 = vmatprep.mubr.bf16.mxu0 0
        %1891 = vmatmul.mubr.bf16.gmra.mrb[0].mxu0 %v1703
        %v1892 = vpop.f32.mrb[0].mxu0
        %v1893 = vadd.f32 0.0, %v1892
        %v1894 = vpop.f32.mrb[0].mxu0
        %v1895 = vpop.f32.mrb[0].mxu0
        %v1896 = vadd.f32 0.0, %v1895
        %v1897 = vpop.f32.mrb[0].mxu0
        %1898 = vmatprep.mubr.bf16.mxu0 0
        %1899 = vmatmul.mubr.bf16.gmra.mrb[0].mxu0 %v1706
        %v1900 = vpop.f32.mrb[0].mxu0
        %v1901 = vadd.f32 0.0, %v1900
        %v1902 = vpop.f32.mrb[0].mxu0
        %v1903 = vpop.f32.mrb[0].mxu0
        %v1904 = vadd.f32 0.0, %v1903
        %v1905 = vpop.f32.mrb[0].mxu0
        %1906 = vmatprep.mubr.bf16.mxu0 0
        %1907 = vmatmul.mubr.bf16.gmra.mrb[0].mxu0 %v1709
        %v1908 = vpop.f32.mrb[0].mxu0
        %v1909 = vadd.f32 0.0, %v1908
        %v1910 = vpop.f32.mrb[0].mxu0
        %v1911 = vpop.f32.mrb[0].mxu0
        %v1912 = vadd.f32 0.0, %v1911
        %v1913 = vpop.f32.mrb[0].mxu0
        %1914 = vmatprep.mubr.bf16.mxu0 0
        %1915 = vmatmul.mubr.bf16.gmra.mrb[0].mxu0 %v1712
        %v1916 = vpop.f32.mrb[0].mxu0
        %v1917 = vadd.f32 0.0, %v1916
        %v1918 = vpop.f32.mrb[0].mxu0
        %v1919 = vpop.f32.mrb[0].mxu0
        %v1920 = vadd.f32 0.0, %v1919
        %v1921 = vpop.f32.mrb[0].mxu0
        %1922 = vmatprep.mubr.bf16.mxu0 0
        %1923 = vmatmul.mubr.bf16.gmra.mrb[0].mxu0 %v1715
        %v1924 = vpop.f32.mrb[0].mxu0
        %v1925 = vadd.f32 0.0, %v1924
        %v1926 = vpop.f32.mrb[0].mxu0
        %v1927 = vpop.f32.mrb[0].mxu0
        %v1928 = vadd.f32 0.0, %v1927
        %v1929 = vpop.f32.mrb[0].mxu0
        %1930 = vmatprep.mubr.bf16.mxu0 0
        %1931 = vmatmul.mubr.bf16.gmra.mrb[0].mxu0 %v1718
        %v1932 = vpop.f32.mrb[0].mxu0
        %v1933 = vadd.f32 0.0, %v1932
        %v1934 = vpop.f32.mrb[0].mxu0
        %v1935 = vpop.f32.mrb[0].mxu0
        %v1936 = vadd.f32 0.0, %v1935
        %v1937 = vpop.f32.mrb[0].mxu0
        %1938 = vdwg.mxu0
        %v1939 = vld [vmem:[#allocation2] sm:$0xff]
        %v1940 = vld [vmem:[#allocation2 + $0x8] sm:$0xff]
        %v1941 = vld [vmem:[#allocation2 + $0x10] sm:$0xff]
        %v1942 = vld [vmem:[#allocation2 + $0x18] sm:$0xff]
        %v1943 = vld [vmem:[#allocation2 + $0x20] sm:$0xff]
        %v1944 = vld [vmem:[#allocation2 + $0x28] sm:$0xff]
        %v1945 = vld [vmem:[#allocation2 + $0x30] sm:$0xff]
        %v1946 = vld [vmem:[#allocation2 + $0x38] sm:$0xff]
        %v1947 = vld [vmem:[#allocation2 + $0x40] sm:$0xff]
        %v1948 = vld [vmem:[#allocation2 + $0x48] sm:$0xff]
        %v1949 = vld [vmem:[#allocation2 + $0x50] sm:$0xff]
        %v1950 = vld [vmem:[#allocation2 + $0x58] sm:$0xff]
        %v1951 = vld [vmem:[#allocation2 + $0x60] sm:$0xff]
        %v1952 = vld [vmem:[#allocation2 + $0x68] sm:$0xff]
        %v1953 = vld [vmem:[#allocation2 + $0x70] sm:$0xff]
        %v1954 = vld [vmem:[#allocation2 + $0x78] sm:$0xff]
        %v1955 = vld [vmem:[#allocation2 + $0x80] sm:$0xff]
        %v1956 = vld [vmem:[#allocation2 + $0x88] sm:$0xff]
        %v1957 = vld [vmem:[#allocation2 + $0x90] sm:$0xff]
        %v1958 = vld [vmem:[#allocation2 + $0x98] sm:$0xff]
        %v1959 = vld [vmem:[#allocation2 + $0xa0] sm:$0xff]
        %v1960 = vld [vmem:[#allocation2 + $0xa8] sm:$0xff]
        %v1961 = vld [vmem:[#allocation2 + $0xb0] sm:$0xff]
        %v1962 = vld [vmem:[#allocation2 + $0xb8] sm:$0xff]
        %v1963 = vld [vmem:[#allocation2 + $0xc0] sm:$0xff]
        %v1964 = vld [vmem:[#allocation2 + $0xc8] sm:$0xff]
        %v1965 = vld [vmem:[#allocation2 + $0xd0] sm:$0xff]
        %v1966 = vld [vmem:[#allocation2 + $0xd8] sm:$0xff]
        %v1967 = vld [vmem:[#allocation2 + $0xe0] sm:$0xff]
        %v1968 = vld [vmem:[#allocation2 + $0xe8] sm:$0xff]
        %v1969 = vld [vmem:[#allocation2 + $0xf0] sm:$0xff]
        %v1970 = vld [vmem:[#allocation2 + $0xf8] sm:$0xff]
        %v1971 = vld [vmem:[#allocation2 + $0x100] sm:$0xff]
        %v1972 = vld [vmem:[#allocation2 + $0x108] sm:$0xff]
        %v1973 = vld [vmem:[#allocation2 + $0x110] sm:$0xff]
        %v1974 = vld [vmem:[#allocation2 + $0x118] sm:$0xff]
        %v1975 = vld [vmem:[#allocation2 + $0x120] sm:$0xff]
        %v1976 = vld [vmem:[#allocation2 + $0x128] sm:$0xff]
        %v1977 = vld [vmem:[#allocation2 + $0x130] sm:$0xff]
        %v1978 = vld [vmem:[#allocation2 + $0x138] sm:$0xff]
        %v1979 = vld [vmem:[#allocation2 + $0x140] sm:$0xff]
        %v1980 = vld [vmem:[#allocation2 + $0x148] sm:$0xff]
        %v1981 = vld [vmem:[#allocation2 + $0x150] sm:$0xff]
        %v1982 = vld [vmem:[#allocation2 + $0x158] sm:$0xff]
        %v1983 = vld [vmem:[#allocation2 + $0x160] sm:$0xff]
        %v1984 = vld [vmem:[#allocation2 + $0x168] sm:$0xff]
        %v1985 = vld [vmem:[#allocation2 + $0x170] sm:$0xff]
        %v1986 = vld [vmem:[#allocation2 + $0x178] sm:$0xff]
        %v1987 = vadd.f32 %v1939, %v1764
        %v1988 = vadd.f32 %v1940, %v1766
        %v1989 = vadd.f32 %v1941, %v1877
        %v1990 = vadd.f32 %v1942, %v1768
        %v1991 = vadd.f32 %v1943, %v1770
        %v1992 = vadd.f32 %v1944, %v1880
        %v1993 = vadd.f32 %v1945, %v1774
        %v1994 = vadd.f32 %v1946, %v1776
        %v1995 = vadd.f32 %v1947, %v1885
        %v1996 = vadd.f32 %v1948, %v1778
        %v1997 = vadd.f32 %v1949, %v1780
        %v1998 = vadd.f32 %v1950, %v1888
        %v1999 = vadd.f32 %v1951, %v1784
        %v2000 = vadd.f32 %v1952, %v1786
        %v2001 = vadd.f32 %v1953, %v1893
        %v2002 = vadd.f32 %v1954, %v1788
        %v2003 = vadd.f32 %v1955, %v1790
        %v2004 = vadd.f32 %v1956, %v1896
        %v2005 = vadd.f32 %v1957, %v1794
        %v2006 = vadd.f32 %v1958, %v1796
        %v2007 = vadd.f32 %v1959, %v1901
        %v2008 = vadd.f32 %v1960, %v1798
        %v2009 = vadd.f32 %v1961, %v1800
        %v2010 = vadd.f32 %v1962, %v1904
        %v2011 = vadd.f32 %v1963, %v1804
        %v2012 = vadd.f32 %v1964, %v1806
        %v2013 = vadd.f32 %v1965, %v1909
        %v2014 = vadd.f32 %v1966, %v1808
        %v2015 = vadd.f32 %v1967, %v1810
        %v2016 = vadd.f32 %v1968, %v1912
        %v2017 = vadd.f32 %v1969, %v1814
        %v2018 = vadd.f32 %v1970, %v1816
        %v2019 = vadd.f32 %v1971, %v1917
        %v2020 = vadd.f32 %v1972, %v1818
        %v2021 = vadd.f32 %v1973, %v1820
        %v2022 = vadd.f32 %v1974, %v1920
        %v2023 = vadd.f32 %v1975, %v1824
        %v2024 = vadd.f32 %v1976, %v1826
        %v2025 = vadd.f32 %v1977, %v1925
        %v2026 = vadd.f32 %v1978, %v1828
        %v2027 = vadd.f32 %v1979, %v1830
        %v2028 = vadd.f32 %v1980, %v1928
        %v2029 = vadd.f32 %v1981, %v1834
        %v2030 = vadd.f32 %v1982, %v1836
        %v2031 = vadd.f32 %v1983, %v1933
        %v2032 = vadd.f32 %v1984, %v1838
        %v2033 = vadd.f32 %v1985, %v1840
        %v2034 = vadd.f32 %v1986, %v1936
        %2035 = vst [vmem:[#allocation2] sm:$0xff] %v1987
        %2036 = vst [vmem:[#allocation2 + $0x8] sm:$0xff] %v1988
        %2037 = vst.msk [vmem:[#allocation2 + $0x10] sm:$0xff] %vm673, %v1989
        %2038 = vst [vmem:[#allocation2 + $0x18] sm:$0xff] %v1990
        %2039 = vst [vmem:[#allocation2 + $0x20] sm:$0xff] %v1991
        %2040 = vst.msk [vmem:[#allocation2 + $0x28] sm:$0xff] %vm673, %v1992
        %2041 = vst [vmem:[#allocation2 + $0x30] sm:$0xff] %v1993
        %2042 = vst [vmem:[#allocation2 + $0x38] sm:$0xff] %v1994
        %2043 = vst.msk [vmem:[#allocation2 + $0x40] sm:$0xff] %vm673, %v1995
        %2044 = vst [vmem:[#allocation2 + $0x48] sm:$0xff] %v1996
        %2045 = vst [vmem:[#allocation2 + $0x50] sm:$0xff] %v1997
        %2046 = vst.msk [vmem:[#allocation2 + $0x58] sm:$0xff] %vm673, %v1998
        %2047 = vst [vmem:[#allocation2 + $0x60] sm:$0xff] %v1999
        %2048 = vst [vmem:[#allocation2 + $0x68] sm:$0xff] %v2000
        %2049 = vst.msk [vmem:[#allocation2 + $0x70] sm:$0xff] %vm673, %v2001
        %2050 = vst [vmem:[#allocation2 + $0x78] sm:$0xff] %v2002
        %2051 = vst [vmem:[#allocation2 + $0x80] sm:$0xff] %v2003
        %2052 = vst.msk [vmem:[#allocation2 + $0x88] sm:$0xff] %vm673, %v2004
        %2053 = vst [vmem:[#allocation2 + $0x90] sm:$0xff] %v2005
        %2054 = vst [vmem:[#allocation2 + $0x98] sm:$0xff] %v2006
        %2055 = vst.msk [vmem:[#allocation2 + $0xa0] sm:$0xff] %vm673, %v2007
        %2056 = vst [vmem:[#allocation2 + $0xa8] sm:$0xff] %v2008
        %2057 = vst [vmem:[#allocation2 + $0xb0] sm:$0xff] %v2009
        %2058 = vst.msk [vmem:[#allocation2 + $0xb8] sm:$0xff] %vm673, %v2010
        %2059 = vst [vmem:[#allocation2 + $0xc0] sm:$0xff] %v2011
        %2060 = vst [vmem:[#allocation2 + $0xc8] sm:$0xff] %v2012
        %2061 = vst.msk [vmem:[#allocation2 + $0xd0] sm:$0xff] %vm673, %v2013
        %2062 = vst [vmem:[#allocation2 + $0xd8] sm:$0xff] %v2014
        %2063 = vst [vmem:[#allocation2 + $0xe0] sm:$0xff] %v2015
        %2064 = vst.msk [vmem:[#allocation2 + $0xe8] sm:$0xff] %vm673, %v2016
        %2065 = vst [vmem:[#allocation2 + $0xf0] sm:$0xff] %v2017
        %2066 = vst [vmem:[#allocation2 + $0xf8] sm:$0xff] %v2018
        %2067 = vst.msk [vmem:[#allocation2 + $0x100] sm:$0xff] %vm673, %v2019
        %2068 = vst [vmem:[#allocation2 + $0x108] sm:$0xff] %v2020
        %2069 = vst [vmem:[#allocation2 + $0x110] sm:$0xff] %v2021
        %2070 = vst.msk [vmem:[#allocation2 + $0x118] sm:$0xff] %vm673, %v2022
        %2071 = vst [vmem:[#allocation2 + $0x120] sm:$0xff] %v2023
        %2072 = vst [vmem:[#allocation2 + $0x128] sm:$0xff] %v2024
        %2073 = vst.msk [vmem:[#allocation2 + $0x130] sm:$0xff] %vm673, %v2025
        %2074 = vst [vmem:[#allocation2 + $0x138] sm:$0xff] %v2026
        %2075 = vst [vmem:[#allocation2 + $0x140] sm:$0xff] %v2027
        %2076 = vst.msk [vmem:[#allocation2 + $0x148] sm:$0xff] %vm673, %v2028
        %2077 = vst [vmem:[#allocation2 + $0x150] sm:$0xff] %v2029
        %2078 = vst [vmem:[#allocation2 + $0x158] sm:$0xff] %v2030
        %2079 = vst.msk [vmem:[#allocation2 + $0x160] sm:$0xff] %vm673, %v2031
        %2080 = vst [vmem:[#allocation2 + $0x168] sm:$0xff] %v2032
        %2081 = vst [vmem:[#allocation2 + $0x170] sm:$0xff] %v2033
        %2082 = vst.msk [vmem:[#allocation2 + $0x178] sm:$0xff] %vm673, %v2034
        %s2083 = scalar_lea.vmem %s2, 256
        %v2084 = vld [vmem:[%s2083] sm:$0xf]
        %v2085 = vld [vmem:[%s2083 + $0x4] sm:$0xf]
        %v2086 = vld [vmem:[%s2083 + $0x8] sm:$0xf]
        %v2087 = vld [vmem:[%s2083 + $0xc] sm:$0xf]
        %v2088 = vld [vmem:[%s2083 + $0x10] sm:$0xf]
        %v2089 = vld [vmem:[%s2083 + $0x14] sm:$0xf]
        %v2090 = vld [vmem:[%s2083 + $0x18] sm:$0xf]
        %v2091 = vld [vmem:[%s2083 + $0x1c] sm:$0xf]
        %v2092 = vld [vmem:[%s2083 + $0x20] sm:$0xf]
        %v2093 = vld [vmem:[%s2083 + $0x24] sm:$0xf]
        %v2094 = vld [vmem:[%s2083 + $0x28] sm:$0xf]
        %v2095 = vld [vmem:[%s2083 + $0x2c] sm:$0xf]
        %v2096 = vld [vmem:[%s2083 + $0x30] sm:$0xf]
        %v2097 = vld [vmem:[%s2083 + $0x34] sm:$0xf]
        %v2098 = vld [vmem:[%s2083 + $0x38] sm:$0xf]
        %v2099 = vld [vmem:[%s2083 + $0x3c] sm:$0xf]
        %v2116 = vunpack.c.l.b16 %v2084
        %v2117 = vunpack.c.l.b16 %v2085
        %v2118 = vunpack.c.l.b16 %v2086
        %v2119 = vunpack.c.l.b16 %v2087
        %v2120 = vunpack.c.l.b16 %v2088
        %v2121 = vunpack.c.l.b16 %v2089
        %v2122 = vunpack.c.l.b16 %v2090
        %v2123 = vunpack.c.l.b16 %v2091
        %v2124 = vunpack.c.l.b16 %v2092
        %v2125 = vunpack.c.l.b16 %v2093
        %v2126 = vunpack.c.l.b16 %v2094
        %v2127 = vunpack.c.l.b16 %v2095
        %v2128 = vunpack.c.l.b16 %v2096
        %v2129 = vunpack.c.l.b16 %v2097
        %v2130 = vunpack.c.l.b16 %v2098
        %v2131 = vunpack.c.l.b16 %v2099
        %v2132 = vpack.c.b16 %v2117, %v2116
        %v2133 = vpack.c.b16 %v2119, %v2118
        %v2134 = vpack.c.b16 %v2121, %v2120
        %v2135 = vpack.c.b16 %v2123, %v2122
        %v2136 = vpack.c.b16 %v2125, %v2124
        %v2137 = vpack.c.b16 %v2127, %v2126
        %v2138 = vpack.c.b16 %v2129, %v2128
        %v2139 = vpack.c.b16 %v2131, %v2130
        %2140 = vrot.lane.b32.xlu0 %v417, 107
        %v2141 = vpop.permute.xlu0 %2140
        %2142 = vrot.lane.b32.xlu0 %v425, 107
        %v2143 = vpop.permute.xlu0 %2142
        %2144 = vrot.lane.b32.xlu0 %v424, 107
        %v2145 = vpop.permute.xlu0 %2144
        %2146 = vrot.lane.b32.xlu0 %v1683, 107
        %v2147 = vpop.permute.xlu0 %2146
        %vm2148 = vcmask 875520
        %v2149 = vsel %vm2148, %v2141, %v2143
        %v2150 = vsel %vm2148, %v2143, %v2145
        %v2151 = vsel %vm2148, %v2145, %v2147
        %v2153 = vsel %vm426, %v2132, 0
        %v2156 = vsel %vm426, %v2133, 0
        %v2159 = vsel %vm426, %v2134, 0
        %v2162 = vsel %vm426, %v2135, 0
        %v2165 = vsel %vm426, %v2136, 0
        %v2168 = vsel %vm426, %v2137, 0
        %v2171 = vsel %vm426, %v2138, 0
        %v2174 = vsel %vm426, %v2139, 0
        %v2177 = vsel %vm451, %v2149, 0
        %v2180 = vsel %vm451, %v2150, 0
        %v2183 = vsel %vm451, %v2151, 0
        %2185 = vmatprep.subr.bf16.mxu0 %v2180
        %2186 = vmatpush1.bf16.msra.mxu0 %v2177
        %2187 = vmatprep.subr.bf16.mxu0 0
        %2188 = vmatpush1.bf16.msra.mxu0 0
        %2189 = vmatprep.subr.bf16.mxu0 0
        %2190 = vmatpush1.bf16.msra.mxu0 0
        %2191 = vmatprep.subr.bf16.mxu0 0
        %2192 = vmatpush1.bf16.msra.mxu0 0
        %2193 = vmatprep.subr.bf16.mxu0 0
        %2194 = vmatpush1.bf16.msra.mxu0 0
        %2195 = vmatprep.subr.bf16.mxu0 0
        %2196 = vmatpush1.bf16.msra.mxu0 0
        %2197 = vmatprep.subr.bf16.mxu0 0
        %2198 = vmatpush1.bf16.msra.mxu0 0
        %2199 = vmatprep.subr.bf16.mxu0 0
        %2200 = vmatpush1.bf16.msra.mxu0 0
        %2201 = vmatprep.subr.bf16.mxu0 0
        %2202 = vmatpush1.bf16.msra.mxu0 0
        %2203 = vmatprep.subr.bf16.mxu0 0
        %2204 = vmatpush1.bf16.msra.mxu0 0
        %2205 = vmatprep.subr.bf16.mxu0 0
        %2206 = vmatpush1.bf16.msra.mxu0 0
        %2207 = vmatprep.subr.bf16.mxu0 0
        %2208 = vmatpush1.bf16.msra.mxu0 0
        %2209 = vmatprep.subr.bf16.mxu0 0
        %2210 = vmatpush1.bf16.msra.mxu0 0
        %2211 = vmatprep.subr.bf16.mxu0 0
        %2212 = vmatpush1.bf16.msra.mxu0 0
        %2213 = vmatprep.subr.bf16.mxu0 0
        %2214 = vmatpush1.bf16.msra.mxu0 0
        %2215 = vmatprep.subr.bf16.mxu0 0
        %2216 = vmatpush1.bf16.msra.mxu0 0
        %2217 = vmatprep.mubr.bf16.mxu0 0
        %2218 = vmatmul.mubr.bf16.gmra.mrb[0].mxu0 %v2153
        %v2219 = vpop.f32.mrb[0].mxu0
        %v2220 = vadd.f32 0.0, %v2219
        %v2221 = vpop.f32.mrb[0].mxu0
        %v2222 = vadd.f32 0.0, %v2221
        %v2223 = vpop.f32.mrb[0].mxu0
        %v2224 = vadd.f32 0.0, %v2223
        %v2225 = vpop.f32.mrb[0].mxu0
        %v2226 = vadd.f32 0.0, %v2225
        %2227 = vmatprep.mubr.bf16.mxu0 0
        %2228 = vmatmul.mubr.bf16.gmra.mrb[0].mxu0 %v2156
        %v2229 = vpop.f32.mrb[0].mxu0
        %v2230 = vadd.f32 0.0, %v2229
        %v2231 = vpop.f32.mrb[0].mxu0
        %v2232 = vadd.f32 0.0, %v2231
        %v2233 = vpop.f32.mrb[0].mxu0
        %v2234 = vadd.f32 0.0, %v2233
        %v2235 = vpop.f32.mrb[0].mxu0
        %v2236 = vadd.f32 0.0, %v2235
        %2237 = vmatprep.mubr.bf16.mxu0 0
        %2238 = vmatmul.mubr.bf16.gmra.mrb[0].mxu0 %v2159
        %v2239 = vpop.f32.mrb[0].mxu0
        %v2240 = vadd.f32 0.0, %v2239
        %v2241 = vpop.f32.mrb[0].mxu0
        %v2242 = vadd.f32 0.0, %v2241
        %v2243 = vpop.f32.mrb[0].mxu0
        %v2244 = vadd.f32 0.0, %v2243
        %v2245 = vpop.f32.mrb[0].mxu0
        %v2246 = vadd.f32 0.0, %v2245
        %2247 = vmatprep.mubr.bf16.mxu0 0
        %2248 = vmatmul.mubr.bf16.gmra.mrb[0].mxu0 %v2162
        %v2249 = vpop.f32.mrb[0].mxu0
        %v2250 = vadd.f32 0.0, %v2249
        %v2251 = vpop.f32.mrb[0].mxu0
        %v2252 = vadd.f32 0.0, %v2251
        %v2253 = vpop.f32.mrb[0].mxu0
        %v2254 = vadd.f32 0.0, %v2253
        %v2255 = vpop.f32.mrb[0].mxu0
        %v2256 = vadd.f32 0.0, %v2255
        %2257 = vmatprep.mubr.bf16.mxu0 0
        %2258 = vmatmul.mubr.bf16.gmra.mrb[0].mxu0 %v2165
        %v2259 = vpop.f32.mrb[0].mxu0
        %v2260 = vadd.f32 0.0, %v2259
        %v2261 = vpop.f32.mrb[0].mxu0
        %v2262 = vadd.f32 0.0, %v2261
        %v2263 = vpop.f32.mrb[0].mxu0
        %v2264 = vadd.f32 0.0, %v2263
        %v2265 = vpop.f32.mrb[0].mxu0
        %v2266 = vadd.f32 0.0, %v2265
        %2267 = vmatprep.mubr.bf16.mxu0 0
        %2268 = vmatmul.mubr.bf16.gmra.mrb[0].mxu0 %v2168
        %v2269 = vpop.f32.mrb[0].mxu0
        %v2270 = vadd.f32 0.0, %v2269
        %v2271 = vpop.f32.mrb[0].mxu0
        %v2272 = vadd.f32 0.0, %v2271
        %v2273 = vpop.f32.mrb[0].mxu0
        %v2274 = vadd.f32 0.0, %v2273
        %v2275 = vpop.f32.mrb[0].mxu0
        %v2276 = vadd.f32 0.0, %v2275
        %2277 = vmatprep.mubr.bf16.mxu0 0
        %2278 = vmatmul.mubr.bf16.gmra.mrb[0].mxu0 %v2171
        %v2279 = vpop.f32.mrb[0].mxu0
        %v2280 = vadd.f32 0.0, %v2279
        %v2281 = vpop.f32.mrb[0].mxu0
        %v2282 = vadd.f32 0.0, %v2281
        %v2283 = vpop.f32.mrb[0].mxu0
        %v2284 = vadd.f32 0.0, %v2283
        %v2285 = vpop.f32.mrb[0].mxu0
        %v2286 = vadd.f32 0.0, %v2285
        %2287 = vmatprep.mubr.bf16.mxu0 0
        %2288 = vmatmul.mubr.bf16.gmra.mrb[0].mxu0 %v2174
        %v2289 = vpop.f32.mrb[0].mxu0
        %v2290 = vadd.f32 0.0, %v2289
        %v2291 = vpop.f32.mrb[0].mxu0
        %v2292 = vadd.f32 0.0, %v2291
        %v2293 = vpop.f32.mrb[0].mxu0
        %v2294 = vadd.f32 0.0, %v2293
        %v2295 = vpop.f32.mrb[0].mxu0
        %v2296 = vadd.f32 0.0, %v2295
        %2297 = vdwg.mxu0
        %2298 = vmatprep.subr.bf16.mxu0 0
        %2299 = vmatpush1.bf16.msra.mxu0 %v2183
        %2300 = vmatprep.subr.bf16.mxu0 0
        %2301 = vmatpush1.bf16.msra.mxu0 0
        %2302 = vmatprep.subr.bf16.mxu0 0
        %2303 = vmatpush1.bf16.msra.mxu0 0
        %2304 = vmatprep.subr.bf16.mxu0 0
        %2305 = vmatpush1.bf16.msra.mxu0 0
        %2306 = vmatprep.subr.bf16.mxu0 0
        %2307 = vmatpush1.bf16.msra.mxu0 0
        %2308 = vmatprep.subr.bf16.mxu0 0
        %2309 = vmatpush1.bf16.msra.mxu0 0
        %2310 = vmatprep.subr.bf16.mxu0 0
        %2311 = vmatpush1.bf16.msra.mxu0 0
        %2312 = vmatprep.subr.bf16.mxu0 0
        %2313 = vmatpush1.bf16.msra.mxu0 0
        %2314 = vmatprep.subr.bf16.mxu0 0
        %2315 = vmatpush1.bf16.msra.mxu0 0
        %2316 = vmatprep.subr.bf16.mxu0 0
        %2317 = vmatpush1.bf16.msra.mxu0 0
        %2318 = vmatprep.subr.bf16.mxu0 0
        %2319 = vmatpush1.bf16.msra.mxu0 0
        %2320 = vmatprep.subr.bf16.mxu0 0
        %2321 = vmatpush1.bf16.msra.mxu0 0
        %2322 = vmatprep.subr.bf16.mxu0 0
        %2323 = vmatpush1.bf16.msra.mxu0 0
        %2324 = vmatprep.subr.bf16.mxu0 0
        %2325 = vmatpush1.bf16.msra.mxu0 0
        %2326 = vmatprep.subr.bf16.mxu0 0
        %2327 = vmatpush1.bf16.msra.mxu0 0
        %2328 = vmatprep.subr.bf16.mxu0 0
        %2329 = vmatpush1.bf16.msra.mxu0 0
        %2330 = vmatprep.mubr.bf16.mxu0 0
        %2331 = vmatmul.mubr.bf16.gmra.mrb[0].mxu0 %v2153
        %v2332 = vpop.f32.mrb[0].mxu0
        %v2333 = vadd.f32 0.0, %v2332
        %v2334 = vpop.f32.mrb[0].mxu0
        %v2335 = vpop.f32.mrb[0].mxu0
        %v2336 = vadd.f32 0.0, %v2335
        %v2337 = vpop.f32.mrb[0].mxu0
        %2338 = vmatprep.mubr.bf16.mxu0 0
        %2339 = vmatmul.mubr.bf16.gmra.mrb[0].mxu0 %v2156
        %v2340 = vpop.f32.mrb[0].mxu0
        %v2341 = vadd.f32 0.0, %v2340
        %v2342 = vpop.f32.mrb[0].mxu0
        %v2343 = vpop.f32.mrb[0].mxu0
        %v2344 = vadd.f32 0.0, %v2343
        %v2345 = vpop.f32.mrb[0].mxu0
        %2346 = vmatprep.mubr.bf16.mxu0 0
        %2347 = vmatmul.mubr.bf16.gmra.mrb[0].mxu0 %v2159
        %v2348 = vpop.f32.mrb[0].mxu0
        %v2349 = vadd.f32 0.0, %v2348
        %v2350 = vpop.f32.mrb[0].mxu0
        %v2351 = vpop.f32.mrb[0].mxu0
        %v2352 = vadd.f32 0.0, %v2351
        %v2353 = vpop.f32.mrb[0].mxu0
        %2354 = vmatprep.mubr.bf16.mxu0 0
        %2355 = vmatmul.mubr.bf16.gmra.mrb[0].mxu0 %v2162
        %v2356 = vpop.f32.mrb[0].mxu0
        %v2357 = vadd.f32 0.0, %v2356
        %v2358 = vpop.f32.mrb[0].mxu0
        %v2359 = vpop.f32.mrb[0].mxu0
        %v2360 = vadd.f32 0.0, %v2359
        %v2361 = vpop.f32.mrb[0].mxu0
        %2362 = vmatprep.mubr.bf16.mxu0 0
        %2363 = vmatmul.mubr.bf16.gmra.mrb[0].mxu0 %v2165
        %v2364 = vpop.f32.mrb[0].mxu0
        %v2365 = vadd.f32 0.0, %v2364
        %v2366 = vpop.f32.mrb[0].mxu0
        %v2367 = vpop.f32.mrb[0].mxu0
        %v2368 = vadd.f32 0.0, %v2367
        %v2369 = vpop.f32.mrb[0].mxu0
        %2370 = vmatprep.mubr.bf16.mxu0 0
        %2371 = vmatmul.mubr.bf16.gmra.mrb[0].mxu0 %v2168
        %v2372 = vpop.f32.mrb[0].mxu0
        %v2373 = vadd.f32 0.0, %v2372
        %v2374 = vpop.f32.mrb[0].mxu0
        %v2375 = vpop.f32.mrb[0].mxu0
        %v2376 = vadd.f32 0.0, %v2375
        %v2377 = vpop.f32.mrb[0].mxu0
        %2378 = vmatprep.mubr.bf16.mxu0 0
        %2379 = vmatmul.mubr.bf16.gmra.mrb[0].mxu0 %v2171
        %v2380 = vpop.f32.mrb[0].mxu0
        %v2381 = vadd.f32 0.0, %v2380
        %v2382 = vpop.f32.mrb[0].mxu0
        %v2383 = vpop.f32.mrb[0].mxu0
        %v2384 = vadd.f32 0.0, %v2383
        %v2385 = vpop.f32.mrb[0].mxu0
        %2386 = vmatprep.mubr.bf16.mxu0 0
        %2387 = vmatmul.mubr.bf16.gmra.mrb[0].mxu0 %v2174
        %v2388 = vpop.f32.mrb[0].mxu0
        %v2389 = vadd.f32 0.0, %v2388
        %v2390 = vpop.f32.mrb[0].mxu0
        %v2391 = vpop.f32.mrb[0].mxu0
        %v2392 = vadd.f32 0.0, %v2391
        %v2393 = vpop.f32.mrb[0].mxu0
        %2394 = vdwg.mxu0
        %v2395 = vld [vmem:[#allocation2] sm:$0xff]
        %v2396 = vld [vmem:[#allocation2 + $0x8] sm:$0xff]
        %v2397 = vld [vmem:[#allocation2 + $0x10] sm:$0xff]
        %v2398 = vld [vmem:[#allocation2 + $0x18] sm:$0xff]
        %v2399 = vld [vmem:[#allocation2 + $0x20] sm:$0xff]
        %v2400 = vld [vmem:[#allocation2 + $0x28] sm:$0xff]
        %v2401 = vld [vmem:[#allocation2 + $0x30] sm:$0xff]
        %v2402 = vld [vmem:[#allocation2 + $0x38] sm:$0xff]
        %v2403 = vld [vmem:[#allocation2 + $0x40] sm:$0xff]
        %v2404 = vld [vmem:[#allocation2 + $0x48] sm:$0xff]
        %v2405 = vld [vmem:[#allocation2 + $0x50] sm:$0xff]
        %v2406 = vld [vmem:[#allocation2 + $0x58] sm:$0xff]
        %v2407 = vld [vmem:[#allocation2 + $0x60] sm:$0xff]
        %v2408 = vld [vmem:[#allocation2 + $0x68] sm:$0xff]
        %v2409 = vld [vmem:[#allocation2 + $0x70] sm:$0xff]
        %v2410 = vld [vmem:[#allocation2 + $0x78] sm:$0xff]
        %v2411 = vld [vmem:[#allocation2 + $0x80] sm:$0xff]
        %v2412 = vld [vmem:[#allocation2 + $0x88] sm:$0xff]
        %v2413 = vld [vmem:[#allocation2 + $0x90] sm:$0xff]
        %v2414 = vld [vmem:[#allocation2 + $0x98] sm:$0xff]
        %v2415 = vld [vmem:[#allocation2 + $0xa0] sm:$0xff]
        %v2416 = vld [vmem:[#allocation2 + $0xa8] sm:$0xff]
        %v2417 = vld [vmem:[#allocation2 + $0xb0] sm:$0xff]
        %v2418 = vld [vmem:[#allocation2 + $0xb8] sm:$0xff]
        %v2419 = vld [vmem:[#allocation2 + $0xc0] sm:$0xff]
        %v2420 = vld [vmem:[#allocation2 + $0xc8] sm:$0xff]
        %v2421 = vld [vmem:[#allocation2 + $0xd0] sm:$0xff]
        %v2422 = vld [vmem:[#allocation2 + $0xd8] sm:$0xff]
        %v2423 = vld [vmem:[#allocation2 + $0xe0] sm:$0xff]
        %v2424 = vld [vmem:[#allocation2 + $0xe8] sm:$0xff]
        %v2425 = vld [vmem:[#allocation2 + $0xf0] sm:$0xff]
        %v2426 = vld [vmem:[#allocation2 + $0xf8] sm:$0xff]
        %v2427 = vld [vmem:[#allocation2 + $0x100] sm:$0xff]
        %v2428 = vld [vmem:[#allocation2 + $0x108] sm:$0xff]
        %v2429 = vld [vmem:[#allocation2 + $0x110] sm:$0xff]
        %v2430 = vld [vmem:[#allocation2 + $0x118] sm:$0xff]
        %v2431 = vld [vmem:[#allocation2 + $0x120] sm:$0xff]
        %v2432 = vld [vmem:[#allocation2 + $0x128] sm:$0xff]
        %v2433 = vld [vmem:[#allocation2 + $0x130] sm:$0xff]
        %v2434 = vld [vmem:[#allocation2 + $0x138] sm:$0xff]
        %v2435 = vld [vmem:[#allocation2 + $0x140] sm:$0xff]
        %v2436 = vld [vmem:[#allocation2 + $0x148] sm:$0xff]
        %v2437 = vld [vmem:[#allocation2 + $0x150] sm:$0xff]
        %v2438 = vld [vmem:[#allocation2 + $0x158] sm:$0xff]
        %v2439 = vld [vmem:[#allocation2 + $0x160] sm:$0xff]
        %v2440 = vld [vmem:[#allocation2 + $0x168] sm:$0xff]
        %v2441 = vld [vmem:[#allocation2 + $0x170] sm:$0xff]
        %v2442 = vld [vmem:[#allocation2 + $0x178] sm:$0xff]
        %v2443 = vadd.f32 %v2395, %v2220
        %v2444 = vadd.f32 %v2396, %v2222
        %v2445 = vadd.f32 %v2397, %v2333
        %v2446 = vadd.f32 %v2398, %v2224
        %v2447 = vadd.f32 %v2399, %v2226
        %v2448 = vadd.f32 %v2400, %v2336
        %v2449 = vadd.f32 %v2401, %v2230
        %v2450 = vadd.f32 %v2402, %v2232
        %v2451 = vadd.f32 %v2403, %v2341
        %v2452 = vadd.f32 %v2404, %v2234
        %v2453 = vadd.f32 %v2405, %v2236
        %v2454 = vadd.f32 %v2406, %v2344
        %v2455 = vadd.f32 %v2407, %v2240
        %v2456 = vadd.f32 %v2408, %v2242
        %v2457 = vadd.f32 %v2409, %v2349
        %v2458 = vadd.f32 %v2410, %v2244
        %v2459 = vadd.f32 %v2411, %v2246
        %v2460 = vadd.f32 %v2412, %v2352
        %v2461 = vadd.f32 %v2413, %v2250
        %v2462 = vadd.f32 %v2414, %v2252
        %v2463 = vadd.f32 %v2415, %v2357
        %v2464 = vadd.f32 %v2416, %v2254
        %v2465 = vadd.f32 %v2417, %v2256
        %v2466 = vadd.f32 %v2418, %v2360
        %v2467 = vadd.f32 %v2419, %v2260
        %v2468 = vadd.f32 %v2420, %v2262
        %v2469 = vadd.f32 %v2421, %v2365
        %v2470 = vadd.f32 %v2422, %v2264
        %v2471 = vadd.f32 %v2423, %v2266
        %v2472 = vadd.f32 %v2424, %v2368
        %v2473 = vadd.f32 %v2425, %v2270
        %v2474 = vadd.f32 %v2426, %v2272
        %v2475 = vadd.f32 %v2427, %v2373
        %v2476 = vadd.f32 %v2428, %v2274
        %v2477 = vadd.f32 %v2429, %v2276
        %v2478 = vadd.f32 %v2430, %v2376
        %v2479 = vadd.f32 %v2431, %v2280
        %v2480 = vadd.f32 %v2432, %v2282
        %v2481 = vadd.f32 %v2433, %v2381
        %v2482 = vadd.f32 %v2434, %v2284
        %v2483 = vadd.f32 %v2435, %v2286
        %v2484 = vadd.f32 %v2436, %v2384
        %v2485 = vadd.f32 %v2437, %v2290
        %v2486 = vadd.f32 %v2438, %v2292
        %v2487 = vadd.f32 %v2439, %v2389
        %v2488 = vadd.f32 %v2440, %v2294
        %v2489 = vadd.f32 %v2441, %v2296
        %v2490 = vadd.f32 %v2442, %v2392
        %2491 = vst [vmem:[#allocation2] sm:$0xff] %v2443
        %2492 = vst [vmem:[#allocation2 + $0x8] sm:$0xff] %v2444
        %2493 = vst.msk [vmem:[#allocation2 + $0x10] sm:$0xff] %vm673, %v2445
        %2494 = vst [vmem:[#allocation2 + $0x18] sm:$0xff] %v2446
        %2495 = vst [vmem:[#allocation2 + $0x20] sm:$0xff] %v2447
        %2496 = vst.msk [vmem:[#allocation2 + $0x28] sm:$0xff] %vm673, %v2448
        %2497 = vst [vmem:[#allocation2 + $0x30] sm:$0xff] %v2449
        %2498 = vst [vmem:[#allocation2 + $0x38] sm:$0xff] %v2450
        %2499 = vst.msk [vmem:[#allocation2 + $0x40] sm:$0xff] %vm673, %v2451
        %2500 = vst [vmem:[#allocation2 + $0x48] sm:$0xff] %v2452
        %2501 = vst [vmem:[#allocation2 + $0x50] sm:$0xff] %v2453
        %2502 = vst.msk [vmem:[#allocation2 + $0x58] sm:$0xff] %vm673, %v2454
        %2503 = vst [vmem:[#allocation2 + $0x60] sm:$0xff] %v2455
        %2504 = vst [vmem:[#allocation2 + $0x68] sm:$0xff] %v2456
        %2505 = vst.msk [vmem:[#allocation2 + $0x70] sm:$0xff] %vm673, %v2457
        %2506 = vst [vmem:[#allocation2 + $0x78] sm:$0xff] %v2458
        %2507 = vst [vmem:[#allocation2 + $0x80] sm:$0xff] %v2459
        %2508 = vst.msk [vmem:[#allocation2 + $0x88] sm:$0xff] %vm673, %v2460
        %2509 = vst [vmem:[#allocation2 + $0x90] sm:$0xff] %v2461
        %2510 = vst [vmem:[#allocation2 + $0x98] sm:$0xff] %v2462
        %2511 = vst.msk [vmem:[#allocation2 + $0xa0] sm:$0xff] %vm673, %v2463
        %2512 = vst [vmem:[#allocation2 + $0xa8] sm:$0xff] %v2464
        %2513 = vst [vmem:[#allocation2 + $0xb0] sm:$0xff] %v2465
        %2514 = vst.msk [vmem:[#allocation2 + $0xb8] sm:$0xff] %vm673, %v2466
        %2515 = vst [vmem:[#allocation2 + $0xc0] sm:$0xff] %v2467
        %2516 = vst [vmem:[#allocation2 + $0xc8] sm:$0xff] %v2468
        %2517 = vst.msk [vmem:[#allocation2 + $0xd0] sm:$0xff] %vm673, %v2469
        %2518 = vst [vmem:[#allocation2 + $0xd8] sm:$0xff] %v2470
        %2519 = vst [vmem:[#allocation2 + $0xe0] sm:$0xff] %v2471
        %2520 = vst.msk [vmem:[#allocation2 + $0xe8] sm:$0xff] %vm673, %v2472
        %2521 = vst [vmem:[#allocation2 + $0xf0] sm:$0xff] %v2473
        %2522 = vst [vmem:[#allocation2 + $0xf8] sm:$0xff] %v2474
        %2523 = vst.msk [vmem:[#allocation2 + $0x100] sm:$0xff] %vm673, %v2475
        %2524 = vst [vmem:[#allocation2 + $0x108] sm:$0xff] %v2476
        %2525 = vst [vmem:[#allocation2 + $0x110] sm:$0xff] %v2477
        %2526 = vst.msk [vmem:[#allocation2 + $0x118] sm:$0xff] %vm673, %v2478
        %2527 = vst [vmem:[#allocation2 + $0x120] sm:$0xff] %v2479
        %2528 = vst [vmem:[#allocation2 + $0x128] sm:$0xff] %v2480
        %2529 = vst.msk [vmem:[#allocation2 + $0x130] sm:$0xff] %vm673, %v2481
        %2530 = vst [vmem:[#allocation2 + $0x138] sm:$0xff] %v2482
        %2531 = vst [vmem:[#allocation2 + $0x140] sm:$0xff] %v2483
        %2532 = vst.msk [vmem:[#allocation2 + $0x148] sm:$0xff] %vm673, %v2484
        %2533 = vst [vmem:[#allocation2 + $0x150] sm:$0xff] %v2485
        %2534 = vst [vmem:[#allocation2 + $0x158] sm:$0xff] %v2486
        %2535 = vst.msk [vmem:[#allocation2 + $0x160] sm:$0xff] %vm673, %v2487
        %2536 = vst [vmem:[#allocation2 + $0x168] sm:$0xff] %v2488
        %2537 = vst [vmem:[#allocation2 + $0x170] sm:$0xff] %v2489
        %2538 = vst.msk [vmem:[#allocation2 + $0x178] sm:$0xff] %vm673, %v2490
        %s2539 = scalar_lea.vmem %s2, 320
        %v2540 = vld [vmem:[%s2539] sm:$0xf]
        %v2541 = vld [vmem:[%s2539 + $0x4] sm:$0xf]
        %v2542 = vld [vmem:[%s2539 + $0x8] sm:$0xf]
        %v2543 = vld [vmem:[%s2539 + $0xc] sm:$0xf]
        %v2544 = vld [vmem:[%s2539 + $0x10] sm:$0xf]
        %v2545 = vld [vmem:[%s2539 + $0x14] sm:$0xf]
        %v2546 = vld [vmem:[%s2539 + $0x18] sm:$0xf]
        %v2547 = vld [vmem:[%s2539 + $0x1c] sm:$0xf]
        %v2548 = vld [vmem:[%s2539 + $0x20] sm:$0xf]
        %v2549 = vld [vmem:[%s2539 + $0x24] sm:$0xf]
        %v2550 = vld [vmem:[%s2539 + $0x28] sm:$0xf]
        %v2551 = vld [vmem:[%s2539 + $0x2c] sm:$0xf]
        %v2552 = vld [vmem:[%s2539 + $0x30] sm:$0xf]
        %v2553 = vld [vmem:[%s2539 + $0x34] sm:$0xf]
        %v2554 = vld [vmem:[%s2539 + $0x38] sm:$0xf]
        %v2555 = vld [vmem:[%s2539 + $0x3c] sm:$0xf]
        %v2572 = vunpack.c.l.b16 %v2540
        %v2573 = vunpack.c.l.b16 %v2541
        %v2574 = vunpack.c.l.b16 %v2542
        %v2575 = vunpack.c.l.b16 %v2543
        %v2576 = vunpack.c.l.b16 %v2544
        %v2577 = vunpack.c.l.b16 %v2545
        %v2578 = vunpack.c.l.b16 %v2546
        %v2579 = vunpack.c.l.b16 %v2547
        %v2580 = vunpack.c.l.b16 %v2548
        %v2581 = vunpack.c.l.b16 %v2549
        %v2582 = vunpack.c.l.b16 %v2550
        %v2583 = vunpack.c.l.b16 %v2551
        %v2584 = vunpack.c.l.b16 %v2552
        %v2585 = vunpack.c.l.b16 %v2553
        %v2586 = vunpack.c.l.b16 %v2554
        %v2587 = vunpack.c.l.b16 %v2555
        %v2588 = vpack.c.b16 %v2573, %v2572
        %v2589 = vpack.c.b16 %v2575, %v2574
        %v2590 = vpack.c.b16 %v2577, %v2576
        %v2591 = vpack.c.b16 %v2579, %v2578
        %v2592 = vpack.c.b16 %v2581, %v2580
        %v2593 = vpack.c.b16 %v2583, %v2582
        %v2594 = vpack.c.b16 %v2585, %v2584
        %v2595 = vpack.c.b16 %v2587, %v2586
        %2596 = vrot.lane.b32.xlu0 %v417, 106
        %v2597 = vpop.permute.xlu0 %2596
        %2598 = vrot.lane.b32.xlu0 %v425, 106
        %v2599 = vpop.permute.xlu0 %2598
        %2600 = vrot.lane.b32.xlu0 %v424, 106
        %v2601 = vpop.permute.xlu0 %2600
        %2602 = vrot.lane.b32.xlu0 %v1683, 106
        %v2603 = vpop.permute.xlu0 %2602
        %vm2604 = vcmask 867328
        %v2605 = vsel %vm2604, %v2597, %v2599
        %v2606 = vsel %vm2604, %v2599, %v2601
        %v2607 = vsel %vm2604, %v2601, %v2603
        %v2609 = vsel %vm426, %v2588, 0
        %v2612 = vsel %vm426, %v2589, 0
        %v2615 = vsel %vm426, %v2590, 0
        %v2618 = vsel %vm426, %v2591, 0
        %v2621 = vsel %vm426, %v2592, 0
        %v2624 = vsel %vm426, %v2593, 0
        %v2627 = vsel %vm426, %v2594, 0
        %v2630 = vsel %vm426, %v2595, 0
        %v2633 = vsel %vm451, %v2605, 0
        %v2636 = vsel %vm451, %v2606, 0
        %v2639 = vsel %vm451, %v2607, 0
        %2641 = vmatprep.subr.bf16.mxu0 %v2636
        %2642 = vmatpush1.bf16.msra.mxu0 %v2633
        %2643 = vmatprep.subr.bf16.mxu0 0
        %2644 = vmatpush1.bf16.msra.mxu0 0
        %2645 = vmatprep.subr.bf16.mxu0 0
        %2646 = vmatpush1.bf16.msra.mxu0 0
        %2647 = vmatprep.subr.bf16.mxu0 0
        %2648 = vmatpush1.bf16.msra.mxu0 0
        %2649 = vmatprep.subr.bf16.mxu0 0
        %2650 = vmatpush1.bf16.msra.mxu0 0
        %2651 = vmatprep.subr.bf16.mxu0 0
        %2652 = vmatpush1.bf16.msra.mxu0 0
        %2653 = vmatprep.subr.bf16.mxu0 0
        %2654 = vmatpush1.bf16.msra.mxu0 0
        %2655 = vmatprep.subr.bf16.mxu0 0
        %2656 = vmatpush1.bf16.msra.mxu0 0
        %2657 = vmatprep.subr.bf16.mxu0 0
        %2658 = vmatpush1.bf16.msra.mxu0 0
        %2659 = vmatprep.subr.bf16.mxu0 0
        %2660 = vmatpush1.bf16.msra.mxu0 0
        %2661 = vmatprep.subr.bf16.mxu0 0
        %2662 = vmatpush1.bf16.msra.mxu0 0
        %2663 = vmatprep.subr.bf16.mxu0 0
        %2664 = vmatpush1.bf16.msra.mxu0 0
        %2665 = vmatprep.subr.bf16.mxu0 0
        %2666 = vmatpush1.bf16.msra.mxu0 0
        %2667 = vmatprep.subr.bf16.mxu0 0
        %2668 = vmatpush1.bf16.msra.mxu0 0
        %2669 = vmatprep.subr.bf16.mxu0 0
        %2670 = vmatpush1.bf16.msra.mxu0 0
        %2671 = vmatprep.subr.bf16.mxu0 0
        %2672 = vmatpush1.bf16.msra.mxu0 0
        %2673 = vmatprep.mubr.bf16.mxu0 0
        %2674 = vmatmul.mubr.bf16.gmra.mrb[0].mxu0 %v2609
        %v2675 = vpop.f32.mrb[0].mxu0
        %v2676 = vadd.f32 0.0, %v2675
        %v2677 = vpop.f32.mrb[0].mxu0
        %v2678 = vadd.f32 0.0, %v2677
        %v2679 = vpop.f32.mrb[0].mxu0
        %v2680 = vadd.f32 0.0, %v2679
        %v2681 = vpop.f32.mrb[0].mxu0
        %v2682 = vadd.f32 0.0, %v2681
        %2683 = vmatprep.mubr.bf16.mxu0 0
        %2684 = vmatmul.mubr.bf16.gmra.mrb[0].mxu0 %v2612
        %v2685 = vpop.f32.mrb[0].mxu0
        %v2686 = vadd.f32 0.0, %v2685
        %v2687 = vpop.f32.mrb[0].mxu0
        %v2688 = vadd.f32 0.0, %v2687
        %v2689 = vpop.f32.mrb[0].mxu0
        %v2690 = vadd.f32 0.0, %v2689
        %v2691 = vpop.f32.mrb[0].mxu0
        %v2692 = vadd.f32 0.0, %v2691
        %2693 = vmatprep.mubr.bf16.mxu0 0
        %2694 = vmatmul.mubr.bf16.gmra.mrb[0].mxu0 %v2615
        %v2695 = vpop.f32.mrb[0].mxu0
        %v2696 = vadd.f32 0.0, %v2695
        %v2697 = vpop.f32.mrb[0].mxu0
        %v2698 = vadd.f32 0.0, %v2697
        %v2699 = vpop.f32.mrb[0].mxu0
        %v2700 = vadd.f32 0.0, %v2699
        %v2701 = vpop.f32.mrb[0].mxu0
        %v2702 = vadd.f32 0.0, %v2701
        %2703 = vmatprep.mubr.bf16.mxu0 0
        %2704 = vmatmul.mubr.bf16.gmra.mrb[0].mxu0 %v2618
        %v2705 = vpop.f32.mrb[0].mxu0
        %v2706 = vadd.f32 0.0, %v2705
        %v2707 = vpop.f32.mrb[0].mxu0
        %v2708 = vadd.f32 0.0, %v2707
        %v2709 = vpop.f32.mrb[0].mxu0
        %v2710 = vadd.f32 0.0, %v2709
        %v2711 = vpop.f32.mrb[0].mxu0
        %v2712 = vadd.f32 0.0, %v2711
        %2713 = vmatprep.mubr.bf16.mxu0 0
        %2714 = vmatmul.mubr.bf16.gmra.mrb[0].mxu0 %v2621
        %v2715 = vpop.f32.mrb[0].mxu0
        %v2716 = vadd.f32 0.0, %v2715
        %v2717 = vpop.f32.mrb[0].mxu0
        %v2718 = vadd.f32 0.0, %v2717
        %v2719 = vpop.f32.mrb[0].mxu0
        %v2720 = vadd.f32 0.0, %v2719
        %v2721 = vpop.f32.mrb[0].mxu0
        %v2722 = vadd.f32 0.0, %v2721
        %2723 = vmatprep.mubr.bf16.mxu0 0
        %2724 = vmatmul.mubr.bf16.gmra.mrb[0].mxu0 %v2624
        %v2725 = vpop.f32.mrb[0].mxu0
        %v2726 = vadd.f32 0.0, %v2725
        %v2727 = vpop.f32.mrb[0].mxu0
        %v2728 = vadd.f32 0.0, %v2727
        %v2729 = vpop.f32.mrb[0].mxu0
        %v2730 = vadd.f32 0.0, %v2729
        %v2731 = vpop.f32.mrb[0].mxu0
        %v2732 = vadd.f32 0.0, %v2731
        %2733 = vmatprep.mubr.bf16.mxu0 0
        %2734 = vmatmul.mubr.bf16.gmra.mrb[0].mxu0 %v2627
        %v2735 = vpop.f32.mrb[0].mxu0
        %v2736 = vadd.f32 0.0, %v2735
        %v2737 = vpop.f32.mrb[0].mxu0
        %v2738 = vadd.f32 0.0, %v2737
        %v2739 = vpop.f32.mrb[0].mxu0
        %v2740 = vadd.f32 0.0, %v2739
        %v2741 = vpop.f32.mrb[0].mxu0
        %v2742 = vadd.f32 0.0, %v2741
        %2743 = vmatprep.mubr.bf16.mxu0 0
        %2744 = vmatmul.mubr.bf16.gmra.mrb[0].mxu0 %v2630
        %v2745 = vpop.f32.mrb[0].mxu0
        %v2746 = vadd.f32 0.0, %v2745
        %v2747 = vpop.f32.mrb[0].mxu0
        %v2748 = vadd.f32 0.0, %v2747
        %v2749 = vpop.f32.mrb[0].mxu0
        %v2750 = vadd.f32 0.0, %v2749
        %v2751 = vpop.f32.mrb[0].mxu0
        %v2752 = vadd.f32 0.0, %v2751
        %2753 = vdwg.mxu0
        %2754 = vmatprep.subr.bf16.mxu0 0
        %2755 = vmatpush1.bf16.msra.mxu0 %v2639
        %2756 = vmatprep.subr.bf16.mxu0 0
        %2757 = vmatpush1.bf16.msra.mxu0 0
        %2758 = vmatprep.subr.bf16.mxu0 0
        %2759 = vmatpush1.bf16.msra.mxu0 0
        %2760 = vmatprep.subr.bf16.mxu0 0
        %2761 = vmatpush1.bf16.msra.mxu0 0
        %2762 = vmatprep.subr.bf16.mxu0 0
        %2763 = vmatpush1.bf16.msra.mxu0 0
        %2764 = vmatprep.subr.bf16.mxu0 0
        %2765 = vmatpush1.bf16.msra.mxu0 0
        %2766 = vmatprep.subr.bf16.mxu0 0
        %2767 = vmatpush1.bf16.msra.mxu0 0
        %2768 = vmatprep.subr.bf16.mxu0 0
        %2769 = vmatpush1.bf16.msra.mxu0 0
        %2770 = vmatprep.subr.bf16.mxu0 0
        %2771 = vmatpush1.bf16.msra.mxu0 0
        %2772 = vmatprep.subr.bf16.mxu0 0
        %2773 = vmatpush1.bf16.msra.mxu0 0
        %2774 = vmatprep.subr.bf16.mxu0 0
        %2775 = vmatpush1.bf16.msra.mxu0 0
        %2776 = vmatprep.subr.bf16.mxu0 0
        %2777 = vmatpush1.bf16.msra.mxu0 0
        %2778 = vmatprep.subr.bf16.mxu0 0
        %2779 = vmatpush1.bf16.msra.mxu0 0
        %2780 = vmatprep.subr.bf16.mxu0 0
        %2781 = vmatpush1.bf16.msra.mxu0 0
        %2782 = vmatprep.subr.bf16.mxu0 0
        %2783 = vmatpush1.bf16.msra.mxu0 0
        %2784 = vmatprep.subr.bf16.mxu0 0
        %2785 = vmatpush1.bf16.msra.mxu0 0
        %2786 = vmatprep.mubr.bf16.mxu0 0
        %2787 = vmatmul.mubr.bf16.gmra.mrb[0].mxu0 %v2609
        %v2788 = vpop.f32.mrb[0].mxu0
        %v2789 = vadd.f32 0.0, %v2788
        %v2790 = vpop.f32.mrb[0].mxu0
        %v2791 = vpop.f32.mrb[0].mxu0
        %v2792 = vadd.f32 0.0, %v2791
        %v2793 = vpop.f32.mrb[0].mxu0
        %2794 = vmatprep.mubr.bf16.mxu0 0
        %2795 = vmatmul.mubr.bf16.gmra.mrb[0].mxu0 %v2612
        %v2796 = vpop.f32.mrb[0].mxu0
        %v2797 = vadd.f32 0.0, %v2796
        %v2798 = vpop.f32.mrb[0].mxu0
        %v2799 = vpop.f32.mrb[0].mxu0
        %v2800 = vadd.f32 0.0, %v2799
        %v2801 = vpop.f32.mrb[0].mxu0
        %2802 = vmatprep.mubr.bf16.mxu0 0
        %2803 = vmatmul.mubr.bf16.gmra.mrb[0].mxu0 %v2615
        %v2804 = vpop.f32.mrb[0].mxu0
        %v2805 = vadd.f32 0.0, %v2804
        %v2806 = vpop.f32.mrb[0].mxu0
        %v2807 = vpop.f32.mrb[0].mxu0
        %v2808 = vadd.f32 0.0, %v2807
        %v2809 = vpop.f32.mrb[0].mxu0
        %2810 = vmatprep.mubr.bf16.mxu0 0
        %2811 = vmatmul.mubr.bf16.gmra.mrb[0].mxu0 %v2618
        %v2812 = vpop.f32.mrb[0].mxu0
        %v2813 = vadd.f32 0.0, %v2812
        %v2814 = vpop.f32.mrb[0].mxu0
        %v2815 = vpop.f32.mrb[0].mxu0
        %v2816 = vadd.f32 0.0, %v2815
        %v2817 = vpop.f32.mrb[0].mxu0
        %2818 = vmatprep.mubr.bf16.mxu0 0
        %2819 = vmatmul.mubr.bf16.gmra.mrb[0].mxu0 %v2621
        %v2820 = vpop.f32.mrb[0].mxu0
        %v2821 = vadd.f32 0.0, %v2820
        %v2822 = vpop.f32.mrb[0].mxu0
        %v2823 = vpop.f32.mrb[0].mxu0
        %v2824 = vadd.f32 0.0, %v2823
        %v2825 = vpop.f32.mrb[0].mxu0
        %2826 = vmatprep.mubr.bf16.mxu0 0
        %2827 = vmatmul.mubr.bf16.gmra.mrb[0].mxu0 %v2624
        %v2828 = vpop.f32.mrb[0].mxu0
        %v2829 = vadd.f32 0.0, %v2828
        %v2830 = vpop.f32.mrb[0].mxu0
        %v2831 = vpop.f32.mrb[0].mxu0
        %v2832 = vadd.f32 0.0, %v2831
        %v2833 = vpop.f32.mrb[0].mxu0
        %2834 = vmatprep.mubr.bf16.mxu0 0
        %2835 = vmatmul.mubr.bf16.gmra.mrb[0].mxu0 %v2627
        %v2836 = vpop.f32.mrb[0].mxu0
        %v2837 = vadd.f32 0.0, %v2836
        %v2838 = vpop.f32.mrb[0].mxu0
        %v2839 = vpop.f32.mrb[0].mxu0
        %v2840 = vadd.f32 0.0, %v2839
        %v2841 = vpop.f32.mrb[0].mxu0
        %2842 = vmatprep.mubr.bf16.mxu0 0
        %2843 = vmatmul.mubr.bf16.gmra.mrb[0].mxu0 %v2630
        %v2844 = vpop.f32.mrb[0].mxu0
        %v2845 = vadd.f32 0.0, %v2844
        %v2846 = vpop.f32.mrb[0].mxu0
        %v2847 = vpop.f32.mrb[0].mxu0
        %v2848 = vadd.f32 0.0, %v2847
        %v2849 = vpop.f32.mrb[0].mxu0
        %2850 = vdwg.mxu0
        %v2851 = vld [vmem:[#allocation2] sm:$0xff]
        %v2852 = vld [vmem:[#allocation2 + $0x8] sm:$0xff]
        %v2853 = vld [vmem:[#allocation2 + $0x10] sm:$0xff]
        %v2854 = vld [vmem:[#allocation2 + $0x18] sm:$0xff]
        %v2855 = vld [vmem:[#allocation2 + $0x20] sm:$0xff]
        %v2856 = vld [vmem:[#allocation2 + $0x28] sm:$0xff]
        %v2857 = vld [vmem:[#allocation2 + $0x30] sm:$0xff]
        %v2858 = vld [vmem:[#allocation2 + $0x38] sm:$0xff]
        %v2859 = vld [vmem:[#allocation2 + $0x40] sm:$0xff]
        %v2860 = vld [vmem:[#allocation2 + $0x48] sm:$0xff]
        %v2861 = vld [vmem:[#allocation2 + $0x50] sm:$0xff]
        %v2862 = vld [vmem:[#allocation2 + $0x58] sm:$0xff]
        %v2863 = vld [vmem:[#allocation2 + $0x60] sm:$0xff]
        %v2864 = vld [vmem:[#allocation2 + $0x68] sm:$0xff]
        %v2865 = vld [vmem:[#allocation2 + $0x70] sm:$0xff]
        %v2866 = vld [vmem:[#allocation2 + $0x78] sm:$0xff]
        %v2867 = vld [vmem:[#allocation2 + $0x80] sm:$0xff]
        %v2868 = vld [vmem:[#allocation2 + $0x88] sm:$0xff]
        %v2869 = vld [vmem:[#allocation2 + $0x90] sm:$0xff]
        %v2870 = vld [vmem:[#allocation2 + $0x98] sm:$0xff]
        %v2871 = vld [vmem:[#allocation2 + $0xa0] sm:$0xff]
        %v2872 = vld [vmem:[#allocation2 + $0xa8] sm:$0xff]
        %v2873 = vld [vmem:[#allocation2 + $0xb0] sm:$0xff]
        %v2874 = vld [vmem:[#allocation2 + $0xb8] sm:$0xff]
        %v2875 = vld [vmem:[#allocation2 + $0xc0] sm:$0xff]
        %v2876 = vld [vmem:[#allocation2 + $0xc8] sm:$0xff]
        %v2877 = vld [vmem:[#allocation2 + $0xd0] sm:$0xff]
        %v2878 = vld [vmem:[#allocation2 + $0xd8] sm:$0xff]
        %v2879 = vld [vmem:[#allocation2 + $0xe0] sm:$0xff]
        %v2880 = vld [vmem:[#allocation2 + $0xe8] sm:$0xff]
        %v2881 = vld [vmem:[#allocation2 + $0xf0] sm:$0xff]
        %v2882 = vld [vmem:[#allocation2 + $0xf8] sm:$0xff]
        %v2883 = vld [vmem:[#allocation2 + $0x100] sm:$0xff]
        %v2884 = vld [vmem:[#allocation2 + $0x108] sm:$0xff]
        %v2885 = vld [vmem:[#allocation2 + $0x110] sm:$0xff]
        %v2886 = vld [vmem:[#allocation2 + $0x118] sm:$0xff]
        %v2887 = vld [vmem:[#allocation2 + $0x120] sm:$0xff]
        %v2888 = vld [vmem:[#allocation2 + $0x128] sm:$0xff]
        %v2889 = vld [vmem:[#allocation2 + $0x130] sm:$0xff]
        %v2890 = vld [vmem:[#allocation2 + $0x138] sm:$0xff]
        %v2891 = vld [vmem:[#allocation2 + $0x140] sm:$0xff]
        %v2892 = vld [vmem:[#allocation2 + $0x148] sm:$0xff]
        %v2893 = vld [vmem:[#allocation2 + $0x150] sm:$0xff]
        %v2894 = vld [vmem:[#allocation2 + $0x158] sm:$0xff]
        %v2895 = vld [vmem:[#allocation2 + $0x160] sm:$0xff]
        %v2896 = vld [vmem:[#allocation2 + $0x168] sm:$0xff]
        %v2897 = vld [vmem:[#allocation2 + $0x170] sm:$0xff]
        %v2898 = vld [vmem:[#allocation2 + $0x178] sm:$0xff]
        %v2899 = vadd.f32 %v2851, %v2676
        %v2900 = vadd.f32 %v2852, %v2678
        %v2901 = vadd.f32 %v2853, %v2789
        %v2902 = vadd.f32 %v2854, %v2680
        %v2903 = vadd.f32 %v2855, %v2682
        %v2904 = vadd.f32 %v2856, %v2792
        %v2905 = vadd.f32 %v2857, %v2686
        %v2906 = vadd.f32 %v2858, %v2688
        %v2907 = vadd.f32 %v2859, %v2797
        %v2908 = vadd.f32 %v2860, %v2690
        %v2909 = vadd.f32 %v2861, %v2692
        %v2910 = vadd.f32 %v2862, %v2800
        %v2911 = vadd.f32 %v2863, %v2696
        %v2912 = vadd.f32 %v2864, %v2698
        %v2913 = vadd.f32 %v2865, %v2805
        %v2914 = vadd.f32 %v2866, %v2700
        %v2915 = vadd.f32 %v2867, %v2702
        %v2916 = vadd.f32 %v2868, %v2808
        %v2917 = vadd.f32 %v2869, %v2706
        %v2918 = vadd.f32 %v2870, %v2708
        %v2919 = vadd.f32 %v2871, %v2813
        %v2920 = vadd.f32 %v2872, %v2710
        %v2921 = vadd.f32 %v2873, %v2712
        %v2922 = vadd.f32 %v2874, %v2816
        %v2923 = vadd.f32 %v2875, %v2716
        %v2924 = vadd.f32 %v2876, %v2718
        %v2925 = vadd.f32 %v2877, %v2821
        %v2926 = vadd.f32 %v2878, %v2720
        %v2927 = vadd.f32 %v2879, %v2722
        %v2928 = vadd.f32 %v2880, %v2824
        %v2929 = vadd.f32 %v2881, %v2726
        %v2930 = vadd.f32 %v2882, %v2728
        %v2931 = vadd.f32 %v2883, %v2829
        %v2932 = vadd.f32 %v2884, %v2730
        %v2933 = vadd.f32 %v2885, %v2732
        %v2934 = vadd.f32 %v2886, %v2832
        %v2935 = vadd.f32 %v2887, %v2736
        %v2936 = vadd.f32 %v2888, %v2738
        %v2937 = vadd.f32 %v2889, %v2837
        %v2938 = vadd.f32 %v2890, %v2740
        %v2939 = vadd.f32 %v2891, %v2742
        %v2940 = vadd.f32 %v2892, %v2840
        %v2941 = vadd.f32 %v2893, %v2746
        %v2942 = vadd.f32 %v2894, %v2748
        %v2943 = vadd.f32 %v2895, %v2845
        %v2944 = vadd.f32 %v2896, %v2750
        %v2945 = vadd.f32 %v2897, %v2752
        %v2946 = vadd.f32 %v2898, %v2848
        %2947 = vst [vmem:[#allocation2] sm:$0xff] %v2899
        %2948 = vst [vmem:[#allocation2 + $0x8] sm:$0xff] %v2900
        %2949 = vst.msk [vmem:[#allocation2 + $0x10] sm:$0xff] %vm673, %v2901
        %2950 = vst [vmem:[#allocation2 + $0x18] sm:$0xff] %v2902
        %2951 = vst [vmem:[#allocation2 + $0x20] sm:$0xff] %v2903
        %2952 = vst.msk [vmem:[#allocation2 + $0x28] sm:$0xff] %vm673, %v2904
        %2953 = vst [vmem:[#allocation2 + $0x30] sm:$0xff] %v2905
        %2954 = vst [vmem:[#allocation2 + $0x38] sm:$0xff] %v2906
        %2955 = vst.msk [vmem:[#allocation2 + $0x40] sm:$0xff] %vm673, %v2907
        %2956 = vst [vmem:[#allocation2 + $0x48] sm:$0xff] %v2908
        %2957 = vst [vmem:[#allocation2 + $0x50] sm:$0xff] %v2909
        %2958 = vst.msk [vmem:[#allocation2 + $0x58] sm:$0xff] %vm673, %v2910
        %2959 = vst [vmem:[#allocation2 + $0x60] sm:$0xff] %v2911
        %2960 = vst [vmem:[#allocation2 + $0x68] sm:$0xff] %v2912
        %2961 = vst.msk [vmem:[#allocation2 + $0x70] sm:$0xff] %vm673, %v2913
        %2962 = vst [vmem:[#allocation2 + $0x78] sm:$0xff] %v2914
        %2963 = vst [vmem:[#allocation2 + $0x80] sm:$0xff] %v2915
        %2964 = vst.msk [vmem:[#allocation2 + $0x88] sm:$0xff] %vm673, %v2916
        %2965 = vst [vmem:[#allocation2 + $0x90] sm:$0xff] %v2917
        %2966 = vst [vmem:[#allocation2 + $0x98] sm:$0xff] %v2918
        %2967 = vst.msk [vmem:[#allocation2 + $0xa0] sm:$0xff] %vm673, %v2919
        %2968 = vst [vmem:[#allocation2 + $0xa8] sm:$0xff] %v2920
        %2969 = vst [vmem:[#allocation2 + $0xb0] sm:$0xff] %v2921
        %2970 = vst.msk [vmem:[#allocation2 + $0xb8] sm:$0xff] %vm673, %v2922
        %2971 = vst [vmem:[#allocation2 + $0xc0] sm:$0xff] %v2923
        %2972 = vst [vmem:[#allocation2 + $0xc8] sm:$0xff] %v2924
        %2973 = vst.msk [vmem:[#allocation2 + $0xd0] sm:$0xff] %vm673, %v2925
        %2974 = vst [vmem:[#allocation2 + $0xd8] sm:$0xff] %v2926
        %2975 = vst [vmem:[#allocation2 + $0xe0] sm:$0xff] %v2927
        %2976 = vst.msk [vmem:[#allocation2 + $0xe8] sm:$0xff] %vm673, %v2928
        %2977 = vst [vmem:[#allocation2 + $0xf0] sm:$0xff] %v2929
        %2978 = vst [vmem:[#allocation2 + $0xf8] sm:$0xff] %v2930
        %2979 = vst.msk [vmem:[#allocation2 + $0x100] sm:$0xff] %vm673, %v2931
        %2980 = vst [vmem:[#allocation2 + $0x108] sm:$0xff] %v2932
        %2981 = vst [vmem:[#allocation2 + $0x110] sm:$0xff] %v2933
        %2982 = vst.msk [vmem:[#allocation2 + $0x118] sm:$0xff] %vm673, %v2934
        %2983 = vst [vmem:[#allocation2 + $0x120] sm:$0xff] %v2935
        %2984 = vst [vmem:[#allocation2 + $0x128] sm:$0xff] %v2936
        %2985 = vst.msk [vmem:[#allocation2 + $0x130] sm:$0xff] %vm673, %v2937
        %2986 = vst [vmem:[#allocation2 + $0x138] sm:$0xff] %v2938
        %2987 = vst [vmem:[#allocation2 + $0x140] sm:$0xff] %v2939
        %2988 = vst.msk [vmem:[#allocation2 + $0x148] sm:$0xff] %vm673, %v2940
        %2989 = vst [vmem:[#allocation2 + $0x150] sm:$0xff] %v2941
        %2990 = vst [vmem:[#allocation2 + $0x158] sm:$0xff] %v2942
        %2991 = vst.msk [vmem:[#allocation2 + $0x160] sm:$0xff] %vm673, %v2943
        %2992 = vst [vmem:[#allocation2 + $0x168] sm:$0xff] %v2944
        %2993 = vst [vmem:[#allocation2 + $0x170] sm:$0xff] %v2945
        %2994 = vst.msk [vmem:[#allocation2 + $0x178] sm:$0xff] %vm673, %v2946
        %s2995 = scalar_lea.vmem %s2, 384
        %v2996 = vld [vmem:[%s2995] sm:$0xf]
        %v2997 = vld [vmem:[%s2995 + $0x4] sm:$0xf]
        %v2998 = vld [vmem:[%s2995 + $0x8] sm:$0xf]
        %v2999 = vld [vmem:[%s2995 + $0xc] sm:$0xf]
        %v3000 = vld [vmem:[%s2995 + $0x10] sm:$0xf]
        %v3001 = vld [vmem:[%s2995 + $0x14] sm:$0xf]
        %v3002 = vld [vmem:[%s2995 + $0x18] sm:$0xf]
        %v3003 = vld [vmem:[%s2995 + $0x1c] sm:$0xf]
        %v3004 = vld [vmem:[%s2995 + $0x20] sm:$0xf]
        %v3005 = vld [vmem:[%s2995 + $0x24] sm:$0xf]
        %v3006 = vld [vmem:[%s2995 + $0x28] sm:$0xf]
        %v3007 = vld [vmem:[%s2995 + $0x2c] sm:$0xf]
        %v3008 = vld [vmem:[%s2995 + $0x30] sm:$0xf]
        %v3009 = vld [vmem:[%s2995 + $0x34] sm:$0xf]
        %v3010 = vld [vmem:[%s2995 + $0x38] sm:$0xf]
        %v3011 = vld [vmem:[%s2995 + $0x3c] sm:$0xf]
        %v3028 = vunpack.c.l.b16 %v2996
        %v3029 = vunpack.c.l.b16 %v2997
        %v3030 = vunpack.c.l.b16 %v2998
        %v3031 = vunpack.c.l.b16 %v2999
        %v3032 = vunpack.c.l.b16 %v3000
        %v3033 = vunpack.c.l.b16 %v3001
        %v3034 = vunpack.c.l.b16 %v3002
        %v3035 = vunpack.c.l.b16 %v3003
        %v3036 = vunpack.c.l.b16 %v3004
        %v3037 = vunpack.c.l.b16 %v3005
        %v3038 = vunpack.c.l.b16 %v3006
        %v3039 = vunpack.c.l.b16 %v3007
        %v3040 = vunpack.c.l.b16 %v3008
        %v3041 = vunpack.c.l.b16 %v3009
        %v3042 = vunpack.c.l.b16 %v3010
        %v3043 = vunpack.c.l.b16 %v3011
        %v3044 = vpack.c.b16 %v3029, %v3028
        %v3045 = vpack.c.b16 %v3031, %v3030
        %v3046 = vpack.c.b16 %v3033, %v3032
        %v3047 = vpack.c.b16 %v3035, %v3034
        %v3048 = vpack.c.b16 %v3037, %v3036
        %v3049 = vpack.c.b16 %v3039, %v3038
        %v3050 = vpack.c.b16 %v3041, %v3040
        %v3051 = vpack.c.b16 %v3043, %v3042
        %3052 = vrot.lane.b32.xlu0 %v417, 88
        %v3053 = vpop.permute.xlu0 %3052
        %3054 = vrot.lane.b32.xlu0 %v425, 88
        %v3055 = vpop.permute.xlu0 %3054
        %3056 = vrot.lane.b32.xlu0 %v424, 88
        %v3057 = vpop.permute.xlu0 %3056
        %3058 = vrot.lane.b32.xlu0 %v1683, 88
        %v3059 = vpop.permute.xlu0 %3058
        %vm3060 = vcmask 719872
        %v3061 = vsel %vm3060, %v3053, %v3055
        %v3062 = vsel %vm3060, %v3055, %v3057
        %v3063 = vsel %vm3060, %v3057, %v3059
        %v3065 = vsel %vm426, %v3044, 0
        %v3068 = vsel %vm426, %v3045, 0
        %v3071 = vsel %vm426, %v3046, 0
        %v3074 = vsel %vm426, %v3047, 0
        %v3077 = vsel %vm426, %v3048, 0
        %v3080 = vsel %vm426, %v3049, 0
        %v3083 = vsel %vm426, %v3050, 0
        %v3086 = vsel %vm426, %v3051, 0
        %v3089 = vsel %vm451, %v3061, 0
        %v3092 = vsel %vm451, %v3062, 0
        %v3095 = vsel %vm451, %v3063, 0
        %3097 = vmatprep.subr.bf16.mxu0 %v3092
        %3098 = vmatpush1.bf16.msra.mxu0 %v3089
        %3099 = vmatprep.subr.bf16.mxu0 0
        %3100 = vmatpush1.bf16.msra.mxu0 0
        %3101 = vmatprep.subr.bf16.mxu0 0
        %3102 = vmatpush1.bf16.msra.mxu0 0
        %3103 = vmatprep.subr.bf16.mxu0 0
        %3104 = vmatpush1.bf16.msra.mxu0 0
        %3105 = vmatprep.subr.bf16.mxu0 0
        %3106 = vmatpush1.bf16.msra.mxu0 0
        %3107 = vmatprep.subr.bf16.mxu0 0
        %3108 = vmatpush1.bf16.msra.mxu0 0
        %3109 = vmatprep.subr.bf16.mxu0 0
        %3110 = vmatpush1.bf16.msra.mxu0 0
        %3111 = vmatprep.subr.bf16.mxu0 0
        %3112 = vmatpush1.bf16.msra.mxu0 0
        %3113 = vmatprep.subr.bf16.mxu0 0
        %3114 = vmatpush1.bf16.msra.mxu0 0
        %3115 = vmatprep.subr.bf16.mxu0 0
        %3116 = vmatpush1.bf16.msra.mxu0 0
        %3117 = vmatprep.subr.bf16.mxu0 0
        %3118 = vmatpush1.bf16.msra.mxu0 0
        %3119 = vmatprep.subr.bf16.mxu0 0
        %3120 = vmatpush1.bf16.msra.mxu0 0
        %3121 = vmatprep.subr.bf16.mxu0 0
        %3122 = vmatpush1.bf16.msra.mxu0 0
        %3123 = vmatprep.subr.bf16.mxu0 0
        %3124 = vmatpush1.bf16.msra.mxu0 0
        %3125 = vmatprep.subr.bf16.mxu0 0
        %3126 = vmatpush1.bf16.msra.mxu0 0
        %3127 = vmatprep.subr.bf16.mxu0 0
        %3128 = vmatpush1.bf16.msra.mxu0 0
        %3129 = vmatprep.mubr.bf16.mxu0 0
        %3130 = vmatmul.mubr.bf16.gmra.mrb[0].mxu0 %v3065
        %v3131 = vpop.f32.mrb[0].mxu0
        %v3132 = vadd.f32 0.0, %v3131
        %v3133 = vpop.f32.mrb[0].mxu0
        %v3134 = vadd.f32 0.0, %v3133
        %v3135 = vpop.f32.mrb[0].mxu0
        %v3136 = vadd.f32 0.0, %v3135
        %v3137 = vpop.f32.mrb[0].mxu0
        %v3138 = vadd.f32 0.0, %v3137
        %3139 = vmatprep.mubr.bf16.mxu0 0
        %3140 = vmatmul.mubr.bf16.gmra.mrb[0].mxu0 %v3068
        %v3141 = vpop.f32.mrb[0].mxu0
        %v3142 = vadd.f32 0.0, %v3141
        %v3143 = vpop.f32.mrb[0].mxu0
        %v3144 = vadd.f32 0.0, %v3143
        %v3145 = vpop.f32.mrb[0].mxu0
        %v3146 = vadd.f32 0.0, %v3145
        %v3147 = vpop.f32.mrb[0].mxu0
        %v3148 = vadd.f32 0.0, %v3147
        %3149 = vmatprep.mubr.bf16.mxu0 0
        %3150 = vmatmul.mubr.bf16.gmra.mrb[0].mxu0 %v3071
        %v3151 = vpop.f32.mrb[0].mxu0
        %v3152 = vadd.f32 0.0, %v3151
        %v3153 = vpop.f32.mrb[0].mxu0
        %v3154 = vadd.f32 0.0, %v3153
        %v3155 = vpop.f32.mrb[0].mxu0
        %v3156 = vadd.f32 0.0, %v3155
        %v3157 = vpop.f32.mrb[0].mxu0
        %v3158 = vadd.f32 0.0, %v3157
        %3159 = vmatprep.mubr.bf16.mxu0 0
        %3160 = vmatmul.mubr.bf16.gmra.mrb[0].mxu0 %v3074
        %v3161 = vpop.f32.mrb[0].mxu0
        %v3162 = vadd.f32 0.0, %v3161
        %v3163 = vpop.f32.mrb[0].mxu0
        %v3164 = vadd.f32 0.0, %v3163
        %v3165 = vpop.f32.mrb[0].mxu0
        %v3166 = vadd.f32 0.0, %v3165
        %v3167 = vpop.f32.mrb[0].mxu0
        %v3168 = vadd.f32 0.0, %v3167
        %3169 = vmatprep.mubr.bf16.mxu0 0
        %3170 = vmatmul.mubr.bf16.gmra.mrb[0].mxu0 %v3077
        %v3171 = vpop.f32.mrb[0].mxu0
        %v3172 = vadd.f32 0.0, %v3171
        %v3173 = vpop.f32.mrb[0].mxu0
        %v3174 = vadd.f32 0.0, %v3173
        %v3175 = vpop.f32.mrb[0].mxu0
        %v3176 = vadd.f32 0.0, %v3175
        %v3177 = vpop.f32.mrb[0].mxu0
        %v3178 = vadd.f32 0.0, %v3177
        %3179 = vmatprep.mubr.bf16.mxu0 0
        %3180 = vmatmul.mubr.bf16.gmra.mrb[0].mxu0 %v3080
        %v3181 = vpop.f32.mrb[0].mxu0
        %v3182 = vadd.f32 0.0, %v3181
        %v3183 = vpop.f32.mrb[0].mxu0
        %v3184 = vadd.f32 0.0, %v3183
        %v3185 = vpop.f32.mrb[0].mxu0
        %v3186 = vadd.f32 0.0, %v3185
        %v3187 = vpop.f32.mrb[0].mxu0
        %v3188 = vadd.f32 0.0, %v3187
        %3189 = vmatprep.mubr.bf16.mxu0 0
        %3190 = vmatmul.mubr.bf16.gmra.mrb[0].mxu0 %v3083
        %v3191 = vpop.f32.mrb[0].mxu0
        %v3192 = vadd.f32 0.0, %v3191
        %v3193 = vpop.f32.mrb[0].mxu0
        %v3194 = vadd.f32 0.0, %v3193
        %v3195 = vpop.f32.mrb[0].mxu0
        %v3196 = vadd.f32 0.0, %v3195
        %v3197 = vpop.f32.mrb[0].mxu0
        %v3198 = vadd.f32 0.0, %v3197
        %3199 = vmatprep.mubr.bf16.mxu0 0
        %3200 = vmatmul.mubr.bf16.gmra.mrb[0].mxu0 %v3086
        %v3201 = vpop.f32.mrb[0].mxu0
        %v3202 = vadd.f32 0.0, %v3201
        %v3203 = vpop.f32.mrb[0].mxu0
        %v3204 = vadd.f32 0.0, %v3203
        %v3205 = vpop.f32.mrb[0].mxu0
        %v3206 = vadd.f32 0.0, %v3205
        %v3207 = vpop.f32.mrb[0].mxu0
        %v3208 = vadd.f32 0.0, %v3207
        %3209 = vdwg.mxu0
        %3210 = vmatprep.subr.bf16.mxu0 0
        %3211 = vmatpush1.bf16.msra.mxu0 %v3095
        %3212 = vmatprep.subr.bf16.mxu0 0
        %3213 = vmatpush1.bf16.msra.mxu0 0
        %3214 = vmatprep.subr.bf16.mxu0 0
        %3215 = vmatpush1.bf16.msra.mxu0 0
        %3216 = vmatprep.subr.bf16.mxu0 0
        %3217 = vmatpush1.bf16.msra.mxu0 0
        %3218 = vmatprep.subr.bf16.mxu0 0
        %3219 = vmatpush1.bf16.msra.mxu0 0
        %3220 = vmatprep.subr.bf16.mxu0 0
        %3221 = vmatpush1.bf16.msra.mxu0 0
        %3222 = vmatprep.subr.bf16.mxu0 0
        %3223 = vmatpush1.bf16.msra.mxu0 0
        %3224 = vmatprep.subr.bf16.mxu0 0
        %3225 = vmatpush1.bf16.msra.mxu0 0
        %3226 = vmatprep.subr.bf16.mxu0 0
        %3227 = vmatpush1.bf16.msra.mxu0 0
        %3228 = vmatprep.subr.bf16.mxu0 0
        %3229 = vmatpush1.bf16.msra.mxu0 0
        %3230 = vmatprep.subr.bf16.mxu0 0
        %3231 = vmatpush1.bf16.msra.mxu0 0
        %3232 = vmatprep.subr.bf16.mxu0 0
        %3233 = vmatpush1.bf16.msra.mxu0 0
        %3234 = vmatprep.subr.bf16.mxu0 0
        %3235 = vmatpush1.bf16.msra.mxu0 0
        %3236 = vmatprep.subr.bf16.mxu0 0
        %3237 = vmatpush1.bf16.msra.mxu0 0
        %3238 = vmatprep.subr.bf16.mxu0 0
        %3239 = vmatpush1.bf16.msra.mxu0 0
        %3240 = vmatprep.subr.bf16.mxu0 0
        %3241 = vmatpush1.bf16.msra.mxu0 0
        %3242 = vmatprep.mubr.bf16.mxu0 0
        %3243 = vmatmul.mubr.bf16.gmra.mrb[0].mxu0 %v3065
        %v3244 = vpop.f32.mrb[0].mxu0
        %v3245 = vadd.f32 0.0, %v3244
        %v3246 = vpop.f32.mrb[0].mxu0
        %v3247 = vpop.f32.mrb[0].mxu0
        %v3248 = vadd.f32 0.0, %v3247
        %v3249 = vpop.f32.mrb[0].mxu0
        %3250 = vmatprep.mubr.bf16.mxu0 0
        %3251 = vmatmul.mubr.bf16.gmra.mrb[0].mxu0 %v3068
        %v3252 = vpop.f32.mrb[0].mxu0
        %v3253 = vadd.f32 0.0, %v3252
        %v3254 = vpop.f32.mrb[0].mxu0
        %v3255 = vpop.f32.mrb[0].mxu0
        %v3256 = vadd.f32 0.0, %v3255
        %v3257 = vpop.f32.mrb[0].mxu0
        %3258 = vmatprep.mubr.bf16.mxu0 0
        %3259 = vmatmul.mubr.bf16.gmra.mrb[0].mxu0 %v3071
        %v3260 = vpop.f32.mrb[0].mxu0
        %v3261 = vadd.f32 0.0, %v3260
        %v3262 = vpop.f32.mrb[0].mxu0
        %v3263 = vpop.f32.mrb[0].mxu0
        %v3264 = vadd.f32 0.0, %v3263
        %v3265 = vpop.f32.mrb[0].mxu0
        %3266 = vmatprep.mubr.bf16.mxu0 0
        %3267 = vmatmul.mubr.bf16.gmra.mrb[0].mxu0 %v3074
        %v3268 = vpop.f32.mrb[0].mxu0
        %v3269 = vadd.f32 0.0, %v3268
        %v3270 = vpop.f32.mrb[0].mxu0
        %v3271 = vpop.f32.mrb[0].mxu0
        %v3272 = vadd.f32 0.0, %v3271
        %v3273 = vpop.f32.mrb[0].mxu0
        %3274 = vmatprep.mubr.bf16.mxu0 0
        %3275 = vmatmul.mubr.bf16.gmra.mrb[0].mxu0 %v3077
        %v3276 = vpop.f32.mrb[0].mxu0
        %v3277 = vadd.f32 0.0, %v3276
        %v3278 = vpop.f32.mrb[0].mxu0
        %v3279 = vpop.f32.mrb[0].mxu0
        %v3280 = vadd.f32 0.0, %v3279
        %v3281 = vpop.f32.mrb[0].mxu0
        %3282 = vmatprep.mubr.bf16.mxu0 0
        %3283 = vmatmul.mubr.bf16.gmra.mrb[0].mxu0 %v3080
        %v3284 = vpop.f32.mrb[0].mxu0
        %v3285 = vadd.f32 0.0, %v3284
        %v3286 = vpop.f32.mrb[0].mxu0
        %v3287 = vpop.f32.mrb[0].mxu0
        %v3288 = vadd.f32 0.0, %v3287
        %v3289 = vpop.f32.mrb[0].mxu0
        %3290 = vmatprep.mubr.bf16.mxu0 0
        %3291 = vmatmul.mubr.bf16.gmra.mrb[0].mxu0 %v3083
        %v3292 = vpop.f32.mrb[0].mxu0
        %v3293 = vadd.f32 0.0, %v3292
        %v3294 = vpop.f32.mrb[0].mxu0
        %v3295 = vpop.f32.mrb[0].mxu0
        %v3296 = vadd.f32 0.0, %v3295
        %v3297 = vpop.f32.mrb[0].mxu0
        %3298 = vmatprep.mubr.bf16.mxu0 0
        %3299 = vmatmul.mubr.bf16.gmra.mrb[0].mxu0 %v3086
        %v3300 = vpop.f32.mrb[0].mxu0
        %v3301 = vadd.f32 0.0, %v3300
        %v3302 = vpop.f32.mrb[0].mxu0
        %v3303 = vpop.f32.mrb[0].mxu0
        %v3304 = vadd.f32 0.0, %v3303
        %v3305 = vpop.f32.mrb[0].mxu0
        %3306 = vdwg.mxu0
        %v3307 = vld [vmem:[#allocation2] sm:$0xff]
        %v3308 = vld [vmem:[#allocation2 + $0x8] sm:$0xff]
        %v3309 = vld [vmem:[#allocation2 + $0x10] sm:$0xff]
        %v3310 = vld [vmem:[#allocation2 + $0x18] sm:$0xff]
        %v3311 = vld [vmem:[#allocation2 + $0x20] sm:$0xff]
        %v3312 = vld [vmem:[#allocation2 + $0x28] sm:$0xff]
        %v3313 = vld [vmem:[#allocation2 + $0x30] sm:$0xff]
        %v3314 = vld [vmem:[#allocation2 + $0x38] sm:$0xff]
        %v3315 = vld [vmem:[#allocation2 + $0x40] sm:$0xff]
        %v3316 = vld [vmem:[#allocation2 + $0x48] sm:$0xff]
        %v3317 = vld [vmem:[#allocation2 + $0x50] sm:$0xff]
        %v3318 = vld [vmem:[#allocation2 + $0x58] sm:$0xff]
        %v3319 = vld [vmem:[#allocation2 + $0x60] sm:$0xff]
        %v3320 = vld [vmem:[#allocation2 + $0x68] sm:$0xff]
        %v3321 = vld [vmem:[#allocation2 + $0x70] sm:$0xff]
        %v3322 = vld [vmem:[#allocation2 + $0x78] sm:$0xff]
        %v3323 = vld [vmem:[#allocation2 + $0x80] sm:$0xff]
        %v3324 = vld [vmem:[#allocation2 + $0x88] sm:$0xff]
        %v3325 = vld [vmem:[#allocation2 + $0x90] sm:$0xff]
        %v3326 = vld [vmem:[#allocation2 + $0x98] sm:$0xff]
        %v3327 = vld [vmem:[#allocation2 + $0xa0] sm:$0xff]
        %v3328 = vld [vmem:[#allocation2 + $0xa8] sm:$0xff]
        %v3329 = vld [vmem:[#allocation2 + $0xb0] sm:$0xff]
        %v3330 = vld [vmem:[#allocation2 + $0xb8] sm:$0xff]
        %v3331 = vld [vmem:[#allocation2 + $0xc0] sm:$0xff]
        %v3332 = vld [vmem:[#allocation2 + $0xc8] sm:$0xff]
        %v3333 = vld [vmem:[#allocation2 + $0xd0] sm:$0xff]
        %v3334 = vld [vmem:[#allocation2 + $0xd8] sm:$0xff]
        %v3335 = vld [vmem:[#allocation2 + $0xe0] sm:$0xff]
        %v3336 = vld [vmem:[#allocation2 + $0xe8] sm:$0xff]
        %v3337 = vld [vmem:[#allocation2 + $0xf0] sm:$0xff]
        %v3338 = vld [vmem:[#allocation2 + $0xf8] sm:$0xff]
        %v3339 = vld [vmem:[#allocation2 + $0x100] sm:$0xff]
        %v3340 = vld [vmem:[#allocation2 + $0x108] sm:$0xff]
        %v3341 = vld [vmem:[#allocation2 + $0x110] sm:$0xff]
        %v3342 = vld [vmem:[#allocation2 + $0x118] sm:$0xff]
        %v3343 = vld [vmem:[#allocation2 + $0x120] sm:$0xff]
        %v3344 = vld [vmem:[#allocation2 + $0x128] sm:$0xff]
        %v3345 = vld [vmem:[#allocation2 + $0x130] sm:$0xff]
        %v3346 = vld [vmem:[#allocation2 + $0x138] sm:$0xff]
        %v3347 = vld [vmem:[#allocation2 + $0x140] sm:$0xff]
        %v3348 = vld [vmem:[#allocation2 + $0x148] sm:$0xff]
        %v3349 = vld [vmem:[#allocation2 + $0x150] sm:$0xff]
        %v3350 = vld [vmem:[#allocation2 + $0x158] sm:$0xff]
        %v3351 = vld [vmem:[#allocation2 + $0x160] sm:$0xff]
        %v3352 = vld [vmem:[#allocation2 + $0x168] sm:$0xff]
        %v3353 = vld [vmem:[#allocation2 + $0x170] sm:$0xff]
        %v3354 = vld [vmem:[#allocation2 + $0x178] sm:$0xff]
        %v3355 = vadd.f32 %v3307, %v3132
        %v3356 = vadd.f32 %v3308, %v3134
        %v3357 = vadd.f32 %v3309, %v3245
        %v3358 = vadd.f32 %v3310, %v3136
        %v3359 = vadd.f32 %v3311, %v3138
        %v3360 = vadd.f32 %v3312, %v3248
        %v3361 = vadd.f32 %v3313, %v3142
        %v3362 = vadd.f32 %v3314, %v3144
        %v3363 = vadd.f32 %v3315, %v3253
        %v3364 = vadd.f32 %v3316, %v3146
        %v3365 = vadd.f32 %v3317, %v3148
        %v3366 = vadd.f32 %v3318, %v3256
        %v3367 = vadd.f32 %v3319, %v3152
        %v3368 = vadd.f32 %v3320, %v3154
        %v3369 = vadd.f32 %v3321, %v3261
        %v3370 = vadd.f32 %v3322, %v3156
        %v3371 = vadd.f32 %v3323, %v3158
        %v3372 = vadd.f32 %v3324, %v3264
        %v3373 = vadd.f32 %v3325, %v3162
        %v3374 = vadd.f32 %v3326, %v3164
        %v3375 = vadd.f32 %v3327, %v3269
        %v3376 = vadd.f32 %v3328, %v3166
        %v3377 = vadd.f32 %v3329, %v3168
        %v3378 = vadd.f32 %v3330, %v3272
        %v3379 = vadd.f32 %v3331, %v3172
        %v3380 = vadd.f32 %v3332, %v3174
        %v3381 = vadd.f32 %v3333, %v3277
        %v3382 = vadd.f32 %v3334, %v3176
        %v3383 = vadd.f32 %v3335, %v3178
        %v3384 = vadd.f32 %v3336, %v3280
        %v3385 = vadd.f32 %v3337, %v3182
        %v3386 = vadd.f32 %v3338, %v3184
        %v3387 = vadd.f32 %v3339, %v3285
        %v3388 = vadd.f32 %v3340, %v3186
        %v3389 = vadd.f32 %v3341, %v3188
        %v3390 = vadd.f32 %v3342, %v3288
        %v3391 = vadd.f32 %v3343, %v3192
        %v3392 = vadd.f32 %v3344, %v3194
        %v3393 = vadd.f32 %v3345, %v3293
        %v3394 = vadd.f32 %v3346, %v3196
        %v3395 = vadd.f32 %v3347, %v3198
        %v3396 = vadd.f32 %v3348, %v3296
        %v3397 = vadd.f32 %v3349, %v3202
        %v3398 = vadd.f32 %v3350, %v3204
        %v3399 = vadd.f32 %v3351, %v3301
        %v3400 = vadd.f32 %v3352, %v3206
        %v3401 = vadd.f32 %v3353, %v3208
        %v3402 = vadd.f32 %v3354, %v3304
        %3403 = vst [vmem:[#allocation2] sm:$0xff] %v3355
        %3404 = vst [vmem:[#allocation2 + $0x8] sm:$0xff] %v3356
        %3405 = vst.msk [vmem:[#allocation2 + $0x10] sm:$0xff] %vm673, %v3357
        %3406 = vst [vmem:[#allocation2 + $0x18] sm:$0xff] %v3358
        %3407 = vst [vmem:[#allocation2 + $0x20] sm:$0xff] %v3359
        %3408 = vst.msk [vmem:[#allocation2 + $0x28] sm:$0xff] %vm673, %v3360
        %3409 = vst [vmem:[#allocation2 + $0x30] sm:$0xff] %v3361
        %3410 = vst [vmem:[#allocation2 + $0x38] sm:$0xff] %v3362
        %3411 = vst.msk [vmem:[#allocation2 + $0x40] sm:$0xff] %vm673, %v3363
        %3412 = vst [vmem:[#allocation2 + $0x48] sm:$0xff] %v3364
        %3413 = vst [vmem:[#allocation2 + $0x50] sm:$0xff] %v3365
        %3414 = vst.msk [vmem:[#allocation2 + $0x58] sm:$0xff] %vm673, %v3366
        %3415 = vst [vmem:[#allocation2 + $0x60] sm:$0xff] %v3367
        %3416 = vst [vmem:[#allocation2 + $0x68] sm:$0xff] %v3368
        %3417 = vst.msk [vmem:[#allocation2 + $0x70] sm:$0xff] %vm673, %v3369
        %3418 = vst [vmem:[#allocation2 + $0x78] sm:$0xff] %v3370
        %3419 = vst [vmem:[#allocation2 + $0x80] sm:$0xff] %v3371
        %3420 = vst.msk [vmem:[#allocation2 + $0x88] sm:$0xff] %vm673, %v3372
        %3421 = vst [vmem:[#allocation2 + $0x90] sm:$0xff] %v3373
        %3422 = vst [vmem:[#allocation2 + $0x98] sm:$0xff] %v3374
        %3423 = vst.msk [vmem:[#allocation2 + $0xa0] sm:$0xff] %vm673, %v3375
        %3424 = vst [vmem:[#allocation2 + $0xa8] sm:$0xff] %v3376
        %3425 = vst [vmem:[#allocation2 + $0xb0] sm:$0xff] %v3377
        %3426 = vst.msk [vmem:[#allocation2 + $0xb8] sm:$0xff] %vm673, %v3378
        %3427 = vst [vmem:[#allocation2 + $0xc0] sm:$0xff] %v3379
        %3428 = vst [vmem:[#allocation2 + $0xc8] sm:$0xff] %v3380
        %3429 = vst.msk [vmem:[#allocation2 + $0xd0] sm:$0xff] %vm673, %v3381
        %3430 = vst [vmem:[#allocation2 + $0xd8] sm:$0xff] %v3382
        %3431 = vst [vmem:[#allocation2 + $0xe0] sm:$0xff] %v3383
        %3432 = vst.msk [vmem:[#allocation2 + $0xe8] sm:$0xff] %vm673, %v3384
        %3433 = vst [vmem:[#allocation2 + $0xf0] sm:$0xff] %v3385
        %3434 = vst [vmem:[#allocation2 + $0xf8] sm:$0xff] %v3386
        %3435 = vst.msk [vmem:[#allocation2 + $0x100] sm:$0xff] %vm673, %v3387
        %3436 = vst [vmem:[#allocation2 + $0x108] sm:$0xff] %v3388
        %3437 = vst [vmem:[#allocation2 + $0x110] sm:$0xff] %v3389
        %3438 = vst.msk [vmem:[#allocation2 + $0x118] sm:$0xff] %vm673, %v3390
        %3439 = vst [vmem:[#allocation2 + $0x120] sm:$0xff] %v3391
        %3440 = vst [vmem:[#allocation2 + $0x128] sm:$0xff] %v3392
        %3441 = vst.msk [vmem:[#allocation2 + $0x130] sm:$0xff] %vm673, %v3393
        %3442 = vst [vmem:[#allocation2 + $0x138] sm:$0xff] %v3394
        %3443 = vst [vmem:[#allocation2 + $0x140] sm:$0xff] %v3395
        %3444 = vst.msk [vmem:[#allocation2 + $0x148] sm:$0xff] %vm673, %v3396
        %3445 = vst [vmem:[#allocation2 + $0x150] sm:$0xff] %v3397
        %3446 = vst [vmem:[#allocation2 + $0x158] sm:$0xff] %v3398
        %3447 = vst.msk [vmem:[#allocation2 + $0x160] sm:$0xff] %vm673, %v3399
        %3448 = vst [vmem:[#allocation2 + $0x168] sm:$0xff] %v3400
        %3449 = vst [vmem:[#allocation2 + $0x170] sm:$0xff] %v3401
        %3450 = vst.msk [vmem:[#allocation2 + $0x178] sm:$0xff] %vm673, %v3402
        %s3451 = scalar_lea.vmem %s2, 448
        %v3452 = vld [vmem:[%s3451] sm:$0xf]
        %v3453 = vld [vmem:[%s3451 + $0x4] sm:$0xf]
        %v3454 = vld [vmem:[%s3451 + $0x8] sm:$0xf]
        %v3455 = vld [vmem:[%s3451 + $0xc] sm:$0xf]
        %v3456 = vld [vmem:[%s3451 + $0x10] sm:$0xf]
        %v3457 = vld [vmem:[%s3451 + $0x14] sm:$0xf]
        %v3458 = vld [vmem:[%s3451 + $0x18] sm:$0xf]
        %v3459 = vld [vmem:[%s3451 + $0x1c] sm:$0xf]
        %v3460 = vld [vmem:[%s3451 + $0x20] sm:$0xf]
        %v3461 = vld [vmem:[%s3451 + $0x24] sm:$0xf]
        %v3462 = vld [vmem:[%s3451 + $0x28] sm:$0xf]
        %v3463 = vld [vmem:[%s3451 + $0x2c] sm:$0xf]
        %v3464 = vld [vmem:[%s3451 + $0x30] sm:$0xf]
        %v3465 = vld [vmem:[%s3451 + $0x34] sm:$0xf]
        %v3466 = vld [vmem:[%s3451 + $0x38] sm:$0xf]
        %v3467 = vld [vmem:[%s3451 + $0x3c] sm:$0xf]
        %v3484 = vunpack.c.l.b16 %v3452
        %v3485 = vunpack.c.l.b16 %v3453
        %v3486 = vunpack.c.l.b16 %v3454
        %v3487 = vunpack.c.l.b16 %v3455
        %v3488 = vunpack.c.l.b16 %v3456
        %v3489 = vunpack.c.l.b16 %v3457
        %v3490 = vunpack.c.l.b16 %v3458
        %v3491 = vunpack.c.l.b16 %v3459
        %v3492 = vunpack.c.l.b16 %v3460
        %v3493 = vunpack.c.l.b16 %v3461
        %v3494 = vunpack.c.l.b16 %v3462
        %v3495 = vunpack.c.l.b16 %v3463
        %v3496 = vunpack.c.l.b16 %v3464
        %v3497 = vunpack.c.l.b16 %v3465
        %v3498 = vunpack.c.l.b16 %v3466
        %v3499 = vunpack.c.l.b16 %v3467
        %v3500 = vpack.c.b16 %v3485, %v3484
        %v3501 = vpack.c.b16 %v3487, %v3486
        %v3502 = vpack.c.b16 %v3489, %v3488
        %v3503 = vpack.c.b16 %v3491, %v3490
        %v3504 = vpack.c.b16 %v3493, %v3492
        %v3505 = vpack.c.b16 %v3495, %v3494
        %v3506 = vpack.c.b16 %v3497, %v3496
        %v3507 = vpack.c.b16 %v3499, %v3498
        %3508 = vrot.lane.b32.xlu0 %v417, 87
        %v3509 = vpop.permute.xlu0 %3508
        %3510 = vrot.lane.b32.xlu0 %v425, 87
        %v3511 = vpop.permute.xlu0 %3510
        %3512 = vrot.lane.b32.xlu0 %v424, 87
        %v3513 = vpop.permute.xlu0 %3512
        %3514 = vrot.lane.b32.xlu0 %v1683, 87
        %v3515 = vpop.permute.xlu0 %3514
        %vm3516 = vcmask 711680
        %v3517 = vsel %vm3516, %v3509, %v3511
        %v3518 = vsel %vm3516, %v3511, %v3513
        %v3519 = vsel %vm3516, %v3513, %v3515
        %v3521 = vsel %vm426, %v3500, 0
        %v3524 = vsel %vm426, %v3501, 0
        %v3527 = vsel %vm426, %v3502, 0
        %v3530 = vsel %vm426, %v3503, 0
        %v3533 = vsel %vm426, %v3504, 0
        %v3536 = vsel %vm426, %v3505, 0
        %v3539 = vsel %vm426, %v3506, 0
        %v3542 = vsel %vm426, %v3507, 0
        %v3545 = vsel %vm451, %v3517, 0
        %v3548 = vsel %vm451, %v3518, 0
        %v3551 = vsel %vm451, %v3519, 0
        %3553 = vmatprep.subr.bf16.mxu0 %v3548
        %3554 = vmatpush1.bf16.msra.mxu0 %v3545
        %3555 = vmatprep.subr.bf16.mxu0 0
        %3556 = vmatpush1.bf16.msra.mxu0 0
        %3557 = vmatprep.subr.bf16.mxu0 0
        %3558 = vmatpush1.bf16.msra.mxu0 0
        %3559 = vmatprep.subr.bf16.mxu0 0
        %3560 = vmatpush1.bf16.msra.mxu0 0
        %3561 = vmatprep.subr.bf16.mxu0 0
        %3562 = vmatpush1.bf16.msra.mxu0 0
        %3563 = vmatprep.subr.bf16.mxu0 0
        %3564 = vmatpush1.bf16.msra.mxu0 0
        %3565 = vmatprep.subr.bf16.mxu0 0
        %3566 = vmatpush1.bf16.msra.mxu0 0
        %3567 = vmatprep.subr.bf16.mxu0 0
        %3568 = vmatpush1.bf16.msra.mxu0 0
        %3569 = vmatprep.subr.bf16.mxu0 0
        %3570 = vmatpush1.bf16.msra.mxu0 0
        %3571 = vmatprep.subr.bf16.mxu0 0
        %3572 = vmatpush1.bf16.msra.mxu0 0
        %3573 = vmatprep.subr.bf16.mxu0 0
        %3574 = vmatpush1.bf16.msra.mxu0 0
        %3575 = vmatprep.subr.bf16.mxu0 0
        %3576 = vmatpush1.bf16.msra.mxu0 0
        %3577 = vmatprep.subr.bf16.mxu0 0
        %3578 = vmatpush1.bf16.msra.mxu0 0
        %3579 = vmatprep.subr.bf16.mxu0 0
        %3580 = vmatpush1.bf16.msra.mxu0 0
        %3581 = vmatprep.subr.bf16.mxu0 0
        %3582 = vmatpush1.bf16.msra.mxu0 0
        %3583 = vmatprep.subr.bf16.mxu0 0
        %3584 = vmatpush1.bf16.msra.mxu0 0
        %3585 = vmatprep.mubr.bf16.mxu0 0
        %3586 = vmatmul.mubr.bf16.gmra.mrb[0].mxu0 %v3521
        %v3587 = vpop.f32.mrb[0].mxu0
        %v3588 = vadd.f32 0.0, %v3587
        %v3589 = vpop.f32.mrb[0].mxu0
        %v3590 = vadd.f32 0.0, %v3589
        %v3591 = vpop.f32.mrb[0].mxu0
        %v3592 = vadd.f32 0.0, %v3591
        %v3593 = vpop.f32.mrb[0].mxu0
        %v3594 = vadd.f32 0.0, %v3593
        %3595 = vmatprep.mubr.bf16.mxu0 0
        %3596 = vmatmul.mubr.bf16.gmra.mrb[0].mxu0 %v3524
        %v3597 = vpop.f32.mrb[0].mxu0
        %v3598 = vadd.f32 0.0, %v3597
        %v3599 = vpop.f32.mrb[0].mxu0
        %v3600 = vadd.f32 0.0, %v3599
        %v3601 = vpop.f32.mrb[0].mxu0
        %v3602 = vadd.f32 0.0, %v3601
        %v3603 = vpop.f32.mrb[0].mxu0
        %v3604 = vadd.f32 0.0, %v3603
        %3605 = vmatprep.mubr.bf16.mxu0 0
        %3606 = vmatmul.mubr.bf16.gmra.mrb[0].mxu0 %v3527
        %v3607 = vpop.f32.mrb[0].mxu0
        %v3608 = vadd.f32 0.0, %v3607
        %v3609 = vpop.f32.mrb[0].mxu0
        %v3610 = vadd.f32 0.0, %v3609
        %v3611 = vpop.f32.mrb[0].mxu0
        %v3612 = vadd.f32 0.0, %v3611
        %v3613 = vpop.f32.mrb[0].mxu0
        %v3614 = vadd.f32 0.0, %v3613
        %3615 = vmatprep.mubr.bf16.mxu0 0
        %3616 = vmatmul.mubr.bf16.gmra.mrb[0].mxu0 %v3530
        %v3617 = vpop.f32.mrb[0].mxu0
        %v3618 = vadd.f32 0.0, %v3617
        %v3619 = vpop.f32.mrb[0].mxu0
        %v3620 = vadd.f32 0.0, %v3619
        %v3621 = vpop.f32.mrb[0].mxu0
        %v3622 = vadd.f32 0.0, %v3621
        %v3623 = vpop.f32.mrb[0].mxu0
        %v3624 = vadd.f32 0.0, %v3623
        %3625 = vmatprep.mubr.bf16.mxu0 0
        %3626 = vmatmul.mubr.bf16.gmra.mrb[0].mxu0 %v3533
        %v3627 = vpop.f32.mrb[0].mxu0
        %v3628 = vadd.f32 0.0, %v3627
        %v3629 = vpop.f32.mrb[0].mxu0
        %v3630 = vadd.f32 0.0, %v3629
        %v3631 = vpop.f32.mrb[0].mxu0
        %v3632 = vadd.f32 0.0, %v3631
        %v3633 = vpop.f32.mrb[0].mxu0
        %v3634 = vadd.f32 0.0, %v3633
        %3635 = vmatprep.mubr.bf16.mxu0 0
        %3636 = vmatmul.mubr.bf16.gmra.mrb[0].mxu0 %v3536
        %v3637 = vpop.f32.mrb[0].mxu0
        %v3638 = vadd.f32 0.0, %v3637
        %v3639 = vpop.f32.mrb[0].mxu0
        %v3640 = vadd.f32 0.0, %v3639
        %v3641 = vpop.f32.mrb[0].mxu0
        %v3642 = vadd.f32 0.0, %v3641
        %v3643 = vpop.f32.mrb[0].mxu0
        %v3644 = vadd.f32 0.0, %v3643
        %3645 = vmatprep.mubr.bf16.mxu0 0
        %3646 = vmatmul.mubr.bf16.gmra.mrb[0].mxu0 %v3539
        %v3647 = vpop.f32.mrb[0].mxu0
        %v3648 = vadd.f32 0.0, %v3647
        %v3649 = vpop.f32.mrb[0].mxu0
        %v3650 = vadd.f32 0.0, %v3649
        %v3651 = vpop.f32.mrb[0].mxu0
        %v3652 = vadd.f32 0.0, %v3651
        %v3653 = vpop.f32.mrb[0].mxu0
        %v3654 = vadd.f32 0.0, %v3653
        %3655 = vmatprep.mubr.bf16.mxu0 0
        %3656 = vmatmul.mubr.bf16.gmra.mrb[0].mxu0 %v3542
        %v3657 = vpop.f32.mrb[0].mxu0
        %v3658 = vadd.f32 0.0, %v3657
        %v3659 = vpop.f32.mrb[0].mxu0
        %v3660 = vadd.f32 0.0, %v3659
        %v3661 = vpop.f32.mrb[0].mxu0
        %v3662 = vadd.f32 0.0, %v3661
        %v3663 = vpop.f32.mrb[0].mxu0
        %v3664 = vadd.f32 0.0, %v3663
        %3665 = vdwg.mxu0
        %3666 = vmatprep.subr.bf16.mxu0 0
        %3667 = vmatpush1.bf16.msra.mxu0 %v3551
        %3668 = vmatprep.subr.bf16.mxu0 0
        %3669 = vmatpush1.bf16.msra.mxu0 0
        %3670 = vmatprep.subr.bf16.mxu0 0
        %3671 = vmatpush1.bf16.msra.mxu0 0
        %3672 = vmatprep.subr.bf16.mxu0 0
        %3673 = vmatpush1.bf16.msra.mxu0 0
        %3674 = vmatprep.subr.bf16.mxu0 0
        %3675 = vmatpush1.bf16.msra.mxu0 0
        %3676 = vmatprep.subr.bf16.mxu0 0
        %3677 = vmatpush1.bf16.msra.mxu0 0
        %3678 = vmatprep.subr.bf16.mxu0 0
        %3679 = vmatpush1.bf16.msra.mxu0 0
        %3680 = vmatprep.subr.bf16.mxu0 0
        %3681 = vmatpush1.bf16.msra.mxu0 0
        %3682 = vmatprep.subr.bf16.mxu0 0
        %3683 = vmatpush1.bf16.msra.mxu0 0
        %3684 = vmatprep.subr.bf16.mxu0 0
        %3685 = vmatpush1.bf16.msra.mxu0 0
        %3686 = vmatprep.subr.bf16.mxu0 0
        %3687 = vmatpush1.bf16.msra.mxu0 0
        %3688 = vmatprep.subr.bf16.mxu0 0
        %3689 = vmatpush1.bf16.msra.mxu0 0
        %3690 = vmatprep.subr.bf16.mxu0 0
        %3691 = vmatpush1.bf16.msra.mxu0 0
        %3692 = vmatprep.subr.bf16.mxu0 0
        %3693 = vmatpush1.bf16.msra.mxu0 0
        %3694 = vmatprep.subr.bf16.mxu0 0
        %3695 = vmatpush1.bf16.msra.mxu0 0
        %3696 = vmatprep.subr.bf16.mxu0 0
        %3697 = vmatpush1.bf16.msra.mxu0 0
        %3698 = vmatprep.mubr.bf16.mxu0 0
        %3699 = vmatmul.mubr.bf16.gmra.mrb[0].mxu0 %v3521
        %v3700 = vpop.f32.mrb[0].mxu0
        %v3701 = vadd.f32 0.0, %v3700
        %v3702 = vpop.f32.mrb[0].mxu0
        %v3703 = vpop.f32.mrb[0].mxu0
        %v3704 = vadd.f32 0.0, %v3703
        %v3705 = vpop.f32.mrb[0].mxu0
        %3706 = vmatprep.mubr.bf16.mxu0 0
        %3707 = vmatmul.mubr.bf16.gmra.mrb[0].mxu0 %v3524
        %v3708 = vpop.f32.mrb[0].mxu0
        %v3709 = vadd.f32 0.0, %v3708
        %v3710 = vpop.f32.mrb[0].mxu0
        %v3711 = vpop.f32.mrb[0].mxu0
        %v3712 = vadd.f32 0.0, %v3711
        %v3713 = vpop.f32.mrb[0].mxu0
        %3714 = vmatprep.mubr.bf16.mxu0 0
        %3715 = vmatmul.mubr.bf16.gmra.mrb[0].mxu0 %v3527
        %v3716 = vpop.f32.mrb[0].mxu0
        %v3717 = vadd.f32 0.0, %v3716
        %v3718 = vpop.f32.mrb[0].mxu0
        %v3719 = vpop.f32.mrb[0].mxu0
        %v3720 = vadd.f32 0.0, %v3719
        %v3721 = vpop.f32.mrb[0].mxu0
        %3722 = vmatprep.mubr.bf16.mxu0 0
        %3723 = vmatmul.mubr.bf16.gmra.mrb[0].mxu0 %v3530
        %v3724 = vpop.f32.mrb[0].mxu0
        %v3725 = vadd.f32 0.0, %v3724
        %v3726 = vpop.f32.mrb[0].mxu0
        %v3727 = vpop.f32.mrb[0].mxu0
        %v3728 = vadd.f32 0.0, %v3727
        %v3729 = vpop.f32.mrb[0].mxu0
        %3730 = vmatprep.mubr.bf16.mxu0 0
        %3731 = vmatmul.mubr.bf16.gmra.mrb[0].mxu0 %v3533
        %v3732 = vpop.f32.mrb[0].mxu0
        %v3733 = vadd.f32 0.0, %v3732
        %v3734 = vpop.f32.mrb[0].mxu0
        %v3735 = vpop.f32.mrb[0].mxu0
        %v3736 = vadd.f32 0.0, %v3735
        %v3737 = vpop.f32.mrb[0].mxu0
        %3738 = vmatprep.mubr.bf16.mxu0 0
        %3739 = vmatmul.mubr.bf16.gmra.mrb[0].mxu0 %v3536
        %v3740 = vpop.f32.mrb[0].mxu0
        %v3741 = vadd.f32 0.0, %v3740
        %v3742 = vpop.f32.mrb[0].mxu0
        %v3743 = vpop.f32.mrb[0].mxu0
        %v3744 = vadd.f32 0.0, %v3743
        %v3745 = vpop.f32.mrb[0].mxu0
        %3746 = vmatprep.mubr.bf16.mxu0 0
        %3747 = vmatmul.mubr.bf16.gmra.mrb[0].mxu0 %v3539
        %v3748 = vpop.f32.mrb[0].mxu0
        %v3749 = vadd.f32 0.0, %v3748
        %v3750 = vpop.f32.mrb[0].mxu0
        %v3751 = vpop.f32.mrb[0].mxu0
        %v3752 = vadd.f32 0.0, %v3751
        %v3753 = vpop.f32.mrb[0].mxu0
        %3754 = vmatprep.mubr.bf16.mxu0 0
        %3755 = vmatmul.mubr.bf16.gmra.mrb[0].mxu0 %v3542
        %v3756 = vpop.f32.mrb[0].mxu0
        %v3757 = vadd.f32 0.0, %v3756
        %v3758 = vpop.f32.mrb[0].mxu0
        %v3759 = vpop.f32.mrb[0].mxu0
        %v3760 = vadd.f32 0.0, %v3759
        %v3761 = vpop.f32.mrb[0].mxu0
        %3762 = vdwg.mxu0
        %v3763 = vld [vmem:[#allocation2] sm:$0xff]
        %v3764 = vld [vmem:[#allocation2 + $0x8] sm:$0xff]
        %v3765 = vld [vmem:[#allocation2 + $0x10] sm:$0xff]
        %v3766 = vld [vmem:[#allocation2 + $0x18] sm:$0xff]
        %v3767 = vld [vmem:[#allocation2 + $0x20] sm:$0xff]
        %v3768 = vld [vmem:[#allocation2 + $0x28] sm:$0xff]
        %v3769 = vld [vmem:[#allocation2 + $0x30] sm:$0xff]
        %v3770 = vld [vmem:[#allocation2 + $0x38] sm:$0xff]
        %v3771 = vld [vmem:[#allocation2 + $0x40] sm:$0xff]
        %v3772 = vld [vmem:[#allocation2 + $0x48] sm:$0xff]
        %v3773 = vld [vmem:[#allocation2 + $0x50] sm:$0xff]
        %v3774 = vld [vmem:[#allocation2 + $0x58] sm:$0xff]
        %v3775 = vld [vmem:[#allocation2 + $0x60] sm:$0xff]
        %v3776 = vld [vmem:[#allocation2 + $0x68] sm:$0xff]
        %v3777 = vld [vmem:[#allocation2 + $0x70] sm:$0xff]
        %v3778 = vld [vmem:[#allocation2 + $0x78] sm:$0xff]
        %v3779 = vld [vmem:[#allocation2 + $0x80] sm:$0xff]
        %v3780 = vld [vmem:[#allocation2 + $0x88] sm:$0xff]
        %v3781 = vld [vmem:[#allocation2 + $0x90] sm:$0xff]
        %v3782 = vld [vmem:[#allocation2 + $0x98] sm:$0xff]
        %v3783 = vld [vmem:[#allocation2 + $0xa0] sm:$0xff]
        %v3784 = vld [vmem:[#allocation2 + $0xa8] sm:$0xff]
        %v3785 = vld [vmem:[#allocation2 + $0xb0] sm:$0xff]
        %v3786 = vld [vmem:[#allocation2 + $0xb8] sm:$0xff]
        %v3787 = vld [vmem:[#allocation2 + $0xc0] sm:$0xff]
        %v3788 = vld [vmem:[#allocation2 + $0xc8] sm:$0xff]
        %v3789 = vld [vmem:[#allocation2 + $0xd0] sm:$0xff]
        %v3790 = vld [vmem:[#allocation2 + $0xd8] sm:$0xff]
        %v3791 = vld [vmem:[#allocation2 + $0xe0] sm:$0xff]
        %v3792 = vld [vmem:[#allocation2 + $0xe8] sm:$0xff]
        %v3793 = vld [vmem:[#allocation2 + $0xf0] sm:$0xff]
        %v3794 = vld [vmem:[#allocation2 + $0xf8] sm:$0xff]
        %v3795 = vld [vmem:[#allocation2 + $0x100] sm:$0xff]
        %v3796 = vld [vmem:[#allocation2 + $0x108] sm:$0xff]
        %v3797 = vld [vmem:[#allocation2 + $0x110] sm:$0xff]
        %v3798 = vld [vmem:[#allocation2 + $0x118] sm:$0xff]
        %v3799 = vld [vmem:[#allocation2 + $0x120] sm:$0xff]
        %v3800 = vld [vmem:[#allocation2 + $0x128] sm:$0xff]
        %v3801 = vld [vmem:[#allocation2 + $0x130] sm:$0xff]
        %v3802 = vld [vmem:[#allocation2 + $0x138] sm:$0xff]
        %v3803 = vld [vmem:[#allocation2 + $0x140] sm:$0xff]
        %v3804 = vld [vmem:[#allocation2 + $0x148] sm:$0xff]
        %v3805 = vld [vmem:[#allocation2 + $0x150] sm:$0xff]
        %v3806 = vld [vmem:[#allocation2 + $0x158] sm:$0xff]
        %v3807 = vld [vmem:[#allocation2 + $0x160] sm:$0xff]
        %v3808 = vld [vmem:[#allocation2 + $0x168] sm:$0xff]
        %v3809 = vld [vmem:[#allocation2 + $0x170] sm:$0xff]
        %v3810 = vld [vmem:[#allocation2 + $0x178] sm:$0xff]
        %v3811 = vadd.f32 %v3763, %v3588
        %v3812 = vadd.f32 %v3764, %v3590
        %v3813 = vadd.f32 %v3765, %v3701
        %v3814 = vadd.f32 %v3766, %v3592
        %v3815 = vadd.f32 %v3767, %v3594
        %v3816 = vadd.f32 %v3768, %v3704
        %v3817 = vadd.f32 %v3769, %v3598
        %v3818 = vadd.f32 %v3770, %v3600
        %v3819 = vadd.f32 %v3771, %v3709
        %v3820 = vadd.f32 %v3772, %v3602
        %v3821 = vadd.f32 %v3773, %v3604
        %v3822 = vadd.f32 %v3774, %v3712
        %v3823 = vadd.f32 %v3775, %v3608
        %v3824 = vadd.f32 %v3776, %v3610
        %v3825 = vadd.f32 %v3777, %v3717
        %v3826 = vadd.f32 %v3778, %v3612
        %v3827 = vadd.f32 %v3779, %v3614
        %v3828 = vadd.f32 %v3780, %v3720
        %v3829 = vadd.f32 %v3781, %v3618
        %v3830 = vadd.f32 %v3782, %v3620
        %v3831 = vadd.f32 %v3783, %v3725
        %v3832 = vadd.f32 %v3784, %v3622
        %v3833 = vadd.f32 %v3785, %v3624
        %v3834 = vadd.f32 %v3786, %v3728
        %v3835 = vadd.f32 %v3787, %v3628
        %v3836 = vadd.f32 %v3788, %v3630
        %v3837 = vadd.f32 %v3789, %v3733
        %v3838 = vadd.f32 %v3790, %v3632
        %v3839 = vadd.f32 %v3791, %v3634
        %v3840 = vadd.f32 %v3792, %v3736
        %v3841 = vadd.f32 %v3793, %v3638
        %v3842 = vadd.f32 %v3794, %v3640
        %v3843 = vadd.f32 %v3795, %v3741
        %v3844 = vadd.f32 %v3796, %v3642
        %v3845 = vadd.f32 %v3797, %v3644
        %v3846 = vadd.f32 %v3798, %v3744
        %v3847 = vadd.f32 %v3799, %v3648
        %v3848 = vadd.f32 %v3800, %v3650
        %v3849 = vadd.f32 %v3801, %v3749
        %v3850 = vadd.f32 %v3802, %v3652
        %v3851 = vadd.f32 %v3803, %v3654
        %v3852 = vadd.f32 %v3804, %v3752
        %v3853 = vadd.f32 %v3805, %v3658
        %v3854 = vadd.f32 %v3806, %v3660
        %v3855 = vadd.f32 %v3807, %v3757
        %v3856 = vadd.f32 %v3808, %v3662
        %v3857 = vadd.f32 %v3809, %v3664
        %v3858 = vadd.f32 %v3810, %v3760
        %3859 = vst [vmem:[#allocation2] sm:$0xff] %v3811
        %3860 = vst [vmem:[#allocation2 + $0x8] sm:$0xff] %v3812
        %3861 = vst.msk [vmem:[#allocation2 + $0x10] sm:$0xff] %vm673, %v3813
        %3862 = vst [vmem:[#allocation2 + $0x18] sm:$0xff] %v3814
        %3863 = vst [vmem:[#allocation2 + $0x20] sm:$0xff] %v3815
        %3864 = vst.msk [vmem:[#allocation2 + $0x28] sm:$0xff] %vm673, %v3816
        %3865 = vst [vmem:[#allocation2 + $0x30] sm:$0xff] %v3817
        %3866 = vst [vmem:[#allocation2 + $0x38] sm:$0xff] %v3818
        %3867 = vst.msk [vmem:[#allocation2 + $0x40] sm:$0xff] %vm673, %v3819
        %3868 = vst [vmem:[#allocation2 + $0x48] sm:$0xff] %v3820
        %3869 = vst [vmem:[#allocation2 + $0x50] sm:$0xff] %v3821
        %3870 = vst.msk [vmem:[#allocation2 + $0x58] sm:$0xff] %vm673, %v3822
        %3871 = vst [vmem:[#allocation2 + $0x60] sm:$0xff] %v3823
        %3872 = vst [vmem:[#allocation2 + $0x68] sm:$0xff] %v3824
        %3873 = vst.msk [vmem:[#allocation2 + $0x70] sm:$0xff] %vm673, %v3825
        %3874 = vst [vmem:[#allocation2 + $0x78] sm:$0xff] %v3826
        %3875 = vst [vmem:[#allocation2 + $0x80] sm:$0xff] %v3827
        %3876 = vst.msk [vmem:[#allocation2 + $0x88] sm:$0xff] %vm673, %v3828
        %3877 = vst [vmem:[#allocation2 + $0x90] sm:$0xff] %v3829
        %3878 = vst [vmem:[#allocation2 + $0x98] sm:$0xff] %v3830
        %3879 = vst.msk [vmem:[#allocation2 + $0xa0] sm:$0xff] %vm673, %v3831
        %3880 = vst [vmem:[#allocation2 + $0xa8] sm:$0xff] %v3832
        %3881 = vst [vmem:[#allocation2 + $0xb0] sm:$0xff] %v3833
        %3882 = vst.msk [vmem:[#allocation2 + $0xb8] sm:$0xff] %vm673, %v3834
        %3883 = vst [vmem:[#allocation2 + $0xc0] sm:$0xff] %v3835
        %3884 = vst [vmem:[#allocation2 + $0xc8] sm:$0xff] %v3836
        %3885 = vst.msk [vmem:[#allocation2 + $0xd0] sm:$0xff] %vm673, %v3837
        %3886 = vst [vmem:[#allocation2 + $0xd8] sm:$0xff] %v3838
        %3887 = vst [vmem:[#allocation2 + $0xe0] sm:$0xff] %v3839
        %3888 = vst.msk [vmem:[#allocation2 + $0xe8] sm:$0xff] %vm673, %v3840
        %3889 = vst [vmem:[#allocation2 + $0xf0] sm:$0xff] %v3841
        %3890 = vst [vmem:[#allocation2 + $0xf8] sm:$0xff] %v3842
        %3891 = vst.msk [vmem:[#allocation2 + $0x100] sm:$0xff] %vm673, %v3843
        %3892 = vst [vmem:[#allocation2 + $0x108] sm:$0xff] %v3844
        %3893 = vst [vmem:[#allocation2 + $0x110] sm:$0xff] %v3845
        %3894 = vst.msk [vmem:[#allocation2 + $0x118] sm:$0xff] %vm673, %v3846
        %3895 = vst [vmem:[#allocation2 + $0x120] sm:$0xff] %v3847
        %3896 = vst [vmem:[#allocation2 + $0x128] sm:$0xff] %v3848
        %3897 = vst.msk [vmem:[#allocation2 + $0x130] sm:$0xff] %vm673, %v3849
        %3898 = vst [vmem:[#allocation2 + $0x138] sm:$0xff] %v3850
        %3899 = vst [vmem:[#allocation2 + $0x140] sm:$0xff] %v3851
        %3900 = vst.msk [vmem:[#allocation2 + $0x148] sm:$0xff] %vm673, %v3852
        %3901 = vst [vmem:[#allocation2 + $0x150] sm:$0xff] %v3853
        %3902 = vst [vmem:[#allocation2 + $0x158] sm:$0xff] %v3854
        %3903 = vst.msk [vmem:[#allocation2 + $0x160] sm:$0xff] %vm673, %v3855
        %3904 = vst [vmem:[#allocation2 + $0x168] sm:$0xff] %v3856
        %3905 = vst [vmem:[#allocation2 + $0x170] sm:$0xff] %v3857
        %3906 = vst.msk [vmem:[#allocation2 + $0x178] sm:$0xff] %vm673, %v3858
        %s3907 = scalar_lea.vmem %s2, 512
        %v3908 = vld [vmem:[%s3907] sm:$0xf]
        %v3909 = vld [vmem:[%s3907 + $0x4] sm:$0xf]
        %v3910 = vld [vmem:[%s3907 + $0x8] sm:$0xf]
        %v3911 = vld [vmem:[%s3907 + $0xc] sm:$0xf]
        %v3912 = vld [vmem:[%s3907 + $0x10] sm:$0xf]
        %v3913 = vld [vmem:[%s3907 + $0x14] sm:$0xf]
        %v3914 = vld [vmem:[%s3907 + $0x18] sm:$0xf]
        %v3915 = vld [vmem:[%s3907 + $0x1c] sm:$0xf]
        %v3916 = vld [vmem:[%s3907 + $0x20] sm:$0xf]
        %v3917 = vld [vmem:[%s3907 + $0x24] sm:$0xf]
        %v3918 = vld [vmem:[%s3907 + $0x28] sm:$0xf]
        %v3919 = vld [vmem:[%s3907 + $0x2c] sm:$0xf]
        %v3920 = vld [vmem:[%s3907 + $0x30] sm:$0xf]
        %v3921 = vld [vmem:[%s3907 + $0x34] sm:$0xf]
        %v3922 = vld [vmem:[%s3907 + $0x38] sm:$0xf]
        %v3923 = vld [vmem:[%s3907 + $0x3c] sm:$0xf]
        %v3940 = vunpack.c.l.b16 %v3908
        %v3941 = vunpack.c.l.b16 %v3909
        %v3942 = vunpack.c.l.b16 %v3910
        %v3943 = vunpack.c.l.b16 %v3911
        %v3944 = vunpack.c.l.b16 %v3912
        %v3945 = vunpack.c.l.b16 %v3913
        %v3946 = vunpack.c.l.b16 %v3914
        %v3947 = vunpack.c.l.b16 %v3915
        %v3948 = vunpack.c.l.b16 %v3916
        %v3949 = vunpack.c.l.b16 %v3917
        %v3950 = vunpack.c.l.b16 %v3918
        %v3951 = vunpack.c.l.b16 %v3919
        %v3952 = vunpack.c.l.b16 %v3920
        %v3953 = vunpack.c.l.b16 %v3921
        %v3954 = vunpack.c.l.b16 %v3922
        %v3955 = vunpack.c.l.b16 %v3923
        %v3956 = vpack.c.b16 %v3941, %v3940
        %v3957 = vpack.c.b16 %v3943, %v3942
        %v3958 = vpack.c.b16 %v3945, %v3944
        %v3959 = vpack.c.b16 %v3947, %v3946
        %v3960 = vpack.c.b16 %v3949, %v3948
        %v3961 = vpack.c.b16 %v3951, %v3950
        %v3962 = vpack.c.b16 %v3953, %v3952
        %v3963 = vpack.c.b16 %v3955, %v3954
        %3964 = vrot.lane.b32.xlu0 %v417, 86
        %v3965 = vpop.permute.xlu0 %3964
        %3966 = vrot.lane.b32.xlu0 %v425, 86
        %v3967 = vpop.permute.xlu0 %3966
        %3968 = vrot.lane.b32.xlu0 %v424, 86
        %v3969 = vpop.permute.xlu0 %3968
        %3970 = vrot.lane.b32.xlu0 %v1683, 86
        %v3971 = vpop.permute.xlu0 %3970
        %vm3972 = vcmask 703488
        %v3973 = vsel %vm3972, %v3965, %v3967
        %v3974 = vsel %vm3972, %v3967, %v3969
        %v3975 = vsel %vm3972, %v3969, %v3971
        %v3977 = vsel %vm426, %v3956, 0
        %v3980 = vsel %vm426, %v3957, 0
        %v3983 = vsel %vm426, %v3958, 0
        %v3986 = vsel %vm426, %v3959, 0
        %v3989 = vsel %vm426, %v3960, 0
        %v3992 = vsel %vm426, %v3961, 0
        %v3995 = vsel %vm426, %v3962, 0
        %v3998 = vsel %vm426, %v3963, 0
        %v4001 = vsel %vm451, %v3973, 0
        %v4004 = vsel %vm451, %v3974, 0
        %v4007 = vsel %vm451, %v3975, 0
        %4009 = vmatprep.subr.bf16.mxu0 %v4004
        %4010 = vmatpush1.bf16.msra.mxu0 %v4001
        %4011 = vmatprep.subr.bf16.mxu0 0
        %4012 = vmatpush1.bf16.msra.mxu0 0
        %4013 = vmatprep.subr.bf16.mxu0 0
        %4014 = vmatpush1.bf16.msra.mxu0 0
        %4015 = vmatprep.subr.bf16.mxu0 0
        %4016 = vmatpush1.bf16.msra.mxu0 0
        %4017 = vmatprep.subr.bf16.mxu0 0
        %4018 = vmatpush1.bf16.msra.mxu0 0
        %4019 = vmatprep.subr.bf16.mxu0 0
        %4020 = vmatpush1.bf16.msra.mxu0 0
        %4021 = vmatprep.subr.bf16.mxu0 0
        %4022 = vmatpush1.bf16.msra.mxu0 0
        %4023 = vmatprep.subr.bf16.mxu0 0
        %4024 = vmatpush1.bf16.msra.mxu0 0
        %4025 = vmatprep.subr.bf16.mxu0 0
        %4026 = vmatpush1.bf16.msra.mxu0 0
        %4027 = vmatprep.subr.bf16.mxu0 0
        %4028 = vmatpush1.bf16.msra.mxu0 0
        %4029 = vmatprep.subr.bf16.mxu0 0
        %4030 = vmatpush1.bf16.msra.mxu0 0
        %4031 = vmatprep.subr.bf16.mxu0 0
        %4032 = vmatpush1.bf16.msra.mxu0 0
        %4033 = vmatprep.subr.bf16.mxu0 0
        %4034 = vmatpush1.bf16.msra.mxu0 0
        %4035 = vmatprep.subr.bf16.mxu0 0
        %4036 = vmatpush1.bf16.msra.mxu0 0
        %4037 = vmatprep.subr.bf16.mxu0 0
        %4038 = vmatpush1.bf16.msra.mxu0 0
        %4039 = vmatprep.subr.bf16.mxu0 0
        %4040 = vmatpush1.bf16.msra.mxu0 0
        %4041 = vmatprep.mubr.bf16.mxu0 0
        %4042 = vmatmul.mubr.bf16.gmra.mrb[0].mxu0 %v3977
        %v4043 = vpop.f32.mrb[0].mxu0
        %v4044 = vadd.f32 0.0, %v4043
        %v4045 = vpop.f32.mrb[0].mxu0
        %v4046 = vadd.f32 0.0, %v4045
        %v4047 = vpop.f32.mrb[0].mxu0
        %v4048 = vadd.f32 0.0, %v4047
        %v4049 = vpop.f32.mrb[0].mxu0
        %v4050 = vadd.f32 0.0, %v4049
        %4051 = vmatprep.mubr.bf16.mxu0 0
        %4052 = vmatmul.mubr.bf16.gmra.mrb[0].mxu0 %v3980
        %v4053 = vpop.f32.mrb[0].mxu0
        %v4054 = vadd.f32 0.0, %v4053
        %v4055 = vpop.f32.mrb[0].mxu0
        %v4056 = vadd.f32 0.0, %v4055
        %v4057 = vpop.f32.mrb[0].mxu0
        %v4058 = vadd.f32 0.0, %v4057
        %v4059 = vpop.f32.mrb[0].mxu0
        %v4060 = vadd.f32 0.0, %v4059
        %4061 = vmatprep.mubr.bf16.mxu0 0
        %4062 = vmatmul.mubr.bf16.gmra.mrb[0].mxu0 %v3983
        %v4063 = vpop.f32.mrb[0].mxu0
        %v4064 = vadd.f32 0.0, %v4063
        %v4065 = vpop.f32.mrb[0].mxu0
        %v4066 = vadd.f32 0.0, %v4065
        %v4067 = vpop.f32.mrb[0].mxu0
        %v4068 = vadd.f32 0.0, %v4067
        %v4069 = vpop.f32.mrb[0].mxu0
        %v4070 = vadd.f32 0.0, %v4069
        %4071 = vmatprep.mubr.bf16.mxu0 0
        %4072 = vmatmul.mubr.bf16.gmra.mrb[0].mxu0 %v3986
        %v4073 = vpop.f32.mrb[0].mxu0
        %v4074 = vadd.f32 0.0, %v4073
        %v4075 = vpop.f32.mrb[0].mxu0
        %v4076 = vadd.f32 0.0, %v4075
        %v4077 = vpop.f32.mrb[0].mxu0
        %v4078 = vadd.f32 0.0, %v4077
        %v4079 = vpop.f32.mrb[0].mxu0
        %v4080 = vadd.f32 0.0, %v4079
        %4081 = vmatprep.mubr.bf16.mxu0 0
        %4082 = vmatmul.mubr.bf16.gmra.mrb[0].mxu0 %v3989
        %v4083 = vpop.f32.mrb[0].mxu0
        %v4084 = vadd.f32 0.0, %v4083
        %v4085 = vpop.f32.mrb[0].mxu0
        %v4086 = vadd.f32 0.0, %v4085
        %v4087 = vpop.f32.mrb[0].mxu0
        %v4088 = vadd.f32 0.0, %v4087
        %v4089 = vpop.f32.mrb[0].mxu0
        %v4090 = vadd.f32 0.0, %v4089
        %4091 = vmatprep.mubr.bf16.mxu0 0
        %4092 = vmatmul.mubr.bf16.gmra.mrb[0].mxu0 %v3992
        %v4093 = vpop.f32.mrb[0].mxu0
        %v4094 = vadd.f32 0.0, %v4093
        %v4095 = vpop.f32.mrb[0].mxu0
        %v4096 = vadd.f32 0.0, %v4095
        %v4097 = vpop.f32.mrb[0].mxu0
        %v4098 = vadd.f32 0.0, %v4097
        %v4099 = vpop.f32.mrb[0].mxu0
        %v4100 = vadd.f32 0.0, %v4099
        %4101 = vmatprep.mubr.bf16.mxu0 0
        %4102 = vmatmul.mubr.bf16.gmra.mrb[0].mxu0 %v3995
        %v4103 = vpop.f32.mrb[0].mxu0
        %v4104 = vadd.f32 0.0, %v4103
        %v4105 = vpop.f32.mrb[0].mxu0
        %v4106 = vadd.f32 0.0, %v4105
        %v4107 = vpop.f32.mrb[0].mxu0
        %v4108 = vadd.f32 0.0, %v4107
        %v4109 = vpop.f32.mrb[0].mxu0
        %v4110 = vadd.f32 0.0, %v4109
        %4111 = vmatprep.mubr.bf16.mxu0 0
        %4112 = vmatmul.mubr.bf16.gmra.mrb[0].mxu0 %v3998
        %v4113 = vpop.f32.mrb[0].mxu0
        %v4114 = vadd.f32 0.0, %v4113
        %v4115 = vpop.f32.mrb[0].mxu0
        %v4116 = vadd.f32 0.0, %v4115
        %v4117 = vpop.f32.mrb[0].mxu0
        %v4118 = vadd.f32 0.0, %v4117
        %v4119 = vpop.f32.mrb[0].mxu0
        %v4120 = vadd.f32 0.0, %v4119
        %4121 = vdwg.mxu0
        %4122 = vmatprep.subr.bf16.mxu0 0
        %4123 = vmatpush1.bf16.msra.mxu0 %v4007
        %4124 = vmatprep.subr.bf16.mxu0 0
        %4125 = vmatpush1.bf16.msra.mxu0 0
        %4126 = vmatprep.subr.bf16.mxu0 0
        %4127 = vmatpush1.bf16.msra.mxu0 0
        %4128 = vmatprep.subr.bf16.mxu0 0
        %4129 = vmatpush1.bf16.msra.mxu0 0
        %4130 = vmatprep.subr.bf16.mxu0 0
        %4131 = vmatpush1.bf16.msra.mxu0 0
        %4132 = vmatprep.subr.bf16.mxu0 0
        %4133 = vmatpush1.bf16.msra.mxu0 0
        %4134 = vmatprep.subr.bf16.mxu0 0
        %4135 = vmatpush1.bf16.msra.mxu0 0
        %4136 = vmatprep.subr.bf16.mxu0 0
        %4137 = vmatpush1.bf16.msra.mxu0 0
        %4138 = vmatprep.subr.bf16.mxu0 0
        %4139 = vmatpush1.bf16.msra.mxu0 0
        %4140 = vmatprep.subr.bf16.mxu0 0
        %4141 = vmatpush1.bf16.msra.mxu0 0
        %4142 = vmatprep.subr.bf16.mxu0 0
        %4143 = vmatpush1.bf16.msra.mxu0 0
        %4144 = vmatprep.subr.bf16.mxu0 0
        %4145 = vmatpush1.bf16.msra.mxu0 0
        %4146 = vmatprep.subr.bf16.mxu0 0
        %4147 = vmatpush1.bf16.msra.mxu0 0
        %4148 = vmatprep.subr.bf16.mxu0 0
        %4149 = vmatpush1.bf16.msra.mxu0 0
        %4150 = vmatprep.subr.bf16.mxu0 0
        %4151 = vmatpush1.bf16.msra.mxu0 0
        %4152 = vmatprep.subr.bf16.mxu0 0
        %4153 = vmatpush1.bf16.msra.mxu0 0
        %4154 = vmatprep.mubr.bf16.mxu0 0
        %4155 = vmatmul.mubr.bf16.gmra.mrb[0].mxu0 %v3977
        %v4156 = vpop.f32.mrb[0].mxu0
        %v4157 = vadd.f32 0.0, %v4156
        %v4158 = vpop.f32.mrb[0].mxu0
        %v4159 = vpop.f32.mrb[0].mxu0
        %v4160 = vadd.f32 0.0, %v4159
        %v4161 = vpop.f32.mrb[0].mxu0
        %4162 = vmatprep.mubr.bf16.mxu0 0
        %4163 = vmatmul.mubr.bf16.gmra.mrb[0].mxu0 %v3980
        %v4164 = vpop.f32.mrb[0].mxu0
        %v4165 = vadd.f32 0.0, %v4164
        %v4166 = vpop.f32.mrb[0].mxu0
        %v4167 = vpop.f32.mrb[0].mxu0
        %v4168 = vadd.f32 0.0, %v4167
        %v4169 = vpop.f32.mrb[0].mxu0
        %4170 = vmatprep.mubr.bf16.mxu0 0
        %4171 = vmatmul.mubr.bf16.gmra.mrb[0].mxu0 %v3983
        %v4172 = vpop.f32.mrb[0].mxu0
        %v4173 = vadd.f32 0.0, %v4172
        %v4174 = vpop.f32.mrb[0].mxu0
        %v4175 = vpop.f32.mrb[0].mxu0
        %v4176 = vadd.f32 0.0, %v4175
        %v4177 = vpop.f32.mrb[0].mxu0
        %4178 = vmatprep.mubr.bf16.mxu0 0
        %4179 = vmatmul.mubr.bf16.gmra.mrb[0].mxu0 %v3986
        %v4180 = vpop.f32.mrb[0].mxu0
        %v4181 = vadd.f32 0.0, %v4180
        %v4182 = vpop.f32.mrb[0].mxu0
        %v4183 = vpop.f32.mrb[0].mxu0
        %v4184 = vadd.f32 0.0, %v4183
        %v4185 = vpop.f32.mrb[0].mxu0
        %4186 = vmatprep.mubr.bf16.mxu0 0
        %4187 = vmatmul.mubr.bf16.gmra.mrb[0].mxu0 %v3989
        %v4188 = vpop.f32.mrb[0].mxu0
        %v4189 = vadd.f32 0.0, %v4188
        %v4190 = vpop.f32.mrb[0].mxu0
        %v4191 = vpop.f32.mrb[0].mxu0
        %v4192 = vadd.f32 0.0, %v4191
        %v4193 = vpop.f32.mrb[0].mxu0
        %4194 = vmatprep.mubr.bf16.mxu0 0
        %4195 = vmatmul.mubr.bf16.gmra.mrb[0].mxu0 %v3992
        %v4196 = vpop.f32.mrb[0].mxu0
        %v4197 = vadd.f32 0.0, %v4196
        %v4198 = vpop.f32.mrb[0].mxu0
        %v4199 = vpop.f32.mrb[0].mxu0
        %v4200 = vadd.f32 0.0, %v4199
        %v4201 = vpop.f32.mrb[0].mxu0
        %4202 = vmatprep.mubr.bf16.mxu0 0
        %4203 = vmatmul.mubr.bf16.gmra.mrb[0].mxu0 %v3995
        %v4204 = vpop.f32.mrb[0].mxu0
        %v4205 = vadd.f32 0.0, %v4204
        %v4206 = vpop.f32.mrb[0].mxu0
        %v4207 = vpop.f32.mrb[0].mxu0
        %v4208 = vadd.f32 0.0, %v4207
        %v4209 = vpop.f32.mrb[0].mxu0
        %4210 = vmatprep.mubr.bf16.mxu0 0
        %4211 = vmatmul.mubr.bf16.gmra.mrb[0].mxu0 %v3998
        %v4212 = vpop.f32.mrb[0].mxu0
        %v4213 = vadd.f32 0.0, %v4212
        %v4214 = vpop.f32.mrb[0].mxu0
        %v4215 = vpop.f32.mrb[0].mxu0
        %v4216 = vadd.f32 0.0, %v4215
        %v4217 = vpop.f32.mrb[0].mxu0
        %4218 = vdwg.mxu0
        %v4219 = vld [vmem:[#allocation2] sm:$0xff]
        %v4220 = vld [vmem:[#allocation2 + $0x8] sm:$0xff]
        %v4221 = vld [vmem:[#allocation2 + $0x10] sm:$0xff]
        %v4222 = vld [vmem:[#allocation2 + $0x18] sm:$0xff]
        %v4223 = vld [vmem:[#allocation2 + $0x20] sm:$0xff]
        %v4224 = vld [vmem:[#allocation2 + $0x28] sm:$0xff]
        %v4225 = vld [vmem:[#allocation2 + $0x30] sm:$0xff]
        %v4226 = vld [vmem:[#allocation2 + $0x38] sm:$0xff]
        %v4227 = vld [vmem:[#allocation2 + $0x40] sm:$0xff]
        %v4228 = vld [vmem:[#allocation2 + $0x48] sm:$0xff]
        %v4229 = vld [vmem:[#allocation2 + $0x50] sm:$0xff]
        %v4230 = vld [vmem:[#allocation2 + $0x58] sm:$0xff]
        %v4231 = vld [vmem:[#allocation2 + $0x60] sm:$0xff]
        %v4232 = vld [vmem:[#allocation2 + $0x68] sm:$0xff]
        %v4233 = vld [vmem:[#allocation2 + $0x70] sm:$0xff]
        %v4234 = vld [vmem:[#allocation2 + $0x78] sm:$0xff]
        %v4235 = vld [vmem:[#allocation2 + $0x80] sm:$0xff]
        %v4236 = vld [vmem:[#allocation2 + $0x88] sm:$0xff]
        %v4237 = vld [vmem:[#allocation2 + $0x90] sm:$0xff]
        %v4238 = vld [vmem:[#allocation2 + $0x98] sm:$0xff]
        %v4239 = vld [vmem:[#allocation2 + $0xa0] sm:$0xff]
        %v4240 = vld [vmem:[#allocation2 + $0xa8] sm:$0xff]
        %v4241 = vld [vmem:[#allocation2 + $0xb0] sm:$0xff]
        %v4242 = vld [vmem:[#allocation2 + $0xb8] sm:$0xff]
        %v4243 = vld [vmem:[#allocation2 + $0xc0] sm:$0xff]
        %v4244 = vld [vmem:[#allocation2 + $0xc8] sm:$0xff]
        %v4245 = vld [vmem:[#allocation2 + $0xd0] sm:$0xff]
        %v4246 = vld [vmem:[#allocation2 + $0xd8] sm:$0xff]
        %v4247 = vld [vmem:[#allocation2 + $0xe0] sm:$0xff]
        %v4248 = vld [vmem:[#allocation2 + $0xe8] sm:$0xff]
        %v4249 = vld [vmem:[#allocation2 + $0xf0] sm:$0xff]
        %v4250 = vld [vmem:[#allocation2 + $0xf8] sm:$0xff]
        %v4251 = vld [vmem:[#allocation2 + $0x100] sm:$0xff]
        %v4252 = vld [vmem:[#allocation2 + $0x108] sm:$0xff]
        %v4253 = vld [vmem:[#allocation2 + $0x110] sm:$0xff]
        %v4254 = vld [vmem:[#allocation2 + $0x118] sm:$0xff]
        %v4255 = vld [vmem:[#allocation2 + $0x120] sm:$0xff]
        %v4256 = vld [vmem:[#allocation2 + $0x128] sm:$0xff]
        %v4257 = vld [vmem:[#allocation2 + $0x130] sm:$0xff]
        %v4258 = vld [vmem:[#allocation2 + $0x138] sm:$0xff]
        %v4259 = vld [vmem:[#allocation2 + $0x140] sm:$0xff]
        %v4260 = vld [vmem:[#allocation2 + $0x148] sm:$0xff]
        %v4261 = vld [vmem:[#allocation2 + $0x150] sm:$0xff]
        %v4262 = vld [vmem:[#allocation2 + $0x158] sm:$0xff]
        %v4263 = vld [vmem:[#allocation2 + $0x160] sm:$0xff]
        %v4264 = vld [vmem:[#allocation2 + $0x168] sm:$0xff]
        %v4265 = vld [vmem:[#allocation2 + $0x170] sm:$0xff]
        %v4266 = vld [vmem:[#allocation2 + $0x178] sm:$0xff]
        %v4267 = vadd.f32 %v4219, %v4044
        %v4268 = vadd.f32 %v4220, %v4046
        %v4269 = vadd.f32 %v4221, %v4157
        %v4270 = vadd.f32 %v4222, %v4048
        %v4271 = vadd.f32 %v4223, %v4050
        %v4272 = vadd.f32 %v4224, %v4160
        %v4273 = vadd.f32 %v4225, %v4054
        %v4274 = vadd.f32 %v4226, %v4056
        %v4275 = vadd.f32 %v4227, %v4165
        %v4276 = vadd.f32 %v4228, %v4058
        %v4277 = vadd.f32 %v4229, %v4060
        %v4278 = vadd.f32 %v4230, %v4168
        %v4279 = vadd.f32 %v4231, %v4064
        %v4280 = vadd.f32 %v4232, %v4066
        %v4281 = vadd.f32 %v4233, %v4173
        %v4282 = vadd.f32 %v4234, %v4068
        %v4283 = vadd.f32 %v4235, %v4070
        %v4284 = vadd.f32 %v4236, %v4176
        %v4285 = vadd.f32 %v4237, %v4074
        %v4286 = vadd.f32 %v4238, %v4076
        %v4287 = vadd.f32 %v4239, %v4181
        %v4288 = vadd.f32 %v4240, %v4078
        %v4289 = vadd.f32 %v4241, %v4080
        %v4290 = vadd.f32 %v4242, %v4184
        %v4291 = vadd.f32 %v4243, %v4084
        %v4292 = vadd.f32 %v4244, %v4086
        %v4293 = vadd.f32 %v4245, %v4189
        %v4294 = vadd.f32 %v4246, %v4088
        %v4295 = vadd.f32 %v4247, %v4090
        %v4296 = vadd.f32 %v4248, %v4192
        %v4297 = vadd.f32 %v4249, %v4094
        %v4298 = vadd.f32 %v4250, %v4096
        %v4299 = vadd.f32 %v4251, %v4197
        %v4300 = vadd.f32 %v4252, %v4098
        %v4301 = vadd.f32 %v4253, %v4100
        %v4302 = vadd.f32 %v4254, %v4200
        %v4303 = vadd.f32 %v4255, %v4104
        %v4304 = vadd.f32 %v4256, %v4106
        %v4305 = vadd.f32 %v4257, %v4205
        %v4306 = vadd.f32 %v4258, %v4108
        %v4307 = vadd.f32 %v4259, %v4110
        %v4308 = vadd.f32 %v4260, %v4208
        %v4309 = vadd.f32 %v4261, %v4114
        %v4310 = vadd.f32 %v4262, %v4116
        %v4311 = vadd.f32 %v4263, %v4213
        %v4312 = vadd.f32 %v4264, %v4118
        %v4313 = vadd.f32 %v4265, %v4120
        %v4314 = vadd.f32 %v4266, %v4216
        %4315 = vst [vmem:[#allocation2] sm:$0xff] %v4267
        %4316 = vst [vmem:[#allocation2 + $0x8] sm:$0xff] %v4268
        %4317 = vst.msk [vmem:[#allocation2 + $0x10] sm:$0xff] %vm673, %v4269
        %4318 = vst [vmem:[#allocation2 + $0x18] sm:$0xff] %v4270
        %4319 = vst [vmem:[#allocation2 + $0x20] sm:$0xff] %v4271
        %4320 = vst.msk [vmem:[#allocation2 + $0x28] sm:$0xff] %vm673, %v4272
        %4321 = vst [vmem:[#allocation2 + $0x30] sm:$0xff] %v4273
        %4322 = vst [vmem:[#allocation2 + $0x38] sm:$0xff] %v4274
        %4323 = vst.msk [vmem:[#allocation2 + $0x40] sm:$0xff] %vm673, %v4275
        %4324 = vst [vmem:[#allocation2 + $0x48] sm:$0xff] %v4276
        %4325 = vst [vmem:[#allocation2 + $0x50] sm:$0xff] %v4277
        %4326 = vst.msk [vmem:[#allocation2 + $0x58] sm:$0xff] %vm673, %v4278
        %4327 = vst [vmem:[#allocation2 + $0x60] sm:$0xff] %v4279
        %4328 = vst [vmem:[#allocation2 + $0x68] sm:$0xff] %v4280
        %4329 = vst.msk [vmem:[#allocation2 + $0x70] sm:$0xff] %vm673, %v4281
        %4330 = vst [vmem:[#allocation2 + $0x78] sm:$0xff] %v4282
        %4331 = vst [vmem:[#allocation2 + $0x80] sm:$0xff] %v4283
        %4332 = vst.msk [vmem:[#allocation2 + $0x88] sm:$0xff] %vm673, %v4284
        %4333 = vst [vmem:[#allocation2 + $0x90] sm:$0xff] %v4285
        %4334 = vst [vmem:[#allocation2 + $0x98] sm:$0xff] %v4286
        %4335 = vst.msk [vmem:[#allocation2 + $0xa0] sm:$0xff] %vm673, %v4287
        %4336 = vst [vmem:[#allocation2 + $0xa8] sm:$0xff] %v4288
        %4337 = vst [vmem:[#allocation2 + $0xb0] sm:$0xff] %v4289
        %4338 = vst.msk [vmem:[#allocation2 + $0xb8] sm:$0xff] %vm673, %v4290
        %4339 = vst [vmem:[#allocation2 + $0xc0] sm:$0xff] %v4291
        %4340 = vst [vmem:[#allocation2 + $0xc8] sm:$0xff] %v4292
        %4341 = vst.msk [vmem:[#allocation2 + $0xd0] sm:$0xff] %vm673, %v4293
        %4342 = vst [vmem:[#allocation2 + $0xd8] sm:$0xff] %v4294
        %4343 = vst [vmem:[#allocation2 + $0xe0] sm:$0xff] %v4295
        %4344 = vst.msk [vmem:[#allocation2 + $0xe8] sm:$0xff] %vm673, %v4296
        %4345 = vst [vmem:[#allocation2 + $0xf0] sm:$0xff] %v4297
        %4346 = vst [vmem:[#allocation2 + $0xf8] sm:$0xff] %v4298
        %4347 = vst.msk [vmem:[#allocation2 + $0x100] sm:$0xff] %vm673, %v4299
        %4348 = vst [vmem:[#allocation2 + $0x108] sm:$0xff] %v4300
        %4349 = vst [vmem:[#allocation2 + $0x110] sm:$0xff] %v4301
        %4350 = vst.msk [vmem:[#allocation2 + $0x118] sm:$0xff] %vm673, %v4302
        %4351 = vst [vmem:[#allocation2 + $0x120] sm:$0xff] %v4303
        %4352 = vst [vmem:[#allocation2 + $0x128] sm:$0xff] %v4304
        %4353 = vst.msk [vmem:[#allocation2 + $0x130] sm:$0xff] %vm673, %v4305
        %4354 = vst [vmem:[#allocation2 + $0x138] sm:$0xff] %v4306
        %4355 = vst [vmem:[#allocation2 + $0x140] sm:$0xff] %v4307
        %4356 = vst.msk [vmem:[#allocation2 + $0x148] sm:$0xff] %vm673, %v4308
        %4357 = vst [vmem:[#allocation2 + $0x150] sm:$0xff] %v4309
        %4358 = vst [vmem:[#allocation2 + $0x158] sm:$0xff] %v4310
        %4359 = vst.msk [vmem:[#allocation2 + $0x160] sm:$0xff] %vm673, %v4311
        %4360 = vst [vmem:[#allocation2 + $0x168] sm:$0xff] %v4312
        %4361 = vst [vmem:[#allocation2 + $0x170] sm:$0xff] %v4313
        %4362 = vst.msk [vmem:[#allocation2 + $0x178] sm:$0xff] %vm673, %v4314
        %v4363 = vld [vmem:[#allocation2] sm:$0xff]
        %v4364 = vld [vmem:[#allocation2 + $0x8] sm:$0xff]
        %v4365 = vld [vmem:[#allocation2 + $0x10] sm:$0xff]
        %v4366 = vld [vmem:[#allocation2 + $0x18] sm:$0xff]
        %v4367 = vld [vmem:[#allocation2 + $0x20] sm:$0xff]
        %v4368 = vld [vmem:[#allocation2 + $0x28] sm:$0xff]
        %v4369 = vld [vmem:[#allocation2 + $0x30] sm:$0xff]
        %v4370 = vld [vmem:[#allocation2 + $0x38] sm:$0xff]
        %v4371 = vld [vmem:[#allocation2 + $0x40] sm:$0xff]
        %v4372 = vld [vmem:[#allocation2 + $0x48] sm:$0xff]
        %v4373 = vld [vmem:[#allocation2 + $0x50] sm:$0xff]
        %v4374 = vld [vmem:[#allocation2 + $0x58] sm:$0xff]
        %v4375 = vld [vmem:[#allocation2 + $0x60] sm:$0xff]
        %v4376 = vld [vmem:[#allocation2 + $0x68] sm:$0xff]
        %v4377 = vld [vmem:[#allocation2 + $0x70] sm:$0xff]
        %v4378 = vld [vmem:[#allocation2 + $0x78] sm:$0xff]
        %v4379 = vld [vmem:[#allocation2 + $0x80] sm:$0xff]
        %v4380 = vld [vmem:[#allocation2 + $0x88] sm:$0xff]
        %v4381 = vld [vmem:[#allocation2 + $0x90] sm:$0xff]
        %v4382 = vld [vmem:[#allocation2 + $0x98] sm:$0xff]
        %v4383 = vld [vmem:[#allocation2 + $0xa0] sm:$0xff]
        %v4384 = vld [vmem:[#allocation2 + $0xa8] sm:$0xff]
        %v4385 = vld [vmem:[#allocation2 + $0xb0] sm:$0xff]
        %v4386 = vld [vmem:[#allocation2 + $0xb8] sm:$0xff]
        %v4387 = vld [vmem:[#allocation2 + $0xc0] sm:$0xff]
        %v4388 = vld [vmem:[#allocation2 + $0xc8] sm:$0xff]
        %v4389 = vld [vmem:[#allocation2 + $0xd0] sm:$0xff]
        %v4390 = vld [vmem:[#allocation2 + $0xd8] sm:$0xff]
        %v4391 = vld [vmem:[#allocation2 + $0xe0] sm:$0xff]
        %v4392 = vld [vmem:[#allocation2 + $0xe8] sm:$0xff]
        %v4393 = vld [vmem:[#allocation2 + $0xf0] sm:$0xff]
        %v4394 = vld [vmem:[#allocation2 + $0xf8] sm:$0xff]
        %v4395 = vld [vmem:[#allocation2 + $0x100] sm:$0xff]
        %v4396 = vld [vmem:[#allocation2 + $0x108] sm:$0xff]
        %v4397 = vld [vmem:[#allocation2 + $0x110] sm:$0xff]
        %v4398 = vld [vmem:[#allocation2 + $0x118] sm:$0xff]
        %v4399 = vld [vmem:[#allocation2 + $0x120] sm:$0xff]
        %v4400 = vld [vmem:[#allocation2 + $0x128] sm:$0xff]
        %v4401 = vld [vmem:[#allocation2 + $0x130] sm:$0xff]
        %v4402 = vld [vmem:[#allocation2 + $0x138] sm:$0xff]
        %v4403 = vld [vmem:[#allocation2 + $0x140] sm:$0xff]
        %v4404 = vld [vmem:[#allocation2 + $0x148] sm:$0xff]
        %v4405 = vld [vmem:[#allocation2 + $0x150] sm:$0xff]
        %v4406 = vld [vmem:[#allocation2 + $0x158] sm:$0xff]
        %v4407 = vld [vmem:[#allocation2 + $0x160] sm:$0xff]
        %v4408 = vld [vmem:[#allocation2 + $0x168] sm:$0xff]
        %v4409 = vld [vmem:[#allocation2 + $0x170] sm:$0xff]
        %v4410 = vld [vmem:[#allocation2 + $0x178] sm:$0xff]
        %v4411 = vld [vmem:[%s5] sm:$0xff]
        %v4412 = vld [vmem:[%s5 + $0x8] sm:$0xff]
        %v4413 = vld [vmem:[%s5 + $0x10] sm:$0xff]
        %v4414 = vld [vmem:[%s5 + $0x18] sm:$0xff]
        %v4415 = vld [vmem:[%s5 + $0x20] sm:$0xff]
        %v4416 = vld [vmem:[%s5 + $0x28] sm:$0xff]
        %v4417 = vld [vmem:[%s5 + $0x30] sm:$0xff]
        %v4418 = vld [vmem:[%s5 + $0x38] sm:$0xff]
        %v4419 = vld [vmem:[%s5 + $0x40] sm:$0xff]
        %v4420 = vld [vmem:[%s5 + $0x48] sm:$0xff]
        %v4421 = vld [vmem:[%s5 + $0x50] sm:$0xff]
        %v4422 = vld [vmem:[%s5 + $0x58] sm:$0xff]
        %v4423 = vld [vmem:[%s5 + $0x60] sm:$0xff]
        %v4424 = vld [vmem:[%s5 + $0x68] sm:$0xff]
        %v4425 = vld [vmem:[%s5 + $0x70] sm:$0xff]
        %v4426 = vld [vmem:[%s5 + $0x78] sm:$0xff]
        %4428 = vset.pattern.permute.xlu0 0
        %4429 = vperm.xlu0 %4428, %v4411
        %v4430 = vpop.permute.xlu0 %4429
        %4433 = vset.pattern.permute.xlu0 0
        %4434 = vperm.xlu0 %4433, %v4412
        %v4435 = vpop.permute.xlu0 %4434
        %4438 = vset.pattern.permute.xlu0 0
        %4439 = vperm.xlu0 %4438, %v4413
        %v4440 = vpop.permute.xlu0 %4439
        %4443 = vset.pattern.permute.xlu0 0
        %4444 = vperm.xlu0 %4443, %v4414
        %v4445 = vpop.permute.xlu0 %4444
        %4448 = vset.pattern.permute.xlu0 0
        %4449 = vperm.xlu0 %4448, %v4415
        %v4450 = vpop.permute.xlu0 %4449
        %4453 = vset.pattern.permute.xlu0 0
        %4454 = vperm.xlu0 %4453, %v4416
        %v4455 = vpop.permute.xlu0 %4454
        %4458 = vset.pattern.permute.xlu0 0
        %4459 = vperm.xlu0 %4458, %v4417
        %v4460 = vpop.permute.xlu0 %4459
        %4463 = vset.pattern.permute.xlu0 0
        %4464 = vperm.xlu0 %4463, %v4418
        %v4465 = vpop.permute.xlu0 %4464
        %4468 = vset.pattern.permute.xlu0 0
        %4469 = vperm.xlu0 %4468, %v4419
        %v4470 = vpop.permute.xlu0 %4469
        %4473 = vset.pattern.permute.xlu0 0
        %4474 = vperm.xlu0 %4473, %v4420
        %v4475 = vpop.permute.xlu0 %4474
        %4478 = vset.pattern.permute.xlu0 0
        %4479 = vperm.xlu0 %4478, %v4421
        %v4480 = vpop.permute.xlu0 %4479
        %4483 = vset.pattern.permute.xlu0 0
        %4484 = vperm.xlu0 %4483, %v4422
        %v4485 = vpop.permute.xlu0 %4484
        %4488 = vset.pattern.permute.xlu0 0
        %4489 = vperm.xlu0 %4488, %v4423
        %v4490 = vpop.permute.xlu0 %4489
        %4493 = vset.pattern.permute.xlu0 0
        %4494 = vperm.xlu0 %4493, %v4424
        %v4495 = vpop.permute.xlu0 %4494
        %4498 = vset.pattern.permute.xlu0 0
        %4499 = vperm.xlu0 %4498, %v4425
        %v4500 = vpop.permute.xlu0 %4499
        %4503 = vset.pattern.permute.xlu0 0
        %4504 = vperm.xlu0 %4503, %v4426
        %v4505 = vpop.permute.xlu0 %4504
        %v4507 = vadd.f32 %v4363, %v4430
        %v4508 = vadd.f32 %v4364, %v4430
        %v4509 = vadd.f32 %v4365, %v4430
        %v4510 = vadd.f32 %v4366, %v4435
        %v4511 = vadd.f32 %v4367, %v4435
        %v4512 = vadd.f32 %v4368, %v4435
        %v4513 = vadd.f32 %v4369, %v4440
        %v4514 = vadd.f32 %v4370, %v4440
        %v4515 = vadd.f32 %v4371, %v4440
        %v4516 = vadd.f32 %v4372, %v4445
        %v4517 = vadd.f32 %v4373, %v4445
        %v4518 = vadd.f32 %v4374, %v4445
        %v4519 = vadd.f32 %v4375, %v4450
        %v4520 = vadd.f32 %v4376, %v4450
        %v4521 = vadd.f32 %v4377, %v4450
        %v4522 = vadd.f32 %v4378, %v4455
        %v4523 = vadd.f32 %v4379, %v4455
        %v4524 = vadd.f32 %v4380, %v4455
        %v4525 = vadd.f32 %v4381, %v4460
        %v4526 = vadd.f32 %v4382, %v4460
        %v4527 = vadd.f32 %v4383, %v4460
        %v4528 = vadd.f32 %v4384, %v4465
        %v4529 = vadd.f32 %v4385, %v4465
        %v4530 = vadd.f32 %v4386, %v4465
        %v4531 = vadd.f32 %v4387, %v4470
        %v4532 = vadd.f32 %v4388, %v4470
        %v4533 = vadd.f32 %v4389, %v4470
        %v4534 = vadd.f32 %v4390, %v4475
        %v4535 = vadd.f32 %v4391, %v4475
        %v4536 = vadd.f32 %v4392, %v4475
        %v4537 = vadd.f32 %v4393, %v4480
        %v4538 = vadd.f32 %v4394, %v4480
        %v4539 = vadd.f32 %v4395, %v4480
        %v4540 = vadd.f32 %v4396, %v4485
        %v4541 = vadd.f32 %v4397, %v4485
        %v4542 = vadd.f32 %v4398, %v4485
        %v4543 = vadd.f32 %v4399, %v4490
        %v4544 = vadd.f32 %v4400, %v4490
        %v4545 = vadd.f32 %v4401, %v4490
        %v4546 = vadd.f32 %v4402, %v4495
        %v4547 = vadd.f32 %v4403, %v4495
        %v4548 = vadd.f32 %v4404, %v4495
        %v4549 = vadd.f32 %v4405, %v4500
        %v4550 = vadd.f32 %v4406, %v4500
        %v4551 = vadd.f32 %v4407, %v4500
        %v4552 = vadd.f32 %v4408, %v4505
        %v4553 = vadd.f32 %v4409, %v4505
        %v4554 = vadd.f32 %v4410, %v4505
        %v4555 = vmax.f32 %v4507, 0.0
        %v4556 = vmax.f32 %v4508, 0.0
        %v4557 = vmax.f32 %v4509, 0.0
        %v4558 = vmax.f32 %v4510, 0.0
        %v4559 = vmax.f32 %v4511, 0.0
        %v4560 = vmax.f32 %v4512, 0.0
        %v4561 = vmax.f32 %v4513, 0.0
        %v4562 = vmax.f32 %v4514, 0.0
        %v4563 = vmax.f32 %v4515, 0.0
        %v4564 = vmax.f32 %v4516, 0.0
        %v4565 = vmax.f32 %v4517, 0.0
        %v4566 = vmax.f32 %v4518, 0.0
        %v4567 = vmax.f32 %v4519, 0.0
        %v4568 = vmax.f32 %v4520, 0.0
        %v4569 = vmax.f32 %v4521, 0.0
        %v4570 = vmax.f32 %v4522, 0.0
        %v4571 = vmax.f32 %v4523, 0.0
        %v4572 = vmax.f32 %v4524, 0.0
        %v4573 = vmax.f32 %v4525, 0.0
        %v4574 = vmax.f32 %v4526, 0.0
        %v4575 = vmax.f32 %v4527, 0.0
        %v4576 = vmax.f32 %v4528, 0.0
        %v4577 = vmax.f32 %v4529, 0.0
        %v4578 = vmax.f32 %v4530, 0.0
        %v4579 = vmax.f32 %v4531, 0.0
        %v4580 = vmax.f32 %v4532, 0.0
        %v4581 = vmax.f32 %v4533, 0.0
        %v4582 = vmax.f32 %v4534, 0.0
        %v4583 = vmax.f32 %v4535, 0.0
        %v4584 = vmax.f32 %v4536, 0.0
        %v4585 = vmax.f32 %v4537, 0.0
        %v4586 = vmax.f32 %v4538, 0.0
        %v4587 = vmax.f32 %v4539, 0.0
        %v4588 = vmax.f32 %v4540, 0.0
        %v4589 = vmax.f32 %v4541, 0.0
        %v4590 = vmax.f32 %v4542, 0.0
        %v4591 = vmax.f32 %v4543, 0.0
        %v4592 = vmax.f32 %v4544, 0.0
        %v4593 = vmax.f32 %v4545, 0.0
        %v4594 = vmax.f32 %v4546, 0.0
        %v4595 = vmax.f32 %v4547, 0.0
        %v4596 = vmax.f32 %v4548, 0.0
        %v4597 = vmax.f32 %v4549, 0.0
        %v4598 = vmax.f32 %v4550, 0.0
        %v4599 = vmax.f32 %v4551, 0.0
        %v4600 = vmax.f32 %v4552, 0.0
        %v4601 = vmax.f32 %v4553, 0.0
        %v4602 = vmax.f32 %v4554, 0.0
        %v4603 = vld [vmem:[%s8] sm:$0x7]
        %v4605 = vlaneseq
        %v4606 = vshrl.u32 %v4605, 7
        %v4607 = vsub.s32 0, %v4606
        %v4608 = vrot.slane %v4603, %v4607
        %v4609 = vlaneseq
        %v4610 = vshrl.u32 %v4609, 7
        %v4611 = vsub.s32 1, %v4610
        %v4612 = vrot.slane %v4603, %v4611
        %v4613 = vlaneseq
        %v4614 = vshrl.u32 %v4613, 7
        %v4615 = vsub.s32 2, %v4614
        %v4616 = vrot.slane %v4603, %v4615
        %v4620 = vmul.f32 %v4555, %v4608
        %v4621 = vmul.f32 %v4556, %v4612
        %v4622 = vmul.f32 %v4557, %v4616
        %v4623 = vmul.f32 %v4558, %v4608
        %v4624 = vmul.f32 %v4559, %v4612
        %v4625 = vmul.f32 %v4560, %v4616
        %v4626 = vmul.f32 %v4561, %v4608
        %v4627 = vmul.f32 %v4562, %v4612
        %v4628 = vmul.f32 %v4563, %v4616
        %v4629 = vmul.f32 %v4564, %v4608
        %v4630 = vmul.f32 %v4565, %v4612
        %v4631 = vmul.f32 %v4566, %v4616
        %v4632 = vmul.f32 %v4567, %v4608
        %v4633 = vmul.f32 %v4568, %v4612
        %v4634 = vmul.f32 %v4569, %v4616
        %v4635 = vmul.f32 %v4570, %v4608
        %v4636 = vmul.f32 %v4571, %v4612
        %v4637 = vmul.f32 %v4572, %v4616
        %v4638 = vmul.f32 %v4573, %v4608
        %v4639 = vmul.f32 %v4574, %v4612
        %v4640 = vmul.f32 %v4575, %v4616
        %v4641 = vmul.f32 %v4576, %v4608
        %v4642 = vmul.f32 %v4577, %v4612
        %v4643 = vmul.f32 %v4578, %v4616
        %v4644 = vmul.f32 %v4579, %v4608
        %v4645 = vmul.f32 %v4580, %v4612
        %v4646 = vmul.f32 %v4581, %v4616
        %v4647 = vmul.f32 %v4582, %v4608
        %v4648 = vmul.f32 %v4583, %v4612
        %v4649 = vmul.f32 %v4584, %v4616
        %v4650 = vmul.f32 %v4585, %v4608
        %v4651 = vmul.f32 %v4586, %v4612
        %v4652 = vmul.f32 %v4587, %v4616
        %v4653 = vmul.f32 %v4588, %v4608
        %v4654 = vmul.f32 %v4589, %v4612
        %v4655 = vmul.f32 %v4590, %v4616
        %v4656 = vmul.f32 %v4591, %v4608
        %v4657 = vmul.f32 %v4592, %v4612
        %v4658 = vmul.f32 %v4593, %v4616
        %v4659 = vmul.f32 %v4594, %v4608
        %v4660 = vmul.f32 %v4595, %v4612
        %v4661 = vmul.f32 %v4596, %v4616
        %v4662 = vmul.f32 %v4597, %v4608
        %v4663 = vmul.f32 %v4598, %v4612
        %v4664 = vmul.f32 %v4599, %v4616
        %v4665 = vmul.f32 %v4600, %v4608
        %v4666 = vmul.f32 %v4601, %v4612
        %v4667 = vmul.f32 %v4602, %v4616
        %v4668 = vpack.c.bf16 %v4623, %v4620
        %v4669 = vpack.c.bf16 %v4624, %v4621
        %v4670 = vpack.c.bf16 %v4625, %v4622
        %v4671 = vpack.c.bf16 %v4629, %v4626
        %v4672 = vpack.c.bf16 %v4630, %v4627
        %v4673 = vpack.c.bf16 %v4631, %v4628
        %v4674 = vpack.c.bf16 %v4635, %v4632
        %v4675 = vpack.c.bf16 %v4636, %v4633
        %v4676 = vpack.c.bf16 %v4637, %v4634
        %v4677 = vpack.c.bf16 %v4641, %v4638
        %v4678 = vpack.c.bf16 %v4642, %v4639
        %v4679 = vpack.c.bf16 %v4643, %v4640
        %v4680 = vpack.c.bf16 %v4647, %v4644
        %v4681 = vpack.c.bf16 %v4648, %v4645
        %v4682 = vpack.c.bf16 %v4649, %v4646
        %v4683 = vpack.c.bf16 %v4653, %v4650
        %v4684 = vpack.c.bf16 %v4654, %v4651
        %v4685 = vpack.c.bf16 %v4655, %v4652
        %v4686 = vpack.c.bf16 %v4659, %v4656
        %v4687 = vpack.c.bf16 %v4660, %v4657
        %v4688 = vpack.c.bf16 %v4661, %v4658
        %v4689 = vpack.c.bf16 %v4665, %v4662
        %v4690 = vpack.c.bf16 %v4666, %v4663
        %v4691 = vpack.c.bf16 %v4667, %v4664
        %4692 = vst [vmem:[#allocation3] sm:$0xff] %v4668
        %4693 = vst [vmem:[#allocation3 + $0x8] sm:$0xff] %v4669
        %4694 = vst.msk [vmem:[#allocation3 + $0x10] sm:$0xff] %vm673, %v4670
        %4695 = vst [vmem:[#allocation3 + $0x18] sm:$0xff] %v4671
        %4696 = vst [vmem:[#allocation3 + $0x20] sm:$0xff] %v4672
        %4697 = vst.msk [vmem:[#allocation3 + $0x28] sm:$0xff] %vm673, %v4673
        %4698 = vst [vmem:[#allocation3 + $0x30] sm:$0xff] %v4674
        %4699 = vst [vmem:[#allocation3 + $0x38] sm:$0xff] %v4675
        %4700 = vst.msk [vmem:[#allocation3 + $0x40] sm:$0xff] %vm673, %v4676
        %4701 = vst [vmem:[#allocation3 + $0x48] sm:$0xff] %v4677
        %4702 = vst [vmem:[#allocation3 + $0x50] sm:$0xff] %v4678
        %4703 = vst.msk [vmem:[#allocation3 + $0x58] sm:$0xff] %vm673, %v4679
        %4704 = vst [vmem:[#allocation3 + $0x60] sm:$0xff] %v4680
        %4705 = vst [vmem:[#allocation3 + $0x68] sm:$0xff] %v4681
        %4706 = vst.msk [vmem:[#allocation3 + $0x70] sm:$0xff] %vm673, %v4682
        %4707 = vst [vmem:[#allocation3 + $0x78] sm:$0xff] %v4683
        %4708 = vst [vmem:[#allocation3 + $0x80] sm:$0xff] %v4684
        %4709 = vst.msk [vmem:[#allocation3 + $0x88] sm:$0xff] %vm673, %v4685
        %4710 = vst [vmem:[#allocation3 + $0x90] sm:$0xff] %v4686
        %4711 = vst [vmem:[#allocation3 + $0x98] sm:$0xff] %v4687
        %4712 = vst.msk [vmem:[#allocation3 + $0xa0] sm:$0xff] %vm673, %v4688
        %4713 = vst [vmem:[#allocation3 + $0xa8] sm:$0xff] %v4689
        %4714 = vst [vmem:[#allocation3 + $0xb0] sm:$0xff] %v4690
        %4715 = vst.msk [vmem:[#allocation3 + $0xb8] sm:$0xff] %vm673, %v4691
        %v4716 = vld [vmem:[#allocation3] sm:$0xff]
        %v4717 = vld [vmem:[#allocation3 + $0x8] sm:$0xff]
        %v4718 = vld [vmem:[#allocation3 + $0x10] sm:$0xff]
        %v4719 = vld [vmem:[#allocation3 + $0x18] sm:$0xff]
        %v4720 = vld [vmem:[#allocation3 + $0x20] sm:$0xff]
        %v4721 = vld [vmem:[#allocation3 + $0x28] sm:$0xff]
        %v4722 = vld [vmem:[#allocation3 + $0x30] sm:$0xff]
        %v4723 = vld [vmem:[#allocation3 + $0x38] sm:$0xff]
        %v4724 = vld [vmem:[#allocation3 + $0x40] sm:$0xff]
        %v4725 = vld [vmem:[#allocation3 + $0x48] sm:$0xff]
        %v4726 = vld [vmem:[#allocation3 + $0x50] sm:$0xff]
        %v4727 = vld [vmem:[#allocation3 + $0x58] sm:$0xff]
        %v4728 = vld [vmem:[#allocation3 + $0x60] sm:$0xff]
        %v4729 = vld [vmem:[#allocation3 + $0x68] sm:$0xff]
        %v4730 = vld [vmem:[#allocation3 + $0x70] sm:$0xff]
        %v4731 = vld [vmem:[#allocation3 + $0x78] sm:$0xff]
        %v4732 = vld [vmem:[#allocation3 + $0x80] sm:$0xff]
        %v4733 = vld [vmem:[#allocation3 + $0x88] sm:$0xff]
        %v4734 = vld [vmem:[#allocation3 + $0x90] sm:$0xff]
        %v4735 = vld [vmem:[#allocation3 + $0x98] sm:$0xff]
        %v4736 = vld [vmem:[#allocation3 + $0xa0] sm:$0xff]
        %v4737 = vld [vmem:[#allocation3 + $0xa8] sm:$0xff]
        %v4738 = vld [vmem:[#allocation3 + $0xb0] sm:$0xff]
        %v4739 = vld [vmem:[#allocation3 + $0xb8] sm:$0xff]
        %v4740 = vld [vmem:[%s3] sm:$0x3]
        %v4741 = vld [vmem:[%s4] sm:$0x3]
        %s4742 = scalar_lea.vmem %s3, 2
        %v4743 = vld [vmem:[%s4742] sm:$0x3]
        %4768 = vrot.lane.b32.xlu0 %v4716, 127
        %v4769 = vpop.permute.xlu0 %4768
        %4770 = vrot.lane.b32.xlu0 %v4717, 127
        %v4771 = vpop.permute.xlu0 %4770
        %4772 = vrot.lane.b32.xlu0 %v4718, 127
        %v4773 = vpop.permute.xlu0 %4772
        %4774 = vrot.lane.b32.xlu0 %v4719, 127
        %v4775 = vpop.permute.xlu0 %4774
        %4776 = vrot.lane.b32.xlu0 %v4720, 127
        %v4777 = vpop.permute.xlu0 %4776
        %4778 = vrot.lane.b32.xlu0 %v4721, 127
        %v4779 = vpop.permute.xlu0 %4778
        %4780 = vrot.lane.b32.xlu0 %v4722, 127
        %v4781 = vpop.permute.xlu0 %4780
        %4782 = vrot.lane.b32.xlu0 %v4723, 127
        %v4783 = vpop.permute.xlu0 %4782
        %4784 = vrot.lane.b32.xlu0 %v4724, 127
        %v4785 = vpop.permute.xlu0 %4784
        %4786 = vrot.lane.b32.xlu0 %v4725, 127
        %v4787 = vpop.permute.xlu0 %4786
        %4788 = vrot.lane.b32.xlu0 %v4726, 127
        %v4789 = vpop.permute.xlu0 %4788
        %4790 = vrot.lane.b32.xlu0 %v4727, 127
        %v4791 = vpop.permute.xlu0 %4790
        %4792 = vrot.lane.b32.xlu0 %v4728, 127
        %v4793 = vpop.permute.xlu0 %4792
        %4794 = vrot.lane.b32.xlu0 %v4729, 127
        %v4795 = vpop.permute.xlu0 %4794
        %4796 = vrot.lane.b32.xlu0 %v4730, 127
        %v4797 = vpop.permute.xlu0 %4796
        %4798 = vrot.lane.b32.xlu0 %v4731, 127
        %v4799 = vpop.permute.xlu0 %4798
        %4800 = vrot.lane.b32.xlu0 %v4732, 127
        %v4801 = vpop.permute.xlu0 %4800
        %4802 = vrot.lane.b32.xlu0 %v4733, 127
        %v4803 = vpop.permute.xlu0 %4802
        %4804 = vrot.lane.b32.xlu0 %v4734, 127
        %v4805 = vpop.permute.xlu0 %4804
        %4806 = vrot.lane.b32.xlu0 %v4735, 127
        %v4807 = vpop.permute.xlu0 %4806
        %4808 = vrot.lane.b32.xlu0 %v4736, 127
        %v4809 = vpop.permute.xlu0 %4808
        %4810 = vrot.lane.b32.xlu0 %v4737, 127
        %v4811 = vpop.permute.xlu0 %4810
        %4812 = vrot.lane.b32.xlu0 %v4738, 127
        %v4813 = vpop.permute.xlu0 %4812
        %4814 = vrot.lane.b32.xlu0 %v4739, 127
        %v4815 = vpop.permute.xlu0 %4814
        %v4816 = vsel %vm783, %v4769, %v4771
        %v4817 = vsel %vm783, %v4771, %v4773
        %v4818 = vsel %vm783, %v4775, %v4777
        %v4819 = vsel %vm783, %v4777, %v4779
        %v4820 = vsel %vm783, %v4781, %v4783
        %v4821 = vsel %vm783, %v4783, %v4785
        %v4822 = vsel %vm783, %v4787, %v4789
        %v4823 = vsel %vm783, %v4789, %v4791
        %v4824 = vsel %vm783, %v4793, %v4795
        %v4825 = vsel %vm783, %v4795, %v4797
        %v4826 = vsel %vm783, %v4799, %v4801
        %v4827 = vsel %vm783, %v4801, %v4803
        %v4828 = vsel %vm783, %v4805, %v4807
        %v4829 = vsel %vm783, %v4807, %v4809
        %v4830 = vsel %vm783, %v4811, %v4813
        %v4831 = vsel %vm783, %v4813, %v4815
        %4856 = vmatprep.subr.bf16.mxu0 %v4817
        %4857 = vmatpush1.bf16.msra.mxu0 %v4816
        %4858 = vmatprep.subr.bf16.mxu0 %v4819
        %4859 = vmatpush1.bf16.msra.mxu0 %v4818
        %4860 = vmatprep.subr.bf16.mxu0 %v4821
        %4861 = vmatpush1.bf16.msra.mxu0 %v4820
        %4862 = vmatprep.subr.bf16.mxu0 %v4823
        %4863 = vmatpush1.bf16.msra.mxu0 %v4822
        %4864 = vmatprep.subr.bf16.mxu0 %v4825
        %4865 = vmatpush1.bf16.msra.mxu0 %v4824
        %4866 = vmatprep.subr.bf16.mxu0 %v4827
        %4867 = vmatpush1.bf16.msra.mxu0 %v4826
        %4868 = vmatprep.subr.bf16.mxu0 %v4829
        %4869 = vmatpush1.bf16.msra.mxu0 %v4828
        %4870 = vmatprep.subr.bf16.mxu0 %v4831
        %4871 = vmatpush1.bf16.msra.mxu0 %v4830
        %4872 = vmatprep.subr.bf16.mxu0 0
        %4873 = vmatpush1.bf16.msra.mxu0 0
        %4874 = vmatprep.subr.bf16.mxu0 0
        %4875 = vmatpush1.bf16.msra.mxu0 0
        %4876 = vmatprep.subr.bf16.mxu0 0
        %4877 = vmatpush1.bf16.msra.mxu0 0
        %4878 = vmatprep.subr.bf16.mxu0 0
        %4879 = vmatpush1.bf16.msra.mxu0 0
        %4880 = vmatprep.subr.bf16.mxu0 0
        %4881 = vmatpush1.bf16.msra.mxu0 0
        %4882 = vmatprep.subr.bf16.mxu0 0
        %4883 = vmatpush1.bf16.msra.mxu0 0
        %4884 = vmatprep.subr.bf16.mxu0 0
        %4885 = vmatpush1.bf16.msra.mxu0 0
        %4886 = vmatprep.subr.bf16.mxu0 0
        %4887 = vmatpush1.bf16.msra.mxu0 0
        %4888 = vmatprep.mubr.bf16.mxu0 0
        %4889 = vmatmul.mubr.bf16.gmra.mrb[0].mxu0 %v4743
        %v4890 = vpop.f32.mrb[0].mxu0
        %v4891 = vadd.f32 0.0, %v4890
        %v4892 = vpop.f32.mrb[0].mxu0
        %v4893 = vadd.f32 0.0, %v4892
        %v4894 = vpop.f32.mrb[0].mxu0
        %v4895 = vpop.f32.mrb[0].mxu0
        %4896 = vdwg.mxu0
        %4897 = vmatprep.subr.bf16.mxu0 0
        %4898 = vmatpush1.bf16.msra.mxu0 %v4773
        %4899 = vmatprep.subr.bf16.mxu0 0
        %4900 = vmatpush1.bf16.msra.mxu0 %v4779
        %4901 = vmatprep.subr.bf16.mxu0 0
        %4902 = vmatpush1.bf16.msra.mxu0 %v4785
        %4903 = vmatprep.subr.bf16.mxu0 0
        %4904 = vmatpush1.bf16.msra.mxu0 %v4791
        %4905 = vmatprep.subr.bf16.mxu0 0
        %4906 = vmatpush1.bf16.msra.mxu0 %v4797
        %4907 = vmatprep.subr.bf16.mxu0 0
        %4908 = vmatpush1.bf16.msra.mxu0 %v4803
        %4909 = vmatprep.subr.bf16.mxu0 0
        %4910 = vmatpush1.bf16.msra.mxu0 %v4809
        %4911 = vmatprep.subr.bf16.mxu0 0
        %4912 = vmatpush1.bf16.msra.mxu0 %v4815
        %4913 = vmatprep.subr.bf16.mxu0 0
        %4914 = vmatpush1.bf16.msra.mxu0 0
        %4915 = vmatprep.subr.bf16.mxu0 0
        %4916 = vmatpush1.bf16.msra.mxu0 0
        %4917 = vmatprep.subr.bf16.mxu0 0
        %4918 = vmatpush1.bf16.msra.mxu0 0
        %4919 = vmatprep.subr.bf16.mxu0 0
        %4920 = vmatpush1.bf16.msra.mxu0 0
        %4921 = vmatprep.subr.bf16.mxu0 0
        %4922 = vmatpush1.bf16.msra.mxu0 0
        %4923 = vmatprep.subr.bf16.mxu0 0
        %4924 = vmatpush1.bf16.msra.mxu0 0
        %4925 = vmatprep.subr.bf16.mxu0 0
        %4926 = vmatpush1.bf16.msra.mxu0 0
        %4927 = vmatprep.subr.bf16.mxu0 0
        %4928 = vmatpush1.bf16.msra.mxu0 0
        %4929 = vmatprep.mubr.bf16.mxu0 0
        %4930 = vmatmul.mubr.bf16.gmra.mrb[0].mxu0 %v4743
        %v4931 = vpop.f32.mrb[0].mxu0
        %v4932 = vadd.f32 0.0, %v4931
        %v4933 = vpop.f32.mrb[0].mxu0
        %v4934 = vpop.f32.mrb[0].mxu0
        %v4935 = vpop.f32.mrb[0].mxu0
        %4936 = vdwg.mxu0
        %4937 = vmatprep.subr.bf16.mxu0 %v4717
        %4938 = vmatpush1.bf16.msra.mxu0 %v4716
        %4939 = vmatprep.subr.bf16.mxu0 %v4720
        %4940 = vmatpush1.bf16.msra.mxu0 %v4719
        %4941 = vmatprep.subr.bf16.mxu0 %v4723
        %4942 = vmatpush1.bf16.msra.mxu0 %v4722
        %4943 = vmatprep.subr.bf16.mxu0 %v4726
        %4944 = vmatpush1.bf16.msra.mxu0 %v4725
        %4945 = vmatprep.subr.bf16.mxu0 %v4729
        %4946 = vmatpush1.bf16.msra.mxu0 %v4728
        %4947 = vmatprep.subr.bf16.mxu0 %v4732
        %4948 = vmatpush1.bf16.msra.mxu0 %v4731
        %4949 = vmatprep.subr.bf16.mxu0 %v4735
        %4950 = vmatpush1.bf16.msra.mxu0 %v4734
        %4951 = vmatprep.subr.bf16.mxu0 %v4738
        %4952 = vmatpush1.bf16.msra.mxu0 %v4737
        %4953 = vmatprep.subr.bf16.mxu0 0
        %4954 = vmatpush1.bf16.msra.mxu0 0
        %4955 = vmatprep.subr.bf16.mxu0 0
        %4956 = vmatpush1.bf16.msra.mxu0 0
        %4957 = vmatprep.subr.bf16.mxu0 0
        %4958 = vmatpush1.bf16.msra.mxu0 0
        %4959 = vmatprep.subr.bf16.mxu0 0
        %4960 = vmatpush1.bf16.msra.mxu0 0
        %4961 = vmatprep.subr.bf16.mxu0 0
        %4962 = vmatpush1.bf16.msra.mxu0 0
        %4963 = vmatprep.subr.bf16.mxu0 0
        %4964 = vmatpush1.bf16.msra.mxu0 0
        %4965 = vmatprep.subr.bf16.mxu0 0
        %4966 = vmatpush1.bf16.msra.mxu0 0
        %4967 = vmatprep.subr.bf16.mxu0 0
        %4968 = vmatpush1.bf16.msra.mxu0 0
        %4969 = vmatprep.mubr.bf16.mxu0 0
        %4970 = vmatmul.mubr.bf16.gmra.mrb[0].mxu0 %v4740
        %v4971 = vpop.f32.mrb[0].mxu0
        %v4972 = vadd.f32 %v4891, %v4971
        %v4973 = vpop.f32.mrb[0].mxu0
        %v4974 = vadd.f32 %v4893, %v4973
        %v4975 = vpop.f32.mrb[0].mxu0
        %v4976 = vpop.f32.mrb[0].mxu0
        %4977 = vdwg.mxu0
        %4978 = vmatprep.subr.bf16.mxu0 0
        %4979 = vmatpush1.bf16.msra.mxu0 %v4718
        %4980 = vmatprep.subr.bf16.mxu0 0
        %4981 = vmatpush1.bf16.msra.mxu0 %v4721
        %4982 = vmatprep.subr.bf16.mxu0 0
        %4983 = vmatpush1.bf16.msra.mxu0 %v4724
        %4984 = vmatprep.subr.bf16.mxu0 0
        %4985 = vmatpush1.bf16.msra.mxu0 %v4727
        %4986 = vmatprep.subr.bf16.mxu0 0
        %4987 = vmatpush1.bf16.msra.mxu0 %v4730
        %4988 = vmatprep.subr.bf16.mxu0 0
        %4989 = vmatpush1.bf16.msra.mxu0 %v4733
        %4990 = vmatprep.subr.bf16.mxu0 0
        %4991 = vmatpush1.bf16.msra.mxu0 %v4736
        %4992 = vmatprep.subr.bf16.mxu0 0
        %4993 = vmatpush1.bf16.msra.mxu0 %v4739
        %4994 = vmatprep.subr.bf16.mxu0 0
        %4995 = vmatpush1.bf16.msra.mxu0 0
        %4996 = vmatprep.subr.bf16.mxu0 0
        %4997 = vmatpush1.bf16.msra.mxu0 0
        %4998 = vmatprep.subr.bf16.mxu0 0
        %4999 = vmatpush1.bf16.msra.mxu0 0
        %5000 = vmatprep.subr.bf16.mxu0 0
        %5001 = vmatpush1.bf16.msra.mxu0 0
        %5002 = vmatprep.subr.bf16.mxu0 0
        %5003 = vmatpush1.bf16.msra.mxu0 0
        %5004 = vmatprep.subr.bf16.mxu0 0
        %5005 = vmatpush1.bf16.msra.mxu0 0
        %5006 = vmatprep.subr.bf16.mxu0 0
        %5007 = vmatpush1.bf16.msra.mxu0 0
        %5008 = vmatprep.subr.bf16.mxu0 0
        %5009 = vmatpush1.bf16.msra.mxu0 0
        %5010 = vmatprep.mubr.bf16.mxu0 0
        %5011 = vmatmul.mubr.bf16.gmra.mrb[0].mxu0 %v4740
        %v5012 = vpop.f32.mrb[0].mxu0
        %v5013 = vadd.f32 %v4932, %v5012
        %v5014 = vpop.f32.mrb[0].mxu0
        %v5015 = vpop.f32.mrb[0].mxu0
        %v5016 = vpop.f32.mrb[0].mxu0
        %5017 = vdwg.mxu0
        %s5018 = scalar_lea.vmem %s4, 2
        %v5019 = vld [vmem:[%s5018] sm:$0x3]
        %5020 = vmatprep.subr.bf16.mxu0 %v4817
        %5021 = vmatpush1.bf16.msra.mxu0 %v4816
        %5022 = vmatprep.subr.bf16.mxu0 %v4819
        %5023 = vmatpush1.bf16.msra.mxu0 %v4818
        %5024 = vmatprep.subr.bf16.mxu0 %v4821
        %5025 = vmatpush1.bf16.msra.mxu0 %v4820
        %5026 = vmatprep.subr.bf16.mxu0 %v4823
        %5027 = vmatpush1.bf16.msra.mxu0 %v4822
        %5028 = vmatprep.subr.bf16.mxu0 %v4825
        %5029 = vmatpush1.bf16.msra.mxu0 %v4824
        %5030 = vmatprep.subr.bf16.mxu0 %v4827
        %5031 = vmatpush1.bf16.msra.mxu0 %v4826
        %5032 = vmatprep.subr.bf16.mxu0 %v4829
        %5033 = vmatpush1.bf16.msra.mxu0 %v4828
        %5034 = vmatprep.subr.bf16.mxu0 %v4831
        %5035 = vmatpush1.bf16.msra.mxu0 %v4830
        %5036 = vmatprep.subr.bf16.mxu0 0
        %5037 = vmatpush1.bf16.msra.mxu0 0
        %5038 = vmatprep.subr.bf16.mxu0 0
        %5039 = vmatpush1.bf16.msra.mxu0 0
        %5040 = vmatprep.subr.bf16.mxu0 0
        %5041 = vmatpush1.bf16.msra.mxu0 0
        %5042 = vmatprep.subr.bf16.mxu0 0
        %5043 = vmatpush1.bf16.msra.mxu0 0
        %5044 = vmatprep.subr.bf16.mxu0 0
        %5045 = vmatpush1.bf16.msra.mxu0 0
        %5046 = vmatprep.subr.bf16.mxu0 0
        %5047 = vmatpush1.bf16.msra.mxu0 0
        %5048 = vmatprep.subr.bf16.mxu0 0
        %5049 = vmatpush1.bf16.msra.mxu0 0
        %5050 = vmatprep.subr.bf16.mxu0 0
        %5051 = vmatpush1.bf16.msra.mxu0 0
        %5052 = vmatprep.mubr.bf16.mxu0 0
        %5053 = vmatmul.mubr.bf16.gmra.mrb[0].mxu0 %v5019
        %v5054 = vpop.f32.mrb[0].mxu0
        %v5055 = vadd.f32 0.0, %v5054
        %v5056 = vpop.f32.mrb[0].mxu0
        %v5057 = vadd.f32 0.0, %v5056
        %v5058 = vpop.f32.mrb[0].mxu0
        %v5059 = vpop.f32.mrb[0].mxu0
        %5060 = vdwg.mxu0
        %5061 = vmatprep.subr.bf16.mxu0 0
        %5062 = vmatpush1.bf16.msra.mxu0 %v4773
        %5063 = vmatprep.subr.bf16.mxu0 0
        %5064 = vmatpush1.bf16.msra.mxu0 %v4779
        %5065 = vmatprep.subr.bf16.mxu0 0
        %5066 = vmatpush1.bf16.msra.mxu0 %v4785
        %5067 = vmatprep.subr.bf16.mxu0 0
        %5068 = vmatpush1.bf16.msra.mxu0 %v4791
        %5069 = vmatprep.subr.bf16.mxu0 0
        %5070 = vmatpush1.bf16.msra.mxu0 %v4797
        %5071 = vmatprep.subr.bf16.mxu0 0
        %5072 = vmatpush1.bf16.msra.mxu0 %v4803
        %5073 = vmatprep.subr.bf16.mxu0 0
        %5074 = vmatpush1.bf16.msra.mxu0 %v4809
        %5075 = vmatprep.subr.bf16.mxu0 0
        %5076 = vmatpush1.bf16.msra.mxu0 %v4815
        %5077 = vmatprep.subr.bf16.mxu0 0
        %5078 = vmatpush1.bf16.msra.mxu0 0
        %5079 = vmatprep.subr.bf16.mxu0 0
        %5080 = vmatpush1.bf16.msra.mxu0 0
        %5081 = vmatprep.subr.bf16.mxu0 0
        %5082 = vmatpush1.bf16.msra.mxu0 0
        %5083 = vmatprep.subr.bf16.mxu0 0
        %5084 = vmatpush1.bf16.msra.mxu0 0
        %5085 = vmatprep.subr.bf16.mxu0 0
        %5086 = vmatpush1.bf16.msra.mxu0 0
        %5087 = vmatprep.subr.bf16.mxu0 0
        %5088 = vmatpush1.bf16.msra.mxu0 0
        %5089 = vmatprep.subr.bf16.mxu0 0
        %5090 = vmatpush1.bf16.msra.mxu0 0
        %5091 = vmatprep.subr.bf16.mxu0 0
        %5092 = vmatpush1.bf16.msra.mxu0 0
        %5093 = vmatprep.mubr.bf16.mxu0 0
        %5094 = vmatmul.mubr.bf16.gmra.mrb[0].mxu0 %v5019
        %v5095 = vpop.f32.mrb[0].mxu0
        %v5096 = vadd.f32 0.0, %v5095
        %v5097 = vpop.f32.mrb[0].mxu0
        %v5098 = vpop.f32.mrb[0].mxu0
        %v5099 = vpop.f32.mrb[0].mxu0
        %5100 = vdwg.mxu0
        %5101 = vmatprep.subr.bf16.mxu0 %v4717
        %5102 = vmatpush1.bf16.msra.mxu0 %v4716
        %5103 = vmatprep.subr.bf16.mxu0 %v4720
        %5104 = vmatpush1.bf16.msra.mxu0 %v4719
        %5105 = vmatprep.subr.bf16.mxu0 %v4723
        %5106 = vmatpush1.bf16.msra.mxu0 %v4722
        %5107 = vmatprep.subr.bf16.mxu0 %v4726
        %5108 = vmatpush1.bf16.msra.mxu0 %v4725
        %5109 = vmatprep.subr.bf16.mxu0 %v4729
        %5110 = vmatpush1.bf16.msra.mxu0 %v4728
        %5111 = vmatprep.subr.bf16.mxu0 %v4732
        %5112 = vmatpush1.bf16.msra.mxu0 %v4731
        %5113 = vmatprep.subr.bf16.mxu0 %v4735
        %5114 = vmatpush1.bf16.msra.mxu0 %v4734
        %5115 = vmatprep.subr.bf16.mxu0 %v4738
        %5116 = vmatpush1.bf16.msra.mxu0 %v4737
        %5117 = vmatprep.subr.bf16.mxu0 0
        %5118 = vmatpush1.bf16.msra.mxu0 0
        %5119 = vmatprep.subr.bf16.mxu0 0
        %5120 = vmatpush1.bf16.msra.mxu0 0
        %5121 = vmatprep.subr.bf16.mxu0 0
        %5122 = vmatpush1.bf16.msra.mxu0 0
        %5123 = vmatprep.subr.bf16.mxu0 0
        %5124 = vmatpush1.bf16.msra.mxu0 0
        %5125 = vmatprep.subr.bf16.mxu0 0
        %5126 = vmatpush1.bf16.msra.mxu0 0
        %5127 = vmatprep.subr.bf16.mxu0 0
        %5128 = vmatpush1.bf16.msra.mxu0 0
        %5129 = vmatprep.subr.bf16.mxu0 0
        %5130 = vmatpush1.bf16.msra.mxu0 0
        %5131 = vmatprep.subr.bf16.mxu0 0
        %5132 = vmatpush1.bf16.msra.mxu0 0
        %5133 = vmatprep.mubr.bf16.mxu0 0
        %5134 = vmatmul.mubr.bf16.gmra.mrb[0].mxu0 %v4741
        %v5135 = vpop.f32.mrb[0].mxu0
        %v5136 = vadd.f32 %v5055, %v5135
        %v5137 = vpop.f32.mrb[0].mxu0
        %v5138 = vadd.f32 %v5057, %v5137
        %v5139 = vpop.f32.mrb[0].mxu0
        %v5140 = vpop.f32.mrb[0].mxu0
        %5141 = vdwg.mxu0
        %5142 = vmatprep.subr.bf16.mxu0 0
        %5143 = vmatpush1.bf16.msra.mxu0 %v4718
        %5144 = vmatprep.subr.bf16.mxu0 0
        %5145 = vmatpush1.bf16.msra.mxu0 %v4721
        %5146 = vmatprep.subr.bf16.mxu0 0
        %5147 = vmatpush1.bf16.msra.mxu0 %v4724
        %5148 = vmatprep.subr.bf16.mxu0 0
        %5149 = vmatpush1.bf16.msra.mxu0 %v4727
        %5150 = vmatprep.subr.bf16.mxu0 0
        %5151 = vmatpush1.bf16.msra.mxu0 %v4730
        %5152 = vmatprep.subr.bf16.mxu0 0
        %5153 = vmatpush1.bf16.msra.mxu0 %v4733
        %5154 = vmatprep.subr.bf16.mxu0 0
        %5155 = vmatpush1.bf16.msra.mxu0 %v4736
        %5156 = vmatprep.subr.bf16.mxu0 0
        %5157 = vmatpush1.bf16.msra.mxu0 %v4739
        %5158 = vmatprep.subr.bf16.mxu0 0
        %5159 = vmatpush1.bf16.msra.mxu0 0
        %5160 = vmatprep.subr.bf16.mxu0 0
        %5161 = vmatpush1.bf16.msra.mxu0 0
        %5162 = vmatprep.subr.bf16.mxu0 0
        %5163 = vmatpush1.bf16.msra.mxu0 0
        %5164 = vmatprep.subr.bf16.mxu0 0
        %5165 = vmatpush1.bf16.msra.mxu0 0
        %5166 = vmatprep.subr.bf16.mxu0 0
        %5167 = vmatpush1.bf16.msra.mxu0 0
        %5168 = vmatprep.subr.bf16.mxu0 0
        %5169 = vmatpush1.bf16.msra.mxu0 0
        %5170 = vmatprep.subr.bf16.mxu0 0
        %5171 = vmatpush1.bf16.msra.mxu0 0
        %5172 = vmatprep.subr.bf16.mxu0 0
        %5173 = vmatpush1.bf16.msra.mxu0 0
        %5174 = vmatprep.mubr.bf16.mxu0 0
        %5175 = vmatmul.mubr.bf16.gmra.mrb[0].mxu0 %v4741
        %v5176 = vpop.f32.mrb[0].mxu0
        %v5177 = vadd.f32 %v5096, %v5176
        %v5178 = vpop.f32.mrb[0].mxu0
        %v5179 = vpop.f32.mrb[0].mxu0
        %v5180 = vpop.f32.mrb[0].mxu0
        %5181 = vdwg.mxu0
        %s5182 = scalar_lea.vmem %s3, 4
        %v5183 = vld [vmem:[%s5182] sm:$0x3]
        %5184 = vrot.lane.b32.xlu0 %v4716, 126
        %v5185 = vpop.permute.xlu0 %5184
        %5186 = vrot.lane.b32.xlu0 %v4717, 126
        %v5187 = vpop.permute.xlu0 %5186
        %5188 = vrot.lane.b32.xlu0 %v4718, 126
        %v5189 = vpop.permute.xlu0 %5188
        %5190 = vrot.lane.b32.xlu0 %v4719, 126
        %v5191 = vpop.permute.xlu0 %5190
        %5192 = vrot.lane.b32.xlu0 %v4720, 126
        %v5193 = vpop.permute.xlu0 %5192
        %5194 = vrot.lane.b32.xlu0 %v4721, 126
        %v5195 = vpop.permute.xlu0 %5194
        %5196 = vrot.lane.b32.xlu0 %v4722, 126
        %v5197 = vpop.permute.xlu0 %5196
        %5198 = vrot.lane.b32.xlu0 %v4723, 126
        %v5199 = vpop.permute.xlu0 %5198
        %5200 = vrot.lane.b32.xlu0 %v4724, 126
        %v5201 = vpop.permute.xlu0 %5200
        %5202 = vrot.lane.b32.xlu0 %v4725, 126
        %v5203 = vpop.permute.xlu0 %5202
        %5204 = vrot.lane.b32.xlu0 %v4726, 126
        %v5205 = vpop.permute.xlu0 %5204
        %5206 = vrot.lane.b32.xlu0 %v4727, 126
        %v5207 = vpop.permute.xlu0 %5206
        %5208 = vrot.lane.b32.xlu0 %v4728, 126
        %v5209 = vpop.permute.xlu0 %5208
        %5210 = vrot.lane.b32.xlu0 %v4729, 126
        %v5211 = vpop.permute.xlu0 %5210
        %5212 = vrot.lane.b32.xlu0 %v4730, 126
        %v5213 = vpop.permute.xlu0 %5212
        %5214 = vrot.lane.b32.xlu0 %v4731, 126
        %v5215 = vpop.permute.xlu0 %5214
        %5216 = vrot.lane.b32.xlu0 %v4732, 126
        %v5217 = vpop.permute.xlu0 %5216
        %5218 = vrot.lane.b32.xlu0 %v4733, 126
        %v5219 = vpop.permute.xlu0 %5218
        %5220 = vrot.lane.b32.xlu0 %v4734, 126
        %v5221 = vpop.permute.xlu0 %5220
        %5222 = vrot.lane.b32.xlu0 %v4735, 126
        %v5223 = vpop.permute.xlu0 %5222
        %5224 = vrot.lane.b32.xlu0 %v4736, 126
        %v5225 = vpop.permute.xlu0 %5224
        %5226 = vrot.lane.b32.xlu0 %v4737, 126
        %v5227 = vpop.permute.xlu0 %5226
        %5228 = vrot.lane.b32.xlu0 %v4738, 126
        %v5229 = vpop.permute.xlu0 %5228
        %5230 = vrot.lane.b32.xlu0 %v4739, 126
        %v5231 = vpop.permute.xlu0 %5230
        %v5232 = vsel %vm1236, %v5185, %v5187
        %v5233 = vsel %vm1236, %v5187, %v5189
        %v5234 = vsel %vm1236, %v5191, %v5193
        %v5235 = vsel %vm1236, %v5193, %v5195
        %v5236 = vsel %vm1236, %v5197, %v5199
        %v5237 = vsel %vm1236, %v5199, %v5201
        %v5238 = vsel %vm1236, %v5203, %v5205
        %v5239 = vsel %vm1236, %v5205, %v5207
        %v5240 = vsel %vm1236, %v5209, %v5211
        %v5241 = vsel %vm1236, %v5211, %v5213
        %v5242 = vsel %vm1236, %v5215, %v5217
        %v5243 = vsel %vm1236, %v5217, %v5219
        %v5244 = vsel %vm1236, %v5221, %v5223
        %v5245 = vsel %vm1236, %v5223, %v5225
        %v5246 = vsel %vm1236, %v5227, %v5229
        %v5247 = vsel %vm1236, %v5229, %v5231
        %5272 = vmatprep.subr.bf16.mxu0 %v5233
        %5273 = vmatpush1.bf16.msra.mxu0 %v5232
        %5274 = vmatprep.subr.bf16.mxu0 %v5235
        %5275 = vmatpush1.bf16.msra.mxu0 %v5234
        %5276 = vmatprep.subr.bf16.mxu0 %v5237
        %5277 = vmatpush1.bf16.msra.mxu0 %v5236
        %5278 = vmatprep.subr.bf16.mxu0 %v5239
        %5279 = vmatpush1.bf16.msra.mxu0 %v5238
        %5280 = vmatprep.subr.bf16.mxu0 %v5241
        %5281 = vmatpush1.bf16.msra.mxu0 %v5240
        %5282 = vmatprep.subr.bf16.mxu0 %v5243
        %5283 = vmatpush1.bf16.msra.mxu0 %v5242
        %5284 = vmatprep.subr.bf16.mxu0 %v5245
        %5285 = vmatpush1.bf16.msra.mxu0 %v5244
        %5286 = vmatprep.subr.bf16.mxu0 %v5247
        %5287 = vmatpush1.bf16.msra.mxu0 %v5246
        %5288 = vmatprep.subr.bf16.mxu0 0
        %5289 = vmatpush1.bf16.msra.mxu0 0
        %5290 = vmatprep.subr.bf16.mxu0 0
        %5291 = vmatpush1.bf16.msra.mxu0 0
        %5292 = vmatprep.subr.bf16.mxu0 0
        %5293 = vmatpush1.bf16.msra.mxu0 0
        %5294 = vmatprep.subr.bf16.mxu0 0
        %5295 = vmatpush1.bf16.msra.mxu0 0
        %5296 = vmatprep.subr.bf16.mxu0 0
        %5297 = vmatpush1.bf16.msra.mxu0 0
        %5298 = vmatprep.subr.bf16.mxu0 0
        %5299 = vmatpush1.bf16.msra.mxu0 0
        %5300 = vmatprep.subr.bf16.mxu0 0
        %5301 = vmatpush1.bf16.msra.mxu0 0
        %5302 = vmatprep.subr.bf16.mxu0 0
        %5303 = vmatpush1.bf16.msra.mxu0 0
        %5304 = vmatprep.mubr.bf16.mxu0 0
        %5305 = vmatmul.mubr.bf16.gmra.mrb[0].mxu0 %v5183
        %v5306 = vpop.f32.mrb[0].mxu0
        %v5307 = vadd.f32 0.0, %v5306
        %v5308 = vpop.f32.mrb[0].mxu0
        %v5309 = vadd.f32 0.0, %v5308
        %v5310 = vpop.f32.mrb[0].mxu0
        %v5311 = vpop.f32.mrb[0].mxu0
        %5312 = vdwg.mxu0
        %5313 = vmatprep.subr.bf16.mxu0 0
        %5314 = vmatpush1.bf16.msra.mxu0 %v5189
        %5315 = vmatprep.subr.bf16.mxu0 0
        %5316 = vmatpush1.bf16.msra.mxu0 %v5195
        %5317 = vmatprep.subr.bf16.mxu0 0
        %5318 = vmatpush1.bf16.msra.mxu0 %v5201
        %5319 = vmatprep.subr.bf16.mxu0 0
        %5320 = vmatpush1.bf16.msra.mxu0 %v5207
        %5321 = vmatprep.subr.bf16.mxu0 0
        %5322 = vmatpush1.bf16.msra.mxu0 %v5213
        %5323 = vmatprep.subr.bf16.mxu0 0
        %5324 = vmatpush1.bf16.msra.mxu0 %v5219
        %5325 = vmatprep.subr.bf16.mxu0 0
        %5326 = vmatpush1.bf16.msra.mxu0 %v5225
        %5327 = vmatprep.subr.bf16.mxu0 0
        %5328 = vmatpush1.bf16.msra.mxu0 %v5231
        %5329 = vmatprep.subr.bf16.mxu0 0
        %5330 = vmatpush1.bf16.msra.mxu0 0
        %5331 = vmatprep.subr.bf16.mxu0 0
        %5332 = vmatpush1.bf16.msra.mxu0 0
        %5333 = vmatprep.subr.bf16.mxu0 0
        %5334 = vmatpush1.bf16.msra.mxu0 0
        %5335 = vmatprep.subr.bf16.mxu0 0
        %5336 = vmatpush1.bf16.msra.mxu0 0
        %5337 = vmatprep.subr.bf16.mxu0 0
        %5338 = vmatpush1.bf16.msra.mxu0 0
        %5339 = vmatprep.subr.bf16.mxu0 0
        %5340 = vmatpush1.bf16.msra.mxu0 0
        %5341 = vmatprep.subr.bf16.mxu0 0
        %5342 = vmatpush1.bf16.msra.mxu0 0
        %5343 = vmatprep.subr.bf16.mxu0 0
        %5344 = vmatpush1.bf16.msra.mxu0 0
        %5345 = vmatprep.mubr.bf16.mxu0 0
        %5346 = vmatmul.mubr.bf16.gmra.mrb[0].mxu0 %v5183
        %v5347 = vpop.f32.mrb[0].mxu0
        %v5348 = vadd.f32 0.0, %v5347
        %v5349 = vpop.f32.mrb[0].mxu0
        %v5350 = vpop.f32.mrb[0].mxu0
        %v5351 = vpop.f32.mrb[0].mxu0
        %5352 = vdwg.mxu0
        %v5353 = vadd.f32 %v4972, %v5307
        %v5354 = vadd.f32 %v4974, %v5309
        %v5355 = vadd.f32 %v5013, %v5348
        %s5356 = scalar_lea.vmem %s4, 4
        %v5357 = vld [vmem:[%s5356] sm:$0x3]
        %5358 = vmatprep.subr.bf16.mxu0 %v5233
        %5359 = vmatpush1.bf16.msra.mxu0 %v5232
        %5360 = vmatprep.subr.bf16.mxu0 %v5235
        %5361 = vmatpush1.bf16.msra.mxu0 %v5234
        %5362 = vmatprep.subr.bf16.mxu0 %v5237
        %5363 = vmatpush1.bf16.msra.mxu0 %v5236
        %5364 = vmatprep.subr.bf16.mxu0 %v5239
        %5365 = vmatpush1.bf16.msra.mxu0 %v5238
        %5366 = vmatprep.subr.bf16.mxu0 %v5241
        %5367 = vmatpush1.bf16.msra.mxu0 %v5240
        %5368 = vmatprep.subr.bf16.mxu0 %v5243
        %5369 = vmatpush1.bf16.msra.mxu0 %v5242
        %5370 = vmatprep.subr.bf16.mxu0 %v5245
        %5371 = vmatpush1.bf16.msra.mxu0 %v5244
        %5372 = vmatprep.subr.bf16.mxu0 %v5247
        %5373 = vmatpush1.bf16.msra.mxu0 %v5246
        %5374 = vmatprep.subr.bf16.mxu0 0
        %5375 = vmatpush1.bf16.msra.mxu0 0
        %5376 = vmatprep.subr.bf16.mxu0 0
        %5377 = vmatpush1.bf16.msra.mxu0 0
        %5378 = vmatprep.subr.bf16.mxu0 0
        %5379 = vmatpush1.bf16.msra.mxu0 0
        %5380 = vmatprep.subr.bf16.mxu0 0
        %5381 = vmatpush1.bf16.msra.mxu0 0
        %5382 = vmatprep.subr.bf16.mxu0 0
        %5383 = vmatpush1.bf16.msra.mxu0 0
        %5384 = vmatprep.subr.bf16.mxu0 0
        %5385 = vmatpush1.bf16.msra.mxu0 0
        %5386 = vmatprep.subr.bf16.mxu0 0
        %5387 = vmatpush1.bf16.msra.mxu0 0
        %5388 = vmatprep.subr.bf16.mxu0 0
        %5389 = vmatpush1.bf16.msra.mxu0 0
        %5390 = vmatprep.mubr.bf16.mxu0 0
        %5391 = vmatmul.mubr.bf16.gmra.mrb[0].mxu0 %v5357
        %v5392 = vpop.f32.mrb[0].mxu0
        %v5393 = vadd.f32 0.0, %v5392
        %v5394 = vpop.f32.mrb[0].mxu0
        %v5395 = vadd.f32 0.0, %v5394
        %v5396 = vpop.f32.mrb[0].mxu0
        %v5397 = vpop.f32.mrb[0].mxu0
        %5398 = vdwg.mxu0
        %5399 = vmatprep.subr.bf16.mxu0 0
        %5400 = vmatpush1.bf16.msra.mxu0 %v5189
        %5401 = vmatprep.subr.bf16.mxu0 0
        %5402 = vmatpush1.bf16.msra.mxu0 %v5195
        %5403 = vmatprep.subr.bf16.mxu0 0
        %5404 = vmatpush1.bf16.msra.mxu0 %v5201
        %5405 = vmatprep.subr.bf16.mxu0 0
        %5406 = vmatpush1.bf16.msra.mxu0 %v5207
        %5407 = vmatprep.subr.bf16.mxu0 0
        %5408 = vmatpush1.bf16.msra.mxu0 %v5213
        %5409 = vmatprep.subr.bf16.mxu0 0
        %5410 = vmatpush1.bf16.msra.mxu0 %v5219
        %5411 = vmatprep.subr.bf16.mxu0 0
        %5412 = vmatpush1.bf16.msra.mxu0 %v5225
        %5413 = vmatprep.subr.bf16.mxu0 0
        %5414 = vmatpush1.bf16.msra.mxu0 %v5231
        %5415 = vmatprep.subr.bf16.mxu0 0
        %5416 = vmatpush1.bf16.msra.mxu0 0
        %5417 = vmatprep.subr.bf16.mxu0 0
        %5418 = vmatpush1.bf16.msra.mxu0 0
        %5419 = vmatprep.subr.bf16.mxu0 0
        %5420 = vmatpush1.bf16.msra.mxu0 0
        %5421 = vmatprep.subr.bf16.mxu0 0
        %5422 = vmatpush1.bf16.msra.mxu0 0
        %5423 = vmatprep.subr.bf16.mxu0 0
        %5424 = vmatpush1.bf16.msra.mxu0 0
        %5425 = vmatprep.subr.bf16.mxu0 0
        %5426 = vmatpush1.bf16.msra.mxu0 0
        %5427 = vmatprep.subr.bf16.mxu0 0
        %5428 = vmatpush1.bf16.msra.mxu0 0
        %5429 = vmatprep.subr.bf16.mxu0 0
        %5430 = vmatpush1.bf16.msra.mxu0 0
        %5431 = vmatprep.mubr.bf16.mxu0 0
        %5432 = vmatmul.mubr.bf16.gmra.mrb[0].mxu0 %v5357
        %v5433 = vpop.f32.mrb[0].mxu0
        %v5434 = vadd.f32 0.0, %v5433
        %v5435 = vpop.f32.mrb[0].mxu0
        %v5436 = vpop.f32.mrb[0].mxu0
        %v5437 = vpop.f32.mrb[0].mxu0
        %5438 = vdwg.mxu0
        %v5439 = vadd.f32 %v5136, %v5393
        %v5440 = vadd.f32 %v5138, %v5395
        %v5441 = vadd.f32 %v5177, %v5434
        %s5442 = scalar_lea.vmem %s3, 6
        %v5443 = vld [vmem:[%s5442] sm:$0x3]
        %5444 = vrot.lane.b32.xlu0 %v4716, 108
        %v5445 = vpop.permute.xlu0 %5444
        %5446 = vrot.lane.b32.xlu0 %v4717, 108
        %v5447 = vpop.permute.xlu0 %5446
        %5448 = vrot.lane.b32.xlu0 %v4718, 108
        %v5449 = vpop.permute.xlu0 %5448
        %5450 = vrot.lane.b32.xlu0 %v4719, 108
        %v5451 = vpop.permute.xlu0 %5450
        %5452 = vrot.lane.b32.xlu0 %v4720, 108
        %v5453 = vpop.permute.xlu0 %5452
        %5454 = vrot.lane.b32.xlu0 %v4721, 108
        %v5455 = vpop.permute.xlu0 %5454
        %5456 = vrot.lane.b32.xlu0 %v4722, 108
        %v5457 = vpop.permute.xlu0 %5456
        %5458 = vrot.lane.b32.xlu0 %v4723, 108
        %v5459 = vpop.permute.xlu0 %5458
        %5460 = vrot.lane.b32.xlu0 %v4724, 108
        %v5461 = vpop.permute.xlu0 %5460
        %5462 = vrot.lane.b32.xlu0 %v4725, 108
        %v5463 = vpop.permute.xlu0 %5462
        %5464 = vrot.lane.b32.xlu0 %v4726, 108
        %v5465 = vpop.permute.xlu0 %5464
        %5466 = vrot.lane.b32.xlu0 %v4727, 108
        %v5467 = vpop.permute.xlu0 %5466
        %5468 = vrot.lane.b32.xlu0 %v4728, 108
        %v5469 = vpop.permute.xlu0 %5468
        %5470 = vrot.lane.b32.xlu0 %v4729, 108
        %v5471 = vpop.permute.xlu0 %5470
        %5472 = vrot.lane.b32.xlu0 %v4730, 108
        %v5473 = vpop.permute.xlu0 %5472
        %5474 = vrot.lane.b32.xlu0 %v4731, 108
        %v5475 = vpop.permute.xlu0 %5474
        %5476 = vrot.lane.b32.xlu0 %v4732, 108
        %v5477 = vpop.permute.xlu0 %5476
        %5478 = vrot.lane.b32.xlu0 %v4733, 108
        %v5479 = vpop.permute.xlu0 %5478
        %5480 = vrot.lane.b32.xlu0 %v4734, 108
        %v5481 = vpop.permute.xlu0 %5480
        %5482 = vrot.lane.b32.xlu0 %v4735, 108
        %v5483 = vpop.permute.xlu0 %5482
        %5484 = vrot.lane.b32.xlu0 %v4736, 108
        %v5485 = vpop.permute.xlu0 %5484
        %5486 = vrot.lane.b32.xlu0 %v4737, 108
        %v5487 = vpop.permute.xlu0 %5486
        %5488 = vrot.lane.b32.xlu0 %v4738, 108
        %v5489 = vpop.permute.xlu0 %5488
        %5490 = vrot.lane.b32.xlu0 %v4739, 108
        %v5491 = vpop.permute.xlu0 %5490
        %v5492 = vsel %vm1692, %v5445, %v5447
        %v5493 = vsel %vm1692, %v5447, %v5449
        %v5494 = vsel %vm1692, %v5451, %v5453
        %v5495 = vsel %vm1692, %v5453, %v5455
        %v5496 = vsel %vm1692, %v5457, %v5459
        %v5497 = vsel %vm1692, %v5459, %v5461
        %v5498 = vsel %vm1692, %v5463, %v5465
        %v5499 = vsel %vm1692, %v5465, %v5467
        %v5500 = vsel %vm1692, %v5469, %v5471
        %v5501 = vsel %vm1692, %v5471, %v5473
        %v5502 = vsel %vm1692, %v5475, %v5477
        %v5503 = vsel %vm1692, %v5477, %v5479
        %v5504 = vsel %vm1692, %v5481, %v5483
        %v5505 = vsel %vm1692, %v5483, %v5485
        %v5506 = vsel %vm1692, %v5487, %v5489
        %v5507 = vsel %vm1692, %v5489, %v5491
        %5532 = vmatprep.subr.bf16.mxu0 %v5493
        %5533 = vmatpush1.bf16.msra.mxu0 %v5492
        %5534 = vmatprep.subr.bf16.mxu0 %v5495
        %5535 = vmatpush1.bf16.msra.mxu0 %v5494
        %5536 = vmatprep.subr.bf16.mxu0 %v5497
        %5537 = vmatpush1.bf16.msra.mxu0 %v5496
        %5538 = vmatprep.subr.bf16.mxu0 %v5499
        %5539 = vmatpush1.bf16.msra.mxu0 %v5498
        %5540 = vmatprep.subr.bf16.mxu0 %v5501
        %5541 = vmatpush1.bf16.msra.mxu0 %v5500
        %5542 = vmatprep.subr.bf16.mxu0 %v5503
        %5543 = vmatpush1.bf16.msra.mxu0 %v5502
        %5544 = vmatprep.subr.bf16.mxu0 %v5505
        %5545 = vmatpush1.bf16.msra.mxu0 %v5504
        %5546 = vmatprep.subr.bf16.mxu0 %v5507
        %5547 = vmatpush1.bf16.msra.mxu0 %v5506
        %5548 = vmatprep.subr.bf16.mxu0 0
        %5549 = vmatpush1.bf16.msra.mxu0 0
        %5550 = vmatprep.subr.bf16.mxu0 0
        %5551 = vmatpush1.bf16.msra.mxu0 0
        %5552 = vmatprep.subr.bf16.mxu0 0
        %5553 = vmatpush1.bf16.msra.mxu0 0
        %5554 = vmatprep.subr.bf16.mxu0 0
        %5555 = vmatpush1.bf16.msra.mxu0 0
        %5556 = vmatprep.subr.bf16.mxu0 0
        %5557 = vmatpush1.bf16.msra.mxu0 0
        %5558 = vmatprep.subr.bf16.mxu0 0
        %5559 = vmatpush1.bf16.msra.mxu0 0
        %5560 = vmatprep.subr.bf16.mxu0 0
        %5561 = vmatpush1.bf16.msra.mxu0 0
        %5562 = vmatprep.subr.bf16.mxu0 0
        %5563 = vmatpush1.bf16.msra.mxu0 0
        %5564 = vmatprep.mubr.bf16.mxu0 0
        %5565 = vmatmul.mubr.bf16.gmra.mrb[0].mxu0 %v5443
        %v5566 = vpop.f32.mrb[0].mxu0
        %v5567 = vadd.f32 0.0, %v5566
        %v5568 = vpop.f32.mrb[0].mxu0
        %v5569 = vadd.f32 0.0, %v5568
        %v5570 = vpop.f32.mrb[0].mxu0
        %v5571 = vpop.f32.mrb[0].mxu0
        %5572 = vdwg.mxu0
        %5573 = vmatprep.subr.bf16.mxu0 0
        %5574 = vmatpush1.bf16.msra.mxu0 %v5449
        %5575 = vmatprep.subr.bf16.mxu0 0
        %5576 = vmatpush1.bf16.msra.mxu0 %v5455
        %5577 = vmatprep.subr.bf16.mxu0 0
        %5578 = vmatpush1.bf16.msra.mxu0 %v5461
        %5579 = vmatprep.subr.bf16.mxu0 0
        %5580 = vmatpush1.bf16.msra.mxu0 %v5467
        %5581 = vmatprep.subr.bf16.mxu0 0
        %5582 = vmatpush1.bf16.msra.mxu0 %v5473
        %5583 = vmatprep.subr.bf16.mxu0 0
        %5584 = vmatpush1.bf16.msra.mxu0 %v5479
        %5585 = vmatprep.subr.bf16.mxu0 0
        %5586 = vmatpush1.bf16.msra.mxu0 %v5485
        %5587 = vmatprep.subr.bf16.mxu0 0
        %5588 = vmatpush1.bf16.msra.mxu0 %v5491
        %5589 = vmatprep.subr.bf16.mxu0 0
        %5590 = vmatpush1.bf16.msra.mxu0 0
        %5591 = vmatprep.subr.bf16.mxu0 0
        %5592 = vmatpush1.bf16.msra.mxu0 0
        %5593 = vmatprep.subr.bf16.mxu0 0
        %5594 = vmatpush1.bf16.msra.mxu0 0
        %5595 = vmatprep.subr.bf16.mxu0 0
        %5596 = vmatpush1.bf16.msra.mxu0 0
        %5597 = vmatprep.subr.bf16.mxu0 0
        %5598 = vmatpush1.bf16.msra.mxu0 0
        %5599 = vmatprep.subr.bf16.mxu0 0
        %5600 = vmatpush1.bf16.msra.mxu0 0
        %5601 = vmatprep.subr.bf16.mxu0 0
        %5602 = vmatpush1.bf16.msra.mxu0 0
        %5603 = vmatprep.subr.bf16.mxu0 0
        %5604 = vmatpush1.bf16.msra.mxu0 0
        %5605 = vmatprep.mubr.bf16.mxu0 0
        %5606 = vmatmul.mubr.bf16.gmra.mrb[0].mxu0 %v5443
        %v5607 = vpop.f32.mrb[0].mxu0
        %v5608 = vadd.f32 0.0, %v5607
        %v5609 = vpop.f32.mrb[0].mxu0
        %v5610 = vpop.f32.mrb[0].mxu0
        %v5611 = vpop.f32.mrb[0].mxu0
        %5612 = vdwg.mxu0
        %v5613 = vadd.f32 %v5353, %v5567
        %v5614 = vadd.f32 %v5354, %v5569
        %v5615 = vadd.f32 %v5355, %v5608
        %s5616 = scalar_lea.vmem %s4, 6
        %v5617 = vld [vmem:[%s5616] sm:$0x3]
        %5618 = vmatprep.subr.bf16.mxu0 %v5493
        %5619 = vmatpush1.bf16.msra.mxu0 %v5492
        %5620 = vmatprep.subr.bf16.mxu0 %v5495
        %5621 = vmatpush1.bf16.msra.mxu0 %v5494
        %5622 = vmatprep.subr.bf16.mxu0 %v5497
        %5623 = vmatpush1.bf16.msra.mxu0 %v5496
        %5624 = vmatprep.subr.bf16.mxu0 %v5499
        %5625 = vmatpush1.bf16.msra.mxu0 %v5498
        %5626 = vmatprep.subr.bf16.mxu0 %v5501
        %5627 = vmatpush1.bf16.msra.mxu0 %v5500
        %5628 = vmatprep.subr.bf16.mxu0 %v5503
        %5629 = vmatpush1.bf16.msra.mxu0 %v5502
        %5630 = vmatprep.subr.bf16.mxu0 %v5505
        %5631 = vmatpush1.bf16.msra.mxu0 %v5504
        %5632 = vmatprep.subr.bf16.mxu0 %v5507
        %5633 = vmatpush1.bf16.msra.mxu0 %v5506
        %5634 = vmatprep.subr.bf16.mxu0 0
        %5635 = vmatpush1.bf16.msra.mxu0 0
        %5636 = vmatprep.subr.bf16.mxu0 0
        %5637 = vmatpush1.bf16.msra.mxu0 0
        %5638 = vmatprep.subr.bf16.mxu0 0
        %5639 = vmatpush1.bf16.msra.mxu0 0
        %5640 = vmatprep.subr.bf16.mxu0 0
        %5641 = vmatpush1.bf16.msra.mxu0 0
        %5642 = vmatprep.subr.bf16.mxu0 0
        %5643 = vmatpush1.bf16.msra.mxu0 0
        %5644 = vmatprep.subr.bf16.mxu0 0
        %5645 = vmatpush1.bf16.msra.mxu0 0
        %5646 = vmatprep.subr.bf16.mxu0 0
        %5647 = vmatpush1.bf16.msra.mxu0 0
        %5648 = vmatprep.subr.bf16.mxu0 0
        %5649 = vmatpush1.bf16.msra.mxu0 0
        %5650 = vmatprep.mubr.bf16.mxu0 0
        %5651 = vmatmul.mubr.bf16.gmra.mrb[0].mxu0 %v5617
        %v5652 = vpop.f32.mrb[0].mxu0
        %v5653 = vadd.f32 0.0, %v5652
        %v5654 = vpop.f32.mrb[0].mxu0
        %v5655 = vadd.f32 0.0, %v5654
        %v5656 = vpop.f32.mrb[0].mxu0
        %v5657 = vpop.f32.mrb[0].mxu0
        %5658 = vdwg.mxu0
        %5659 = vmatprep.subr.bf16.mxu0 0
        %5660 = vmatpush1.bf16.msra.mxu0 %v5449
        %5661 = vmatprep.subr.bf16.mxu0 0
        %5662 = vmatpush1.bf16.msra.mxu0 %v5455
        %5663 = vmatprep.subr.bf16.mxu0 0
        %5664 = vmatpush1.bf16.msra.mxu0 %v5461
        %5665 = vmatprep.subr.bf16.mxu0 0
        %5666 = vmatpush1.bf16.msra.mxu0 %v5467
        %5667 = vmatprep.subr.bf16.mxu0 0
        %5668 = vmatpush1.bf16.msra.mxu0 %v5473
        %5669 = vmatprep.subr.bf16.mxu0 0
        %5670 = vmatpush1.bf16.msra.mxu0 %v5479
        %5671 = vmatprep.subr.bf16.mxu0 0
        %5672 = vmatpush1.bf16.msra.mxu0 %v5485
        %5673 = vmatprep.subr.bf16.mxu0 0
        %5674 = vmatpush1.bf16.msra.mxu0 %v5491
        %5675 = vmatprep.subr.bf16.mxu0 0
        %5676 = vmatpush1.bf16.msra.mxu0 0
        %5677 = vmatprep.subr.bf16.mxu0 0
        %5678 = vmatpush1.bf16.msra.mxu0 0
        %5679 = vmatprep.subr.bf16.mxu0 0
        %5680 = vmatpush1.bf16.msra.mxu0 0
        %5681 = vmatprep.subr.bf16.mxu0 0
        %5682 = vmatpush1.bf16.msra.mxu0 0
        %5683 = vmatprep.subr.bf16.mxu0 0
        %5684 = vmatpush1.bf16.msra.mxu0 0
        %5685 = vmatprep.subr.bf16.mxu0 0
        %5686 = vmatpush1.bf16.msra.mxu0 0
        %5687 = vmatprep.subr.bf16.mxu0 0
        %5688 = vmatpush1.bf16.msra.mxu0 0
        %5689 = vmatprep.subr.bf16.mxu0 0
        %5690 = vmatpush1.bf16.msra.mxu0 0
        %5691 = vmatprep.mubr.bf16.mxu0 0
        %5692 = vmatmul.mubr.bf16.gmra.mrb[0].mxu0 %v5617
        %v5693 = vpop.f32.mrb[0].mxu0
        %v5694 = vadd.f32 0.0, %v5693
        %v5695 = vpop.f32.mrb[0].mxu0
        %v5696 = vpop.f32.mrb[0].mxu0
        %v5697 = vpop.f32.mrb[0].mxu0
        %5698 = vdwg.mxu0
        %v5699 = vadd.f32 %v5439, %v5653
        %v5700 = vadd.f32 %v5440, %v5655
        %v5701 = vadd.f32 %v5441, %v5694
        %s5702 = scalar_lea.vmem %s3, 8
        %v5703 = vld [vmem:[%s5702] sm:$0x3]
        %5704 = vrot.lane.b32.xlu0 %v4716, 107
        %v5705 = vpop.permute.xlu0 %5704
        %5706 = vrot.lane.b32.xlu0 %v4717, 107
        %v5707 = vpop.permute.xlu0 %5706
        %5708 = vrot.lane.b32.xlu0 %v4718, 107
        %v5709 = vpop.permute.xlu0 %5708
        %5710 = vrot.lane.b32.xlu0 %v4719, 107
        %v5711 = vpop.permute.xlu0 %5710
        %5712 = vrot.lane.b32.xlu0 %v4720, 107
        %v5713 = vpop.permute.xlu0 %5712
        %5714 = vrot.lane.b32.xlu0 %v4721, 107
        %v5715 = vpop.permute.xlu0 %5714
        %5716 = vrot.lane.b32.xlu0 %v4722, 107
        %v5717 = vpop.permute.xlu0 %5716
        %5718 = vrot.lane.b32.xlu0 %v4723, 107
        %v5719 = vpop.permute.xlu0 %5718
        %5720 = vrot.lane.b32.xlu0 %v4724, 107
        %v5721 = vpop.permute.xlu0 %5720
        %5722 = vrot.lane.b32.xlu0 %v4725, 107
        %v5723 = vpop.permute.xlu0 %5722
        %5724 = vrot.lane.b32.xlu0 %v4726, 107
        %v5725 = vpop.permute.xlu0 %5724
        %5726 = vrot.lane.b32.xlu0 %v4727, 107
        %v5727 = vpop.permute.xlu0 %5726
        %5728 = vrot.lane.b32.xlu0 %v4728, 107
        %v5729 = vpop.permute.xlu0 %5728
        %5730 = vrot.lane.b32.xlu0 %v4729, 107
        %v5731 = vpop.permute.xlu0 %5730
        %5732 = vrot.lane.b32.xlu0 %v4730, 107
        %v5733 = vpop.permute.xlu0 %5732
        %5734 = vrot.lane.b32.xlu0 %v4731, 107
        %v5735 = vpop.permute.xlu0 %5734
        %5736 = vrot.lane.b32.xlu0 %v4732, 107
        %v5737 = vpop.permute.xlu0 %5736
        %5738 = vrot.lane.b32.xlu0 %v4733, 107
        %v5739 = vpop.permute.xlu0 %5738
        %5740 = vrot.lane.b32.xlu0 %v4734, 107
        %v5741 = vpop.permute.xlu0 %5740
        %5742 = vrot.lane.b32.xlu0 %v4735, 107
        %v5743 = vpop.permute.xlu0 %5742
        %5744 = vrot.lane.b32.xlu0 %v4736, 107
        %v5745 = vpop.permute.xlu0 %5744
        %5746 = vrot.lane.b32.xlu0 %v4737, 107
        %v5747 = vpop.permute.xlu0 %5746
        %5748 = vrot.lane.b32.xlu0 %v4738, 107
        %v5749 = vpop.permute.xlu0 %5748
        %5750 = vrot.lane.b32.xlu0 %v4739, 107
        %v5751 = vpop.permute.xlu0 %5750
        %v5752 = vsel %vm2148, %v5705, %v5707
        %v5753 = vsel %vm2148, %v5707, %v5709
        %v5754 = vsel %vm2148, %v5711, %v5713
        %v5755 = vsel %vm2148, %v5713, %v5715
        %v5756 = vsel %vm2148, %v5717, %v5719
        %v5757 = vsel %vm2148, %v5719, %v5721
        %v5758 = vsel %vm2148, %v5723, %v5725
        %v5759 = vsel %vm2148, %v5725, %v5727
        %v5760 = vsel %vm2148, %v5729, %v5731
        %v5761 = vsel %vm2148, %v5731, %v5733
        %v5762 = vsel %vm2148, %v5735, %v5737
        %v5763 = vsel %vm2148, %v5737, %v5739
        %v5764 = vsel %vm2148, %v5741, %v5743
        %v5765 = vsel %vm2148, %v5743, %v5745
        %v5766 = vsel %vm2148, %v5747, %v5749
        %v5767 = vsel %vm2148, %v5749, %v5751
        %5792 = vmatprep.subr.bf16.mxu0 %v5753
        %5793 = vmatpush1.bf16.msra.mxu0 %v5752
        %5794 = vmatprep.subr.bf16.mxu0 %v5755
        %5795 = vmatpush1.bf16.msra.mxu0 %v5754
        %5796 = vmatprep.subr.bf16.mxu0 %v5757
        %5797 = vmatpush1.bf16.msra.mxu0 %v5756
        %5798 = vmatprep.subr.bf16.mxu0 %v5759
        %5799 = vmatpush1.bf16.msra.mxu0 %v5758
        %5800 = vmatprep.subr.bf16.mxu0 %v5761
        %5801 = vmatpush1.bf16.msra.mxu0 %v5760
        %5802 = vmatprep.subr.bf16.mxu0 %v5763
        %5803 = vmatpush1.bf16.msra.mxu0 %v5762
        %5804 = vmatprep.subr.bf16.mxu0 %v5765
        %5805 = vmatpush1.bf16.msra.mxu0 %v5764
        %5806 = vmatprep.subr.bf16.mxu0 %v5767
        %5807 = vmatpush1.bf16.msra.mxu0 %v5766
        %5808 = vmatprep.subr.bf16.mxu0 0
        %5809 = vmatpush1.bf16.msra.mxu0 0
        %5810 = vmatprep.subr.bf16.mxu0 0
        %5811 = vmatpush1.bf16.msra.mxu0 0
        %5812 = vmatprep.subr.bf16.mxu0 0
        %5813 = vmatpush1.bf16.msra.mxu0 0
        %5814 = vmatprep.subr.bf16.mxu0 0
        %5815 = vmatpush1.bf16.msra.mxu0 0
        %5816 = vmatprep.subr.bf16.mxu0 0
        %5817 = vmatpush1.bf16.msra.mxu0 0
        %5818 = vmatprep.subr.bf16.mxu0 0
        %5819 = vmatpush1.bf16.msra.mxu0 0
        %5820 = vmatprep.subr.bf16.mxu0 0
        %5821 = vmatpush1.bf16.msra.mxu0 0
        %5822 = vmatprep.subr.bf16.mxu0 0
        %5823 = vmatpush1.bf16.msra.mxu0 0
        %5824 = vmatprep.mubr.bf16.mxu0 0
        %5825 = vmatmul.mubr.bf16.gmra.mrb[0].mxu0 %v5703
        %v5826 = vpop.f32.mrb[0].mxu0
        %v5827 = vadd.f32 0.0, %v5826
        %v5828 = vpop.f32.mrb[0].mxu0
        %v5829 = vadd.f32 0.0, %v5828
        %v5830 = vpop.f32.mrb[0].mxu0
        %v5831 = vpop.f32.mrb[0].mxu0
        %5832 = vdwg.mxu0
        %5833 = vmatprep.subr.bf16.mxu0 0
        %5834 = vmatpush1.bf16.msra.mxu0 %v5709
        %5835 = vmatprep.subr.bf16.mxu0 0
        %5836 = vmatpush1.bf16.msra.mxu0 %v5715
        %5837 = vmatprep.subr.bf16.mxu0 0
        %5838 = vmatpush1.bf16.msra.mxu0 %v5721
        %5839 = vmatprep.subr.bf16.mxu0 0
        %5840 = vmatpush1.bf16.msra.mxu0 %v5727
        %5841 = vmatprep.subr.bf16.mxu0 0
        %5842 = vmatpush1.bf16.msra.mxu0 %v5733
        %5843 = vmatprep.subr.bf16.mxu0 0
        %5844 = vmatpush1.bf16.msra.mxu0 %v5739
        %5845 = vmatprep.subr.bf16.mxu0 0
        %5846 = vmatpush1.bf16.msra.mxu0 %v5745
        %5847 = vmatprep.subr.bf16.mxu0 0
        %5848 = vmatpush1.bf16.msra.mxu0 %v5751
        %5849 = vmatprep.subr.bf16.mxu0 0
        %5850 = vmatpush1.bf16.msra.mxu0 0
        %5851 = vmatprep.subr.bf16.mxu0 0
        %5852 = vmatpush1.bf16.msra.mxu0 0
        %5853 = vmatprep.subr.bf16.mxu0 0
        %5854 = vmatpush1.bf16.msra.mxu0 0
        %5855 = vmatprep.subr.bf16.mxu0 0
        %5856 = vmatpush1.bf16.msra.mxu0 0
        %5857 = vmatprep.subr.bf16.mxu0 0
        %5858 = vmatpush1.bf16.msra.mxu0 0
        %5859 = vmatprep.subr.bf16.mxu0 0
        %5860 = vmatpush1.bf16.msra.mxu0 0
        %5861 = vmatprep.subr.bf16.mxu0 0
        %5862 = vmatpush1.bf16.msra.mxu0 0
        %5863 = vmatprep.subr.bf16.mxu0 0
        %5864 = vmatpush1.bf16.msra.mxu0 0
        %5865 = vmatprep.mubr.bf16.mxu0 0
        %5866 = vmatmul.mubr.bf16.gmra.mrb[0].mxu0 %v5703
        %v5867 = vpop.f32.mrb[0].mxu0
        %v5868 = vadd.f32 0.0, %v5867
        %v5869 = vpop.f32.mrb[0].mxu0
        %v5870 = vpop.f32.mrb[0].mxu0
        %v5871 = vpop.f32.mrb[0].mxu0
        %5872 = vdwg.mxu0
        %v5873 = vadd.f32 %v5613, %v5827
        %v5874 = vadd.f32 %v5614, %v5829
        %v5875 = vadd.f32 %v5615, %v5868
        %s5876 = scalar_lea.vmem %s4, 8
        %v5877 = vld [vmem:[%s5876] sm:$0x3]
        %5878 = vmatprep.subr.bf16.mxu0 %v5753
        %5879 = vmatpush1.bf16.msra.mxu0 %v5752
        %5880 = vmatprep.subr.bf16.mxu0 %v5755
        %5881 = vmatpush1.bf16.msra.mxu0 %v5754
        %5882 = vmatprep.subr.bf16.mxu0 %v5757
        %5883 = vmatpush1.bf16.msra.mxu0 %v5756
        %5884 = vmatprep.subr.bf16.mxu0 %v5759
        %5885 = vmatpush1.bf16.msra.mxu0 %v5758
        %5886 = vmatprep.subr.bf16.mxu0 %v5761
        %5887 = vmatpush1.bf16.msra.mxu0 %v5760
        %5888 = vmatprep.subr.bf16.mxu0 %v5763
        %5889 = vmatpush1.bf16.msra.mxu0 %v5762
        %5890 = vmatprep.subr.bf16.mxu0 %v5765
        %5891 = vmatpush1.bf16.msra.mxu0 %v5764
        %5892 = vmatprep.subr.bf16.mxu0 %v5767
        %5893 = vmatpush1.bf16.msra.mxu0 %v5766
        %5894 = vmatprep.subr.bf16.mxu0 0
        %5895 = vmatpush1.bf16.msra.mxu0 0
        %5896 = vmatprep.subr.bf16.mxu0 0
        %5897 = vmatpush1.bf16.msra.mxu0 0
        %5898 = vmatprep.subr.bf16.mxu0 0
        %5899 = vmatpush1.bf16.msra.mxu0 0
        %5900 = vmatprep.subr.bf16.mxu0 0
        %5901 = vmatpush1.bf16.msra.mxu0 0
        %5902 = vmatprep.subr.bf16.mxu0 0
        %5903 = vmatpush1.bf16.msra.mxu0 0
        %5904 = vmatprep.subr.bf16.mxu0 0
        %5905 = vmatpush1.bf16.msra.mxu0 0
        %5906 = vmatprep.subr.bf16.mxu0 0
        %5907 = vmatpush1.bf16.msra.mxu0 0
        %5908 = vmatprep.subr.bf16.mxu0 0
        %5909 = vmatpush1.bf16.msra.mxu0 0
        %5910 = vmatprep.mubr.bf16.mxu0 0
        %5911 = vmatmul.mubr.bf16.gmra.mrb[0].mxu0 %v5877
        %v5912 = vpop.f32.mrb[0].mxu0
        %v5913 = vadd.f32 0.0, %v5912
        %v5914 = vpop.f32.mrb[0].mxu0
        %v5915 = vadd.f32 0.0, %v5914
        %v5916 = vpop.f32.mrb[0].mxu0
        %v5917 = vpop.f32.mrb[0].mxu0
        %5918 = vdwg.mxu0
        %5919 = vmatprep.subr.bf16.mxu0 0
        %5920 = vmatpush1.bf16.msra.mxu0 %v5709
        %5921 = vmatprep.subr.bf16.mxu0 0
        %5922 = vmatpush1.bf16.msra.mxu0 %v5715
        %5923 = vmatprep.subr.bf16.mxu0 0
        %5924 = vmatpush1.bf16.msra.mxu0 %v5721
        %5925 = vmatprep.subr.bf16.mxu0 0
        %5926 = vmatpush1.bf16.msra.mxu0 %v5727
        %5927 = vmatprep.subr.bf16.mxu0 0
        %5928 = vmatpush1.bf16.msra.mxu0 %v5733
        %5929 = vmatprep.subr.bf16.mxu0 0
        %5930 = vmatpush1.bf16.msra.mxu0 %v5739
        %5931 = vmatprep.subr.bf16.mxu0 0
        %5932 = vmatpush1.bf16.msra.mxu0 %v5745
        %5933 = vmatprep.subr.bf16.mxu0 0
        %5934 = vmatpush1.bf16.msra.mxu0 %v5751
        %5935 = vmatprep.subr.bf16.mxu0 0
        %5936 = vmatpush1.bf16.msra.mxu0 0
        %5937 = vmatprep.subr.bf16.mxu0 0
        %5938 = vmatpush1.bf16.msra.mxu0 0
        %5939 = vmatprep.subr.bf16.mxu0 0
        %5940 = vmatpush1.bf16.msra.mxu0 0
        %5941 = vmatprep.subr.bf16.mxu0 0
        %5942 = vmatpush1.bf16.msra.mxu0 0
        %5943 = vmatprep.subr.bf16.mxu0 0
        %5944 = vmatpush1.bf16.msra.mxu0 0
        %5945 = vmatprep.subr.bf16.mxu0 0
        %5946 = vmatpush1.bf16.msra.mxu0 0
        %5947 = vmatprep.subr.bf16.mxu0 0
        %5948 = vmatpush1.bf16.msra.mxu0 0
        %5949 = vmatprep.subr.bf16.mxu0 0
        %5950 = vmatpush1.bf16.msra.mxu0 0
        %5951 = vmatprep.mubr.bf16.mxu0 0
        %5952 = vmatmul.mubr.bf16.gmra.mrb[0].mxu0 %v5877
        %v5953 = vpop.f32.mrb[0].mxu0
        %v5954 = vadd.f32 0.0, %v5953
        %v5955 = vpop.f32.mrb[0].mxu0
        %v5956 = vpop.f32.mrb[0].mxu0
        %v5957 = vpop.f32.mrb[0].mxu0
        %5958 = vdwg.mxu0
        %v5959 = vadd.f32 %v5699, %v5913
        %v5960 = vadd.f32 %v5700, %v5915
        %v5961 = vadd.f32 %v5701, %v5954
        %s5962 = scalar_lea.vmem %s3, 10
        %v5963 = vld [vmem:[%s5962] sm:$0x3]
        %5964 = vrot.lane.b32.xlu0 %v4716, 106
        %v5965 = vpop.permute.xlu0 %5964
        %5966 = vrot.lane.b32.xlu0 %v4717, 106
        %v5967 = vpop.permute.xlu0 %5966
        %5968 = vrot.lane.b32.xlu0 %v4718, 106
        %v5969 = vpop.permute.xlu0 %5968
        %5970 = vrot.lane.b32.xlu0 %v4719, 106
        %v5971 = vpop.permute.xlu0 %5970
        %5972 = vrot.lane.b32.xlu0 %v4720, 106
        %v5973 = vpop.permute.xlu0 %5972
        %5974 = vrot.lane.b32.xlu0 %v4721, 106
        %v5975 = vpop.permute.xlu0 %5974
        %5976 = vrot.lane.b32.xlu0 %v4722, 106
        %v5977 = vpop.permute.xlu0 %5976
        %5978 = vrot.lane.b32.xlu0 %v4723, 106
        %v5979 = vpop.permute.xlu0 %5978
        %5980 = vrot.lane.b32.xlu0 %v4724, 106
        %v5981 = vpop.permute.xlu0 %5980
        %5982 = vrot.lane.b32.xlu0 %v4725, 106
        %v5983 = vpop.permute.xlu0 %5982
        %5984 = vrot.lane.b32.xlu0 %v4726, 106
        %v5985 = vpop.permute.xlu0 %5984
        %5986 = vrot.lane.b32.xlu0 %v4727, 106
        %v5987 = vpop.permute.xlu0 %5986
        %5988 = vrot.lane.b32.xlu0 %v4728, 106
        %v5989 = vpop.permute.xlu0 %5988
        %5990 = vrot.lane.b32.xlu0 %v4729, 106
        %v5991 = vpop.permute.xlu0 %5990
        %5992 = vrot.lane.b32.xlu0 %v4730, 106
        %v5993 = vpop.permute.xlu0 %5992
        %5994 = vrot.lane.b32.xlu0 %v4731, 106
        %v5995 = vpop.permute.xlu0 %5994
        %5996 = vrot.lane.b32.xlu0 %v4732, 106
        %v5997 = vpop.permute.xlu0 %5996
        %5998 = vrot.lane.b32.xlu0 %v4733, 106
        %v5999 = vpop.permute.xlu0 %5998
        %6000 = vrot.lane.b32.xlu0 %v4734, 106
        %v6001 = vpop.permute.xlu0 %6000
        %6002 = vrot.lane.b32.xlu0 %v4735, 106
        %v6003 = vpop.permute.xlu0 %6002
        %6004 = vrot.lane.b32.xlu0 %v4736, 106
        %v6005 = vpop.permute.xlu0 %6004
        %6006 = vrot.lane.b32.xlu0 %v4737, 106
        %v6007 = vpop.permute.xlu0 %6006
        %6008 = vrot.lane.b32.xlu0 %v4738, 106
        %v6009 = vpop.permute.xlu0 %6008
        %6010 = vrot.lane.b32.xlu0 %v4739, 106
        %v6011 = vpop.permute.xlu0 %6010
        %v6012 = vsel %vm2604, %v5965, %v5967
        %v6013 = vsel %vm2604, %v5967, %v5969
        %v6014 = vsel %vm2604, %v5971, %v5973
        %v6015 = vsel %vm2604, %v5973, %v5975
        %v6016 = vsel %vm2604, %v5977, %v5979
        %v6017 = vsel %vm2604, %v5979, %v5981
        %v6018 = vsel %vm2604, %v5983, %v5985
        %v6019 = vsel %vm2604, %v5985, %v5987
        %v6020 = vsel %vm2604, %v5989, %v5991
        %v6021 = vsel %vm2604, %v5991, %v5993
        %v6022 = vsel %vm2604, %v5995, %v5997
        %v6023 = vsel %vm2604, %v5997, %v5999
        %v6024 = vsel %vm2604, %v6001, %v6003
        %v6025 = vsel %vm2604, %v6003, %v6005
        %v6026 = vsel %vm2604, %v6007, %v6009
        %v6027 = vsel %vm2604, %v6009, %v6011
        %6052 = vmatprep.subr.bf16.mxu0 %v6013
        %6053 = vmatpush1.bf16.msra.mxu0 %v6012
        %6054 = vmatprep.subr.bf16.mxu0 %v6015
        %6055 = vmatpush1.bf16.msra.mxu0 %v6014
        %6056 = vmatprep.subr.bf16.mxu0 %v6017
        %6057 = vmatpush1.bf16.msra.mxu0 %v6016
        %6058 = vmatprep.subr.bf16.mxu0 %v6019
        %6059 = vmatpush1.bf16.msra.mxu0 %v6018
        %6060 = vmatprep.subr.bf16.mxu0 %v6021
        %6061 = vmatpush1.bf16.msra.mxu0 %v6020
        %6062 = vmatprep.subr.bf16.mxu0 %v6023
        %6063 = vmatpush1.bf16.msra.mxu0 %v6022
        %6064 = vmatprep.subr.bf16.mxu0 %v6025
        %6065 = vmatpush1.bf16.msra.mxu0 %v6024
        %6066 = vmatprep.subr.bf16.mxu0 %v6027
        %6067 = vmatpush1.bf16.msra.mxu0 %v6026
        %6068 = vmatprep.subr.bf16.mxu0 0
        %6069 = vmatpush1.bf16.msra.mxu0 0
        %6070 = vmatprep.subr.bf16.mxu0 0
        %6071 = vmatpush1.bf16.msra.mxu0 0
        %6072 = vmatprep.subr.bf16.mxu0 0
        %6073 = vmatpush1.bf16.msra.mxu0 0
        %6074 = vmatprep.subr.bf16.mxu0 0
        %6075 = vmatpush1.bf16.msra.mxu0 0
        %6076 = vmatprep.subr.bf16.mxu0 0
        %6077 = vmatpush1.bf16.msra.mxu0 0
        %6078 = vmatprep.subr.bf16.mxu0 0
        %6079 = vmatpush1.bf16.msra.mxu0 0
        %6080 = vmatprep.subr.bf16.mxu0 0
        %6081 = vmatpush1.bf16.msra.mxu0 0
        %6082 = vmatprep.subr.bf16.mxu0 0
        %6083 = vmatpush1.bf16.msra.mxu0 0
        %6084 = vmatprep.mubr.bf16.mxu0 0
        %6085 = vmatmul.mubr.bf16.gmra.mrb[0].mxu0 %v5963
        %v6086 = vpop.f32.mrb[0].mxu0
        %v6087 = vadd.f32 0.0, %v6086
        %v6088 = vpop.f32.mrb[0].mxu0
        %v6089 = vadd.f32 0.0, %v6088
        %v6090 = vpop.f32.mrb[0].mxu0
        %v6091 = vpop.f32.mrb[0].mxu0
        %6092 = vdwg.mxu0
        %6093 = vmatprep.subr.bf16.mxu0 0
        %6094 = vmatpush1.bf16.msra.mxu0 %v5969
        %6095 = vmatprep.subr.bf16.mxu0 0
        %6096 = vmatpush1.bf16.msra.mxu0 %v5975
        %6097 = vmatprep.subr.bf16.mxu0 0
        %6098 = vmatpush1.bf16.msra.mxu0 %v5981
        %6099 = vmatprep.subr.bf16.mxu0 0
        %6100 = vmatpush1.bf16.msra.mxu0 %v5987
        %6101 = vmatprep.subr.bf16.mxu0 0
        %6102 = vmatpush1.bf16.msra.mxu0 %v5993
        %6103 = vmatprep.subr.bf16.mxu0 0
        %6104 = vmatpush1.bf16.msra.mxu0 %v5999
        %6105 = vmatprep.subr.bf16.mxu0 0
        %6106 = vmatpush1.bf16.msra.mxu0 %v6005
        %6107 = vmatprep.subr.bf16.mxu0 0
        %6108 = vmatpush1.bf16.msra.mxu0 %v6011
        %6109 = vmatprep.subr.bf16.mxu0 0
        %6110 = vmatpush1.bf16.msra.mxu0 0
        %6111 = vmatprep.subr.bf16.mxu0 0
        %6112 = vmatpush1.bf16.msra.mxu0 0
        %6113 = vmatprep.subr.bf16.mxu0 0
        %6114 = vmatpush1.bf16.msra.mxu0 0
        %6115 = vmatprep.subr.bf16.mxu0 0
        %6116 = vmatpush1.bf16.msra.mxu0 0
        %6117 = vmatprep.subr.bf16.mxu0 0
        %6118 = vmatpush1.bf16.msra.mxu0 0
        %6119 = vmatprep.subr.bf16.mxu0 0
        %6120 = vmatpush1.bf16.msra.mxu0 0
        %6121 = vmatprep.subr.bf16.mxu0 0
        %6122 = vmatpush1.bf16.msra.mxu0 0
        %6123 = vmatprep.subr.bf16.mxu0 0
        %6124 = vmatpush1.bf16.msra.mxu0 0
        %6125 = vmatprep.mubr.bf16.mxu0 0
        %6126 = vmatmul.mubr.bf16.gmra.mrb[0].mxu0 %v5963
        %v6127 = vpop.f32.mrb[0].mxu0
        %v6128 = vadd.f32 0.0, %v6127
        %v6129 = vpop.f32.mrb[0].mxu0
        %v6130 = vpop.f32.mrb[0].mxu0
        %v6131 = vpop.f32.mrb[0].mxu0
        %6132 = vdwg.mxu0
        %v6133 = vadd.f32 %v5873, %v6087
        %v6134 = vadd.f32 %v5874, %v6089
        %v6135 = vadd.f32 %v5875, %v6128
        %s6136 = scalar_lea.vmem %s4, 10
        %v6137 = vld [vmem:[%s6136] sm:$0x3]
        %6138 = vmatprep.subr.bf16.mxu0 %v6013
        %6139 = vmatpush1.bf16.msra.mxu0 %v6012
        %6140 = vmatprep.subr.bf16.mxu0 %v6015
        %6141 = vmatpush1.bf16.msra.mxu0 %v6014
        %6142 = vmatprep.subr.bf16.mxu0 %v6017
        %6143 = vmatpush1.bf16.msra.mxu0 %v6016
        %6144 = vmatprep.subr.bf16.mxu0 %v6019
        %6145 = vmatpush1.bf16.msra.mxu0 %v6018
        %6146 = vmatprep.subr.bf16.mxu0 %v6021
        %6147 = vmatpush1.bf16.msra.mxu0 %v6020
        %6148 = vmatprep.subr.bf16.mxu0 %v6023
        %6149 = vmatpush1.bf16.msra.mxu0 %v6022
        %6150 = vmatprep.subr.bf16.mxu0 %v6025
        %6151 = vmatpush1.bf16.msra.mxu0 %v6024
        %6152 = vmatprep.subr.bf16.mxu0 %v6027
        %6153 = vmatpush1.bf16.msra.mxu0 %v6026
        %6154 = vmatprep.subr.bf16.mxu0 0
        %6155 = vmatpush1.bf16.msra.mxu0 0
        %6156 = vmatprep.subr.bf16.mxu0 0
        %6157 = vmatpush1.bf16.msra.mxu0 0
        %6158 = vmatprep.subr.bf16.mxu0 0
        %6159 = vmatpush1.bf16.msra.mxu0 0
        %6160 = vmatprep.subr.bf16.mxu0 0
        %6161 = vmatpush1.bf16.msra.mxu0 0
        %6162 = vmatprep.subr.bf16.mxu0 0
        %6163 = vmatpush1.bf16.msra.mxu0 0
        %6164 = vmatprep.subr.bf16.mxu0 0
        %6165 = vmatpush1.bf16.msra.mxu0 0
        %6166 = vmatprep.subr.bf16.mxu0 0
        %6167 = vmatpush1.bf16.msra.mxu0 0
        %6168 = vmatprep.subr.bf16.mxu0 0
        %6169 = vmatpush1.bf16.msra.mxu0 0
        %6170 = vmatprep.mubr.bf16.mxu0 0
        %6171 = vmatmul.mubr.bf16.gmra.mrb[0].mxu0 %v6137
        %v6172 = vpop.f32.mrb[0].mxu0
        %v6173 = vadd.f32 0.0, %v6172
        %v6174 = vpop.f32.mrb[0].mxu0
        %v6175 = vadd.f32 0.0, %v6174
        %v6176 = vpop.f32.mrb[0].mxu0
        %v6177 = vpop.f32.mrb[0].mxu0
        %6178 = vdwg.mxu0
        %6179 = vmatprep.subr.bf16.mxu0 0
        %6180 = vmatpush1.bf16.msra.mxu0 %v5969
        %6181 = vmatprep.subr.bf16.mxu0 0
        %6182 = vmatpush1.bf16.msra.mxu0 %v5975
        %6183 = vmatprep.subr.bf16.mxu0 0
        %6184 = vmatpush1.bf16.msra.mxu0 %v5981
        %6185 = vmatprep.subr.bf16.mxu0 0
        %6186 = vmatpush1.bf16.msra.mxu0 %v5987
        %6187 = vmatprep.subr.bf16.mxu0 0
        %6188 = vmatpush1.bf16.msra.mxu0 %v5993
        %6189 = vmatprep.subr.bf16.mxu0 0
        %6190 = vmatpush1.bf16.msra.mxu0 %v5999
        %6191 = vmatprep.subr.bf16.mxu0 0
        %6192 = vmatpush1.bf16.msra.mxu0 %v6005
        %6193 = vmatprep.subr.bf16.mxu0 0
        %6194 = vmatpush1.bf16.msra.mxu0 %v6011
        %6195 = vmatprep.subr.bf16.mxu0 0
        %6196 = vmatpush1.bf16.msra.mxu0 0
        %6197 = vmatprep.subr.bf16.mxu0 0
        %6198 = vmatpush1.bf16.msra.mxu0 0
        %6199 = vmatprep.subr.bf16.mxu0 0
        %6200 = vmatpush1.bf16.msra.mxu0 0
        %6201 = vmatprep.subr.bf16.mxu0 0
        %6202 = vmatpush1.bf16.msra.mxu0 0
        %6203 = vmatprep.subr.bf16.mxu0 0
        %6204 = vmatpush1.bf16.msra.mxu0 0
        %6205 = vmatprep.subr.bf16.mxu0 0
        %6206 = vmatpush1.bf16.msra.mxu0 0
        %6207 = vmatprep.subr.bf16.mxu0 0
        %6208 = vmatpush1.bf16.msra.mxu0 0
        %6209 = vmatprep.subr.bf16.mxu0 0
        %6210 = vmatpush1.bf16.msra.mxu0 0
        %6211 = vmatprep.mubr.bf16.mxu0 0
        %6212 = vmatmul.mubr.bf16.gmra.mrb[0].mxu0 %v6137
        %v6213 = vpop.f32.mrb[0].mxu0
        %v6214 = vadd.f32 0.0, %v6213
        %v6215 = vpop.f32.mrb[0].mxu0
        %v6216 = vpop.f32.mrb[0].mxu0
        %v6217 = vpop.f32.mrb[0].mxu0
        %6218 = vdwg.mxu0
        %v6219 = vadd.f32 %v5959, %v6173
        %v6220 = vadd.f32 %v5960, %v6175
        %v6221 = vadd.f32 %v5961, %v6214
        %s6222 = scalar_lea.vmem %s3, 12
        %v6223 = vld [vmem:[%s6222] sm:$0x3]
        %6224 = vrot.lane.b32.xlu0 %v4716, 88
        %v6225 = vpop.permute.xlu0 %6224
        %6226 = vrot.lane.b32.xlu0 %v4717, 88
        %v6227 = vpop.permute.xlu0 %6226
        %6228 = vrot.lane.b32.xlu0 %v4718, 88
        %v6229 = vpop.permute.xlu0 %6228
        %6230 = vrot.lane.b32.xlu0 %v4719, 88
        %v6231 = vpop.permute.xlu0 %6230
        %6232 = vrot.lane.b32.xlu0 %v4720, 88
        %v6233 = vpop.permute.xlu0 %6232
        %6234 = vrot.lane.b32.xlu0 %v4721, 88
        %v6235 = vpop.permute.xlu0 %6234
        %6236 = vrot.lane.b32.xlu0 %v4722, 88
        %v6237 = vpop.permute.xlu0 %6236
        %6238 = vrot.lane.b32.xlu0 %v4723, 88
        %v6239 = vpop.permute.xlu0 %6238
        %6240 = vrot.lane.b32.xlu0 %v4724, 88
        %v6241 = vpop.permute.xlu0 %6240
        %6242 = vrot.lane.b32.xlu0 %v4725, 88
        %v6243 = vpop.permute.xlu0 %6242
        %6244 = vrot.lane.b32.xlu0 %v4726, 88
        %v6245 = vpop.permute.xlu0 %6244
        %6246 = vrot.lane.b32.xlu0 %v4727, 88
        %v6247 = vpop.permute.xlu0 %6246
        %6248 = vrot.lane.b32.xlu0 %v4728, 88
        %v6249 = vpop.permute.xlu0 %6248
        %6250 = vrot.lane.b32.xlu0 %v4729, 88
        %v6251 = vpop.permute.xlu0 %6250
        %6252 = vrot.lane.b32.xlu0 %v4730, 88
        %v6253 = vpop.permute.xlu0 %6252
        %6254 = vrot.lane.b32.xlu0 %v4731, 88
        %v6255 = vpop.permute.xlu0 %6254
        %6256 = vrot.lane.b32.xlu0 %v4732, 88
        %v6257 = vpop.permute.xlu0 %6256
        %6258 = vrot.lane.b32.xlu0 %v4733, 88
        %v6259 = vpop.permute.xlu0 %6258
        %6260 = vrot.lane.b32.xlu0 %v4734, 88
        %v6261 = vpop.permute.xlu0 %6260
        %6262 = vrot.lane.b32.xlu0 %v4735, 88
        %v6263 = vpop.permute.xlu0 %6262
        %6264 = vrot.lane.b32.xlu0 %v4736, 88
        %v6265 = vpop.permute.xlu0 %6264
        %6266 = vrot.lane.b32.xlu0 %v4737, 88
        %v6267 = vpop.permute.xlu0 %6266
        %6268 = vrot.lane.b32.xlu0 %v4738, 88
        %v6269 = vpop.permute.xlu0 %6268
        %6270 = vrot.lane.b32.xlu0 %v4739, 88
        %v6271 = vpop.permute.xlu0 %6270
        %v6272 = vsel %vm3060, %v6225, %v6227
        %v6273 = vsel %vm3060, %v6227, %v6229
        %v6274 = vsel %vm3060, %v6231, %v6233
        %v6275 = vsel %vm3060, %v6233, %v6235
        %v6276 = vsel %vm3060, %v6237, %v6239
        %v6277 = vsel %vm3060, %v6239, %v6241
        %v6278 = vsel %vm3060, %v6243, %v6245
        %v6279 = vsel %vm3060, %v6245, %v6247
        %v6280 = vsel %vm3060, %v6249, %v6251
        %v6281 = vsel %vm3060, %v6251, %v6253
        %v6282 = vsel %vm3060, %v6255, %v6257
        %v6283 = vsel %vm3060, %v6257, %v6259
        %v6284 = vsel %vm3060, %v6261, %v6263
        %v6285 = vsel %vm3060, %v6263, %v6265
        %v6286 = vsel %vm3060, %v6267, %v6269
        %v6287 = vsel %vm3060, %v6269, %v6271
        %6312 = vmatprep.subr.bf16.mxu0 %v6273
        %6313 = vmatpush1.bf16.msra.mxu0 %v6272
        %6314 = vmatprep.subr.bf16.mxu0 %v6275
        %6315 = vmatpush1.bf16.msra.mxu0 %v6274
        %6316 = vmatprep.subr.bf16.mxu0 %v6277
        %6317 = vmatpush1.bf16.msra.mxu0 %v6276
        %6318 = vmatprep.subr.bf16.mxu0 %v6279
        %6319 = vmatpush1.bf16.msra.mxu0 %v6278
        %6320 = vmatprep.subr.bf16.mxu0 %v6281
        %6321 = vmatpush1.bf16.msra.mxu0 %v6280
        %6322 = vmatprep.subr.bf16.mxu0 %v6283
        %6323 = vmatpush1.bf16.msra.mxu0 %v6282
        %6324 = vmatprep.subr.bf16.mxu0 %v6285
        %6325 = vmatpush1.bf16.msra.mxu0 %v6284
        %6326 = vmatprep.subr.bf16.mxu0 %v6287
        %6327 = vmatpush1.bf16.msra.mxu0 %v6286
        %6328 = vmatprep.subr.bf16.mxu0 0
        %6329 = vmatpush1.bf16.msra.mxu0 0
        %6330 = vmatprep.subr.bf16.mxu0 0
        %6331 = vmatpush1.bf16.msra.mxu0 0
        %6332 = vmatprep.subr.bf16.mxu0 0
        %6333 = vmatpush1.bf16.msra.mxu0 0
        %6334 = vmatprep.subr.bf16.mxu0 0
        %6335 = vmatpush1.bf16.msra.mxu0 0
        %6336 = vmatprep.subr.bf16.mxu0 0
        %6337 = vmatpush1.bf16.msra.mxu0 0
        %6338 = vmatprep.subr.bf16.mxu0 0
        %6339 = vmatpush1.bf16.msra.mxu0 0
        %6340 = vmatprep.subr.bf16.mxu0 0
        %6341 = vmatpush1.bf16.msra.mxu0 0
        %6342 = vmatprep.subr.bf16.mxu0 0
        %6343 = vmatpush1.bf16.msra.mxu0 0
        %6344 = vmatprep.mubr.bf16.mxu0 0
        %6345 = vmatmul.mubr.bf16.gmra.mrb[0].mxu0 %v6223
        %v6346 = vpop.f32.mrb[0].mxu0
        %v6347 = vadd.f32 0.0, %v6346
        %v6348 = vpop.f32.mrb[0].mxu0
        %v6349 = vadd.f32 0.0, %v6348
        %v6350 = vpop.f32.mrb[0].mxu0
        %v6351 = vpop.f32.mrb[0].mxu0
        %6352 = vdwg.mxu0
        %6353 = vmatprep.subr.bf16.mxu0 0
        %6354 = vmatpush1.bf16.msra.mxu0 %v6229
        %6355 = vmatprep.subr.bf16.mxu0 0
        %6356 = vmatpush1.bf16.msra.mxu0 %v6235
        %6357 = vmatprep.subr.bf16.mxu0 0
        %6358 = vmatpush1.bf16.msra.mxu0 %v6241
        %6359 = vmatprep.subr.bf16.mxu0 0
        %6360 = vmatpush1.bf16.msra.mxu0 %v6247
        %6361 = vmatprep.subr.bf16.mxu0 0
        %6362 = vmatpush1.bf16.msra.mxu0 %v6253
        %6363 = vmatprep.subr.bf16.mxu0 0
        %6364 = vmatpush1.bf16.msra.mxu0 %v6259
        %6365 = vmatprep.subr.bf16.mxu0 0
        %6366 = vmatpush1.bf16.msra.mxu0 %v6265
        %6367 = vmatprep.subr.bf16.mxu0 0
        %6368 = vmatpush1.bf16.msra.mxu0 %v6271
        %6369 = vmatprep.subr.bf16.mxu0 0
        %6370 = vmatpush1.bf16.msra.mxu0 0
        %6371 = vmatprep.subr.bf16.mxu0 0
        %6372 = vmatpush1.bf16.msra.mxu0 0
        %6373 = vmatprep.subr.bf16.mxu0 0
        %6374 = vmatpush1.bf16.msra.mxu0 0
        %6375 = vmatprep.subr.bf16.mxu0 0
        %6376 = vmatpush1.bf16.msra.mxu0 0
        %6377 = vmatprep.subr.bf16.mxu0 0
        %6378 = vmatpush1.bf16.msra.mxu0 0
        %6379 = vmatprep.subr.bf16.mxu0 0
        %6380 = vmatpush1.bf16.msra.mxu0 0
        %6381 = vmatprep.subr.bf16.mxu0 0
        %6382 = vmatpush1.bf16.msra.mxu0 0
        %6383 = vmatprep.subr.bf16.mxu0 0
        %6384 = vmatpush1.bf16.msra.mxu0 0
        %6385 = vmatprep.mubr.bf16.mxu0 0
        %6386 = vmatmul.mubr.bf16.gmra.mrb[0].mxu0 %v6223
        %v6387 = vpop.f32.mrb[0].mxu0
        %v6388 = vadd.f32 0.0, %v6387
        %v6389 = vpop.f32.mrb[0].mxu0
        %v6390 = vpop.f32.mrb[0].mxu0
        %v6391 = vpop.f32.mrb[0].mxu0
        %6392 = vdwg.mxu0
        %v6393 = vadd.f32 %v6133, %v6347
        %v6394 = vadd.f32 %v6134, %v6349
        %v6395 = vadd.f32 %v6135, %v6388
        %s6396 = scalar_lea.vmem %s4, 12
        %v6397 = vld [vmem:[%s6396] sm:$0x3]
        %6398 = vmatprep.subr.bf16.mxu0 %v6273
        %6399 = vmatpush1.bf16.msra.mxu0 %v6272
        %6400 = vmatprep.subr.bf16.mxu0 %v6275
        %6401 = vmatpush1.bf16.msra.mxu0 %v6274
        %6402 = vmatprep.subr.bf16.mxu0 %v6277
        %6403 = vmatpush1.bf16.msra.mxu0 %v6276
        %6404 = vmatprep.subr.bf16.mxu0 %v6279
        %6405 = vmatpush1.bf16.msra.mxu0 %v6278
        %6406 = vmatprep.subr.bf16.mxu0 %v6281
        %6407 = vmatpush1.bf16.msra.mxu0 %v6280
        %6408 = vmatprep.subr.bf16.mxu0 %v6283
        %6409 = vmatpush1.bf16.msra.mxu0 %v6282
        %6410 = vmatprep.subr.bf16.mxu0 %v6285
        %6411 = vmatpush1.bf16.msra.mxu0 %v6284
        %6412 = vmatprep.subr.bf16.mxu0 %v6287
        %6413 = vmatpush1.bf16.msra.mxu0 %v6286
        %6414 = vmatprep.subr.bf16.mxu0 0
        %6415 = vmatpush1.bf16.msra.mxu0 0
        %6416 = vmatprep.subr.bf16.mxu0 0
        %6417 = vmatpush1.bf16.msra.mxu0 0
        %6418 = vmatprep.subr.bf16.mxu0 0
        %6419 = vmatpush1.bf16.msra.mxu0 0
        %6420 = vmatprep.subr.bf16.mxu0 0
        %6421 = vmatpush1.bf16.msra.mxu0 0
        %6422 = vmatprep.subr.bf16.mxu0 0
        %6423 = vmatpush1.bf16.msra.mxu0 0
        %6424 = vmatprep.subr.bf16.mxu0 0
        %6425 = vmatpush1.bf16.msra.mxu0 0
        %6426 = vmatprep.subr.bf16.mxu0 0
        %6427 = vmatpush1.bf16.msra.mxu0 0
        %6428 = vmatprep.subr.bf16.mxu0 0
        %6429 = vmatpush1.bf16.msra.mxu0 0
        %6430 = vmatprep.mubr.bf16.mxu0 0
        %6431 = vmatmul.mubr.bf16.gmra.mrb[0].mxu0 %v6397
        %v6432 = vpop.f32.mrb[0].mxu0
        %v6433 = vadd.f32 0.0, %v6432
        %v6434 = vpop.f32.mrb[0].mxu0
        %v6435 = vadd.f32 0.0, %v6434
        %v6436 = vpop.f32.mrb[0].mxu0
        %v6437 = vpop.f32.mrb[0].mxu0
        %6438 = vdwg.mxu0
        %6439 = vmatprep.subr.bf16.mxu0 0
        %6440 = vmatpush1.bf16.msra.mxu0 %v6229
        %6441 = vmatprep.subr.bf16.mxu0 0
        %6442 = vmatpush1.bf16.msra.mxu0 %v6235
        %6443 = vmatprep.subr.bf16.mxu0 0
        %6444 = vmatpush1.bf16.msra.mxu0 %v6241
        %6445 = vmatprep.subr.bf16.mxu0 0
        %6446 = vmatpush1.bf16.msra.mxu0 %v6247
        %6447 = vmatprep.subr.bf16.mxu0 0
        %6448 = vmatpush1.bf16.msra.mxu0 %v6253
        %6449 = vmatprep.subr.bf16.mxu0 0
        %6450 = vmatpush1.bf16.msra.mxu0 %v6259
        %6451 = vmatprep.subr.bf16.mxu0 0
        %6452 = vmatpush1.bf16.msra.mxu0 %v6265
        %6453 = vmatprep.subr.bf16.mxu0 0
        %6454 = vmatpush1.bf16.msra.mxu0 %v6271
        %6455 = vmatprep.subr.bf16.mxu0 0
        %6456 = vmatpush1.bf16.msra.mxu0 0
        %6457 = vmatprep.subr.bf16.mxu0 0
        %6458 = vmatpush1.bf16.msra.mxu0 0
        %6459 = vmatprep.subr.bf16.mxu0 0
        %6460 = vmatpush1.bf16.msra.mxu0 0
        %6461 = vmatprep.subr.bf16.mxu0 0
        %6462 = vmatpush1.bf16.msra.mxu0 0
        %6463 = vmatprep.subr.bf16.mxu0 0
        %6464 = vmatpush1.bf16.msra.mxu0 0
        %6465 = vmatprep.subr.bf16.mxu0 0
        %6466 = vmatpush1.bf16.msra.mxu0 0
        %6467 = vmatprep.subr.bf16.mxu0 0
        %6468 = vmatpush1.bf16.msra.mxu0 0
        %6469 = vmatprep.subr.bf16.mxu0 0
        %6470 = vmatpush1.bf16.msra.mxu0 0
        %6471 = vmatprep.mubr.bf16.mxu0 0
        %6472 = vmatmul.mubr.bf16.gmra.mrb[0].mxu0 %v6397
        %v6473 = vpop.f32.mrb[0].mxu0
        %v6474 = vadd.f32 0.0, %v6473
        %v6475 = vpop.f32.mrb[0].mxu0
        %v6476 = vpop.f32.mrb[0].mxu0
        %v6477 = vpop.f32.mrb[0].mxu0
        %6478 = vdwg.mxu0
        %v6479 = vadd.f32 %v6219, %v6433
        %v6480 = vadd.f32 %v6220, %v6435
        %v6481 = vadd.f32 %v6221, %v6474
        %s6482 = scalar_lea.vmem %s3, 14
        %v6483 = vld [vmem:[%s6482] sm:$0x3]
        %6484 = vrot.lane.b32.xlu0 %v4716, 87
        %v6485 = vpop.permute.xlu0 %6484
        %6486 = vrot.lane.b32.xlu0 %v4717, 87
        %v6487 = vpop.permute.xlu0 %6486
        %6488 = vrot.lane.b32.xlu0 %v4718, 87
        %v6489 = vpop.permute.xlu0 %6488
        %6490 = vrot.lane.b32.xlu0 %v4719, 87
        %v6491 = vpop.permute.xlu0 %6490
        %6492 = vrot.lane.b32.xlu0 %v4720, 87
        %v6493 = vpop.permute.xlu0 %6492
        %6494 = vrot.lane.b32.xlu0 %v4721, 87
        %v6495 = vpop.permute.xlu0 %6494
        %6496 = vrot.lane.b32.xlu0 %v4722, 87
        %v6497 = vpop.permute.xlu0 %6496
        %6498 = vrot.lane.b32.xlu0 %v4723, 87
        %v6499 = vpop.permute.xlu0 %6498
        %6500 = vrot.lane.b32.xlu0 %v4724, 87
        %v6501 = vpop.permute.xlu0 %6500
        %6502 = vrot.lane.b32.xlu0 %v4725, 87
        %v6503 = vpop.permute.xlu0 %6502
        %6504 = vrot.lane.b32.xlu0 %v4726, 87
        %v6505 = vpop.permute.xlu0 %6504
        %6506 = vrot.lane.b32.xlu0 %v4727, 87
        %v6507 = vpop.permute.xlu0 %6506
        %6508 = vrot.lane.b32.xlu0 %v4728, 87
        %v6509 = vpop.permute.xlu0 %6508
        %6510 = vrot.lane.b32.xlu0 %v4729, 87
        %v6511 = vpop.permute.xlu0 %6510
        %6512 = vrot.lane.b32.xlu0 %v4730, 87
        %v6513 = vpop.permute.xlu0 %6512
        %6514 = vrot.lane.b32.xlu0 %v4731, 87
        %v6515 = vpop.permute.xlu0 %6514
        %6516 = vrot.lane.b32.xlu0 %v4732, 87
        %v6517 = vpop.permute.xlu0 %6516
        %6518 = vrot.lane.b32.xlu0 %v4733, 87
        %v6519 = vpop.permute.xlu0 %6518
        %6520 = vrot.lane.b32.xlu0 %v4734, 87
        %v6521 = vpop.permute.xlu0 %6520
        %6522 = vrot.lane.b32.xlu0 %v4735, 87
        %v6523 = vpop.permute.xlu0 %6522
        %6524 = vrot.lane.b32.xlu0 %v4736, 87
        %v6525 = vpop.permute.xlu0 %6524
        %6526 = vrot.lane.b32.xlu0 %v4737, 87
        %v6527 = vpop.permute.xlu0 %6526
        %6528 = vrot.lane.b32.xlu0 %v4738, 87
        %v6529 = vpop.permute.xlu0 %6528
        %6530 = vrot.lane.b32.xlu0 %v4739, 87
        %v6531 = vpop.permute.xlu0 %6530
        %v6532 = vsel %vm3516, %v6485, %v6487
        %v6533 = vsel %vm3516, %v6487, %v6489
        %v6534 = vsel %vm3516, %v6491, %v6493
        %v6535 = vsel %vm3516, %v6493, %v6495
        %v6536 = vsel %vm3516, %v6497, %v6499
        %v6537 = vsel %vm3516, %v6499, %v6501
        %v6538 = vsel %vm3516, %v6503, %v6505
        %v6539 = vsel %vm3516, %v6505, %v6507
        %v6540 = vsel %vm3516, %v6509, %v6511
        %v6541 = vsel %vm3516, %v6511, %v6513
        %v6542 = vsel %vm3516, %v6515, %v6517
        %v6543 = vsel %vm3516, %v6517, %v6519
        %v6544 = vsel %vm3516, %v6521, %v6523
        %v6545 = vsel %vm3516, %v6523, %v6525
        %v6546 = vsel %vm3516, %v6527, %v6529
        %v6547 = vsel %vm3516, %v6529, %v6531
        %6572 = vmatprep.subr.bf16.mxu0 %v6533
        %6573 = vmatpush1.bf16.msra.mxu0 %v6532
        %6574 = vmatprep.subr.bf16.mxu0 %v6535
        %6575 = vmatpush1.bf16.msra.mxu0 %v6534
        %6576 = vmatprep.subr.bf16.mxu0 %v6537
        %6577 = vmatpush1.bf16.msra.mxu0 %v6536
        %6578 = vmatprep.subr.bf16.mxu0 %v6539
        %6579 = vmatpush1.bf16.msra.mxu0 %v6538
        %6580 = vmatprep.subr.bf16.mxu0 %v6541
        %6581 = vmatpush1.bf16.msra.mxu0 %v6540
        %6582 = vmatprep.subr.bf16.mxu0 %v6543
        %6583 = vmatpush1.bf16.msra.mxu0 %v6542
        %6584 = vmatprep.subr.bf16.mxu0 %v6545
        %6585 = vmatpush1.bf16.msra.mxu0 %v6544
        %6586 = vmatprep.subr.bf16.mxu0 %v6547
        %6587 = vmatpush1.bf16.msra.mxu0 %v6546
        %6588 = vmatprep.subr.bf16.mxu0 0
        %6589 = vmatpush1.bf16.msra.mxu0 0
        %6590 = vmatprep.subr.bf16.mxu0 0
        %6591 = vmatpush1.bf16.msra.mxu0 0
        %6592 = vmatprep.subr.bf16.mxu0 0
        %6593 = vmatpush1.bf16.msra.mxu0 0
        %6594 = vmatprep.subr.bf16.mxu0 0
        %6595 = vmatpush1.bf16.msra.mxu0 0
        %6596 = vmatprep.subr.bf16.mxu0 0
        %6597 = vmatpush1.bf16.msra.mxu0 0
        %6598 = vmatprep.subr.bf16.mxu0 0
        %6599 = vmatpush1.bf16.msra.mxu0 0
        %6600 = vmatprep.subr.bf16.mxu0 0
        %6601 = vmatpush1.bf16.msra.mxu0 0
        %6602 = vmatprep.subr.bf16.mxu0 0
        %6603 = vmatpush1.bf16.msra.mxu0 0
        %6604 = vmatprep.mubr.bf16.mxu0 0
        %6605 = vmatmul.mubr.bf16.gmra.mrb[0].mxu0 %v6483
        %v6606 = vpop.f32.mrb[0].mxu0
        %v6607 = vadd.f32 0.0, %v6606
        %v6608 = vpop.f32.mrb[0].mxu0
        %v6609 = vadd.f32 0.0, %v6608
        %v6610 = vpop.f32.mrb[0].mxu0
        %v6611 = vpop.f32.mrb[0].mxu0
        %6612 = vdwg.mxu0
        %6613 = vmatprep.subr.bf16.mxu0 0
        %6614 = vmatpush1.bf16.msra.mxu0 %v6489
        %6615 = vmatprep.subr.bf16.mxu0 0
        %6616 = vmatpush1.bf16.msra.mxu0 %v6495
        %6617 = vmatprep.subr.bf16.mxu0 0
        %6618 = vmatpush1.bf16.msra.mxu0 %v6501
        %6619 = vmatprep.subr.bf16.mxu0 0
        %6620 = vmatpush1.bf16.msra.mxu0 %v6507
        %6621 = vmatprep.subr.bf16.mxu0 0
        %6622 = vmatpush1.bf16.msra.mxu0 %v6513
        %6623 = vmatprep.subr.bf16.mxu0 0
        %6624 = vmatpush1.bf16.msra.mxu0 %v6519
        %6625 = vmatprep.subr.bf16.mxu0 0
        %6626 = vmatpush1.bf16.msra.mxu0 %v6525
        %6627 = vmatprep.subr.bf16.mxu0 0
        %6628 = vmatpush1.bf16.msra.mxu0 %v6531
        %6629 = vmatprep.subr.bf16.mxu0 0
        %6630 = vmatpush1.bf16.msra.mxu0 0
        %6631 = vmatprep.subr.bf16.mxu0 0
        %6632 = vmatpush1.bf16.msra.mxu0 0
        %6633 = vmatprep.subr.bf16.mxu0 0
        %6634 = vmatpush1.bf16.msra.mxu0 0
        %6635 = vmatprep.subr.bf16.mxu0 0
        %6636 = vmatpush1.bf16.msra.mxu0 0
        %6637 = vmatprep.subr.bf16.mxu0 0
        %6638 = vmatpush1.bf16.msra.mxu0 0
        %6639 = vmatprep.subr.bf16.mxu0 0
        %6640 = vmatpush1.bf16.msra.mxu0 0
        %6641 = vmatprep.subr.bf16.mxu0 0
        %6642 = vmatpush1.bf16.msra.mxu0 0
        %6643 = vmatprep.subr.bf16.mxu0 0
        %6644 = vmatpush1.bf16.msra.mxu0 0
        %6645 = vmatprep.mubr.bf16.mxu0 0
        %6646 = vmatmul.mubr.bf16.gmra.mrb[0].mxu0 %v6483
        %v6647 = vpop.f32.mrb[0].mxu0
        %v6648 = vadd.f32 0.0, %v6647
        %v6649 = vpop.f32.mrb[0].mxu0
        %v6650 = vpop.f32.mrb[0].mxu0
        %v6651 = vpop.f32.mrb[0].mxu0
        %6652 = vdwg.mxu0
        %v6653 = vadd.f32 %v6393, %v6607
        %v6654 = vadd.f32 %v6394, %v6609
        %v6655 = vadd.f32 %v6395, %v6648
        %s6656 = scalar_lea.vmem %s4, 14
        %v6657 = vld [vmem:[%s6656] sm:$0x3]
        %6658 = vmatprep.subr.bf16.mxu0 %v6533
        %6659 = vmatpush1.bf16.msra.mxu0 %v6532
        %6660 = vmatprep.subr.bf16.mxu0 %v6535
        %6661 = vmatpush1.bf16.msra.mxu0 %v6534
        %6662 = vmatprep.subr.bf16.mxu0 %v6537
        %6663 = vmatpush1.bf16.msra.mxu0 %v6536
        %6664 = vmatprep.subr.bf16.mxu0 %v6539
        %6665 = vmatpush1.bf16.msra.mxu0 %v6538
        %6666 = vmatprep.subr.bf16.mxu0 %v6541
        %6667 = vmatpush1.bf16.msra.mxu0 %v6540
        %6668 = vmatprep.subr.bf16.mxu0 %v6543
        %6669 = vmatpush1.bf16.msra.mxu0 %v6542
        %6670 = vmatprep.subr.bf16.mxu0 %v6545
        %6671 = vmatpush1.bf16.msra.mxu0 %v6544
        %6672 = vmatprep.subr.bf16.mxu0 %v6547
        %6673 = vmatpush1.bf16.msra.mxu0 %v6546
        %6674 = vmatprep.subr.bf16.mxu0 0
        %6675 = vmatpush1.bf16.msra.mxu0 0
        %6676 = vmatprep.subr.bf16.mxu0 0
        %6677 = vmatpush1.bf16.msra.mxu0 0
        %6678 = vmatprep.subr.bf16.mxu0 0
        %6679 = vmatpush1.bf16.msra.mxu0 0
        %6680 = vmatprep.subr.bf16.mxu0 0
        %6681 = vmatpush1.bf16.msra.mxu0 0
        %6682 = vmatprep.subr.bf16.mxu0 0
        %6683 = vmatpush1.bf16.msra.mxu0 0
        %6684 = vmatprep.subr.bf16.mxu0 0
        %6685 = vmatpush1.bf16.msra.mxu0 0
        %6686 = vmatprep.subr.bf16.mxu0 0
        %6687 = vmatpush1.bf16.msra.mxu0 0
        %6688 = vmatprep.subr.bf16.mxu0 0
        %6689 = vmatpush1.bf16.msra.mxu0 0
        %6690 = vmatprep.mubr.bf16.mxu0 0
        %6691 = vmatmul.mubr.bf16.gmra.mrb[0].mxu0 %v6657
        %v6692 = vpop.f32.mrb[0].mxu0
        %v6693 = vadd.f32 0.0, %v6692
        %v6694 = vpop.f32.mrb[0].mxu0
        %v6695 = vadd.f32 0.0, %v6694
        %v6696 = vpop.f32.mrb[0].mxu0
        %v6697 = vpop.f32.mrb[0].mxu0
        %6698 = vdwg.mxu0
        %6699 = vmatprep.subr.bf16.mxu0 0
        %6700 = vmatpush1.bf16.msra.mxu0 %v6489
        %6701 = vmatprep.subr.bf16.mxu0 0
        %6702 = vmatpush1.bf16.msra.mxu0 %v6495
        %6703 = vmatprep.subr.bf16.mxu0 0
        %6704 = vmatpush1.bf16.msra.mxu0 %v6501
        %6705 = vmatprep.subr.bf16.mxu0 0
        %6706 = vmatpush1.bf16.msra.mxu0 %v6507
        %6707 = vmatprep.subr.bf16.mxu0 0
        %6708 = vmatpush1.bf16.msra.mxu0 %v6513
        %6709 = vmatprep.subr.bf16.mxu0 0
        %6710 = vmatpush1.bf16.msra.mxu0 %v6519
        %6711 = vmatprep.subr.bf16.mxu0 0
        %6712 = vmatpush1.bf16.msra.mxu0 %v6525
        %6713 = vmatprep.subr.bf16.mxu0 0
        %6714 = vmatpush1.bf16.msra.mxu0 %v6531
        %6715 = vmatprep.subr.bf16.mxu0 0
        %6716 = vmatpush1.bf16.msra.mxu0 0
        %6717 = vmatprep.subr.bf16.mxu0 0
        %6718 = vmatpush1.bf16.msra.mxu0 0
        %6719 = vmatprep.subr.bf16.mxu0 0
        %6720 = vmatpush1.bf16.msra.mxu0 0
        %6721 = vmatprep.subr.bf16.mxu0 0
        %6722 = vmatpush1.bf16.msra.mxu0 0
        %6723 = vmatprep.subr.bf16.mxu0 0
        %6724 = vmatpush1.bf16.msra.mxu0 0
        %6725 = vmatprep.subr.bf16.mxu0 0
        %6726 = vmatpush1.bf16.msra.mxu0 0
        %6727 = vmatprep.subr.bf16.mxu0 0
        %6728 = vmatpush1.bf16.msra.mxu0 0
        %6729 = vmatprep.subr.bf16.mxu0 0
        %6730 = vmatpush1.bf16.msra.mxu0 0
        %6731 = vmatprep.mubr.bf16.mxu0 0
        %6732 = vmatmul.mubr.bf16.gmra.mrb[0].mxu0 %v6657
        %v6733 = vpop.f32.mrb[0].mxu0
        %v6734 = vadd.f32 0.0, %v6733
        %v6735 = vpop.f32.mrb[0].mxu0
        %v6736 = vpop.f32.mrb[0].mxu0
        %v6737 = vpop.f32.mrb[0].mxu0
        %6738 = vdwg.mxu0
        %v6739 = vadd.f32 %v6479, %v6693
        %v6740 = vadd.f32 %v6480, %v6695
        %v6741 = vadd.f32 %v6481, %v6734
        %s6742 = scalar_lea.vmem %s3, 16
        %v6743 = vld [vmem:[%s6742] sm:$0x3]
        %6744 = vrot.lane.b32.xlu0 %v4716, 86
        %v6745 = vpop.permute.xlu0 %6744
        %6746 = vrot.lane.b32.xlu0 %v4717, 86
        %v6747 = vpop.permute.xlu0 %6746
        %6748 = vrot.lane.b32.xlu0 %v4718, 86
        %v6749 = vpop.permute.xlu0 %6748
        %6750 = vrot.lane.b32.xlu0 %v4719, 86
        %v6751 = vpop.permute.xlu0 %6750
        %6752 = vrot.lane.b32.xlu0 %v4720, 86
        %v6753 = vpop.permute.xlu0 %6752
        %6754 = vrot.lane.b32.xlu0 %v4721, 86
        %v6755 = vpop.permute.xlu0 %6754
        %6756 = vrot.lane.b32.xlu0 %v4722, 86
        %v6757 = vpop.permute.xlu0 %6756
        %6758 = vrot.lane.b32.xlu0 %v4723, 86
        %v6759 = vpop.permute.xlu0 %6758
        %6760 = vrot.lane.b32.xlu0 %v4724, 86
        %v6761 = vpop.permute.xlu0 %6760
        %6762 = vrot.lane.b32.xlu0 %v4725, 86
        %v6763 = vpop.permute.xlu0 %6762
        %6764 = vrot.lane.b32.xlu0 %v4726, 86
        %v6765 = vpop.permute.xlu0 %6764
        %6766 = vrot.lane.b32.xlu0 %v4727, 86
        %v6767 = vpop.permute.xlu0 %6766
        %6768 = vrot.lane.b32.xlu0 %v4728, 86
        %v6769 = vpop.permute.xlu0 %6768
        %6770 = vrot.lane.b32.xlu0 %v4729, 86
        %v6771 = vpop.permute.xlu0 %6770
        %6772 = vrot.lane.b32.xlu0 %v4730, 86
        %v6773 = vpop.permute.xlu0 %6772
        %6774 = vrot.lane.b32.xlu0 %v4731, 86
        %v6775 = vpop.permute.xlu0 %6774
        %6776 = vrot.lane.b32.xlu0 %v4732, 86
        %v6777 = vpop.permute.xlu0 %6776
        %6778 = vrot.lane.b32.xlu0 %v4733, 86
        %v6779 = vpop.permute.xlu0 %6778
        %6780 = vrot.lane.b32.xlu0 %v4734, 86
        %v6781 = vpop.permute.xlu0 %6780
        %6782 = vrot.lane.b32.xlu0 %v4735, 86
        %v6783 = vpop.permute.xlu0 %6782
        %6784 = vrot.lane.b32.xlu0 %v4736, 86
        %v6785 = vpop.permute.xlu0 %6784
        %6786 = vrot.lane.b32.xlu0 %v4737, 86
        %v6787 = vpop.permute.xlu0 %6786
        %6788 = vrot.lane.b32.xlu0 %v4738, 86
        %v6789 = vpop.permute.xlu0 %6788
        %6790 = vrot.lane.b32.xlu0 %v4739, 86
        %v6791 = vpop.permute.xlu0 %6790
        %v6792 = vsel %vm3972, %v6745, %v6747
        %v6793 = vsel %vm3972, %v6747, %v6749
        %v6794 = vsel %vm3972, %v6751, %v6753
        %v6795 = vsel %vm3972, %v6753, %v6755
        %v6796 = vsel %vm3972, %v6757, %v6759
        %v6797 = vsel %vm3972, %v6759, %v6761
        %v6798 = vsel %vm3972, %v6763, %v6765
        %v6799 = vsel %vm3972, %v6765, %v6767
        %v6800 = vsel %vm3972, %v6769, %v6771
        %v6801 = vsel %vm3972, %v6771, %v6773
        %v6802 = vsel %vm3972, %v6775, %v6777
        %v6803 = vsel %vm3972, %v6777, %v6779
        %v6804 = vsel %vm3972, %v6781, %v6783
        %v6805 = vsel %vm3972, %v6783, %v6785
        %v6806 = vsel %vm3972, %v6787, %v6789
        %v6807 = vsel %vm3972, %v6789, %v6791
        %6832 = vmatprep.subr.bf16.mxu0 %v6793
        %6833 = vmatpush1.bf16.msra.mxu0 %v6792
        %6834 = vmatprep.subr.bf16.mxu0 %v6795
        %6835 = vmatpush1.bf16.msra.mxu0 %v6794
        %6836 = vmatprep.subr.bf16.mxu0 %v6797
        %6837 = vmatpush1.bf16.msra.mxu0 %v6796
        %6838 = vmatprep.subr.bf16.mxu0 %v6799
        %6839 = vmatpush1.bf16.msra.mxu0 %v6798
        %6840 = vmatprep.subr.bf16.mxu0 %v6801
        %6841 = vmatpush1.bf16.msra.mxu0 %v6800
        %6842 = vmatprep.subr.bf16.mxu0 %v6803
        %6843 = vmatpush1.bf16.msra.mxu0 %v6802
        %6844 = vmatprep.subr.bf16.mxu0 %v6805
        %6845 = vmatpush1.bf16.msra.mxu0 %v6804
        %6846 = vmatprep.subr.bf16.mxu0 %v6807
        %6847 = vmatpush1.bf16.msra.mxu0 %v6806
        %6848 = vmatprep.subr.bf16.mxu0 0
        %6849 = vmatpush1.bf16.msra.mxu0 0
        %6850 = vmatprep.subr.bf16.mxu0 0
        %6851 = vmatpush1.bf16.msra.mxu0 0
        %6852 = vmatprep.subr.bf16.mxu0 0
        %6853 = vmatpush1.bf16.msra.mxu0 0
        %6854 = vmatprep.subr.bf16.mxu0 0
        %6855 = vmatpush1.bf16.msra.mxu0 0
        %6856 = vmatprep.subr.bf16.mxu0 0
        %6857 = vmatpush1.bf16.msra.mxu0 0
        %6858 = vmatprep.subr.bf16.mxu0 0
        %6859 = vmatpush1.bf16.msra.mxu0 0
        %6860 = vmatprep.subr.bf16.mxu0 0
        %6861 = vmatpush1.bf16.msra.mxu0 0
        %6862 = vmatprep.subr.bf16.mxu0 0
        %6863 = vmatpush1.bf16.msra.mxu0 0
        %6864 = vmatprep.mubr.bf16.mxu0 0
        %6865 = vmatmul.mubr.bf16.gmra.mrb[0].mxu0 %v6743
        %v6866 = vpop.f32.mrb[0].mxu0
        %v6867 = vadd.f32 0.0, %v6866
        %v6868 = vpop.f32.mrb[0].mxu0
        %v6869 = vadd.f32 0.0, %v6868
        %v6870 = vpop.f32.mrb[0].mxu0
        %v6871 = vpop.f32.mrb[0].mxu0
        %6872 = vdwg.mxu0
        %6873 = vmatprep.subr.bf16.mxu0 0
        %6874 = vmatpush1.bf16.msra.mxu0 %v6749
        %6875 = vmatprep.subr.bf16.mxu0 0
        %6876 = vmatpush1.bf16.msra.mxu0 %v6755
        %6877 = vmatprep.subr.bf16.mxu0 0
        %6878 = vmatpush1.bf16.msra.mxu0 %v6761
        %6879 = vmatprep.subr.bf16.mxu0 0
        %6880 = vmatpush1.bf16.msra.mxu0 %v6767
        %6881 = vmatprep.subr.bf16.mxu0 0
        %6882 = vmatpush1.bf16.msra.mxu0 %v6773
        %6883 = vmatprep.subr.bf16.mxu0 0
        %6884 = vmatpush1.bf16.msra.mxu0 %v6779
        %6885 = vmatprep.subr.bf16.mxu0 0
        %6886 = vmatpush1.bf16.msra.mxu0 %v6785
        %6887 = vmatprep.subr.bf16.mxu0 0
        %6888 = vmatpush1.bf16.msra.mxu0 %v6791
        %6889 = vmatprep.subr.bf16.mxu0 0
        %6890 = vmatpush1.bf16.msra.mxu0 0
        %6891 = vmatprep.subr.bf16.mxu0 0
        %6892 = vmatpush1.bf16.msra.mxu0 0
        %6893 = vmatprep.subr.bf16.mxu0 0
        %6894 = vmatpush1.bf16.msra.mxu0 0
        %6895 = vmatprep.subr.bf16.mxu0 0
        %6896 = vmatpush1.bf16.msra.mxu0 0
        %6897 = vmatprep.subr.bf16.mxu0 0
        %6898 = vmatpush1.bf16.msra.mxu0 0
        %6899 = vmatprep.subr.bf16.mxu0 0
        %6900 = vmatpush1.bf16.msra.mxu0 0
        %6901 = vmatprep.subr.bf16.mxu0 0
        %6902 = vmatpush1.bf16.msra.mxu0 0
        %6903 = vmatprep.subr.bf16.mxu0 0
        %6904 = vmatpush1.bf16.msra.mxu0 0
        %6905 = vmatprep.mubr.bf16.mxu0 0
        %6906 = vmatmul.mubr.bf16.gmra.mrb[0].mxu0 %v6743
        %v6907 = vpop.f32.mrb[0].mxu0
        %v6908 = vadd.f32 0.0, %v6907
        %v6909 = vpop.f32.mrb[0].mxu0
        %v6910 = vpop.f32.mrb[0].mxu0
        %v6911 = vpop.f32.mrb[0].mxu0
        %6912 = vdwg.mxu0
        %v6913 = vadd.f32 %v6653, %v6867
        %v6914 = vadd.f32 %v6654, %v6869
        %v6915 = vadd.f32 %v6655, %v6908
        %s6916 = scalar_lea.vmem %s4, 16
        %v6917 = vld [vmem:[%s6916] sm:$0x3]
        %6918 = vmatprep.subr.bf16.mxu0 %v6793
        %6919 = vmatpush1.bf16.msra.mxu0 %v6792
        %6920 = vmatprep.subr.bf16.mxu0 %v6795
        %6921 = vmatpush1.bf16.msra.mxu0 %v6794
        %6922 = vmatprep.subr.bf16.mxu0 %v6797
        %6923 = vmatpush1.bf16.msra.mxu0 %v6796
        %6924 = vmatprep.subr.bf16.mxu0 %v6799
        %6925 = vmatpush1.bf16.msra.mxu0 %v6798
        %6926 = vmatprep.subr.bf16.mxu0 %v6801
        %6927 = vmatpush1.bf16.msra.mxu0 %v6800
        %6928 = vmatprep.subr.bf16.mxu0 %v6803
        %6929 = vmatpush1.bf16.msra.mxu0 %v6802
        %6930 = vmatprep.subr.bf16.mxu0 %v6805
        %6931 = vmatpush1.bf16.msra.mxu0 %v6804
        %6932 = vmatprep.subr.bf16.mxu0 %v6807
        %6933 = vmatpush1.bf16.msra.mxu0 %v6806
        %6934 = vmatprep.subr.bf16.mxu0 0
        %6935 = vmatpush1.bf16.msra.mxu0 0
        %6936 = vmatprep.subr.bf16.mxu0 0
        %6937 = vmatpush1.bf16.msra.mxu0 0
        %6938 = vmatprep.subr.bf16.mxu0 0
        %6939 = vmatpush1.bf16.msra.mxu0 0
        %6940 = vmatprep.subr.bf16.mxu0 0
        %6941 = vmatpush1.bf16.msra.mxu0 0
        %6942 = vmatprep.subr.bf16.mxu0 0
        %6943 = vmatpush1.bf16.msra.mxu0 0
        %6944 = vmatprep.subr.bf16.mxu0 0
        %6945 = vmatpush1.bf16.msra.mxu0 0
        %6946 = vmatprep.subr.bf16.mxu0 0
        %6947 = vmatpush1.bf16.msra.mxu0 0
        %6948 = vmatprep.subr.bf16.mxu0 0
        %6949 = vmatpush1.bf16.msra.mxu0 0
        %6950 = vmatprep.mubr.bf16.mxu0 0
        %6951 = vmatmul.mubr.bf16.gmra.mrb[0].mxu0 %v6917
        %v6952 = vpop.f32.mrb[0].mxu0
        %v6953 = vadd.f32 0.0, %v6952
        %v6954 = vpop.f32.mrb[0].mxu0
        %v6955 = vadd.f32 0.0, %v6954
        %v6956 = vpop.f32.mrb[0].mxu0
        %v6957 = vpop.f32.mrb[0].mxu0
        %6958 = vdwg.mxu0
        %6959 = vmatprep.subr.bf16.mxu0 0
        %6960 = vmatpush1.bf16.msra.mxu0 %v6749
        %6961 = vmatprep.subr.bf16.mxu0 0
        %6962 = vmatpush1.bf16.msra.mxu0 %v6755
        %6963 = vmatprep.subr.bf16.mxu0 0
        %6964 = vmatpush1.bf16.msra.mxu0 %v6761
        %6965 = vmatprep.subr.bf16.mxu0 0
        %6966 = vmatpush1.bf16.msra.mxu0 %v6767
        %6967 = vmatprep.subr.bf16.mxu0 0
        %6968 = vmatpush1.bf16.msra.mxu0 %v6773
        %6969 = vmatprep.subr.bf16.mxu0 0
        %6970 = vmatpush1.bf16.msra.mxu0 %v6779
        %6971 = vmatprep.subr.bf16.mxu0 0
        %6972 = vmatpush1.bf16.msra.mxu0 %v6785
        %6973 = vmatprep.subr.bf16.mxu0 0
        %6974 = vmatpush1.bf16.msra.mxu0 %v6791
        %6975 = vmatprep.subr.bf16.mxu0 0
        %6976 = vmatpush1.bf16.msra.mxu0 0
        %6977 = vmatprep.subr.bf16.mxu0 0
        %6978 = vmatpush1.bf16.msra.mxu0 0
        %6979 = vmatprep.subr.bf16.mxu0 0
        %6980 = vmatpush1.bf16.msra.mxu0 0
        %6981 = vmatprep.subr.bf16.mxu0 0
        %6982 = vmatpush1.bf16.msra.mxu0 0
        %6983 = vmatprep.subr.bf16.mxu0 0
        %6984 = vmatpush1.bf16.msra.mxu0 0
        %6985 = vmatprep.subr.bf16.mxu0 0
        %6986 = vmatpush1.bf16.msra.mxu0 0
        %6987 = vmatprep.subr.bf16.mxu0 0
        %6988 = vmatpush1.bf16.msra.mxu0 0
        %6989 = vmatprep.subr.bf16.mxu0 0
        %6990 = vmatpush1.bf16.msra.mxu0 0
        %6991 = vmatprep.mubr.bf16.mxu0 0
        %6992 = vmatmul.mubr.bf16.gmra.mrb[0].mxu0 %v6917
        %v6993 = vpop.f32.mrb[0].mxu0
        %v6994 = vadd.f32 0.0, %v6993
        %v6995 = vpop.f32.mrb[0].mxu0
        %v6996 = vpop.f32.mrb[0].mxu0
        %v6997 = vpop.f32.mrb[0].mxu0
        %6998 = vdwg.mxu0
        %v6999 = vadd.f32 %v6739, %v6953
        %v7000 = vadd.f32 %v6740, %v6955
        %v7001 = vadd.f32 %v6741, %v6994
        %v7002 = vld [vmem:[%s6] sm:$0xf]
        %7004 = vset.pattern.permute.xlu0 0
        %7005 = vperm.xlu0 %7004, %v7002
        %v7006 = vpop.permute.xlu0 %7005
        %v7008 = vadd.f32 %v6913, %v7006
        %v7009 = vadd.f32 %v6914, %v7006
        %v7010 = vadd.f32 %v6915, %v7006
        %v7011 = vld [vmem:[%s7] sm:$0xf]
        %7013 = vset.pattern.permute.xlu0 0
        %7014 = vperm.xlu0 %7013, %v7011
        %v7015 = vpop.permute.xlu0 %7014
        %v7017 = vadd.f32 %v6999, %v7015
        %v7018 = vadd.f32 %v7000, %v7015
        %v7019 = vadd.f32 %v7001, %v7015
        %v7020 = vld [vmem:[%s350] sm:$0xff]
        %v7021 = vld [vmem:[%s350 + $0x8] sm:$0xf]
        %v7023 = vcombine.high %v7020, %v7020
        %vm7025 = vcmask 1043456
        %v7026 = vsel %vm7025, %v7020, 0.0
        %v7027 = vsel %vm7025, %v7023, 0.0
        %v7028 = vadd.f32 %v7026, %v7027
        %vm7029 = vcmask 519168
        %v7030 = vsel %vm7029, %v7021, 0.0
        %v7031 = vadd.f32 %v7028, %v7030
        %7032 = vadd.xlane.f32.xlu0 %v7031
        %v7033 = vpop.xlane.xlu0 %7032
        %v7034 = vmul.f32 %v7033, 0.00390625
        %v7035 = vmul.f32 %v7020, %v7020
        %v7036 = vmul.f32 %v7021, %v7021
        %v7038 = vcombine.high %v7035, %v7035
        %v7040 = vsel %vm7025, %v7035, 0.0
        %v7041 = vsel %vm7025, %v7038, 0.0
        %v7042 = vadd.f32 %v7040, %v7041
        %v7043 = vsel %vm7029, %v7036, 0.0
        %v7044 = vadd.f32 %v7042, %v7043
        %7045 = vadd.xlane.f32.xlu0 %v7044
        %v7046 = vpop.xlane.xlu0 %7045
        %v7047 = vmul.f32 %v7046, 0.00390625
        %v7048 = vmul.f32 %v7034, %v7034
        %v7049 = vsub.f32 %v7047, %v7048
        %v7050 = vadd.f32 %v7049, 1e-05
        %v7051 = vrsqrt.pop %v7050
        %v7054 = vunpack.c.l.s4 839922192
        %v7055 = vunpack.c.0.s8 %v7054
        %v7056 = vlaneseq
        %v7057 = vshrl.u32 %v7056, 7
        %v7058 = vsub.s32 %v7055, %v7057
        %v7059 = vrot.slane %v7034, %v7058
        %v7061 = vsub.f32 %v7020, %v7059
        %v7062 = vsub.f32 %v7021, %v7059
        %v7065 = vunpack.c.l.s4 839922192
        %v7066 = vunpack.c.0.s8 %v7065
        %v7067 = vlaneseq
        %v7068 = vshrl.u32 %v7067, 7
        %v7069 = vsub.s32 %v7066, %v7068
        %v7070 = vrot.slane %v7051, %v7069
        %v7072 = vmul.f32 %v7061, %v7070
        %v7073 = vmul.f32 %v7062, %v7070
        %v7074 = vadd.f32 %v7008, 1.0
        %v7075 = vadd.f32 %v7009, 1.0
        %v7076 = vadd.f32 %v7010, 1.0
        %v7079 = vcombine.low %v7074, %v7075
        %v7081 = vmul.f32 %v7072, %v7079
        %v7082 = vmul.f32 %v7073, %v7076
        %v7085 = vcombine.low %v7017, %v7018
        %v7087 = vadd.f32 %v7081, %v7085
        %v7088 = vadd.f32 %v7082, %v7019
        %7089 = vst [vmem:[%s340] sm:$0xff] %v7087
        %7090 = vst.msk [vmem:[%s340 + $0x8] sm:$0xf] %vm7029, %v7088
        %s7091 = sand.u32 %s230, 1
        %s7092 = scalar_lea.sflag [#allocation5], %s7091
        %s7093 = sand.u32 %s230, 1
        %s7094 = smul.addr %s7093, 12
        %s7095 = scalar_lea.vmem [#allocation4], %s7094
        // Predicated region
        $region57: #{tpu_custom_call.1} parent=55 // pred_check
          %p7096 = pneg %p240
        $region58: #{tpu_custom_call.1} parent=55 // pred_check_branch
          %7098 = sbr.rel (%p7096) target = $region60
        $region59: #{tpu_custom_call.1} parent=55 // pred_region
          %s7100 = ssub.s32 192, 192
          %7101 = vsyncadd %s7092, %s7100
          %s7102 = smul.addr %s23, 3
          %s7103 = smul.addr %s7102, 64
          %s7104 = scalar_lea.hbm %s9, %s7103
          %s7106 = sshll.u32 %s7095, 4
          %s7107 = int_to_ptr.vmem [resolvable:$true] %s7106
          %7109 = dma.vmem_to_hbm [thread:$0]  %s7107, 192, %s7104, %s7092
        $region60: #{tpu_custom_call.1} parent=55 // pred_fallthru
          _
      $region56: #{tpu_custom_call.1} parent=5 // pred_fallthru
        _
      %p7110 = scmp.le.s32.totalorder 2, %s18
      // Predicated region
      $region61: #{tpu_custom_call.1} parent=5 // pred_check
        %p7111 = pneg %p7110
      $region62: #{tpu_custom_call.1} parent=5 // pred_check_branch
        %7113 = sbr.rel (%p7111) target = $region64
      $region63: #{tpu_custom_call.1} parent=5 // pred_region
        %s7114 = ssub.s32 %s18, 2
        // Predicated region
        $region65: #{tpu_custom_call.1} parent=63 // pred_check
          %p7115 = pneg %p246
        $region66: #{tpu_custom_call.1} parent=63 // pred_check_branch
          %7117 = sbr.rel (%p7115) target = $region68
        $region67: #{tpu_custom_call.1} parent=63 // pred_region
          %s7118 = sand.u32 %s231, 1
          %s7119 = scalar_lea.sflag [#allocation5], %s7118
          %s7120 = sand.u32 %s231, 1
          %s7121 = smul.addr %s7120, 12
          %s7122 = scalar_lea.vmem [#allocation4], %s7121
          %7123 = dma.done %s7119, 192
        $region68: #{tpu_custom_call.1} parent=63 // pred_fallthru
          _
      $region64: #{tpu_custom_call.1} parent=5 // pred_fallthru
        _
    $region6: #{tpu_custom_call.1} parent=1 // loop_footer
      %s22 = sadd.s32 1, %s18
    $region7: #{tpu_custom_call.1} parent=1 // loop_footer_branch
      %17 = sbr.rel target = $region3
    $region8: #{tpu_custom_call.1} parent=1 // loop_exit
      _
    %7124 = vsyncpa [#allocation5], 1
    %s7125 = scalar_lea.sflag [#allocation5], 1
    %7126 = vsyncpa %s7125, 1

</llo_original>
